<compile_context>
chip_gen: v7x
topology: tpu7x:2x2x1
jax: 0.10.0
libtpu: 0.0.40
codegen_flags: <defaults>
</compile_context>

<pallas_src>
import numpy as np

import jax
import jax.numpy as jnp
from jax.experimental import pallas as pl
from jax.experimental.pallas import tpu as pltpu

BF16 = jnp.bfloat16
F32 = jnp.float32


# ------------------------------------------------------------------ Pallas kernel

def _full_spec(shape):
    return pl.BlockSpec(tuple(shape), lambda i: (0,) * len(shape))


def _ae_kernel(x_ref,
               c1w_ref, c1s_ref, c1b_ref,
               c2w_ref, c2s_ref, c2b_ref,
               c3w_ref, c3s_ref, c3b_ref,
               f1w_ref, f1p_ref, f1b_ref,
               f2w_ref, f2pt_ref, f2b_ref,
               d1w_ref, d1s_ref, d1b_ref,
               d2w_ref, d2s_ref, d2b_ref,
               d3w_ref, d3s_ref, d3b_ref,
               enc_ref, img_ref):
    """Whole AE forward.  Activations in (B*H, W*C) layout, everything MXU."""

    def conv_block(x_f32, s_ref, w_ref, b_ref, act):
        # out = act(bias + sum_kh S_kh @ X @ BigW_kh)
        xb = x_f32.astype(BF16)
        out = None
        for kh in range(4):
            # Row gather/scatter (0/1 matrix -> exact copies) of the vertical tap.
            g = jnp.dot(s_ref[kh], xb, preferred_element_type=F32).astype(BF16)
            # Horizontal taps + channel contraction folded into one banded matmul.
            t = jnp.dot(g, w_ref[kh], preferred_element_type=F32)
            out = t if out is None else out + t
        out = out + b_ref[...]
        if act == "relu":
            out = jnp.maximum(out, 0.0)
        elif act == "sigmoid":
            out = jax.nn.sigmoid(out)
        return out

    # ---------------- encoder ----------------
    x0 = x_ref[...].astype(F32)                                  # (B*32,  96)
    a1 = conv_block(x0, c1s_ref, c1w_ref, c1b_ref, "relu")       # (B*16, 192)
    a2 = conv_block(a1, c2s_ref, c2w_ref, c2b_ref, "relu")       # (B* 8, 192)
    a3 = conv_block(a2, c3s_ref, c3w_ref, c3b_ref, "relu")       # (B* 4, 192)

    # fc1 -- Flatten(CHW) folded into per-row (h) weight blocks.
    a3b = a3.astype(BF16)
    enc = None
    for h in range(4):
        g = jnp.dot(f1p_ref[h], a3b, preferred_element_type=F32).astype(BF16)  # (B,192)
        t = jnp.dot(g, f1w_ref[h], preferred_element_type=F32)                 # (B,512)
        enc = t if enc is None else enc + t
    enc = enc + f1b_ref[...]
    enc_ref[...] = enc                                           # (B, 512) f32

    # fc2 -- Unflatten(CHW) back into the (B*4, 4*48) row/lane layout.
    encb = enc.astype(BF16)
    a4 = None
    for h in range(4):
        d = jnp.dot(encb, f2w_ref[h], preferred_element_type=F32) + f2b_ref[h]   # (B,192)
        s = jnp.dot(f2pt_ref[h], d.astype(BF16), preferred_element_type=F32)     # (B*4,192)
        a4 = s if a4 is None else a4 + s

    # ---------------- decoder ----------------
    a5 = conv_block(a4, d1s_ref, d1w_ref, d1b_ref, "relu")       # (B* 8, 192)
    a6 = conv_block(a5, d2s_ref, d2w_ref, d2b_ref, "relu")       # (B*16, 192)
    a7 = conv_block(a6, d3s_ref, d3w_ref, d3b_ref, "sigmoid")    # (B*32,  96)
    img_ref[...] = a7


def ae_cifar10_v3_forward(packed, x_nchw):
    B = x_nchw.shape[0]
    # (B,3,32,32) -> rows (b,h), lanes (w,c).  Single tiny XLA transpose.
    x_rows = jnp.transpose(x_nchw, (0, 2, 3, 1)).reshape(B * 32, 32 * 3)

    operands = [
        x_rows,
        packed["c1_w"], packed["c1_s"], packed["c1_b"],
        packed["c2_w"], packed["c2_s"], packed["c2_b"],
        packed["c3_w"], packed["c3_s"], packed["c3_b"],
        packed["fc1_w"], packed["fc1_p"], packed["fc1_b"],
        packed["fc2_w"], packed["fc2_pt"], packed["fc2_b"],
        packed["d1_w"], packed["d1_s"], packed["d1_b"],
        packed["d2_w"], packed["d2_s"], packed["d2_b"],
        packed["d3_w"], packed["d3_s"], packed["d3_b"],
    ]

    enc, img_rows = pl.pallas_call(
        _ae_kernel,
        out_shape=(jax.ShapeDtypeStruct((B, 512), jnp.float32),
                   jax.ShapeDtypeStruct((B * 32, 96), jnp.float32)),
        grid=(1,),
        in_specs=[_full_spec(op.shape) for op in operands],
        out_specs=(_full_spec((B, 512)), _full_spec((B * 32, 96))),
        compiler_params=pltpu.CompilerParams(
            dimension_semantics=("arbitrary",)),
    )(*operands)

    decoded = img_rows.reshape(B, 32, 32, 3).transpose(0, 3, 1, 2)
    return enc, decoded


# ------------------------------------------------------------------ parameters

def init_params(key):
    keys = jax.random.split(key, 16)
    ki = iter(keys)

    def _uniform(k, shape, fan_in):
        bound = 1.0 / jnp.sqrt(jnp.float32(fan_in))
        return jax.random.uniform(k, shape, jnp.float32, -bound, bound)

    def conv_p(cout, cin, ksz):
        fan = cin * ksz * ksz
        return (_uniform(next(ki), (cout, cin, ksz, ksz), fan),
                _uniform(next(ki), (cout,), fan))

    def convT_p(cin, cout, ksz):
        fan = cout * ksz * ksz
        return (_uniform(next(ki), (cin, cout, ksz, ksz), fan),
                _uniform(next(ki), (cout,), fan))

    def lin_p(cout, cin):
        return (_uniform(next(ki), (cout, cin), cin),
                _uniform(next(ki), (cout,), cin))

    p = {}
    p["c1_w"], p["c1_b"] = conv_p(12, 3, 4)
    p["c2_w"], p["c2_b"] = conv_p(24, 12, 4)
    p["c3_w"], p["c3_b"] = conv_p(48, 24, 4)
    p["fc1_w"], p["fc1_b"] = lin_p(512, 48 * 4 * 4)
    p["fc2_w"], p["fc2_b"] = lin_p(48 * 4 * 4, 512)
    p["d1_w"], p["d1_b"] = convT_p(48, 24, 4)
    p["d2_w"], p["d2_b"] = convT_p(24, 12, 4)
    p["d3_w"], p["d3_b"] = convT_p(12, 3, 4)
    return p


def pack_params(params, batch):
    """One-time packing: matmul-ready bf16 weights / 0-1 gather matrices / f32 biases."""
    B = batch

    def to_np(a):
        return np.asarray(jax.device_get(a), dtype=np.float32)

    # Conv2d(k=4,s=2,p=1): BigW_kh[w*Cin+ci, wo*Cout+co] = W[co,ci,kh,kw] at w=2wo+kw-1.
    def conv_bigw(w_oihw, win):
        w = to_np(w_oihw)
        cout, cin = w.shape[0], w.shape[1]
        wo = win // 2
        big = np.zeros((4, win * cin, wo * cout), np.float32)
        for kh in range(4):
            for wo_i in range(wo):
                for kw in range(4):
                    wc = 2 * wo_i + kw - 1
                    if 0 <= wc < win:
                        big[kh, wc * cin:(wc + 1) * cin,
                            wo_i * cout:(wo_i + 1) * cout] = w[:, :, kh, kw].T
        return jnp.asarray(big, BF16)

    # Row gather for Conv2d: S_kh[(b,ho),(b,h)] = 1 at h = 2ho+kh-1 (padding dropped).
    def conv_sel(hin):
        ho = hin // 2
        s = np.zeros((4, B * ho, B * hin), np.float32)
        for kh in range(4):
            for b in range(B):
                for ho_i in range(ho):
                    h = 2 * ho_i + kh - 1
                    if 0 <= h < hin:
                        s[kh, b * ho + ho_i, b * hin + h] = 1.0
        return jnp.asarray(s, BF16)

    # ConvTranspose2d(k=4,s=2,p=1): BigW'_kh[iw*Cin+ci, ow*Cout+co] = W[ci,co,kh,kw] at ow=2iw+kw-1.
    def convT_bigw(w_iohw, win):
        w = to_np(w_iohw)
        cin, cout = w.shape[0], w.shape[1]
        wout = 2 * win
        big = np.zeros((4, win * cin, wout * cout), np.float32)
        for kh in range(4):
            for iw in range(win):
                for kw in range(4):
                    ow = 2 * iw + kw - 1
                    if 0 <= ow < wout:
                        big[kh, iw * cin:(iw + 1) * cin,
                            ow * cout:(ow + 1) * cout] = w[:, :, kh, kw]
        return jnp.asarray(big, BF16)

    # Row scatter for ConvTranspose2d: S'_kh[(b,oh),(b,ih)] = 1 at oh = 2ih+kh-1.
    def convT_sel(hin):
        hout = 2 * hin
        s = np.zeros((4, B * hout, B * hin), np.float32)
        for kh in range(4):
            for b in range(B):
                for ih in range(hin):
                    oh = 2 * ih + kh - 1
                    if 0 <= oh < hout:
                        s[kh, b * hout + oh, b * hin + ih] = 1.0
        return jnp.asarray(s, BF16)

    def conv_bias(b, wout):
        return jnp.asarray(np.tile(to_np(b), wout).reshape(1, -1), F32)

    p = {}
    p["c1_w"], p["c1_s"], p["c1_b"] = conv_bigw(params["c1_w"], 32), conv_sel(32), conv_bias(params["c1_b"], 16)
    p["c2_w"], p["c2_s"], p["c2_b"] = conv_bigw(params["c2_w"], 16), conv_sel(16), conv_bias(params["c2_b"], 8)
    p["c3_w"], p["c3_s"], p["c3_b"] = conv_bigw(params["c3_w"], 8), conv_sel(8), conv_bias(params["c3_b"], 4)

    # fc1: fold the CHW Flatten into 4 per-row (h) weight blocks, lane order (w,c).
    w1 = to_np(params["fc1_w"]).reshape(512, 48, 4, 4)            # [n, c, h, w]
    w1h = np.stack([np.transpose(w1[:, :, h, :], (2, 1, 0)).reshape(192, 512)
                    for h in range(4)])
    p["fc1_w"] = jnp.asarray(w1h, BF16)
    p["fc1_b"] = jnp.asarray(to_np(params["fc1_b"]).reshape(1, 512), F32)

    pm = np.zeros((4, B, 4 * B), np.float32)     # row gather  (b,h) -> b
    pt = np.zeros((4, 4 * B, B), np.float32)     # row scatter b -> (b,h)
    for h in range(4):
        for b in range(B):
            pm[h, b, b * 4 + h] = 1.0
            pt[h, b * 4 + h, b] = 1.0
    p["fc1_p"] = jnp.asarray(pm, BF16)
    p["fc2_pt"] = jnp.asarray(pt, BF16)

    # fc2: fold the CHW Unflatten into 4 per-row (h) weight / bias blocks.
    w2 = to_np(params["fc2_w"]).reshape(48, 4, 4, 512)            # [c, h, w, n]
    w2h = np.stack([np.transpose(w2[:, h, :, :], (2, 1, 0)).reshape(512, 192)
                    for h in range(4)])
    p["fc2_w"] = jnp.asarray(w2h, BF16)
    b2 = to_np(params["fc2_b"]).reshape(48, 4, 4)                 # [c, h, w]
    b2h = np.stack([b2[:, h, :].T.reshape(1, 192) for h in range(4)])
    p["fc2_b"] = jnp.asarray(b2h, F32)

    p["d1_w"], p["d1_s"], p["d1_b"] = convT_bigw(params["d1_w"], 4), convT_sel(4), conv_bias(params["d1_b"], 8)
    p["d2_w"], p["d2_s"], p["d2_b"] = convT_bigw(params["d2_w"], 8), convT_sel(8), conv_bias(params["d2_b"], 16)
    p["d3_w"], p["d3_s"], p["d3_b"] = convT_bigw(params["d3_w"], 16), convT_sel(16), conv_bias(params["d3_b"], 32)
    return p


# ------------------------------------------------------------------ pure-JAX f32 reference

def _im2col(x_nhwc, k, stride):
    B, H, W, C = x_nhwc.shape
    Ho = (H - k) // stride + 1
    Wo = (W - k) // stride + 1
    cols = []
    for i in range(k):
        for j in range(k):
            cols.append(x_nhwc[:, i:i + stride * Ho:stride,
                               j:j + stride * Wo:stride, :])
    patches = jnp.concatenate(cols, axis=-1)
    return patches.reshape(B * Ho * Wo, k * k * C), Ho, Wo


def _ref_mm(a, w, b, act):
    out = a @ w + b
    if act == "relu":
        out = jnp.maximum(out, 0.0)
    elif act == "sigmoid":
        out = jax.nn.sigmoid(out)
    return out


def _ref_conv2d(x, w_oihw, b, stride, padding, act):
    Cout, Cin, k, _ = w_oihw.shape
    xp = jnp.pad(x, ((0, 0), (padding, padding), (padding, padding), (0, 0)))
    patches, Ho, Wo = _im2col(xp, k, stride)
    wmat = jnp.transpose(w_oihw, (2, 3, 1, 0)).reshape(k * k * Cin, Cout)
    return _ref_mm(patches, wmat, b, act).reshape(x.shape[0], Ho, Wo, Cout)


def _ref_convT(x, w_iohw, b, stride, padding, act):
    Cin, Cout, k, _ = w_iohw.shape
    B, H, W, _ = x.shape
    xd = jnp.zeros((B, (H - 1) * stride + 1, (W - 1) * stride + 1, Cin), x.dtype)
    xd = xd.at[:, ::stride, ::stride, :].set(x)
    p = k - 1 - padding
    xp = jnp.pad(xd, ((0, 0), (p, p), (p, p), (0, 0)))
    w_conv = jnp.transpose(w_iohw[:, :, ::-1, ::-1], (1, 0, 2, 3))
    patches, Ho, Wo = _im2col(xp, k, 1)
    wmat = jnp.transpose(w_conv, (2, 3, 1, 0)).reshape(k * k * Cin, Cout)
    return _ref_mm(patches, wmat, b, act).reshape(B, Ho, Wo, Cout)


def reference_forward(params, x_nchw):
    B = x_nchw.shape[0]
    x = jnp.transpose(x_nchw, (0, 2, 3, 1))
    h = _ref_conv2d(x, params["c1_w"], params["c1_b"], 2, 1, "relu")
    h = _ref_conv2d(h, params["c2_w"], params["c2_b"], 2, 1, "relu")
    h = _ref_conv2d(h, params["c3_w"], params["c3_b"], 2, 1, "relu")
    flat = jnp.transpose(h, (0, 3, 1, 2)).reshape(B, -1)
    encoded = _ref_mm(flat, params["fc1_w"].T, params["fc1_b"], "none")
    d = _ref_mm(encoded, params["fc2_w"].T, params["fc2_b"], "none")
    d = jnp.transpose(d.reshape(B, 48, 4, 4), (0, 2, 3, 1))
    d = _ref_convT(d, params["d1_w"], params["d1_b"], 2, 1, "relu")
    d = _ref_convT(d, params["d2_w"], params["d2_b"], 2, 1, "relu")
    d = _ref_convT(d, params["d3_w"], params["d3_b"], 2, 1, "sigmoid")
    return encoded, jnp.transpose(d, (0, 3, 1, 2))


# ------------------------------------------------------------------ main

if __name__ == "__main__":
    key = jax.random.PRNGKey(0)
    pkey, xkey = jax.random.split(key)

    params = init_params(pkey)
    B = 2
    packed = pack_params(params, B)     # one-time weight packing (outside forward graph)
    # CIFAR10 geometry is hard-wired by the Linear(48*4*4) layer -> 3x32x32 input.
    x = jax.random.normal(xkey, (B, 3, 32, 32), jnp.float32)

    fwd = jax.jit(ae_cifar10_v3_forward)
    encoded, decoded = fwd(packed, x)
    jax.block_until_ready((encoded, decoded))

    assert encoded.shape == (B, 512), encoded.shape
    assert decoded.shape == (B, 3, 32, 32), decoded.shape
    assert bool(jnp.all(jnp.isfinite(encoded)))
    assert bool(jnp.all((decoded >= 0.0) & (decoded <= 1.0)))      # sigmoid range

    # numerical self-check vs pure-JAX float32 reference (bf16 MXU path => loose tol)
    ref_enc, ref_dec = jax.jit(reference_forward)(params, x)
    err_enc = float(jnp.max(jnp.abs(encoded - ref_enc)))
    err_dec = float(jnp.max(jnp.abs(decoded - ref_dec)))
    assert err_enc < 5e-2, err_enc
    assert err_dec < 5e-2, err_dec

    print("KERNEL_OK")
</pallas_src>

<mosaic_0001>
module attributes {stable_mosaic.version = 11 : i64} {
  func.func @_ae_kernel(%arg0: i32, %arg1: memref<64x96xf32, #tpu.memory_space<vmem>>, %arg2: memref<4x96x192xbf16, #tpu.memory_space<vmem>>, %arg3: memref<4x32x64xbf16, #tpu.memory_space<vmem>>, %arg4: memref<1x192xf32, #tpu.memory_space<vmem>>, %arg5: memref<4x192x192xbf16, #tpu.memory_space<vmem>>, %arg6: memref<4x16x32xbf16, #tpu.memory_space<vmem>>, %arg7: memref<1x192xf32, #tpu.memory_space<vmem>>, %arg8: memref<4x192x192xbf16, #tpu.memory_space<vmem>>, %arg9: memref<4x8x16xbf16, #tpu.memory_space<vmem>>, %arg10: memref<1x192xf32, #tpu.memory_space<vmem>>, %arg11: memref<4x192x512xbf16, #tpu.memory_space<vmem>>, %arg12: memref<4x2x8xbf16, #tpu.memory_space<vmem>>, %arg13: memref<1x512xf32, #tpu.memory_space<vmem>>, %arg14: memref<4x512x192xbf16, #tpu.memory_space<vmem>>, %arg15: memref<4x8x2xbf16, #tpu.memory_space<vmem>>, %arg16: memref<4x1x192xf32, #tpu.memory_space<vmem>>, %arg17: memref<4x192x192xbf16, #tpu.memory_space<vmem>>, %arg18: memref<4x16x8xbf16, #tpu.memory_space<vmem>>, %arg19: memref<1x192xf32, #tpu.memory_space<vmem>>, %arg20: memref<4x192x192xbf16, #tpu.memory_space<vmem>>, %arg21: memref<4x32x16xbf16, #tpu.memory_space<vmem>>, %arg22: memref<1x192xf32, #tpu.memory_space<vmem>>, %arg23: memref<4x192x96xbf16, #tpu.memory_space<vmem>>, %arg24: memref<4x64x32xbf16, #tpu.memory_space<vmem>>, %arg25: memref<1x96xf32, #tpu.memory_space<vmem>>, %arg26: memref<2x512xf32, #tpu.memory_space<vmem>>, %arg27: memref<64x96xf32, #tpu.memory_space<vmem>>) attributes {dimension_semantics = [#tpu.dimension_semantics<arbitrary>], iteration_bounds = array<i64: 1>, scalar_prefetch = 0 : i64, scratch_operands = 0 : i64, tpu.core_type = #tpu.core_type<tc>, window_params = [{pipeline_mode = #tpu.pipeline_mode<synchronous>, transform_indices = @transform_0, window_bounds = array<i64: 64, 96>}, {pipeline_mode = #tpu.pipeline_mode<synchronous>, transform_indices = @transform_1, window_bounds = array<i64: 4, 96, 192>}, {pipeline_mode = #tpu.pipeline_mode<synchronous>, transform_indices = @transform_2, window_bounds = array<i64: 4, 32, 64>}, {pipeline_mode = #tpu.pipeline_mode<synchronous>, transform_indices = @transform_3, window_bounds = array<i64: 1, 192>}, {pipeline_mode = #tpu.pipeline_mode<synchronous>, transform_indices = @transform_4, window_bounds = array<i64: 4, 192, 192>}, {pipeline_mode = #tpu.pipeline_mode<synchronous>, transform_indices = @transform_5, window_bounds = array<i64: 4, 16, 32>}, {pipeline_mode = #tpu.pipeline_mode<synchronous>, transform_indices = @transform_6, window_bounds = array<i64: 1, 192>}, {pipeline_mode = #tpu.pipeline_mode<synchronous>, transform_indices = @transform_7, window_bounds = array<i64: 4, 192, 192>}, {pipeline_mode = #tpu.pipeline_mode<synchronous>, transform_indices = @transform_8, window_bounds = array<i64: 4, 8, 16>}, {pipeline_mode = #tpu.pipeline_mode<synchronous>, transform_indices = @transform_9, window_bounds = array<i64: 1, 192>}, {pipeline_mode = #tpu.pipeline_mode<synchronous>, transform_indices = @transform_10, window_bounds = array<i64: 4, 192, 512>}, {pipeline_mode = #tpu.pipeline_mode<synchronous>, transform_indices = @transform_11, window_bounds = array<i64: 4, 2, 8>}, {pipeline_mode = #tpu.pipeline_mode<synchronous>, transform_indices = @transform_12, window_bounds = array<i64: 1, 512>}, {pipeline_mode = #tpu.pipeline_mode<synchronous>, transform_indices = @transform_13, window_bounds = array<i64: 4, 512, 192>}, {pipeline_mode = #tpu.pipeline_mode<synchronous>, transform_indices = @transform_14, window_bounds = array<i64: 4, 8, 2>}, {pipeline_mode = #tpu.pipeline_mode<synchronous>, transform_indices = @transform_15, window_bounds = array<i64: 4, 1, 192>}, {pipeline_mode = #tpu.pipeline_mode<synchronous>, transform_indices = @transform_16, window_bounds = array<i64: 4, 192, 192>}, {pipeline_mode = #tpu.pipeline_mode<synchronous>, transform_indices = @transform_17, window_bounds = array<i64: 4, 16, 8>}, {pipeline_mode = #tpu.pipeline_mode<synchronous>, transform_indices = @transform_18, window_bounds = array<i64: 1, 192>}, {pipeline_mode = #tpu.pipeline_mode<synchronous>, transform_indices = @transform_19, window_bounds = array<i64: 4, 192, 192>}, {pipeline_mode = #tpu.pipeline_mode<synchronous>, transform_indices = @transform_20, window_bounds = array<i64: 4, 32, 16>}, {pipeline_mode = #tpu.pipeline_mode<synchronous>, transform_indices = @transform_21, window_bounds = array<i64: 1, 192>}, {pipeline_mode = #tpu.pipeline_mode<synchronous>, transform_indices = @transform_22, window_bounds = array<i64: 4, 192, 96>}, {pipeline_mode = #tpu.pipeline_mode<synchronous>, transform_indices = @transform_23, window_bounds = array<i64: 4, 64, 32>}, {pipeline_mode = #tpu.pipeline_mode<synchronous>, transform_indices = @transform_24, window_bounds = array<i64: 1, 96>}, {pipeline_mode = #tpu.pipeline_mode<synchronous>, transform_indices = @transform_25, window_bounds = array<i64: 2, 512>}, {pipeline_mode = #tpu.pipeline_mode<synchronous>, transform_indices = @transform_26, window_bounds = array<i64: 64, 96>}]} {
    %c0 = arith.constant 0 : index
    %c0_0 = arith.constant 0 : index
    %0 = vector.load %arg1[%c0, %c0_0] : memref<64x96xf32, #tpu.memory_space<vmem>>, vector<64x96xf32>
    %1 = arith.truncf %0 : vector<64x96xf32> to vector<64x96xbf16>
    %c0_1 = arith.constant 0 : index
    %c0_2 = arith.constant 0 : index
    %c0_3 = arith.constant 0 : index
    %2 = vector.load %arg3[%c0_1, %c0_2, %c0_3] : memref<4x32x64xbf16, #tpu.memory_space<vmem>>, vector<1x32x64xbf16>
    %3 = vector.shape_cast %2 : vector<1x32x64xbf16> to vector<32x64xbf16>
    %cst = arith.constant dense<0.000000e+00> : vector<32x96xf32>
    %4 = tpu.matmul %3, %1, %cst {dimension_numbers = #tpu.dot_dimension_numbers<[1], [0], [0], [1], [0, 0, 1, 1], [], []>} : vector<32x64xbf16>, vector<64x96xbf16>, vector<32x96xf32> -> vector<32x96xf32>
    %5 = arith.truncf %4 : vector<32x96xf32> to vector<32x96xbf16>
    %c0_4 = arith.constant 0 : index
    %c0_5 = arith.constant 0 : index
    %c0_6 = arith.constant 0 : index
    %6 = vector.load %arg2[%c0_4, %c0_5, %c0_6] : memref<4x96x192xbf16, #tpu.memory_space<vmem>>, vector<1x96x192xbf16>
    %7 = vector.shape_cast %6 : vector<1x96x192xbf16> to vector<96x192xbf16>
    %cst_7 = arith.constant dense<0.000000e+00> : vector<32x192xf32>
    %8 = tpu.matmul %5, %7, %cst_7 {dimension_numbers = #tpu.dot_dimension_numbers<[1], [0], [0], [1], [0, 0, 1, 1], [], []>} : vector<32x96xbf16>, vector<96x192xbf16>, vector<32x192xf32> -> vector<32x192xf32>
    %c1 = arith.constant 1 : index
    %c0_8 = arith.constant 0 : index
    %c0_9 = arith.constant 0 : index
    %9 = vector.load %arg3[%c1, %c0_8, %c0_9] : memref<4x32x64xbf16, #tpu.memory_space<vmem>>, vector<1x32x64xbf16>
    %10 = vector.shape_cast %9 : vector<1x32x64xbf16> to vector<32x64xbf16>
    %cst_10 = arith.constant dense<0.000000e+00> : vector<32x96xf32>
    %11 = tpu.matmul %10, %1, %cst_10 {dimension_numbers = #tpu.dot_dimension_numbers<[1], [0], [0], [1], [0, 0, 1, 1], [], []>} : vector<32x64xbf16>, vector<64x96xbf16>, vector<32x96xf32> -> vector<32x96xf32>
    %12 = arith.truncf %11 : vector<32x96xf32> to vector<32x96xbf16>
    %c1_11 = arith.constant 1 : index
    %c0_12 = arith.constant 0 : index
    %c0_13 = arith.constant 0 : index
    %13 = vector.load %arg2[%c1_11, %c0_12, %c0_13] : memref<4x96x192xbf16, #tpu.memory_space<vmem>>, vector<1x96x192xbf16>
    %14 = vector.shape_cast %13 : vector<1x96x192xbf16> to vector<96x192xbf16>
    %cst_14 = arith.constant dense<0.000000e+00> : vector<32x192xf32>
    %15 = tpu.matmul %12, %14, %cst_14 {dimension_numbers = #tpu.dot_dimension_numbers<[1], [0], [0], [1], [0, 0, 1, 1], [], []>} : vector<32x96xbf16>, vector<96x192xbf16>, vector<32x192xf32> -> vector<32x192xf32>
    %16 = arith.addf %8, %15 : vector<32x192xf32>
    %c2 = arith.constant 2 : index
    %c0_15 = arith.constant 0 : index
    %c0_16 = arith.constant 0 : index
    %17 = vector.load %arg3[%c2, %c0_15, %c0_16] : memref<4x32x64xbf16, #tpu.memory_space<vmem>>, vector<1x32x64xbf16>
    %18 = vector.shape_cast %17 : vector<1x32x64xbf16> to vector<32x64xbf16>
    %cst_17 = arith.constant dense<0.000000e+00> : vector<32x96xf32>
    %19 = tpu.matmul %18, %1, %cst_17 {dimension_numbers = #tpu.dot_dimension_numbers<[1], [0], [0], [1], [0, 0, 1, 1], [], []>} : vector<32x64xbf16>, vector<64x96xbf16>, vector<32x96xf32> -> vector<32x96xf32>
    %20 = arith.truncf %19 : vector<32x96xf32> to vector<32x96xbf16>
    %c2_18 = arith.constant 2 : index
    %c0_19 = arith.constant 0 : index
    %c0_20 = arith.constant 0 : index
    %21 = vector.load %arg2[%c2_18, %c0_19, %c0_20] : memref<4x96x192xbf16, #tpu.memory_space<vmem>>, vector<1x96x192xbf16>
    %22 = vector.shape_cast %21 : vector<1x96x192xbf16> to vector<96x192xbf16>
    %cst_21 = arith.constant dense<0.000000e+00> : vector<32x192xf32>
    %23 = tpu.matmul %20, %22, %cst_21 {dimension_numbers = #tpu.dot_dimension_numbers<[1], [0], [0], [1], [0, 0, 1, 1], [], []>} : vector<32x96xbf16>, vector<96x192xbf16>, vector<32x192xf32> -> vector<32x192xf32>
    %24 = arith.addf %16, %23 : vector<32x192xf32>
    %c3 = arith.constant 3 : index
    %c0_22 = arith.constant 0 : index
    %c0_23 = arith.constant 0 : index
    %25 = vector.load %arg3[%c3, %c0_22, %c0_23] : memref<4x32x64xbf16, #tpu.memory_space<vmem>>, vector<1x32x64xbf16>
    %26 = vector.shape_cast %25 : vector<1x32x64xbf16> to vector<32x64xbf16>
    %cst_24 = arith.constant dense<0.000000e+00> : vector<32x96xf32>
    %27 = tpu.matmul %26, %1, %cst_24 {dimension_numbers = #tpu.dot_dimension_numbers<[1], [0], [0], [1], [0, 0, 1, 1], [], []>} : vector<32x64xbf16>, vector<64x96xbf16>, vector<32x96xf32> -> vector<32x96xf32>
    %28 = arith.truncf %27 : vector<32x96xf32> to vector<32x96xbf16>
    %c3_25 = arith.constant 3 : index
    %c0_26 = arith.constant 0 : index
    %c0_27 = arith.constant 0 : index
    %29 = vector.load %arg2[%c3_25, %c0_26, %c0_27] : memref<4x96x192xbf16, #tpu.memory_space<vmem>>, vector<1x96x192xbf16>
    %30 = vector.shape_cast %29 : vector<1x96x192xbf16> to vector<96x192xbf16>
    %cst_28 = arith.constant dense<0.000000e+00> : vector<32x192xf32>
    %31 = tpu.matmul %28, %30, %cst_28 {dimension_numbers = #tpu.dot_dimension_numbers<[1], [0], [0], [1], [0, 0, 1, 1], [], []>} : vector<32x96xbf16>, vector<96x192xbf16>, vector<32x192xf32> -> vector<32x192xf32>
    %32 = arith.addf %24, %31 : vector<32x192xf32>
    %c0_29 = arith.constant 0 : index
    %c0_30 = arith.constant 0 : index
    %33 = vector.load %arg4[%c0_29, %c0_30] : memref<1x192xf32, #tpu.memory_space<vmem>>, vector<1x192xf32>
    %34 = vector.broadcast %33 : vector<1x192xf32> to vector<32x192xf32>
    %35 = arith.addf %32, %34 : vector<32x192xf32>
    %cst_31 = arith.constant 0.000000e+00 : f32
    %36 = vector.broadcast %cst_31 : f32 to vector<32x192xf32>
    %37 = arith.maximumf %35, %36 : vector<32x192xf32>
    %38 = arith.truncf %37 : vector<32x192xf32> to vector<32x192xbf16>
    %c0_32 = arith.constant 0 : index
    %c0_33 = arith.constant 0 : index
    %c0_34 = arith.constant 0 : index
    %39 = vector.load %arg6[%c0_32, %c0_33, %c0_34] : memref<4x16x32xbf16, #tpu.memory_space<vmem>>, vector<1x16x32xbf16>
    %40 = vector.shape_cast %39 : vector<1x16x32xbf16> to vector<16x32xbf16>
    %cst_35 = arith.constant dense<0.000000e+00> : vector<16x192xf32>
    %41 = tpu.matmul %40, %38, %cst_35 {dimension_numbers = #tpu.dot_dimension_numbers<[1], [0], [0], [1], [0, 0, 1, 1], [], []>} : vector<16x32xbf16>, vector<32x192xbf16>, vector<16x192xf32> -> vector<16x192xf32>
    %42 = arith.truncf %41 : vector<16x192xf32> to vector<16x192xbf16>
    %c0_36 = arith.constant 0 : index
    %c0_37 = arith.constant 0 : index
    %c0_38 = arith.constant 0 : index
    %43 = vector.load %arg5[%c0_36, %c0_37, %c0_38] : memref<4x192x192xbf16, #tpu.memory_space<vmem>>, vector<1x192x192xbf16>
    %44 = vector.shape_cast %43 : vector<1x192x192xbf16> to vector<192x192xbf16>
    %cst_39 = arith.constant dense<0.000000e+00> : vector<16x192xf32>
    %45 = tpu.matmul %42, %44, %cst_39 {dimension_numbers = #tpu.dot_dimension_numbers<[1], [0], [0], [1], [0, 0, 1, 1], [], []>} : vector<16x192xbf16>, vector<192x192xbf16>, vector<16x192xf32> -> vector<16x192xf32>
    %c1_40 = arith.constant 1 : index
    %c0_41 = arith.constant 0 : index
    %c0_42 = arith.constant 0 : index
    %46 = vector.load %arg6[%c1_40, %c0_41, %c0_42] : memref<4x16x32xbf16, #tpu.memory_space<vmem>>, vector<1x16x32xbf16>
    %47 = vector.shape_cast %46 : vector<1x16x32xbf16> to vector<16x32xbf16>
    %cst_43 = arith.constant dense<0.000000e+00> : vector<16x192xf32>
    %48 = tpu.matmul %47, %38, %cst_43 {dimension_numbers = #tpu.dot_dimension_numbers<[1], [0], [0], [1], [0, 0, 1, 1], [], []>} : vector<16x32xbf16>, vector<32x192xbf16>, vector<16x192xf32> -> vector<16x192xf32>
    %49 = arith.truncf %48 : vector<16x192xf32> to vector<16x192xbf16>
    %c1_44 = arith.constant 1 : index
    %c0_45 = arith.constant 0 : index
    %c0_46 = arith.constant 0 : index
    %50 = vector.load %arg5[%c1_44, %c0_45, %c0_46] : memref<4x192x192xbf16, #tpu.memory_space<vmem>>, vector<1x192x192xbf16>
    %51 = vector.shape_cast %50 : vector<1x192x192xbf16> to vector<192x192xbf16>
    %cst_47 = arith.constant dense<0.000000e+00> : vector<16x192xf32>
    %52 = tpu.matmul %49, %51, %cst_47 {dimension_numbers = #tpu.dot_dimension_numbers<[1], [0], [0], [1], [0, 0, 1, 1], [], []>} : vector<16x192xbf16>, vector<192x192xbf16>, vector<16x192xf32> -> vector<16x192xf32>
    %53 = arith.addf %45, %52 : vector<16x192xf32>
    %c2_48 = arith.constant 2 : index
    %c0_49 = arith.constant 0 : index
    %c0_50 = arith.constant 0 : index
    %54 = vector.load %arg6[%c2_48, %c0_49, %c0_50] : memref<4x16x32xbf16, #tpu.memory_space<vmem>>, vector<1x16x32xbf16>
    %55 = vector.shape_cast %54 : vector<1x16x32xbf16> to vector<16x32xbf16>
    %cst_51 = arith.constant dense<0.000000e+00> : vector<16x192xf32>
    %56 = tpu.matmul %55, %38, %cst_51 {dimension_numbers = #tpu.dot_dimension_numbers<[1], [0], [0], [1], [0, 0, 1, 1], [], []>} : vector<16x32xbf16>, vector<32x192xbf16>, vector<16x192xf32> -> vector<16x192xf32>
    %57 = arith.truncf %56 : vector<16x192xf32> to vector<16x192xbf16>
    %c2_52 = arith.constant 2 : index
    %c0_53 = arith.constant 0 : index
    %c0_54 = arith.constant 0 : index
    %58 = vector.load %arg5[%c2_52, %c0_53, %c0_54] : memref<4x192x192xbf16, #tpu.memory_space<vmem>>, vector<1x192x192xbf16>
    %59 = vector.shape_cast %58 : vector<1x192x192xbf16> to vector<192x192xbf16>
    %cst_55 = arith.constant dense<0.000000e+00> : vector<16x192xf32>
    %60 = tpu.matmul %57, %59, %cst_55 {dimension_numbers = #tpu.dot_dimension_numbers<[1], [0], [0], [1], [0, 0, 1, 1], [], []>} : vector<16x192xbf16>, vector<192x192xbf16>, vector<16x192xf32> -> vector<16x192xf32>
    %61 = arith.addf %53, %60 : vector<16x192xf32>
    %c3_56 = arith.constant 3 : index
    %c0_57 = arith.constant 0 : index
    %c0_58 = arith.constant 0 : index
    %62 = vector.load %arg6[%c3_56, %c0_57, %c0_58] : memref<4x16x32xbf16, #tpu.memory_space<vmem>>, vector<1x16x32xbf16>
    %63 = vector.shape_cast %62 : vector<1x16x32xbf16> to vector<16x32xbf16>
    %cst_59 = arith.constant dense<0.000000e+00> : vector<16x192xf32>
    %64 = tpu.matmul %63, %38, %cst_59 {dimension_numbers = #tpu.dot_dimension_numbers<[1], [0], [0], [1], [0, 0, 1, 1], [], []>} : vector<16x32xbf16>, vector<32x192xbf16>, vector<16x192xf32> -> vector<16x192xf32>
    %65 = arith.truncf %64 : vector<16x192xf32> to vector<16x192xbf16>
    %c3_60 = arith.constant 3 : index
    %c0_61 = arith.constant 0 : index
    %c0_62 = arith.constant 0 : index
    %66 = vector.load %arg5[%c3_60, %c0_61, %c0_62] : memref<4x192x192xbf16, #tpu.memory_space<vmem>>, vector<1x192x192xbf16>
    %67 = vector.shape_cast %66 : vector<1x192x192xbf16> to vector<192x192xbf16>
    %cst_63 = arith.constant dense<0.000000e+00> : vector<16x192xf32>
    %68 = tpu.matmul %65, %67, %cst_63 {dimension_numbers = #tpu.dot_dimension_numbers<[1], [0], [0], [1], [0, 0, 1, 1], [], []>} : vector<16x192xbf16>, vector<192x192xbf16>, vector<16x192xf32> -> vector<16x192xf32>
    %69 = arith.addf %61, %68 : vector<16x192xf32>
    %c0_64 = arith.constant 0 : index
    %c0_65 = arith.constant 0 : index
    %70 = vector.load %arg7[%c0_64, %c0_65] : memref<1x192xf32, #tpu.memory_space<vmem>>, vector<1x192xf32>
    %71 = vector.broadcast %70 : vector<1x192xf32> to vector<16x192xf32>
    %72 = arith.addf %69, %71 : vector<16x192xf32>
    %cst_66 = arith.constant 0.000000e+00 : f32
    %73 = vector.broadcast %cst_66 : f32 to vector<16x192xf32>
    %74 = arith.maximumf %72, %73 : vector<16x192xf32>
    %75 = arith.truncf %74 : vector<16x192xf32> to vector<16x192xbf16>
    %c0_67 = arith.constant 0 : index
    %c0_68 = arith.constant 0 : index
    %c0_69 = arith.constant 0 : index
    %76 = vector.load %arg9[%c0_67, %c0_68, %c0_69] : memref<4x8x16xbf16, #tpu.memory_space<vmem>>, vector<1x8x16xbf16>
    %77 = vector.shape_cast %76 : vector<1x8x16xbf16> to vector<8x16xbf16>
    %cst_70 = arith.constant dense<0.000000e+00> : vector<8x192xf32>
    %78 = tpu.matmul %77, %75, %cst_70 {dimension_numbers = #tpu.dot_dimension_numbers<[1], [0], [0], [1], [0, 0, 1, 1], [], []>} : vector<8x16xbf16>, vector<16x192xbf16>, vector<8x192xf32> -> vector<8x192xf32>
    %79 = arith.truncf %78 : vector<8x192xf32> to vector<8x192xbf16>
    %c0_71 = arith.constant 0 : index
    %c0_72 = arith.constant 0 : index
    %c0_73 = arith.constant 0 : index
    %80 = vector.load %arg8[%c0_71, %c0_72, %c0_73] : memref<4x192x192xbf16, #tpu.memory_space<vmem>>, vector<1x192x192xbf16>
    %81 = vector.shape_cast %80 : vector<1x192x192xbf16> to vector<192x192xbf16>
    %cst_74 = arith.constant dense<0.000000e+00> : vector<8x192xf32>
    %82 = tpu.matmul %79, %81, %cst_74 {dimension_numbers = #tpu.dot_dimension_numbers<[1], [0], [0], [1], [0, 0, 1, 1], [], []>} : vector<8x192xbf16>, vector<192x192xbf16>, vector<8x192xf32> -> vector<8x192xf32>
    %c1_75 = arith.constant 1 : index
    %c0_76 = arith.constant 0 : index
    %c0_77 = arith.constant 0 : index
    %83 = vector.load %arg9[%c1_75, %c0_76, %c0_77] : memref<4x8x16xbf16, #tpu.memory_space<vmem>>, vector<1x8x16xbf16>
    %84 = vector.shape_cast %83 : vector<1x8x16xbf16> to vector<8x16xbf16>
    %cst_78 = arith.constant dense<0.000000e+00> : vector<8x192xf32>
    %85 = tpu.matmul %84, %75, %cst_78 {dimension_numbers = #tpu.dot_dimension_numbers<[1], [0], [0], [1], [0, 0, 1, 1], [], []>} : vector<8x16xbf16>, vector<16x192xbf16>, vector<8x192xf32> -> vector<8x192xf32>
    %86 = arith.truncf %85 : vector<8x192xf32> to vector<8x192xbf16>
    %c1_79 = arith.constant 1 : index
    %c0_80 = arith.constant 0 : index
    %c0_81 = arith.constant 0 : index
    %87 = vector.load %arg8[%c1_79, %c0_80, %c0_81] : memref<4x192x192xbf16, #tpu.memory_space<vmem>>, vector<1x192x192xbf16>
    %88 = vector.shape_cast %87 : vector<1x192x192xbf16> to vector<192x192xbf16>
    %cst_82 = arith.constant dense<0.000000e+00> : vector<8x192xf32>
    %89 = tpu.matmul %86, %88, %cst_82 {dimension_numbers = #tpu.dot_dimension_numbers<[1], [0], [0], [1], [0, 0, 1, 1], [], []>} : vector<8x192xbf16>, vector<192x192xbf16>, vector<8x192xf32> -> vector<8x192xf32>
    %90 = arith.addf %82, %89 : vector<8x192xf32>
    %c2_83 = arith.constant 2 : index
    %c0_84 = arith.constant 0 : index
    %c0_85 = arith.constant 0 : index
    %91 = vector.load %arg9[%c2_83, %c0_84, %c0_85] : memref<4x8x16xbf16, #tpu.memory_space<vmem>>, vector<1x8x16xbf16>
    %92 = vector.shape_cast %91 : vector<1x8x16xbf16> to vector<8x16xbf16>
    %cst_86 = arith.constant dense<0.000000e+00> : vector<8x192xf32>
    %93 = tpu.matmul %92, %75, %cst_86 {dimension_numbers = #tpu.dot_dimension_numbers<[1], [0], [0], [1], [0, 0, 1, 1], [], []>} : vector<8x16xbf16>, vector<16x192xbf16>, vector<8x192xf32> -> vector<8x192xf32>
    %94 = arith.truncf %93 : vector<8x192xf32> to vector<8x192xbf16>
    %c2_87 = arith.constant 2 : index
    %c0_88 = arith.constant 0 : index
    %c0_89 = arith.constant 0 : index
    %95 = vector.load %arg8[%c2_87, %c0_88, %c0_89] : memref<4x192x192xbf16, #tpu.memory_space<vmem>>, vector<1x192x192xbf16>
    %96 = vector.shape_cast %95 : vector<1x192x192xbf16> to vector<192x192xbf16>
    %cst_90 = arith.constant dense<0.000000e+00> : vector<8x192xf32>
    %97 = tpu.matmul %94, %96, %cst_90 {dimension_numbers = #tpu.dot_dimension_numbers<[1], [0], [0], [1], [0, 0, 1, 1], [], []>} : vector<8x192xbf16>, vector<192x192xbf16>, vector<8x192xf32> -> vector<8x192xf32>
    %98 = arith.addf %90, %97 : vector<8x192xf32>
    %c3_91 = arith.constant 3 : index
    %c0_92 = arith.constant 0 : index
    %c0_93 = arith.constant 0 : index
    %99 = vector.load %arg9[%c3_91, %c0_92, %c0_93] : memref<4x8x16xbf16, #tpu.memory_space<vmem>>, vector<1x8x16xbf16>
    %100 = vector.shape_cast %99 : vector<1x8x16xbf16> to vector<8x16xbf16>
    %cst_94 = arith.constant dense<0.000000e+00> : vector<8x192xf32>
    %101 = tpu.matmul %100, %75, %cst_94 {dimension_numbers = #tpu.dot_dimension_numbers<[1], [0], [0], [1], [0, 0, 1, 1], [], []>} : vector<8x16xbf16>, vector<16x192xbf16>, vector<8x192xf32> -> vector<8x192xf32>
    %102 = arith.truncf %101 : vector<8x192xf32> to vector<8x192xbf16>
    %c3_95 = arith.constant 3 : index
    %c0_96 = arith.constant 0 : index
    %c0_97 = arith.constant 0 : index
    %103 = vector.load %arg8[%c3_95, %c0_96, %c0_97] : memref<4x192x192xbf16, #tpu.memory_space<vmem>>, vector<1x192x192xbf16>
    %104 = vector.shape_cast %103 : vector<1x192x192xbf16> to vector<192x192xbf16>
    %cst_98 = arith.constant dense<0.000000e+00> : vector<8x192xf32>
    %105 = tpu.matmul %102, %104, %cst_98 {dimension_numbers = #tpu.dot_dimension_numbers<[1], [0], [0], [1], [0, 0, 1, 1], [], []>} : vector<8x192xbf16>, vector<192x192xbf16>, vector<8x192xf32> -> vector<8x192xf32>
    %106 = arith.addf %98, %105 : vector<8x192xf32>
    %c0_99 = arith.constant 0 : index
    %c0_100 = arith.constant 0 : index
    %107 = vector.load %arg10[%c0_99, %c0_100] : memref<1x192xf32, #tpu.memory_space<vmem>>, vector<1x192xf32>
    %108 = vector.broadcast %107 : vector<1x192xf32> to vector<8x192xf32>
    %109 = arith.addf %106, %108 : vector<8x192xf32>
    %cst_101 = arith.constant 0.000000e+00 : f32
    %110 = vector.broadcast %cst_101 : f32 to vector<8x192xf32>
    %111 = arith.maximumf %109, %110 : vector<8x192xf32>
    %112 = arith.truncf %111 : vector<8x192xf32> to vector<8x192xbf16>
    %c0_102 = arith.constant 0 : index
    %c0_103 = arith.constant 0 : index
    %c0_104 = arith.constant 0 : index
    %113 = vector.load %arg12[%c0_102, %c0_103, %c0_104] : memref<4x2x8xbf16, #tpu.memory_space<vmem>>, vector<1x2x8xbf16>
    %114 = vector.shape_cast %113 : vector<1x2x8xbf16> to vector<2x8xbf16>
    %cst_105 = arith.constant dense<0.000000e+00> : vector<2x192xf32>
    %115 = tpu.matmul %114, %112, %cst_105 {dimension_numbers = #tpu.dot_dimension_numbers<[1], [0], [0], [1], [0, 0, 1, 1], [], []>} : vector<2x8xbf16>, vector<8x192xbf16>, vector<2x192xf32> -> vector<2x192xf32>
    %116 = arith.truncf %115 : vector<2x192xf32> to vector<2x192xbf16>
    %c0_106 = arith.constant 0 : index
    %c0_107 = arith.constant 0 : index
    %c0_108 = arith.constant 0 : index
    %117 = vector.load %arg11[%c0_106, %c0_107, %c0_108] : memref<4x192x512xbf16, #tpu.memory_space<vmem>>, vector<1x192x512xbf16>
    %118 = vector.shape_cast %117 : vector<1x192x512xbf16> to vector<192x512xbf16>
    %cst_109 = arith.constant dense<0.000000e+00> : vector<2x512xf32>
    %119 = tpu.matmul %116, %118, %cst_109 {dimension_numbers = #tpu.dot_dimension_numbers<[1], [0], [0], [1], [0, 0, 1, 1], [], []>} : vector<2x192xbf16>, vector<192x512xbf16>, vector<2x512xf32> -> vector<2x512xf32>
    %c1_110 = arith.constant 1 : index
    %c0_111 = arith.constant 0 : index
    %c0_112 = arith.constant 0 : index
    %120 = vector.load %arg12[%c1_110, %c0_111, %c0_112] : memref<4x2x8xbf16, #tpu.memory_space<vmem>>, vector<1x2x8xbf16>
    %121 = vector.shape_cast %120 : vector<1x2x8xbf16> to vector<2x8xbf16>
    %cst_113 = arith.constant dense<0.000000e+00> : vector<2x192xf32>
    %122 = tpu.matmul %121, %112, %cst_113 {dimension_numbers = #tpu.dot_dimension_numbers<[1], [0], [0], [1], [0, 0, 1, 1], [], []>} : vector<2x8xbf16>, vector<8x192xbf16>, vector<2x192xf32> -> vector<2x192xf32>
    %123 = arith.truncf %122 : vector<2x192xf32> to vector<2x192xbf16>
    %c1_114 = arith.constant 1 : index
    %c0_115 = arith.constant 0 : index
    %c0_116 = arith.constant 0 : index
    %124 = vector.load %arg11[%c1_114, %c0_115, %c0_116] : memref<4x192x512xbf16, #tpu.memory_space<vmem>>, vector<1x192x512xbf16>
    %125 = vector.shape_cast %124 : vector<1x192x512xbf16> to vector<192x512xbf16>
    %cst_117 = arith.constant dense<0.000000e+00> : vector<2x512xf32>
    %126 = tpu.matmul %123, %125, %cst_117 {dimension_numbers = #tpu.dot_dimension_numbers<[1], [0], [0], [1], [0, 0, 1, 1], [], []>} : vector<2x192xbf16>, vector<192x512xbf16>, vector<2x512xf32> -> vector<2x512xf32>
    %127 = arith.addf %119, %126 : vector<2x512xf32>
    %c2_118 = arith.constant 2 : index
    %c0_119 = arith.constant 0 : index
    %c0_120 = arith.constant 0 : index
    %128 = vector.load %arg12[%c2_118, %c0_119, %c0_120] : memref<4x2x8xbf16, #tpu.memory_space<vmem>>, vector<1x2x8xbf16>
    %129 = vector.shape_cast %128 : vector<1x2x8xbf16> to vector<2x8xbf16>
    %cst_121 = arith.constant dense<0.000000e+00> : vector<2x192xf32>
    %130 = tpu.matmul %129, %112, %cst_121 {dimension_numbers = #tpu.dot_dimension_numbers<[1], [0], [0], [1], [0, 0, 1, 1], [], []>} : vector<2x8xbf16>, vector<8x192xbf16>, vector<2x192xf32> -> vector<2x192xf32>
    %131 = arith.truncf %130 : vector<2x192xf32> to vector<2x192xbf16>
    %c2_122 = arith.constant 2 : index
    %c0_123 = arith.constant 0 : index
    %c0_124 = arith.constant 0 : index
    %132 = vector.load %arg11[%c2_122, %c0_123, %c0_124] : memref<4x192x512xbf16, #tpu.memory_space<vmem>>, vector<1x192x512xbf16>
    %133 = vector.shape_cast %132 : vector<1x192x512xbf16> to vector<192x512xbf16>
    %cst_125 = arith.constant dense<0.000000e+00> : vector<2x512xf32>
    %134 = tpu.matmul %131, %133, %cst_125 {dimension_numbers = #tpu.dot_dimension_numbers<[1], [0], [0], [1], [0, 0, 1, 1], [], []>} : vector<2x192xbf16>, vector<192x512xbf16>, vector<2x512xf32> -> vector<2x512xf32>
    %135 = arith.addf %127, %134 : vector<2x512xf32>
    %c3_126 = arith.constant 3 : index
    %c0_127 = arith.constant 0 : index
    %c0_128 = arith.constant 0 : index
    %136 = vector.load %arg12[%c3_126, %c0_127, %c0_128] : memref<4x2x8xbf16, #tpu.memory_space<vmem>>, vector<1x2x8xbf16>
    %137 = vector.shape_cast %136 : vector<1x2x8xbf16> to vector<2x8xbf16>
    %cst_129 = arith.constant dense<0.000000e+00> : vector<2x192xf32>
    %138 = tpu.matmul %137, %112, %cst_129 {dimension_numbers = #tpu.dot_dimension_numbers<[1], [0], [0], [1], [0, 0, 1, 1], [], []>} : vector<2x8xbf16>, vector<8x192xbf16>, vector<2x192xf32> -> vector<2x192xf32>
    %139 = arith.truncf %138 : vector<2x192xf32> to vector<2x192xbf16>
    %c3_130 = arith.constant 3 : index
    %c0_131 = arith.constant 0 : index
    %c0_132 = arith.constant 0 : index
    %140 = vector.load %arg11[%c3_130, %c0_131, %c0_132] : memref<4x192x512xbf16, #tpu.memory_space<vmem>>, vector<1x192x512xbf16>
    %141 = vector.shape_cast %140 : vector<1x192x512xbf16> to vector<192x512xbf16>
    %cst_133 = arith.constant dense<0.000000e+00> : vector<2x512xf32>
    %142 = tpu.matmul %139, %141, %cst_133 {dimension_numbers = #tpu.dot_dimension_numbers<[1], [0], [0], [1], [0, 0, 1, 1], [], []>} : vector<2x192xbf16>, vector<192x512xbf16>, vector<2x512xf32> -> vector<2x512xf32>
    %143 = arith.addf %135, %142 : vector<2x512xf32>
    %c0_134 = arith.constant 0 : index
    %c0_135 = arith.constant 0 : index
    %144 = vector.load %arg13[%c0_134, %c0_135] : memref<1x512xf32, #tpu.memory_space<vmem>>, vector<1x512xf32>
    %145 = vector.broadcast %144 : vector<1x512xf32> to vector<2x512xf32>
    %146 = arith.addf %143, %145 : vector<2x512xf32>
    %c0_136 = arith.constant 0 : index
    %c0_137 = arith.constant 0 : index
    %147 = vector.load %arg26[%c0_136, %c0_137] : memref<2x512xf32, #tpu.memory_space<vmem>>, vector<2x512xf32>
    tpu.vector_store %arg26[%c0_136, %c0_137], %146 {strides = array<i32>} : memref<2x512xf32, #tpu.memory_space<vmem>>, vector<2x512xf32>,
    %148 = arith.truncf %146 : vector<2x512xf32> to vector<2x512xbf16>
    %c0_138 = arith.constant 0 : index
    %c0_139 = arith.constant 0 : index
    %c0_140 = arith.constant 0 : index
    %149 = vector.load %arg14[%c0_138, %c0_139, %c0_140] : memref<4x512x192xbf16, #tpu.memory_space<vmem>>, vector<1x512x192xbf16>
    %150 = vector.shape_cast %149 : vector<1x512x192xbf16> to vector<512x192xbf16>
    %cst_141 = arith.constant dense<0.000000e+00> : vector<2x192xf32>
    %151 = tpu.matmul %148, %150, %cst_141 {dimension_numbers = #tpu.dot_dimension_numbers<[1], [0], [0], [1], [0, 0, 1, 1], [], []>} : vector<2x512xbf16>, vector<512x192xbf16>, vector<2x192xf32> -> vector<2x192xf32>
    %c0_142 = arith.constant 0 : index
    %c0_143 = arith.constant 0 : index
    %c0_144 = arith.constant 0 : index
    %152 = vector.load %arg16[%c0_142, %c0_143, %c0_144] : memref<4x1x192xf32, #tpu.memory_space<vmem>>, vector<1x1x192xf32>
    %153 = vector.shape_cast %152 : vector<1x1x192xf32> to vector<1x192xf32>
    %154 = vector.broadcast %153 : vector<1x192xf32> to vector<2x192xf32>
    %155 = arith.addf %151, %154 : vector<2x192xf32>
    %c0_145 = arith.constant 0 : index
    %c0_146 = arith.constant 0 : index
    %c0_147 = arith.constant 0 : index
    %156 = vector.load %arg15[%c0_145, %c0_146, %c0_147] : memref<4x8x2xbf16, #tpu.memory_space<vmem>>, vector<1x8x2xbf16>
    %157 = vector.shape_cast %156 : vector<1x8x2xbf16> to vector<8x2xbf16>
    %158 = arith.truncf %155 : vector<2x192xf32> to vector<2x192xbf16>
    %cst_148 = arith.constant dense<0.000000e+00> : vector<8x192xf32>
    %159 = tpu.matmul %157, %158, %cst_148 {dimension_numbers = #tpu.dot_dimension_numbers<[1], [0], [0], [1], [0, 0, 1, 1], [], []>} : vector<8x2xbf16>, vector<2x192xbf16>, vector<8x192xf32> -> vector<8x192xf32>
    %c1_149 = arith.constant 1 : index
    %c0_150 = arith.constant 0 : index
    %c0_151 = arith.constant 0 : index
    %160 = vector.load %arg14[%c1_149, %c0_150, %c0_151] : memref<4x512x192xbf16, #tpu.memory_space<vmem>>, vector<1x512x192xbf16>
    %161 = vector.shape_cast %160 : vector<1x512x192xbf16> to vector<512x192xbf16>
    %cst_152 = arith.constant dense<0.000000e+00> : vector<2x192xf32>
    %162 = tpu.matmul %148, %161, %cst_152 {dimension_numbers = #tpu.dot_dimension_numbers<[1], [0], [0], [1], [0, 0, 1, 1], [], []>} : vector<2x512xbf16>, vector<512x192xbf16>, vector<2x192xf32> -> vector<2x192xf32>
    %c1_153 = arith.constant 1 : index
    %c0_154 = arith.constant 0 : index
    %c0_155 = arith.constant 0 : index
    %163 = vector.load %arg16[%c1_153, %c0_154, %c0_155] : memref<4x1x192xf32, #tpu.memory_space<vmem>>, vector<1x1x192xf32>
    %164 = vector.shape_cast %163 : vector<1x1x192xf32> to vector<1x192xf32>
    %165 = vector.broadcast %164 : vector<1x192xf32> to vector<2x192xf32>
    %166 = arith.addf %162, %165 : vector<2x192xf32>
    %c1_156 = arith.constant 1 : index
    %c0_157 = arith.constant 0 : index
    %c0_158 = arith.constant 0 : index
    %167 = vector.load %arg15[%c1_156, %c0_157, %c0_158] : memref<4x8x2xbf16, #tpu.memory_space<vmem>>, vector<1x8x2xbf16>
    %168 = vector.shape_cast %167 : vector<1x8x2xbf16> to vector<8x2xbf16>
    %169 = arith.truncf %166 : vector<2x192xf32> to vector<2x192xbf16>
    %cst_159 = arith.constant dense<0.000000e+00> : vector<8x192xf32>
    %170 = tpu.matmul %168, %169, %cst_159 {dimension_numbers = #tpu.dot_dimension_numbers<[1], [0], [0], [1], [0, 0, 1, 1], [], []>} : vector<8x2xbf16>, vector<2x192xbf16>, vector<8x192xf32> -> vector<8x192xf32>
    %171 = arith.addf %159, %170 : vector<8x192xf32>
    %c2_160 = arith.constant 2 : index
    %c0_161 = arith.constant 0 : index
    %c0_162 = arith.constant 0 : index
    %172 = vector.load %arg14[%c2_160, %c0_161, %c0_162] : memref<4x512x192xbf16, #tpu.memory_space<vmem>>, vector<1x512x192xbf16>
    %173 = vector.shape_cast %172 : vector<1x512x192xbf16> to vector<512x192xbf16>
    %cst_163 = arith.constant dense<0.000000e+00> : vector<2x192xf32>
    %174 = tpu.matmul %148, %173, %cst_163 {dimension_numbers = #tpu.dot_dimension_numbers<[1], [0], [0], [1], [0, 0, 1, 1], [], []>} : vector<2x512xbf16>, vector<512x192xbf16>, vector<2x192xf32> -> vector<2x192xf32>
    %c2_164 = arith.constant 2 : index
    %c0_165 = arith.constant 0 : index
    %c0_166 = arith.constant 0 : index
    %175 = vector.load %arg16[%c2_164, %c0_165, %c0_166] : memref<4x1x192xf32, #tpu.memory_space<vmem>>, vector<1x1x192xf32>
    %176 = vector.shape_cast %175 : vector<1x1x192xf32> to vector<1x192xf32>
    %177 = vector.broadcast %176 : vector<1x192xf32> to vector<2x192xf32>
    %178 = arith.addf %174, %177 : vector<2x192xf32>
    %c2_167 = arith.constant 2 : index
    %c0_168 = arith.constant 0 : index
    %c0_169 = arith.constant 0 : index
    %179 = vector.load %arg15[%c2_167, %c0_168, %c0_169] : memref<4x8x2xbf16, #tpu.memory_space<vmem>>, vector<1x8x2xbf16>
    %180 = vector.shape_cast %179 : vector<1x8x2xbf16> to vector<8x2xbf16>
    %181 = arith.truncf %178 : vector<2x192xf32> to vector<2x192xbf16>
    %cst_170 = arith.constant dense<0.000000e+00> : vector<8x192xf32>
    %182 = tpu.matmul %180, %181, %cst_170 {dimension_numbers = #tpu.dot_dimension_numbers<[1], [0], [0], [1], [0, 0, 1, 1], [], []>} : vector<8x2xbf16>, vector<2x192xbf16>, vector<8x192xf32> -> vector<8x192xf32>
    %183 = arith.addf %171, %182 : vector<8x192xf32>
    %c3_171 = arith.constant 3 : index
    %c0_172 = arith.constant 0 : index
    %c0_173 = arith.constant 0 : index
    %184 = vector.load %arg14[%c3_171, %c0_172, %c0_173] : memref<4x512x192xbf16, #tpu.memory_space<vmem>>, vector<1x512x192xbf16>
    %185 = vector.shape_cast %184 : vector<1x512x192xbf16> to vector<512x192xbf16>
    %cst_174 = arith.constant dense<0.000000e+00> : vector<2x192xf32>
    %186 = tpu.matmul %148, %185, %cst_174 {dimension_numbers = #tpu.dot_dimension_numbers<[1], [0], [0], [1], [0, 0, 1, 1], [], []>} : vector<2x512xbf16>, vector<512x192xbf16>, vector<2x192xf32> -> vector<2x192xf32>
    %c3_175 = arith.constant 3 : index
    %c0_176 = arith.constant 0 : index
    %c0_177 = arith.constant 0 : index
    %187 = vector.load %arg16[%c3_175, %c0_176, %c0_177] : memref<4x1x192xf32, #tpu.memory_space<vmem>>, vector<1x1x192xf32>
    %188 = vector.shape_cast %187 : vector<1x1x192xf32> to vector<1x192xf32>
    %189 = vector.broadcast %188 : vector<1x192xf32> to vector<2x192xf32>
    %190 = arith.addf %186, %189 : vector<2x192xf32>
    %c3_178 = arith.constant 3 : index
    %c0_179 = arith.constant 0 : index
    %c0_180 = arith.constant 0 : index
    %191 = vector.load %arg15[%c3_178, %c0_179, %c0_180] : memref<4x8x2xbf16, #tpu.memory_space<vmem>>, vector<1x8x2xbf16>
    %192 = vector.shape_cast %191 : vector<1x8x2xbf16> to vector<8x2xbf16>
    %193 = arith.truncf %190 : vector<2x192xf32> to vector<2x192xbf16>
    %cst_181 = arith.constant dense<0.000000e+00> : vector<8x192xf32>
    %194 = tpu.matmul %192, %193, %cst_181 {dimension_numbers = #tpu.dot_dimension_numbers<[1], [0], [0], [1], [0, 0, 1, 1], [], []>} : vector<8x2xbf16>, vector<2x192xbf16>, vector<8x192xf32> -> vector<8x192xf32>
    %195 = arith.addf %183, %194 : vector<8x192xf32>
    %196 = arith.truncf %195 : vector<8x192xf32> to vector<8x192xbf16>
    %c0_182 = arith.constant 0 : index
    %c0_183 = arith.constant 0 : index
    %c0_184 = arith.constant 0 : index
    %197 = vector.load %arg18[%c0_182, %c0_183, %c0_184] : memref<4x16x8xbf16, #tpu.memory_space<vmem>>, vector<1x16x8xbf16>
    %198 = vector.shape_cast %197 : vector<1x16x8xbf16> to vector<16x8xbf16>
    %cst_185 = arith.constant dense<0.000000e+00> : vector<16x192xf32>
    %199 = tpu.matmul %198, %196, %cst_185 {dimension_numbers = #tpu.dot_dimension_numbers<[1], [0], [0], [1], [0, 0, 1, 1], [], []>} : vector<16x8xbf16>, vector<8x192xbf16>, vector<16x192xf32> -> vector<16x192xf32>
    %200 = arith.truncf %199 : vector<16x192xf32> to vector<16x192xbf16>
    %c0_186 = arith.constant 0 : index
    %c0_187 = arith.constant 0 : index
    %c0_188 = arith.constant 0 : index
    %201 = vector.load %arg17[%c0_186, %c0_187, %c0_188] : memref<4x192x192xbf16, #tpu.memory_space<vmem>>, vector<1x192x192xbf16>
    %202 = vector.shape_cast %201 : vector<1x192x192xbf16> to vector<192x192xbf16>
    %cst_189 = arith.constant dense<0.000000e+00> : vector<16x192xf32>
    %203 = tpu.matmul %200, %202, %cst_189 {dimension_numbers = #tpu.dot_dimension_numbers<[1], [0], [0], [1], [0, 0, 1, 1], [], []>} : vector<16x192xbf16>, vector<192x192xbf16>, vector<16x192xf32> -> vector<16x192xf32>
    %c1_190 = arith.constant 1 : index
    %c0_191 = arith.constant 0 : index
    %c0_192 = arith.constant 0 : index
    %204 = vector.load %arg18[%c1_190, %c0_191, %c0_192] : memref<4x16x8xbf16, #tpu.memory_space<vmem>>, vector<1x16x8xbf16>
    %205 = vector.shape_cast %204 : vector<1x16x8xbf16> to vector<16x8xbf16>
    %cst_193 = arith.constant dense<0.000000e+00> : vector<16x192xf32>
    %206 = tpu.matmul %205, %196, %cst_193 {dimension_numbers = #tpu.dot_dimension_numbers<[1], [0], [0], [1], [0, 0, 1, 1], [], []>} : vector<16x8xbf16>, vector<8x192xbf16>, vector<16x192xf32> -> vector<16x192xf32>
    %207 = arith.truncf %206 : vector<16x192xf32> to vector<16x192xbf16>
    %c1_194 = arith.constant 1 : index
    %c0_195 = arith.constant 0 : index
    %c0_196 = arith.constant 0 : index
    %208 = vector.load %arg17[%c1_194, %c0_195, %c0_196] : memref<4x192x192xbf16, #tpu.memory_space<vmem>>, vector<1x192x192xbf16>
    %209 = vector.shape_cast %208 : vector<1x192x192xbf16> to vector<192x192xbf16>
    %cst_197 = arith.constant dense<0.000000e+00> : vector<16x192xf32>
    %210 = tpu.matmul %207, %209, %cst_197 {dimension_numbers = #tpu.dot_dimension_numbers<[1], [0], [0], [1], [0, 0, 1, 1], [], []>} : vector<16x192xbf16>, vector<192x192xbf16>, vector<16x192xf32> -> vector<16x192xf32>
    %211 = arith.addf %203, %210 : vector<16x192xf32>
    %c2_198 = arith.constant 2 : index
    %c0_199 = arith.constant 0 : index
    %c0_200 = arith.constant 0 : index
    %212 = vector.load %arg18[%c2_198, %c0_199, %c0_200] : memref<4x16x8xbf16, #tpu.memory_space<vmem>>, vector<1x16x8xbf16>
    %213 = vector.shape_cast %212 : vector<1x16x8xbf16> to vector<16x8xbf16>
    %cst_201 = arith.constant dense<0.000000e+00> : vector<16x192xf32>
    %214 = tpu.matmul %213, %196, %cst_201 {dimension_numbers = #tpu.dot_dimension_numbers<[1], [0], [0], [1], [0, 0, 1, 1], [], []>} : vector<16x8xbf16>, vector<8x192xbf16>, vector<16x192xf32> -> vector<16x192xf32>
    %215 = arith.truncf %214 : vector<16x192xf32> to vector<16x192xbf16>
    %c2_202 = arith.constant 2 : index
    %c0_203 = arith.constant 0 : index
    %c0_204 = arith.constant 0 : index
    %216 = vector.load %arg17[%c2_202, %c0_203, %c0_204] : memref<4x192x192xbf16, #tpu.memory_space<vmem>>, vector<1x192x192xbf16>
    %217 = vector.shape_cast %216 : vector<1x192x192xbf16> to vector<192x192xbf16>
    %cst_205 = arith.constant dense<0.000000e+00> : vector<16x192xf32>
    %218 = tpu.matmul %215, %217, %cst_205 {dimension_numbers = #tpu.dot_dimension_numbers<[1], [0], [0], [1], [0, 0, 1, 1], [], []>} : vector<16x192xbf16>, vector<192x192xbf16>, vector<16x192xf32> -> vector<16x192xf32>
    %219 = arith.addf %211, %218 : vector<16x192xf32>
    %c3_206 = arith.constant 3 : index
    %c0_207 = arith.constant 0 : index
    %c0_208 = arith.constant 0 : index
    %220 = vector.load %arg18[%c3_206, %c0_207, %c0_208] : memref<4x16x8xbf16, #tpu.memory_space<vmem>>, vector<1x16x8xbf16>
    %221 = vector.shape_cast %220 : vector<1x16x8xbf16> to vector<16x8xbf16>
    %cst_209 = arith.constant dense<0.000000e+00> : vector<16x192xf32>
    %222 = tpu.matmul %221, %196, %cst_209 {dimension_numbers = #tpu.dot_dimension_numbers<[1], [0], [0], [1], [0, 0, 1, 1], [], []>} : vector<16x8xbf16>, vector<8x192xbf16>, vector<16x192xf32> -> vector<16x192xf32>
    %223 = arith.truncf %222 : vector<16x192xf32> to vector<16x192xbf16>
    %c3_210 = arith.constant 3 : index
    %c0_211 = arith.constant 0 : index
    %c0_212 = arith.constant 0 : index
    %224 = vector.load %arg17[%c3_210, %c0_211, %c0_212] : memref<4x192x192xbf16, #tpu.memory_space<vmem>>, vector<1x192x192xbf16>
    %225 = vector.shape_cast %224 : vector<1x192x192xbf16> to vector<192x192xbf16>
    %cst_213 = arith.constant dense<0.000000e+00> : vector<16x192xf32>
    %226 = tpu.matmul %223, %225, %cst_213 {dimension_numbers = #tpu.dot_dimension_numbers<[1], [0], [0], [1], [0, 0, 1, 1], [], []>} : vector<16x192xbf16>, vector<192x192xbf16>, vector<16x192xf32> -> vector<16x192xf32>
    %227 = arith.addf %219, %226 : vector<16x192xf32>
    %c0_214 = arith.constant 0 : index
    %c0_215 = arith.constant 0 : index
    %228 = vector.load %arg19[%c0_214, %c0_215] : memref<1x192xf32, #tpu.memory_space<vmem>>, vector<1x192xf32>
    %229 = vector.broadcast %228 : vector<1x192xf32> to vector<16x192xf32>
    %230 = arith.addf %227, %229 : vector<16x192xf32>
    %cst_216 = arith.constant 0.000000e+00 : f32
    %231 = vector.broadcast %cst_216 : f32 to vector<16x192xf32>
    %232 = arith.maximumf %230, %231 : vector<16x192xf32>
    %233 = arith.truncf %232 : vector<16x192xf32> to vector<16x192xbf16>
    %c0_217 = arith.constant 0 : index
    %c0_218 = arith.constant 0 : index
    %c0_219 = arith.constant 0 : index
    %234 = vector.load %arg21[%c0_217, %c0_218, %c0_219] : memref<4x32x16xbf16, #tpu.memory_space<vmem>>, vector<1x32x16xbf16>
    %235 = vector.shape_cast %234 : vector<1x32x16xbf16> to vector<32x16xbf16>
    %cst_220 = arith.constant dense<0.000000e+00> : vector<32x192xf32>
    %236 = tpu.matmul %235, %233, %cst_220 {dimension_numbers = #tpu.dot_dimension_numbers<[1], [0], [0], [1], [0, 0, 1, 1], [], []>} : vector<32x16xbf16>, vector<16x192xbf16>, vector<32x192xf32> -> vector<32x192xf32>
    %237 = arith.truncf %236 : vector<32x192xf32> to vector<32x192xbf16>
    %c0_221 = arith.constant 0 : index
    %c0_222 = arith.constant 0 : index
    %c0_223 = arith.constant 0 : index
    %238 = vector.load %arg20[%c0_221, %c0_222, %c0_223] : memref<4x192x192xbf16, #tpu.memory_space<vmem>>, vector<1x192x192xbf16>
    %239 = vector.shape_cast %238 : vector<1x192x192xbf16> to vector<192x192xbf16>
    %cst_224 = arith.constant dense<0.000000e+00> : vector<32x192xf32>
    %240 = tpu.matmul %237, %239, %cst_224 {dimension_numbers = #tpu.dot_dimension_numbers<[1], [0], [0], [1], [0, 0, 1, 1], [], []>} : vector<32x192xbf16>, vector<192x192xbf16>, vector<32x192xf32> -> vector<32x192xf32>
    %c1_225 = arith.constant 1 : index
    %c0_226 = arith.constant 0 : index
    %c0_227 = arith.constant 0 : index
    %241 = vector.load %arg21[%c1_225, %c0_226, %c0_227] : memref<4x32x16xbf16, #tpu.memory_space<vmem>>, vector<1x32x16xbf16>
    %242 = vector.shape_cast %241 : vector<1x32x16xbf16> to vector<32x16xbf16>
    %cst_228 = arith.constant dense<0.000000e+00> : vector<32x192xf32>
    %243 = tpu.matmul %242, %233, %cst_228 {dimension_numbers = #tpu.dot_dimension_numbers<[1], [0], [0], [1], [0, 0, 1, 1], [], []>} : vector<32x16xbf16>, vector<16x192xbf16>, vector<32x192xf32> -> vector<32x192xf32>
    %244 = arith.truncf %243 : vector<32x192xf32> to vector<32x192xbf16>
    %c1_229 = arith.constant 1 : index
    %c0_230 = arith.constant 0 : index
    %c0_231 = arith.constant 0 : index
    %245 = vector.load %arg20[%c1_229, %c0_230, %c0_231] : memref<4x192x192xbf16, #tpu.memory_space<vmem>>, vector<1x192x192xbf16>
    %246 = vector.shape_cast %245 : vector<1x192x192xbf16> to vector<192x192xbf16>
    %cst_232 = arith.constant dense<0.000000e+00> : vector<32x192xf32>
    %247 = tpu.matmul %244, %246, %cst_232 {dimension_numbers = #tpu.dot_dimension_numbers<[1], [0], [0], [1], [0, 0, 1, 1], [], []>} : vector<32x192xbf16>, vector<192x192xbf16>, vector<32x192xf32> -> vector<32x192xf32>
    %248 = arith.addf %240, %247 : vector<32x192xf32>
    %c2_233 = arith.constant 2 : index
    %c0_234 = arith.constant 0 : index
    %c0_235 = arith.constant 0 : index
    %249 = vector.load %arg21[%c2_233, %c0_234, %c0_235] : memref<4x32x16xbf16, #tpu.memory_space<vmem>>, vector<1x32x16xbf16>
    %250 = vector.shape_cast %249 : vector<1x32x16xbf16> to vector<32x16xbf16>
    %cst_236 = arith.constant dense<0.000000e+00> : vector<32x192xf32>
    %251 = tpu.matmul %250, %233, %cst_236 {dimension_numbers = #tpu.dot_dimension_numbers<[1], [0], [0], [1], [0, 0, 1, 1], [], []>} : vector<32x16xbf16>, vector<16x192xbf16>, vector<32x192xf32> -> vector<32x192xf32>
    %252 = arith.truncf %251 : vector<32x192xf32> to vector<32x192xbf16>
    %c2_237 = arith.constant 2 : index
    %c0_238 = arith.constant 0 : index
    %c0_239 = arith.constant 0 : index
    %253 = vector.load %arg20[%c2_237, %c0_238, %c0_239] : memref<4x192x192xbf16, #tpu.memory_space<vmem>>, vector<1x192x192xbf16>
    %254 = vector.shape_cast %253 : vector<1x192x192xbf16> to vector<192x192xbf16>
    %cst_240 = arith.constant dense<0.000000e+00> : vector<32x192xf32>
    %255 = tpu.matmul %252, %254, %cst_240 {dimension_numbers = #tpu.dot_dimension_numbers<[1], [0], [0], [1], [0, 0, 1, 1], [], []>} : vector<32x192xbf16>, vector<192x192xbf16>, vector<32x192xf32> -> vector<32x192xf32>
    %256 = arith.addf %248, %255 : vector<32x192xf32>
    %c3_241 = arith.constant 3 : index
    %c0_242 = arith.constant 0 : index
    %c0_243 = arith.constant 0 : index
    %257 = vector.load %arg21[%c3_241, %c0_242, %c0_243] : memref<4x32x16xbf16, #tpu.memory_space<vmem>>, vector<1x32x16xbf16>
    %258 = vector.shape_cast %257 : vector<1x32x16xbf16> to vector<32x16xbf16>
    %cst_244 = arith.constant dense<0.000000e+00> : vector<32x192xf32>
    %259 = tpu.matmul %258, %233, %cst_244 {dimension_numbers = #tpu.dot_dimension_numbers<[1], [0], [0], [1], [0, 0, 1, 1], [], []>} : vector<32x16xbf16>, vector<16x192xbf16>, vector<32x192xf32> -> vector<32x192xf32>
    %260 = arith.truncf %259 : vector<32x192xf32> to vector<32x192xbf16>
    %c3_245 = arith.constant 3 : index
    %c0_246 = arith.constant 0 : index
    %c0_247 = arith.constant 0 : index
    %261 = vector.load %arg20[%c3_245, %c0_246, %c0_247] : memref<4x192x192xbf16, #tpu.memory_space<vmem>>, vector<1x192x192xbf16>
    %262 = vector.shape_cast %261 : vector<1x192x192xbf16> to vector<192x192xbf16>
    %cst_248 = arith.constant dense<0.000000e+00> : vector<32x192xf32>
    %263 = tpu.matmul %260, %262, %cst_248 {dimension_numbers = #tpu.dot_dimension_numbers<[1], [0], [0], [1], [0, 0, 1, 1], [], []>} : vector<32x192xbf16>, vector<192x192xbf16>, vector<32x192xf32> -> vector<32x192xf32>
    %264 = arith.addf %256, %263 : vector<32x192xf32>
    %c0_249 = arith.constant 0 : index
    %c0_250 = arith.constant 0 : index
    %265 = vector.load %arg22[%c0_249, %c0_250] : memref<1x192xf32, #tpu.memory_space<vmem>>, vector<1x192xf32>
    %266 = vector.broadcast %265 : vector<1x192xf32> to vector<32x192xf32>
    %267 = arith.addf %264, %266 : vector<32x192xf32>
    %cst_251 = arith.constant 0.000000e+00 : f32
    %268 = vector.broadcast %cst_251 : f32 to vector<32x192xf32>
    %269 = arith.maximumf %267, %268 : vector<32x192xf32>
    %270 = arith.truncf %269 : vector<32x192xf32> to vector<32x192xbf16>
    %c0_252 = arith.constant 0 : index
    %c0_253 = arith.constant 0 : index
    %c0_254 = arith.constant 0 : index
    %271 = vector.load %arg24[%c0_252, %c0_253, %c0_254] : memref<4x64x32xbf16, #tpu.memory_space<vmem>>, vector<1x64x32xbf16>
    %272 = vector.shape_cast %271 : vector<1x64x32xbf16> to vector<64x32xbf16>
    %cst_255 = arith.constant dense<0.000000e+00> : vector<64x192xf32>
    %273 = tpu.matmul %272, %270, %cst_255 {dimension_numbers = #tpu.dot_dimension_numbers<[1], [0], [0], [1], [0, 0, 1, 1], [], []>} : vector<64x32xbf16>, vector<32x192xbf16>, vector<64x192xf32> -> vector<64x192xf32>
    %274 = arith.truncf %273 : vector<64x192xf32> to vector<64x192xbf16>
    %c0_256 = arith.constant 0 : index
    %c0_257 = arith.constant 0 : index
    %c0_258 = arith.constant 0 : index
    %275 = vector.load %arg23[%c0_256, %c0_257, %c0_258] : memref<4x192x96xbf16, #tpu.memory_space<vmem>>, vector<1x192x96xbf16>
    %276 = vector.shape_cast %275 : vector<1x192x96xbf16> to vector<192x96xbf16>
    %cst_259 = arith.constant dense<0.000000e+00> : vector<64x96xf32>
    %277 = tpu.matmul %274, %276, %cst_259 {dimension_numbers = #tpu.dot_dimension_numbers<[1], [0], [0], [1], [0, 0, 1, 1], [], []>} : vector<64x192xbf16>, vector<192x96xbf16>, vector<64x96xf32> -> vector<64x96xf32>
    %c1_260 = arith.constant 1 : index
    %c0_261 = arith.constant 0 : index
    %c0_262 = arith.constant 0 : index
    %278 = vector.load %arg24[%c1_260, %c0_261, %c0_262] : memref<4x64x32xbf16, #tpu.memory_space<vmem>>, vector<1x64x32xbf16>
    %279 = vector.shape_cast %278 : vector<1x64x32xbf16> to vector<64x32xbf16>
    %cst_263 = arith.constant dense<0.000000e+00> : vector<64x192xf32>
    %280 = tpu.matmul %279, %270, %cst_263 {dimension_numbers = #tpu.dot_dimension_numbers<[1], [0], [0], [1], [0, 0, 1, 1], [], []>} : vector<64x32xbf16>, vector<32x192xbf16>, vector<64x192xf32> -> vector<64x192xf32>
    %281 = arith.truncf %280 : vector<64x192xf32> to vector<64x192xbf16>
    %c1_264 = arith.constant 1 : index
    %c0_265 = arith.constant 0 : index
    %c0_266 = arith.constant 0 : index
    %282 = vector.load %arg23[%c1_264, %c0_265, %c0_266] : memref<4x192x96xbf16, #tpu.memory_space<vmem>>, vector<1x192x96xbf16>
    %283 = vector.shape_cast %282 : vector<1x192x96xbf16> to vector<192x96xbf16>
    %cst_267 = arith.constant dense<0.000000e+00> : vector<64x96xf32>
    %284 = tpu.matmul %281, %283, %cst_267 {dimension_numbers = #tpu.dot_dimension_numbers<[1], [0], [0], [1], [0, 0, 1, 1], [], []>} : vector<64x192xbf16>, vector<192x96xbf16>, vector<64x96xf32> -> vector<64x96xf32>
    %285 = arith.addf %277, %284 : vector<64x96xf32>
    %c2_268 = arith.constant 2 : index
    %c0_269 = arith.constant 0 : index
    %c0_270 = arith.constant 0 : index
    %286 = vector.load %arg24[%c2_268, %c0_269, %c0_270] : memref<4x64x32xbf16, #tpu.memory_space<vmem>>, vector<1x64x32xbf16>
    %287 = vector.shape_cast %286 : vector<1x64x32xbf16> to vector<64x32xbf16>
    %cst_271 = arith.constant dense<0.000000e+00> : vector<64x192xf32>
    %288 = tpu.matmul %287, %270, %cst_271 {dimension_numbers = #tpu.dot_dimension_numbers<[1], [0], [0], [1], [0, 0, 1, 1], [], []>} : vector<64x32xbf16>, vector<32x192xbf16>, vector<64x192xf32> -> vector<64x192xf32>
    %289 = arith.truncf %288 : vector<64x192xf32> to vector<64x192xbf16>
    %c2_272 = arith.constant 2 : index
    %c0_273 = arith.constant 0 : index
    %c0_274 = arith.constant 0 : index
    %290 = vector.load %arg23[%c2_272, %c0_273, %c0_274] : memref<4x192x96xbf16, #tpu.memory_space<vmem>>, vector<1x192x96xbf16>
    %291 = vector.shape_cast %290 : vector<1x192x96xbf16> to vector<192x96xbf16>
    %cst_275 = arith.constant dense<0.000000e+00> : vector<64x96xf32>
    %292 = tpu.matmul %289, %291, %cst_275 {dimension_numbers = #tpu.dot_dimension_numbers<[1], [0], [0], [1], [0, 0, 1, 1], [], []>} : vector<64x192xbf16>, vector<192x96xbf16>, vector<64x96xf32> -> vector<64x96xf32>
    %293 = arith.addf %285, %292 : vector<64x96xf32>
    %c3_276 = arith.constant 3 : index
    %c0_277 = arith.constant 0 : index
    %c0_278 = arith.constant 0 : index
    %294 = vector.load %arg24[%c3_276, %c0_277, %c0_278] : memref<4x64x32xbf16, #tpu.memory_space<vmem>>, vector<1x64x32xbf16>
    %295 = vector.shape_cast %294 : vector<1x64x32xbf16> to vector<64x32xbf16>
    %cst_279 = arith.constant dense<0.000000e+00> : vector<64x192xf32>
    %296 = tpu.matmul %295, %270, %cst_279 {dimension_numbers = #tpu.dot_dimension_numbers<[1], [0], [0], [1], [0, 0, 1, 1], [], []>} : vector<64x32xbf16>, vector<32x192xbf16>, vector<64x192xf32> -> vector<64x192xf32>
    %297 = arith.truncf %296 : vector<64x192xf32> to vector<64x192xbf16>
    %c3_280 = arith.constant 3 : index
    %c0_281 = arith.constant 0 : index
    %c0_282 = arith.constant 0 : index
    %298 = vector.load %arg23[%c3_280, %c0_281, %c0_282] : memref<4x192x96xbf16, #tpu.memory_space<vmem>>, vector<1x192x96xbf16>
    %299 = vector.shape_cast %298 : vector<1x192x96xbf16> to vector<192x96xbf16>
    %cst_283 = arith.constant dense<0.000000e+00> : vector<64x96xf32>
    %300 = tpu.matmul %297, %299, %cst_283 {dimension_numbers = #tpu.dot_dimension_numbers<[1], [0], [0], [1], [0, 0, 1, 1], [], []>} : vector<64x192xbf16>, vector<192x96xbf16>, vector<64x96xf32> -> vector<64x96xf32>
    %301 = arith.addf %293, %300 : vector<64x96xf32>
    %c0_284 = arith.constant 0 : index
    %c0_285 = arith.constant 0 : index
    %302 = vector.load %arg25[%c0_284, %c0_285] : memref<1x96xf32, #tpu.memory_space<vmem>>, vector<1x96xf32>
    %303 = vector.broadcast %302 : vector<1x96xf32> to vector<64x96xf32>
    %304 = arith.addf %301, %303 : vector<64x96xf32>
    %305 = arith.negf %304 : vector<64x96xf32>
    %306 = math.exp %305 : vector<64x96xf32>
    %cst_286 = arith.constant 1.000000e+00 : f32
    %307 = vector.broadcast %cst_286 : f32 to vector<64x96xf32>
    %308 = arith.addf %307, %306 : vector<64x96xf32>
    %309 = arith.divf %307, %308 : vector<64x96xf32>
    %c0_287 = arith.constant 0 : index
    %c0_288 = arith.constant 0 : index
    %310 = vector.load %arg27[%c0_287, %c0_288] : memref<64x96xf32, #tpu.memory_space<vmem>>, vector<64x96xf32>
    tpu.vector_store %arg27[%c0_287, %c0_288], %309 {strides = array<i32>} : memref<64x96xf32, #tpu.memory_space<vmem>>, vector<64x96xf32>,
    return
  }
  func.func @transform_0(%arg0: i32) -> (i32, i32) {
    %c0_i32 = arith.constant 0 : i32
    %c0_i32_0 = arith.constant 0 : i32
    %c0_i32_1 = arith.constant 0 : i32
    return %c0_i32, %c0_i32_0 : i32, i32
  }
  func.func @transform_1(%arg0: i32) -> (i32, i32, i32) {
    %c0_i32 = arith.constant 0 : i32
    %c0_i32_0 = arith.constant 0 : i32
    %c0_i32_1 = arith.constant 0 : i32
    %c0_i32_2 = arith.constant 0 : i32
    return %c0_i32, %c0_i32_0, %c0_i32_1 : i32, i32, i32
  }
  func.func @transform_2(%arg0: i32) -> (i32, i32, i32) {
    %c0_i32 = arith.constant 0 : i32
    %c0_i32_0 = arith.constant 0 : i32
    %c0_i32_1 = arith.constant 0 : i32
    %c0_i32_2 = arith.constant 0 : i32
    return %c0_i32, %c0_i32_0, %c0_i32_1 : i32, i32, i32
  }
  func.func @transform_3(%arg0: i32) -> (i32, i32) {
    %c0_i32 = arith.constant 0 : i32
    %c0_i32_0 = arith.constant 0 : i32
    %c0_i32_1 = arith.constant 0 : i32
    return %c0_i32, %c0_i32_0 : i32, i32
  }
  func.func @transform_4(%arg0: i32) -> (i32, i32, i32) {
    %c0_i32 = arith.constant 0 : i32
    %c0_i32_0 = arith.constant 0 : i32
    %c0_i32_1 = arith.constant 0 : i32
    %c0_i32_2 = arith.constant 0 : i32
    return %c0_i32, %c0_i32_0, %c0_i32_1 : i32, i32, i32
  }
  func.func @transform_5(%arg0: i32) -> (i32, i32, i32) {
    %c0_i32 = arith.constant 0 : i32
    %c0_i32_0 = arith.constant 0 : i32
    %c0_i32_1 = arith.constant 0 : i32
    %c0_i32_2 = arith.constant 0 : i32
    return %c0_i32, %c0_i32_0, %c0_i32_1 : i32, i32, i32
  }
  func.func @transform_6(%arg0: i32) -> (i32, i32) {
    %c0_i32 = arith.constant 0 : i32
    %c0_i32_0 = arith.constant 0 : i32
    %c0_i32_1 = arith.constant 0 : i32
    return %c0_i32, %c0_i32_0 : i32, i32
  }
  func.func @transform_7(%arg0: i32) -> (i32, i32, i32) {
    %c0_i32 = arith.constant 0 : i32
    %c0_i32_0 = arith.constant 0 : i32
    %c0_i32_1 = arith.constant 0 : i32
    %c0_i32_2 = arith.constant 0 : i32
    return %c0_i32, %c0_i32_0, %c0_i32_1 : i32, i32, i32
  }
  func.func @transform_8(%arg0: i32) -> (i32, i32, i32) {
    %c0_i32 = arith.constant 0 : i32
    %c0_i32_0 = arith.constant 0 : i32
    %c0_i32_1 = arith.constant 0 : i32
    %c0_i32_2 = arith.constant 0 : i32
    return %c0_i32, %c0_i32_0, %c0_i32_1 : i32, i32, i32
  }
  func.func @transform_9(%arg0: i32) -> (i32, i32) {
    %c0_i32 = arith.constant 0 : i32
    %c0_i32_0 = arith.constant 0 : i32
    %c0_i32_1 = arith.constant 0 : i32
    return %c0_i32, %c0_i32_0 : i32, i32
  }
  func.func @transform_10(%arg0: i32) -> (i32, i32, i32) {
    %c0_i32 = arith.constant 0 : i32
    %c0_i32_0 = arith.constant 0 : i32
    %c0_i32_1 = arith.constant 0 : i32
    %c0_i32_2 = arith.constant 0 : i32
    return %c0_i32, %c0_i32_0, %c0_i32_1 : i32, i32, i32
  }
  func.func @transform_11(%arg0: i32) -> (i32, i32, i32) {
    %c0_i32 = arith.constant 0 : i32
    %c0_i32_0 = arith.constant 0 : i32
    %c0_i32_1 = arith.constant 0 : i32
    %c0_i32_2 = arith.constant 0 : i32
    return %c0_i32, %c0_i32_0, %c0_i32_1 : i32, i32, i32
  }
  func.func @transform_12(%arg0: i32) -> (i32, i32) {
    %c0_i32 = arith.constant 0 : i32
    %c0_i32_0 = arith.constant 0 : i32
    %c0_i32_1 = arith.constant 0 : i32
    return %c0_i32, %c0_i32_0 : i32, i32
  }
  func.func @transform_13(%arg0: i32) -> (i32, i32, i32) {
    %c0_i32 = arith.constant 0 : i32
    %c0_i32_0 = arith.constant 0 : i32
    %c0_i32_1 = arith.constant 0 : i32
    %c0_i32_2 = arith.constant 0 : i32
    return %c0_i32, %c0_i32_0, %c0_i32_1 : i32, i32, i32
  }
  func.func @transform_14(%arg0: i32) -> (i32, i32, i32) {
    %c0_i32 = arith.constant 0 : i32
    %c0_i32_0 = arith.constant 0 : i32
    %c0_i32_1 = arith.constant 0 : i32
    %c0_i32_2 = arith.constant 0 : i32
    return %c0_i32, %c0_i32_0, %c0_i32_1 : i32, i32, i32
  }
  func.func @transform_15(%arg0: i32) -> (i32, i32, i32) {
    %c0_i32 = arith.constant 0 : i32
    %c0_i32_0 = arith.constant 0 : i32
    %c0_i32_1 = arith.constant 0 : i32
    %c0_i32_2 = arith.constant 0 : i32
    return %c0_i32, %c0_i32_0, %c0_i32_1 : i32, i32, i32
  }
  func.func @transform_16(%arg0: i32) -> (i32, i32, i32) {
    %c0_i32 = arith.constant 0 : i32
    %c0_i32_0 = arith.constant 0 : i32
    %c0_i32_1 = arith.constant 0 : i32
    %c0_i32_2 = arith.constant 0 : i32
    return %c0_i32, %c0_i32_0, %c0_i32_1 : i32, i32, i32
  }
  func.func @transform_17(%arg0: i32) -> (i32, i32, i32) {
    %c0_i32 = arith.constant 0 : i32
    %c0_i32_0 = arith.constant 0 : i32
    %c0_i32_1 = arith.constant 0 : i32
    %c0_i32_2 = arith.constant 0 : i32
    return %c0_i32, %c0_i32_0, %c0_i32_1 : i32, i32, i32
  }
  func.func @transform_18(%arg0: i32) -> (i32, i32) {
    %c0_i32 = arith.constant 0 : i32
    %c0_i32_0 = arith.constant 0 : i32
    %c0_i32_1 = arith.constant 0 : i32
    return %c0_i32, %c0_i32_0 : i32, i32
  }
  func.func @transform_19(%arg0: i32) -> (i32, i32, i32) {
    %c0_i32 = arith.constant 0 : i32
    %c0_i32_0 = arith.constant 0 : i32
    %c0_i32_1 = arith.constant 0 : i32
    %c0_i32_2 = arith.constant 0 : i32
    return %c0_i32, %c0_i32_0, %c0_i32_1 : i32, i32, i32
  }
  func.func @transform_20(%arg0: i32) -> (i32, i32, i32) {
    %c0_i32 = arith.constant 0 : i32
    %c0_i32_0 = arith.constant 0 : i32
    %c0_i32_1 = arith.constant 0 : i32
    %c0_i32_2 = arith.constant 0 : i32
    return %c0_i32, %c0_i32_0, %c0_i32_1 : i32, i32, i32
  }
  func.func @transform_21(%arg0: i32) -> (i32, i32) {
    %c0_i32 = arith.constant 0 : i32
    %c0_i32_0 = arith.constant 0 : i32
    %c0_i32_1 = arith.constant 0 : i32
    return %c0_i32, %c0_i32_0 : i32, i32
  }
  func.func @transform_22(%arg0: i32) -> (i32, i32, i32) {
    %c0_i32 = arith.constant 0 : i32
    %c0_i32_0 = arith.constant 0 : i32
    %c0_i32_1 = arith.constant 0 : i32
    %c0_i32_2 = arith.constant 0 : i32
    return %c0_i32, %c0_i32_0, %c0_i32_1 : i32, i32, i32
  }
  func.func @transform_23(%arg0: i32) -> (i32, i32, i32) {
    %c0_i32 = arith.constant 0 : i32
    %c0_i32_0 = arith.constant 0 : i32
    %c0_i32_1 = arith.constant 0 : i32
    %c0_i32_2 = arith.constant 0 : i32
    return %c0_i32, %c0_i32_0, %c0_i32_1 : i32, i32, i32
  }
  func.func @transform_24(%arg0: i32) -> (i32, i32) {
    %c0_i32 = arith.constant 0 : i32
    %c0_i32_0 = arith.constant 0 : i32
    %c0_i32_1 = arith.constant 0 : i32
    return %c0_i32, %c0_i32_0 : i32, i32
  }
  func.func @transform_25(%arg0: i32) -> (i32, i32) {
    %c0_i32 = arith.constant 0 : i32
    %c0_i32_0 = arith.constant 0 : i32
    %c0_i32_1 = arith.constant 0 : i32
    return %c0_i32, %c0_i32_0 : i32, i32
  }
  func.func @transform_26(%arg0: i32) -> (i32, i32) {
    %c0_i32 = arith.constant 0 : i32
    %c0_i32_0 = arith.constant 0 : i32
    %c0_i32_1 = arith.constant 0 : i32
    return %c0_i32, %c0_i32_0 : i32, i32
  }
}

</mosaic_0001>

<llo_original>
// kernel: ae_cifar10_v3_forward.1
$region0: #{ae_cifar10_v3_forward.1}
  #allocation0 [shape = 'u32[]', space=smem, size = 0x4, offset = 0x4, fixed_abs, tag = 'smem constant byte address 0x4 - core index']
  #allocation1 [shape = 'u32[144,128]{1,0:T(1,128)}', space=vmem, size = 0x12000, scoped, tag = 'internal scratch']
  %s0 = inlined_call_operand.vmem [shape: f32[64,96], index: 0, kind: input, shape index: {}]
  %s1 = inlined_call_operand.hbm [shape: bf16[4,96,192], index: 1, kind: input, shape index: {}]
  %s2 = inlined_call_operand.hbm [shape: bf16[4,32,64], index: 2, kind: input, shape index: {}]
  %s3 = inlined_call_operand.hbm [shape: f32[1,192], index: 3, kind: input, shape index: {}]
  %s4 = inlined_call_operand.vmem [shape: bf16[4,192,192], index: 4, kind: input, shape index: {}]
  %s5 = inlined_call_operand.hbm [shape: bf16[4,16,32], index: 5, kind: input, shape index: {}]
  %s6 = inlined_call_operand.hbm [shape: f32[1,192], index: 6, kind: input, shape index: {}]
  %s7 = inlined_call_operand.vmem [shape: bf16[4,192,192], index: 7, kind: input, shape index: {}]
  %s8 = inlined_call_operand.hbm [shape: bf16[4,8,16], index: 8, kind: input, shape index: {}]
  %s9 = inlined_call_operand.hbm [shape: f32[1,192], index: 9, kind: input, shape index: {}]
  %s10 = inlined_call_operand.vmem [shape: bf16[4,192,512], index: 10, kind: input, shape index: {}]
  %s11 = inlined_call_operand.vmem [shape: bf16[4,2,8], index: 11, kind: input, shape index: {}]
  %s12 = inlined_call_operand.vmem [shape: f32[1,512], index: 12, kind: input, shape index: {}]
  %s13 = inlined_call_operand.vmem [shape: bf16[4,512,192], index: 13, kind: input, shape index: {}]
  %s14 = inlined_call_operand.vmem [shape: bf16[4,8,2], index: 14, kind: input, shape index: {}]
  %s15 = inlined_call_operand.vmem [shape: f32[4,1,192], index: 15, kind: input, shape index: {}]
  %s16 = inlined_call_operand.vmem [shape: bf16[4,192,192], index: 16, kind: input, shape index: {}]
  %s17 = inlined_call_operand.vmem [shape: bf16[4,16,8], index: 17, kind: input, shape index: {}]
  %s18 = inlined_call_operand.hbm [shape: f32[1,192], index: 18, kind: input, shape index: {}]
  %s19 = inlined_call_operand.vmem [shape: bf16[4,192,192], index: 19, kind: input, shape index: {}]
  %s20 = inlined_call_operand.vmem [shape: bf16[4,32,16], index: 20, kind: input, shape index: {}]
  %s21 = inlined_call_operand.hbm [shape: f32[1,192], index: 21, kind: input, shape index: {}]
  %s22 = inlined_call_operand.hbm [shape: bf16[4,192,96], index: 22, kind: input, shape index: {}]
  %s23 = inlined_call_operand.vmem [shape: bf16[4,64,32], index: 23, kind: input, shape index: {}]
  %s24 = inlined_call_operand.vmem [shape: f32[1,96], index: 24, kind: input, shape index: {}]
  %s25 = inlined_call_operand.hbm [shape: f32[2,512], index: 25, kind: output, shape index: {0}]
  %s26 = inlined_call_operand.vmem [shape: f32[64,96], index: 26, kind: output, shape index: {1}]
  %27 = xla_tuple %s25, %s26
  %s28 = sld [smem:[#allocation0]]
  $region158: #{ae_cifar10_v3_forward.1} parent=0
    _
  %s30 = ssub.s32 1, %s28
  %s31 = scalar_select 0, %s30, %s28
  $region1: #{ae_cifar10_v3_forward.1} parent=0
    #allocation2 [shape = 'u8[196608]{0}', space=vmem, size = 0x30000, scoped, tag = 'input window, operand 1, single buffered']
    #allocation3 [shape = 's32[1]{0}', space=sflag, size = 0x4, scoped, tag = 'scoped memory for ae_cifar10_v3_forward.1']
    #allocation4 [shape = 's32[1]{0}', space=sflag, size = 0x4, scoped, tag = 'scoped memory for ae_cifar10_v3_forward.1']
    #allocation5 [shape = 'u8[32768]{0}', space=vmem, size = 0x8000, scoped, tag = 'input window, operand 2, single buffered']
    #allocation6 [shape = 's32[1]{0}', space=sflag, size = 0x4, scoped, tag = 'scoped memory for ae_cifar10_v3_forward.1']
    #allocation7 [shape = 'u8[1024]{0}', space=vmem, size = 0x400, scoped, tag = 'input window, operand 3, single buffered']
    #allocation8 [shape = 'u8[16384]{0}', space=vmem, size = 0x4000, scoped, tag = 'input window, operand 5, single buffered']
    #allocation9 [shape = 's32[1]{0}', space=sflag, size = 0x4, scoped, tag = 'scoped memory for ae_cifar10_v3_forward.1']
    #allocation10 [shape = 'u8[1024]{0}', space=vmem, size = 0x400, scoped, tag = 'input window, operand 6, single buffered']
    #allocation11 [shape = 'u8[8192]{0}', space=vmem, size = 0x2000, scoped, tag = 'input window, operand 8, single buffered']
    #allocation12 [shape = 's32[1]{0}', space=sflag, size = 0x4, scoped, tag = 'scoped memory for ae_cifar10_v3_forward.1']
    #allocation13 [shape = 'u8[1024]{0}', space=vmem, size = 0x400, scoped, tag = 'input window, operand 9, single buffered']
    #allocation14 [shape = 'u8[1024]{0}', space=vmem, size = 0x400, scoped, tag = 'input window, operand 18, single buffered']
    #allocation15 [shape = 's32[1]{0}', space=sflag, size = 0x4, scoped, tag = 'scoped memory for ae_cifar10_v3_forward.1']
    #allocation16 [shape = 'u8[1024]{0}', space=vmem, size = 0x400, scoped, tag = 'input window, operand 21, single buffered']
    #allocation17 [shape = 'u8[196608]{0}', space=vmem, size = 0x30000, scoped, tag = 'input window, operand 22, single buffered']
    #allocation18 [shape = 's32[1]{0}', space=sflag, size = 0x4, scoped, tag = 'scoped memory for ae_cifar10_v3_forward.1']
    #allocation19 [shape = 'u8[4096]{0}', space=vmem, size = 0x1000, scoped, tag = 'output window, operand 0, single buffered']
    %32 = vsyncpa [#allocation3], 0
    %33 = vsyncpa [#allocation6], 0
    %34 = vsyncpa [#allocation9], 0
    %35 = vsyncpa [#allocation12], 0
    %36 = vsyncpa [#allocation15], 0
    %37 = vsyncpa [#allocation18], 0
    %38 = vsyncpa [#allocation4], 0
    // Predicated region
    $region2: #{ae_cifar10_v3_forward.1} parent=1 // pred_check
      _
    $region3: #{ae_cifar10_v3_forward.1} parent=1 // pred_check_branch
      %40 = sbr.rel (0) target = $region5
    $region4: #{ae_cifar10_v3_forward.1} parent=1 // pred_region
      _
    $region5: #{ae_cifar10_v3_forward.1} parent=1 // pred_fallthru
      _
    // Predicated region
    $region6: #{ae_cifar10_v3_forward.1} parent=1 // pred_check
      _
    $region7: #{ae_cifar10_v3_forward.1} parent=1 // pred_check_branch
      %42 = sbr.rel (0) target = $region9
    $region8: #{ae_cifar10_v3_forward.1} parent=1 // pred_region
      %s44 = ssub.s32 6144, 6144
      %45 = vsyncadd [#allocation3], %s44
      %s46 = sshll.u32 [#allocation2], 4
      %s47 = int_to_ptr.vmem [resolvable:$true] %s46
      %52 = dma.hbm_to_vmem [thread:$0]  %s1, 6144, %s47, [#allocation3], 128, 128, 8
    $region9: #{ae_cifar10_v3_forward.1} parent=1 // pred_fallthru
      _
    // Predicated region
    $region10: #{ae_cifar10_v3_forward.1} parent=1 // pred_check
      _
    $region11: #{ae_cifar10_v3_forward.1} parent=1 // pred_check_branch
      %54 = sbr.rel (0) target = $region13
    $region12: #{ae_cifar10_v3_forward.1} parent=1 // pred_region
      %s56 = ssub.s32 1024, 1024
      %57 = vsyncadd [#allocation6], %s56
      %s58 = sshll.u32 [#allocation5], 4
      %s59 = int_to_ptr.vmem [resolvable:$true] %s58
      %64 = dma.hbm_to_vmem [thread:$0]  %s2, 1024, %s59, [#allocation6], 64, 64, 4
    $region13: #{ae_cifar10_v3_forward.1} parent=1 // pred_fallthru
      _
    // Predicated region
    $region14: #{ae_cifar10_v3_forward.1} parent=1 // pred_check
      _
    $region15: #{ae_cifar10_v3_forward.1} parent=1 // pred_check_branch
      %66 = sbr.rel (0) target = $region17
    $region16: #{ae_cifar10_v3_forward.1} parent=1 // pred_region
      %s68 = ssub.s32 32, 32
      %69 = vsyncadd [#allocation6], %s68
      %s71 = sshll.u32 [#allocation7], 4
      %s72 = int_to_ptr.vmem [resolvable:$true] %s71
      %74 = dma.hbm_to_vmem [thread:$0]  %s3, 32, %s72, [#allocation6]
    $region17: #{ae_cifar10_v3_forward.1} parent=1 // pred_fallthru
      _
    // Predicated region
    $region18: #{ae_cifar10_v3_forward.1} parent=1 // pred_check
      _
    $region19: #{ae_cifar10_v3_forward.1} parent=1 // pred_check_branch
      %76 = sbr.rel (0) target = $region21
    $region20: #{ae_cifar10_v3_forward.1} parent=1 // pred_region
      _
    $region21: #{ae_cifar10_v3_forward.1} parent=1 // pred_fallthru
      _
    // Predicated region
    $region22: #{ae_cifar10_v3_forward.1} parent=1 // pred_check
      _
    $region23: #{ae_cifar10_v3_forward.1} parent=1 // pred_check_branch
      %78 = sbr.rel (0) target = $region25
    $region24: #{ae_cifar10_v3_forward.1} parent=1 // pred_region
      %s80 = ssub.s32 512, 512
      %81 = vsyncadd [#allocation9], %s80
      %s82 = sshll.u32 [#allocation8], 4
      %s83 = int_to_ptr.vmem [resolvable:$true] %s82
      %88 = dma.hbm_to_vmem [thread:$0]  %s5, 512, %s83, [#allocation9], 64, 64, 4
    $region25: #{ae_cifar10_v3_forward.1} parent=1 // pred_fallthru
      _
    // Predicated region
    $region26: #{ae_cifar10_v3_forward.1} parent=1 // pred_check
      _
    $region27: #{ae_cifar10_v3_forward.1} parent=1 // pred_check_branch
      %90 = sbr.rel (0) target = $region29
    $region28: #{ae_cifar10_v3_forward.1} parent=1 // pred_region
      %s92 = ssub.s32 32, 32
      %93 = vsyncadd [#allocation9], %s92
      %s95 = sshll.u32 [#allocation10], 4
      %s96 = int_to_ptr.vmem [resolvable:$true] %s95
      %98 = dma.hbm_to_vmem [thread:$0]  %s6, 32, %s96, [#allocation9]
    $region29: #{ae_cifar10_v3_forward.1} parent=1 // pred_fallthru
      _
    // Predicated region
    $region30: #{ae_cifar10_v3_forward.1} parent=1 // pred_check
      _
    $region31: #{ae_cifar10_v3_forward.1} parent=1 // pred_check_branch
      %100 = sbr.rel (0) target = $region33
    $region32: #{ae_cifar10_v3_forward.1} parent=1 // pred_region
      _
    $region33: #{ae_cifar10_v3_forward.1} parent=1 // pred_fallthru
      _
    // Predicated region
    $region34: #{ae_cifar10_v3_forward.1} parent=1 // pred_check
      _
    $region35: #{ae_cifar10_v3_forward.1} parent=1 // pred_check_branch
      %102 = sbr.rel (0) target = $region37
    $region36: #{ae_cifar10_v3_forward.1} parent=1 // pred_region
      %s104 = ssub.s32 256, 256
      %105 = vsyncadd [#allocation12], %s104
      %s106 = sshll.u32 [#allocation11], 4
      %s107 = int_to_ptr.vmem [resolvable:$true] %s106
      %112 = dma.hbm_to_vmem [thread:$0]  %s8, 256, %s107, [#allocation12], 64, 64, 4
    $region37: #{ae_cifar10_v3_forward.1} parent=1 // pred_fallthru
      _
    // Predicated region
    $region38: #{ae_cifar10_v3_forward.1} parent=1 // pred_check
      _
    $region39: #{ae_cifar10_v3_forward.1} parent=1 // pred_check_branch
      %114 = sbr.rel (0) target = $region41
    $region40: #{ae_cifar10_v3_forward.1} parent=1 // pred_region
      %s116 = ssub.s32 32, 32
      %117 = vsyncadd [#allocation12], %s116
      %s119 = sshll.u32 [#allocation13], 4
      %s120 = int_to_ptr.vmem [resolvable:$true] %s119
      %122 = dma.hbm_to_vmem [thread:$0]  %s9, 32, %s120, [#allocation12]
    $region41: #{ae_cifar10_v3_forward.1} parent=1 // pred_fallthru
      _
    // Predicated region
    $region42: #{ae_cifar10_v3_forward.1} parent=1 // pred_check
      _
    $region43: #{ae_cifar10_v3_forward.1} parent=1 // pred_check_branch
      %124 = sbr.rel (0) target = $region45
    $region44: #{ae_cifar10_v3_forward.1} parent=1 // pred_region
      _
    $region45: #{ae_cifar10_v3_forward.1} parent=1 // pred_fallthru
      _
    // Predicated region
    $region46: #{ae_cifar10_v3_forward.1} parent=1 // pred_check
      _
    $region47: #{ae_cifar10_v3_forward.1} parent=1 // pred_check_branch
      %126 = sbr.rel (0) target = $region49
    $region48: #{ae_cifar10_v3_forward.1} parent=1 // pred_region
      _
    $region49: #{ae_cifar10_v3_forward.1} parent=1 // pred_fallthru
      _
    // Predicated region
    $region50: #{ae_cifar10_v3_forward.1} parent=1 // pred_check
      _
    $region51: #{ae_cifar10_v3_forward.1} parent=1 // pred_check_branch
      %128 = sbr.rel (0) target = $region53
    $region52: #{ae_cifar10_v3_forward.1} parent=1 // pred_region
      _
    $region53: #{ae_cifar10_v3_forward.1} parent=1 // pred_fallthru
      _
    // Predicated region
    $region54: #{ae_cifar10_v3_forward.1} parent=1 // pred_check
      _
    $region55: #{ae_cifar10_v3_forward.1} parent=1 // pred_check_branch
      %130 = sbr.rel (0) target = $region57
    $region56: #{ae_cifar10_v3_forward.1} parent=1 // pred_region
      _
    $region57: #{ae_cifar10_v3_forward.1} parent=1 // pred_fallthru
      _
    // Predicated region
    $region58: #{ae_cifar10_v3_forward.1} parent=1 // pred_check
      _
    $region59: #{ae_cifar10_v3_forward.1} parent=1 // pred_check_branch
      %132 = sbr.rel (0) target = $region61
    $region60: #{ae_cifar10_v3_forward.1} parent=1 // pred_region
      _
    $region61: #{ae_cifar10_v3_forward.1} parent=1 // pred_fallthru
      _
    // Predicated region
    $region62: #{ae_cifar10_v3_forward.1} parent=1 // pred_check
      _
    $region63: #{ae_cifar10_v3_forward.1} parent=1 // pred_check_branch
      %134 = sbr.rel (0) target = $region65
    $region64: #{ae_cifar10_v3_forward.1} parent=1 // pred_region
      _
    $region65: #{ae_cifar10_v3_forward.1} parent=1 // pred_fallthru
      _
    // Predicated region
    $region66: #{ae_cifar10_v3_forward.1} parent=1 // pred_check
      _
    $region67: #{ae_cifar10_v3_forward.1} parent=1 // pred_check_branch
      %136 = sbr.rel (0) target = $region69
    $region68: #{ae_cifar10_v3_forward.1} parent=1 // pred_region
      _
    $region69: #{ae_cifar10_v3_forward.1} parent=1 // pred_fallthru
      _
    // Predicated region
    $region70: #{ae_cifar10_v3_forward.1} parent=1 // pred_check
      _
    $region71: #{ae_cifar10_v3_forward.1} parent=1 // pred_check_branch
      %138 = sbr.rel (0) target = $region73
    $region72: #{ae_cifar10_v3_forward.1} parent=1 // pred_region
      _
    $region73: #{ae_cifar10_v3_forward.1} parent=1 // pred_fallthru
      _
    // Predicated region
    $region74: #{ae_cifar10_v3_forward.1} parent=1 // pred_check
      _
    $region75: #{ae_cifar10_v3_forward.1} parent=1 // pred_check_branch
      %140 = sbr.rel (0) target = $region77
    $region76: #{ae_cifar10_v3_forward.1} parent=1 // pred_region
      %s142 = ssub.s32 32, 32
      %143 = vsyncadd [#allocation15], %s142
      %s145 = sshll.u32 [#allocation14], 4
      %s146 = int_to_ptr.vmem [resolvable:$true] %s145
      %148 = dma.hbm_to_vmem [thread:$0]  %s18, 32, %s146, [#allocation15]
    $region77: #{ae_cifar10_v3_forward.1} parent=1 // pred_fallthru
      _
    // Predicated region
    $region78: #{ae_cifar10_v3_forward.1} parent=1 // pred_check
      _
    $region79: #{ae_cifar10_v3_forward.1} parent=1 // pred_check_branch
      %150 = sbr.rel (0) target = $region81
    $region80: #{ae_cifar10_v3_forward.1} parent=1 // pred_region
      _
    $region81: #{ae_cifar10_v3_forward.1} parent=1 // pred_fallthru
      _
    // Predicated region
    $region82: #{ae_cifar10_v3_forward.1} parent=1 // pred_check
      _
    $region83: #{ae_cifar10_v3_forward.1} parent=1 // pred_check_branch
      %152 = sbr.rel (0) target = $region85
    $region84: #{ae_cifar10_v3_forward.1} parent=1 // pred_region
      _
    $region85: #{ae_cifar10_v3_forward.1} parent=1 // pred_fallthru
      _
    // Predicated region
    $region86: #{ae_cifar10_v3_forward.1} parent=1 // pred_check
      _
    $region87: #{ae_cifar10_v3_forward.1} parent=1 // pred_check_branch
      %154 = sbr.rel (0) target = $region89
    $region88: #{ae_cifar10_v3_forward.1} parent=1 // pred_region
      %s156 = ssub.s32 32, 32
      %157 = vsyncadd [#allocation15], %s156
      %s159 = sshll.u32 [#allocation16], 4
      %s160 = int_to_ptr.vmem [resolvable:$true] %s159
      %162 = dma.hbm_to_vmem [thread:$0]  %s21, 32, %s160, [#allocation15]
    $region89: #{ae_cifar10_v3_forward.1} parent=1 // pred_fallthru
      _
    // Predicated region
    $region90: #{ae_cifar10_v3_forward.1} parent=1 // pred_check
      _
    $region91: #{ae_cifar10_v3_forward.1} parent=1 // pred_check_branch
      %164 = sbr.rel (0) target = $region93
    $region92: #{ae_cifar10_v3_forward.1} parent=1 // pred_region
      %s166 = ssub.s32 6144, 6144
      %167 = vsyncadd [#allocation18], %s166
      %s168 = sshll.u32 [#allocation17], 4
      %s169 = int_to_ptr.vmem [resolvable:$true] %s168
      %174 = dma.hbm_to_vmem [thread:$0]  %s22, 6144, %s169, [#allocation18], 64, 64, 4
    $region93: #{ae_cifar10_v3_forward.1} parent=1 // pred_fallthru
      _
    // Predicated region
    $region94: #{ae_cifar10_v3_forward.1} parent=1 // pred_check
      _
    $region95: #{ae_cifar10_v3_forward.1} parent=1 // pred_check_branch
      %176 = sbr.rel (0) target = $region97
    $region96: #{ae_cifar10_v3_forward.1} parent=1 // pred_region
      _
    $region97: #{ae_cifar10_v3_forward.1} parent=1 // pred_fallthru
      _
    // Predicated region
    $region98: #{ae_cifar10_v3_forward.1} parent=1 // pred_check
      _
    $region99: #{ae_cifar10_v3_forward.1} parent=1 // pred_check_branch
      %178 = sbr.rel (0) target = $region101
    $region100: #{ae_cifar10_v3_forward.1} parent=1 // pred_region
      _
    $region101: #{ae_cifar10_v3_forward.1} parent=1 // pred_fallthru
      _
    // Predicated region
    $region102: #{ae_cifar10_v3_forward.1} parent=1 // pred_check
      _
    $region103: #{ae_cifar10_v3_forward.1} parent=1 // pred_check_branch
      %180 = sbr.rel (0) target = $region105
    $region104: #{ae_cifar10_v3_forward.1} parent=1 // pred_region
      %181 = dma.done [#allocation3], 6144
    $region105: #{ae_cifar10_v3_forward.1} parent=1 // pred_fallthru
      _
    // Predicated region
    $region106: #{ae_cifar10_v3_forward.1} parent=1 // pred_check
      _
    $region107: #{ae_cifar10_v3_forward.1} parent=1 // pred_check_branch
      %183 = sbr.rel (0) target = $region109
    $region108: #{ae_cifar10_v3_forward.1} parent=1 // pred_region
      %184 = dma.done [#allocation6], 1024
    $region109: #{ae_cifar10_v3_forward.1} parent=1 // pred_fallthru
      _
    // Predicated region
    $region110: #{ae_cifar10_v3_forward.1} parent=1 // pred_check
      _
    $region111: #{ae_cifar10_v3_forward.1} parent=1 // pred_check_branch
      %186 = sbr.rel (0) target = $region113
    $region112: #{ae_cifar10_v3_forward.1} parent=1 // pred_region
      %187 = dma.done [#allocation6], 32
    $region113: #{ae_cifar10_v3_forward.1} parent=1 // pred_fallthru
      _
    // Predicated region
    $region114: #{ae_cifar10_v3_forward.1} parent=1 // pred_check
      _
    $region115: #{ae_cifar10_v3_forward.1} parent=1 // pred_check_branch
      %189 = sbr.rel (0) target = $region117
    $region116: #{ae_cifar10_v3_forward.1} parent=1 // pred_region
      %190 = dma.done [#allocation9], 512
    $region117: #{ae_cifar10_v3_forward.1} parent=1 // pred_fallthru
      _
    // Predicated region
    $region118: #{ae_cifar10_v3_forward.1} parent=1 // pred_check
      _
    $region119: #{ae_cifar10_v3_forward.1} parent=1 // pred_check_branch
      %192 = sbr.rel (0) target = $region121
    $region120: #{ae_cifar10_v3_forward.1} parent=1 // pred_region
      %193 = dma.done [#allocation9], 32
    $region121: #{ae_cifar10_v3_forward.1} parent=1 // pred_fallthru
      _
    // Predicated region
    $region122: #{ae_cifar10_v3_forward.1} parent=1 // pred_check
      _
    $region123: #{ae_cifar10_v3_forward.1} parent=1 // pred_check_branch
      %195 = sbr.rel (0) target = $region125
    $region124: #{ae_cifar10_v3_forward.1} parent=1 // pred_region
      %196 = dma.done [#allocation12], 256
    $region125: #{ae_cifar10_v3_forward.1} parent=1 // pred_fallthru
      _
    // Predicated region
    $region126: #{ae_cifar10_v3_forward.1} parent=1 // pred_check
      _
    $region127: #{ae_cifar10_v3_forward.1} parent=1 // pred_check_branch
      %198 = sbr.rel (0) target = $region129
    $region128: #{ae_cifar10_v3_forward.1} parent=1 // pred_region
      %199 = dma.done [#allocation12], 32
    $region129: #{ae_cifar10_v3_forward.1} parent=1 // pred_fallthru
      _
    // Predicated region
    $region130: #{ae_cifar10_v3_forward.1} parent=1 // pred_check
      _
    $region131: #{ae_cifar10_v3_forward.1} parent=1 // pred_check_branch
      %201 = sbr.rel (0) target = $region133
    $region132: #{ae_cifar10_v3_forward.1} parent=1 // pred_region
      %202 = dma.done [#allocation15], 32
    $region133: #{ae_cifar10_v3_forward.1} parent=1 // pred_fallthru
      _
    // Predicated region
    $region134: #{ae_cifar10_v3_forward.1} parent=1 // pred_check
      _
    $region135: #{ae_cifar10_v3_forward.1} parent=1 // pred_check_branch
      %204 = sbr.rel (0) target = $region137
    $region136: #{ae_cifar10_v3_forward.1} parent=1 // pred_region
      %205 = dma.done [#allocation15], 32
    $region137: #{ae_cifar10_v3_forward.1} parent=1 // pred_fallthru
      _
    // Predicated region
    $region138: #{ae_cifar10_v3_forward.1} parent=1 // pred_check
      _
    $region139: #{ae_cifar10_v3_forward.1} parent=1 // pred_check_branch
      %207 = sbr.rel (0) target = $region141
    $region140: #{ae_cifar10_v3_forward.1} parent=1 // pred_region
      %208 = dma.done [#allocation18], 6144
    $region141: #{ae_cifar10_v3_forward.1} parent=1 // pred_fallthru
      _
    %v210 = vld [vmem:[%s0] sm:$0xff]
    %v211 = vld [vmem:[%s0 + $0x8] sm:$0xff]
    %v212 = vld [vmem:[%s0 + $0x10] sm:$0xff]
    %v213 = vld [vmem:[%s0 + $0x18] sm:$0xff]
    %v214 = vld [vmem:[%s0 + $0x20] sm:$0xff]
    %v215 = vld [vmem:[%s0 + $0x28] sm:$0xff]
    %v216 = vld [vmem:[%s0 + $0x30] sm:$0xff]
    %v217 = vld [vmem:[%s0 + $0x38] sm:$0xff]
    %v218 = vpack.c.bf16 %v211, %v210
    %v219 = vpack.c.bf16 %v213, %v212
    %v220 = vpack.c.bf16 %v215, %v214
    %v221 = vpack.c.bf16 %v217, %v216
    %v222 = vld [vmem:[#allocation5] sm:$0xf]
    %v223 = vld [vmem:[#allocation5 + $0x4] sm:$0xf]
    %v224 = vld [vmem:[#allocation5 + $0x8] sm:$0xf]
    %v225 = vld [vmem:[#allocation5 + $0xc] sm:$0xf]
    %v230 = vunpack.c.l.b16 %v222
    %v231 = vunpack.c.l.b16 %v223
    %v232 = vunpack.c.l.b16 %v224
    %v233 = vunpack.c.l.b16 %v225
    %v234 = vpack.c.b16 %v231, %v230
    %v235 = vpack.c.b16 %v233, %v232
    %vm236 = vcmask 523264
    %v238 = vsel %vm236, %v234, 0
    %v241 = vsel %vm236, %v235, 0
    %243 = vmatprep.subr.bf16.mxu0 0
    %244 = vmatpush1.bf16.msra.mxu0 %v218
    %245 = vmatprep.subr.bf16.mxu0 0
    %246 = vmatpush1.bf16.msra.mxu0 %v219
    %247 = vmatprep.subr.bf16.mxu0 0
    %248 = vmatpush1.bf16.msra.mxu0 %v220
    %249 = vmatprep.subr.bf16.mxu0 0
    %250 = vmatpush1.bf16.msra.mxu0 %v221
    %251 = vmatprep.subr.bf16.mxu0 0
    %252 = vmatpush1.bf16.msra.mxu0 0
    %253 = vmatprep.subr.bf16.mxu0 0
    %254 = vmatpush1.bf16.msra.mxu0 0
    %255 = vmatprep.subr.bf16.mxu0 0
    %256 = vmatpush1.bf16.msra.mxu0 0
    %257 = vmatprep.subr.bf16.mxu0 0
    %258 = vmatpush1.bf16.msra.mxu0 0
    %259 = vmatprep.subr.bf16.mxu0 0
    %260 = vmatpush1.bf16.msra.mxu0 0
    %261 = vmatprep.subr.bf16.mxu0 0
    %262 = vmatpush1.bf16.msra.mxu0 0
    %263 = vmatprep.subr.bf16.mxu0 0
    %264 = vmatpush1.bf16.msra.mxu0 0
    %265 = vmatprep.subr.bf16.mxu0 0
    %266 = vmatpush1.bf16.msra.mxu0 0
    %267 = vmatprep.subr.bf16.mxu0 0
    %268 = vmatpush1.bf16.msra.mxu0 0
    %269 = vmatprep.subr.bf16.mxu0 0
    %270 = vmatpush1.bf16.msra.mxu0 0
    %271 = vmatprep.subr.bf16.mxu0 0
    %272 = vmatpush1.bf16.msra.mxu0 0
    %273 = vmatprep.subr.bf16.mxu0 0
    %274 = vmatpush1.bf16.msra.mxu0 0
    %275 = vmatprep.mubr.bf16.mxu0 0
    %276 = vmatmul.mubr.bf16.gmra.mrb[0].mxu0 %v238
    %v277 = vpop.f32.mrb[0].mxu0
    %v278 = vadd.f32 0.0, %v277
    %v279 = vpop.f32.mrb[0].mxu0
    %v280 = vpop.f32.mrb[0].mxu0
    %v281 = vadd.f32 0.0, %v280
    %v282 = vpop.f32.mrb[0].mxu0
    %283 = vmatprep.mubr.bf16.mxu0 0
    %284 = vmatmul.mubr.bf16.gmra.mrb[0].mxu0 %v241
    %v285 = vpop.f32.mrb[0].mxu0
    %v286 = vadd.f32 0.0, %v285
    %v287 = vpop.f32.mrb[0].mxu0
    %v288 = vpop.f32.mrb[0].mxu0
    %v289 = vadd.f32 0.0, %v288
    %v290 = vpop.f32.mrb[0].mxu0
    %291 = vdwg.mxu0
    %v292 = vpack.c.bf16 %v281, %v278
    %v293 = vpack.c.bf16 %v289, %v286
    %v294 = vld [vmem:[#allocation2] sm:$0xff]
    %v295 = vld [vmem:[#allocation2 + $0x8] sm:$0xff]
    %v296 = vld [vmem:[#allocation2 + $0x10] sm:$0xff]
    %v297 = vld [vmem:[#allocation2 + $0x18] sm:$0xff]
    %v298 = vld [vmem:[#allocation2 + $0x20] sm:$0xff]
    %v299 = vld [vmem:[#allocation2 + $0x28] sm:$0xff]
    %v300 = vld [vmem:[#allocation2 + $0x30] sm:$0xff]
    %v301 = vld [vmem:[#allocation2 + $0x38] sm:$0xff]
    %v302 = vld [vmem:[#allocation2 + $0x40] sm:$0xff]
    %v303 = vld [vmem:[#allocation2 + $0x48] sm:$0xff]
    %v304 = vld [vmem:[#allocation2 + $0x50] sm:$0xff]
    %v305 = vld [vmem:[#allocation2 + $0x58] sm:$0xff]
    %s306 = scalar_lea.vmem [#allocation5], 16
    %v307 = vld [vmem:[%s306] sm:$0xf]
    %v308 = vld [vmem:[%s306 + $0x4] sm:$0xf]
    %v309 = vld [vmem:[%s306 + $0x8] sm:$0xf]
    %v310 = vld [vmem:[%s306 + $0xc] sm:$0xf]
    %v315 = vunpack.c.l.b16 %v307
    %v316 = vunpack.c.l.b16 %v308
    %v317 = vunpack.c.l.b16 %v309
    %v318 = vunpack.c.l.b16 %v310
    %v319 = vpack.c.b16 %v316, %v315
    %v320 = vpack.c.b16 %v318, %v317
    %v322 = vsel %vm236, %v319, 0
    %v325 = vsel %vm236, %v320, 0
    %327 = vmatprep.subr.bf16.mxu0 0
    %328 = vmatpush1.bf16.msra.mxu0 %v218
    %329 = vmatprep.subr.bf16.mxu0 0
    %330 = vmatpush1.bf16.msra.mxu0 %v219
    %331 = vmatprep.subr.bf16.mxu0 0
    %332 = vmatpush1.bf16.msra.mxu0 %v220
    %333 = vmatprep.subr.bf16.mxu0 0
    %334 = vmatpush1.bf16.msra.mxu0 %v221
    %335 = vmatprep.subr.bf16.mxu0 0
    %336 = vmatpush1.bf16.msra.mxu0 0
    %337 = vmatprep.subr.bf16.mxu0 0
    %338 = vmatpush1.bf16.msra.mxu0 0
    %339 = vmatprep.subr.bf16.mxu0 0
    %340 = vmatpush1.bf16.msra.mxu0 0
    %341 = vmatprep.subr.bf16.mxu0 0
    %342 = vmatpush1.bf16.msra.mxu0 0
    %343 = vmatprep.subr.bf16.mxu0 0
    %344 = vmatpush1.bf16.msra.mxu0 0
    %345 = vmatprep.subr.bf16.mxu0 0
    %346 = vmatpush1.bf16.msra.mxu0 0
    %347 = vmatprep.subr.bf16.mxu0 0
    %348 = vmatpush1.bf16.msra.mxu0 0
    %349 = vmatprep.subr.bf16.mxu0 0
    %350 = vmatpush1.bf16.msra.mxu0 0
    %351 = vmatprep.subr.bf16.mxu0 0
    %352 = vmatpush1.bf16.msra.mxu0 0
    %353 = vmatprep.subr.bf16.mxu0 0
    %354 = vmatpush1.bf16.msra.mxu0 0
    %355 = vmatprep.subr.bf16.mxu0 0
    %356 = vmatpush1.bf16.msra.mxu0 0
    %357 = vmatprep.subr.bf16.mxu0 0
    %358 = vmatpush1.bf16.msra.mxu0 0
    %359 = vmatprep.mubr.bf16.mxu0 0
    %360 = vmatmul.mubr.bf16.gmra.mrb[0].mxu0 %v322
    %v361 = vpop.f32.mrb[0].mxu0
    %v362 = vadd.f32 0.0, %v361
    %v363 = vpop.f32.mrb[0].mxu0
    %v364 = vpop.f32.mrb[0].mxu0
    %v365 = vadd.f32 0.0, %v364
    %v366 = vpop.f32.mrb[0].mxu0
    %367 = vmatprep.mubr.bf16.mxu0 0
    %368 = vmatmul.mubr.bf16.gmra.mrb[0].mxu0 %v325
    %v369 = vpop.f32.mrb[0].mxu0
    %v370 = vadd.f32 0.0, %v369
    %v371 = vpop.f32.mrb[0].mxu0
    %v372 = vpop.f32.mrb[0].mxu0
    %v373 = vadd.f32 0.0, %v372
    %v374 = vpop.f32.mrb[0].mxu0
    %375 = vdwg.mxu0
    %v376 = vpack.c.bf16 %v365, %v362
    %v377 = vpack.c.bf16 %v373, %v370
    %s378 = scalar_lea.vmem [#allocation2], 96
    %v379 = vld [vmem:[%s378] sm:$0xff]
    %v380 = vld [vmem:[%s378 + $0x8] sm:$0xff]
    %v381 = vld [vmem:[%s378 + $0x10] sm:$0xff]
    %v382 = vld [vmem:[%s378 + $0x18] sm:$0xff]
    %v383 = vld [vmem:[%s378 + $0x20] sm:$0xff]
    %v384 = vld [vmem:[%s378 + $0x28] sm:$0xff]
    %v385 = vld [vmem:[%s378 + $0x30] sm:$0xff]
    %v386 = vld [vmem:[%s378 + $0x38] sm:$0xff]
    %v387 = vld [vmem:[%s378 + $0x40] sm:$0xff]
    %v388 = vld [vmem:[%s378 + $0x48] sm:$0xff]
    %v389 = vld [vmem:[%s378 + $0x50] sm:$0xff]
    %v390 = vld [vmem:[%s378 + $0x58] sm:$0xff]
    %v403 = vunpack.c.l.b16 %v379
    %v404 = vunpack.c.h.b16 %v379
    %v405 = vunpack.c.l.b16 %v380
    %v406 = vunpack.c.h.b16 %v380
    %v407 = vunpack.c.l.b16 %v381
    %v408 = vunpack.c.h.b16 %v381
    %v409 = vunpack.c.l.b16 %v382
    %v410 = vunpack.c.h.b16 %v382
    %v411 = vunpack.c.l.b16 %v383
    %v412 = vunpack.c.h.b16 %v383
    %v413 = vunpack.c.l.b16 %v384
    %v414 = vunpack.c.h.b16 %v384
    %v415 = vunpack.c.l.b16 %v385
    %v416 = vunpack.c.h.b16 %v385
    %v417 = vunpack.c.l.b16 %v386
    %v418 = vunpack.c.h.b16 %v386
    %v419 = vunpack.c.l.b16 %v387
    %v420 = vunpack.c.h.b16 %v387
    %v421 = vunpack.c.l.b16 %v388
    %v422 = vunpack.c.h.b16 %v388
    %v423 = vunpack.c.l.b16 %v389
    %v424 = vunpack.c.h.b16 %v389
    %v425 = vunpack.c.l.b16 %v390
    %v426 = vunpack.c.h.b16 %v390
    %v427 = vpack.c.b16 %v405, %v403
    %v428 = vpack.c.b16 %v406, %v404
    %v429 = vpack.c.b16 %v409, %v407
    %v430 = vpack.c.b16 %v410, %v408
    %v431 = vpack.c.b16 %v413, %v411
    %v432 = vpack.c.b16 %v414, %v412
    %v433 = vpack.c.b16 %v417, %v415
    %v434 = vpack.c.b16 %v418, %v416
    %v435 = vpack.c.b16 %v421, %v419
    %v436 = vpack.c.b16 %v422, %v420
    %v437 = vpack.c.b16 %v425, %v423
    %v438 = vpack.c.b16 %v426, %v424
    %vm451 = vcmask 785408
    %v453 = vsel %vm451, %v376, 0
    %v456 = vsel %vm451, %v377, 0
    %458 = vmatprep.subr.bf16.mxu0 %v428
    %459 = vmatpush1.bf16.msra.mxu0 %v427
    %460 = vmatprep.subr.bf16.mxu0 %v430
    %461 = vmatpush1.bf16.msra.mxu0 %v429
    %462 = vmatprep.subr.bf16.mxu0 %v432
    %463 = vmatpush1.bf16.msra.mxu0 %v431
    %464 = vmatprep.subr.bf16.mxu0 %v434
    %465 = vmatpush1.bf16.msra.mxu0 %v433
    %466 = vmatprep.subr.bf16.mxu0 %v436
    %467 = vmatpush1.bf16.msra.mxu0 %v435
    %468 = vmatprep.subr.bf16.mxu0 %v438
    %469 = vmatpush1.bf16.msra.mxu0 %v437
    %470 = vmatprep.subr.bf16.mxu0 0
    %471 = vmatpush1.bf16.msra.mxu0 0
    %472 = vmatprep.subr.bf16.mxu0 0
    %473 = vmatpush1.bf16.msra.mxu0 0
    %474 = vmatprep.subr.bf16.mxu0 0
    %475 = vmatpush1.bf16.msra.mxu0 0
    %476 = vmatprep.subr.bf16.mxu0 0
    %477 = vmatpush1.bf16.msra.mxu0 0
    %478 = vmatprep.subr.bf16.mxu0 0
    %479 = vmatpush1.bf16.msra.mxu0 0
    %480 = vmatprep.subr.bf16.mxu0 0
    %481 = vmatpush1.bf16.msra.mxu0 0
    %482 = vmatprep.subr.bf16.mxu0 0
    %483 = vmatpush1.bf16.msra.mxu0 0
    %484 = vmatprep.subr.bf16.mxu0 0
    %485 = vmatpush1.bf16.msra.mxu0 0
    %486 = vmatprep.subr.bf16.mxu0 0
    %487 = vmatpush1.bf16.msra.mxu0 0
    %488 = vmatprep.subr.bf16.mxu0 0
    %489 = vmatpush1.bf16.msra.mxu0 0
    %490 = vmatprep.mubr.bf16.mxu0 0
    %491 = vmatmul.mubr.bf16.gmra.mrb[0].mxu0 %v453
    %v492 = vpop.f32.mrb[0].mxu0
    %v493 = vadd.f32 0.0, %v492
    %v494 = vpop.f32.mrb[0].mxu0
    %v495 = vadd.f32 0.0, %v494
    %v496 = vpop.f32.mrb[0].mxu0
    %v497 = vadd.f32 0.0, %v496
    %v498 = vpop.f32.mrb[0].mxu0
    %v499 = vadd.f32 0.0, %v498
    %500 = vmatprep.mubr.bf16.mxu0 0
    %501 = vmatmul.mubr.bf16.gmra.mrb[0].mxu0 %v456
    %v502 = vpop.f32.mrb[0].mxu0
    %v503 = vadd.f32 0.0, %v502
    %v504 = vpop.f32.mrb[0].mxu0
    %v505 = vadd.f32 0.0, %v504
    %v506 = vpop.f32.mrb[0].mxu0
    %v507 = vadd.f32 0.0, %v506
    %v508 = vpop.f32.mrb[0].mxu0
    %v509 = vadd.f32 0.0, %v508
    %510 = vdwg.mxu0
    %v523 = vunpack.c.l.b16 %v294
    %v524 = vunpack.c.h.b16 %v294
    %v525 = vunpack.c.l.b16 %v295
    %v526 = vunpack.c.h.b16 %v295
    %v527 = vunpack.c.l.b16 %v296
    %v528 = vunpack.c.h.b16 %v296
    %v529 = vunpack.c.l.b16 %v297
    %v530 = vunpack.c.h.b16 %v297
    %v531 = vunpack.c.l.b16 %v298
    %v532 = vunpack.c.h.b16 %v298
    %v533 = vunpack.c.l.b16 %v299
    %v534 = vunpack.c.h.b16 %v299
    %v535 = vunpack.c.l.b16 %v300
    %v536 = vunpack.c.h.b16 %v300
    %v537 = vunpack.c.l.b16 %v301
    %v538 = vunpack.c.h.b16 %v301
    %v539 = vunpack.c.l.b16 %v302
    %v540 = vunpack.c.h.b16 %v302
    %v541 = vunpack.c.l.b16 %v303
    %v542 = vunpack.c.h.b16 %v303
    %v543 = vunpack.c.l.b16 %v304
    %v544 = vunpack.c.h.b16 %v304
    %v545 = vunpack.c.l.b16 %v305
    %v546 = vunpack.c.h.b16 %v305
    %v547 = vpack.c.b16 %v525, %v523
    %v548 = vpack.c.b16 %v526, %v524
    %v549 = vpack.c.b16 %v529, %v527
    %v550 = vpack.c.b16 %v530, %v528
    %v551 = vpack.c.b16 %v533, %v531
    %v552 = vpack.c.b16 %v534, %v532
    %v553 = vpack.c.b16 %v537, %v535
    %v554 = vpack.c.b16 %v538, %v536
    %v555 = vpack.c.b16 %v541, %v539
    %v556 = vpack.c.b16 %v542, %v540
    %v557 = vpack.c.b16 %v545, %v543
    %v558 = vpack.c.b16 %v546, %v544
    %v572 = vsel %vm451, %v292, 0
    %v575 = vsel %vm451, %v293, 0
    %577 = vmatprep.subr.bf16.mxu0 %v548
    %578 = vmatpush1.bf16.msra.mxu0 %v547
    %579 = vmatprep.subr.bf16.mxu0 %v550
    %580 = vmatpush1.bf16.msra.mxu0 %v549
    %581 = vmatprep.subr.bf16.mxu0 %v552
    %582 = vmatpush1.bf16.msra.mxu0 %v551
    %583 = vmatprep.subr.bf16.mxu0 %v554
    %584 = vmatpush1.bf16.msra.mxu0 %v553
    %585 = vmatprep.subr.bf16.mxu0 %v556
    %586 = vmatpush1.bf16.msra.mxu0 %v555
    %587 = vmatprep.subr.bf16.mxu0 %v558
    %588 = vmatpush1.bf16.msra.mxu0 %v557
    %589 = vmatprep.subr.bf16.mxu0 0
    %590 = vmatpush1.bf16.msra.mxu0 0
    %591 = vmatprep.subr.bf16.mxu0 0
    %592 = vmatpush1.bf16.msra.mxu0 0
    %593 = vmatprep.subr.bf16.mxu0 0
    %594 = vmatpush1.bf16.msra.mxu0 0
    %595 = vmatprep.subr.bf16.mxu0 0
    %596 = vmatpush1.bf16.msra.mxu0 0
    %597 = vmatprep.subr.bf16.mxu0 0
    %598 = vmatpush1.bf16.msra.mxu0 0
    %599 = vmatprep.subr.bf16.mxu0 0
    %600 = vmatpush1.bf16.msra.mxu0 0
    %601 = vmatprep.subr.bf16.mxu0 0
    %602 = vmatpush1.bf16.msra.mxu0 0
    %603 = vmatprep.subr.bf16.mxu0 0
    %604 = vmatpush1.bf16.msra.mxu0 0
    %605 = vmatprep.subr.bf16.mxu0 0
    %606 = vmatpush1.bf16.msra.mxu0 0
    %607 = vmatprep.subr.bf16.mxu0 0
    %608 = vmatpush1.bf16.msra.mxu0 0
    %609 = vmatprep.mubr.bf16.mxu0 0
    %610 = vmatmul.mubr.bf16.gmra.mrb[0].mxu0 %v572
    %v611 = vpop.f32.mrb[0].mxu0
    %v612 = vadd.f32 %v493, %v611
    %v613 = vpop.f32.mrb[0].mxu0
    %v614 = vadd.f32 %v495, %v613
    %v615 = vpop.f32.mrb[0].mxu0
    %v616 = vadd.f32 %v497, %v615
    %v617 = vpop.f32.mrb[0].mxu0
    %v618 = vadd.f32 %v499, %v617
    %619 = vmatprep.mubr.bf16.mxu0 0
    %620 = vmatmul.mubr.bf16.gmra.mrb[0].mxu0 %v575
    %v621 = vpop.f32.mrb[0].mxu0
    %v622 = vadd.f32 %v503, %v621
    %v623 = vpop.f32.mrb[0].mxu0
    %v624 = vadd.f32 %v505, %v623
    %v625 = vpop.f32.mrb[0].mxu0
    %v626 = vadd.f32 %v507, %v625
    %v627 = vpop.f32.mrb[0].mxu0
    %v628 = vadd.f32 %v509, %v627
    %629 = vdwg.mxu0
    %s630 = scalar_lea.vmem [#allocation5], 32
    %v631 = vld [vmem:[%s630] sm:$0xf]
    %v632 = vld [vmem:[%s630 + $0x4] sm:$0xf]
    %v633 = vld [vmem:[%s630 + $0x8] sm:$0xf]
    %v634 = vld [vmem:[%s630 + $0xc] sm:$0xf]
    %v639 = vunpack.c.l.b16 %v631
    %v640 = vunpack.c.l.b16 %v632
    %v641 = vunpack.c.l.b16 %v633
    %v642 = vunpack.c.l.b16 %v634
    %v643 = vpack.c.b16 %v640, %v639
    %v644 = vpack.c.b16 %v642, %v641
    %v646 = vsel %vm236, %v643, 0
    %v649 = vsel %vm236, %v644, 0
    %651 = vmatprep.subr.bf16.mxu0 0
    %652 = vmatpush1.bf16.msra.mxu0 %v218
    %653 = vmatprep.subr.bf16.mxu0 0
    %654 = vmatpush1.bf16.msra.mxu0 %v219
    %655 = vmatprep.subr.bf16.mxu0 0
    %656 = vmatpush1.bf16.msra.mxu0 %v220
    %657 = vmatprep.subr.bf16.mxu0 0
    %658 = vmatpush1.bf16.msra.mxu0 %v221
    %659 = vmatprep.subr.bf16.mxu0 0
    %660 = vmatpush1.bf16.msra.mxu0 0
    %661 = vmatprep.subr.bf16.mxu0 0
    %662 = vmatpush1.bf16.msra.mxu0 0
    %663 = vmatprep.subr.bf16.mxu0 0
    %664 = vmatpush1.bf16.msra.mxu0 0
    %665 = vmatprep.subr.bf16.mxu0 0
    %666 = vmatpush1.bf16.msra.mxu0 0
    %667 = vmatprep.subr.bf16.mxu0 0
    %668 = vmatpush1.bf16.msra.mxu0 0
    %669 = vmatprep.subr.bf16.mxu0 0
    %670 = vmatpush1.bf16.msra.mxu0 0
    %671 = vmatprep.subr.bf16.mxu0 0
    %672 = vmatpush1.bf16.msra.mxu0 0
    %673 = vmatprep.subr.bf16.mxu0 0
    %674 = vmatpush1.bf16.msra.mxu0 0
    %675 = vmatprep.subr.bf16.mxu0 0
    %676 = vmatpush1.bf16.msra.mxu0 0
    %677 = vmatprep.subr.bf16.mxu0 0
    %678 = vmatpush1.bf16.msra.mxu0 0
    %679 = vmatprep.subr.bf16.mxu0 0
    %680 = vmatpush1.bf16.msra.mxu0 0
    %681 = vmatprep.subr.bf16.mxu0 0
    %682 = vmatpush1.bf16.msra.mxu0 0
    %683 = vmatprep.mubr.bf16.mxu0 0
    %684 = vmatmul.mubr.bf16.gmra.mrb[0].mxu0 %v646
    %v685 = vpop.f32.mrb[0].mxu0
    %v686 = vadd.f32 0.0, %v685
    %v687 = vpop.f32.mrb[0].mxu0
    %v688 = vpop.f32.mrb[0].mxu0
    %v689 = vadd.f32 0.0, %v688
    %v690 = vpop.f32.mrb[0].mxu0
    %691 = vmatprep.mubr.bf16.mxu0 0
    %692 = vmatmul.mubr.bf16.gmra.mrb[0].mxu0 %v649
    %v693 = vpop.f32.mrb[0].mxu0
    %v694 = vadd.f32 0.0, %v693
    %v695 = vpop.f32.mrb[0].mxu0
    %v696 = vpop.f32.mrb[0].mxu0
    %v697 = vadd.f32 0.0, %v696
    %v698 = vpop.f32.mrb[0].mxu0
    %699 = vdwg.mxu0
    %v700 = vpack.c.bf16 %v689, %v686
    %v701 = vpack.c.bf16 %v697, %v694
    %s702 = scalar_lea.vmem [#allocation2], 192
    %v703 = vld [vmem:[%s702] sm:$0xff]
    %v704 = vld [vmem:[%s702 + $0x8] sm:$0xff]
    %v705 = vld [vmem:[%s702 + $0x10] sm:$0xff]
    %v706 = vld [vmem:[%s702 + $0x18] sm:$0xff]
    %v707 = vld [vmem:[%s702 + $0x20] sm:$0xff]
    %v708 = vld [vmem:[%s702 + $0x28] sm:$0xff]
    %v709 = vld [vmem:[%s702 + $0x30] sm:$0xff]
    %v710 = vld [vmem:[%s702 + $0x38] sm:$0xff]
    %v711 = vld [vmem:[%s702 + $0x40] sm:$0xff]
    %v712 = vld [vmem:[%s702 + $0x48] sm:$0xff]
    %v713 = vld [vmem:[%s702 + $0x50] sm:$0xff]
    %v714 = vld [vmem:[%s702 + $0x58] sm:$0xff]
    %v727 = vunpack.c.l.b16 %v703
    %v728 = vunpack.c.h.b16 %v703
    %v729 = vunpack.c.l.b16 %v704
    %v730 = vunpack.c.h.b16 %v704
    %v731 = vunpack.c.l.b16 %v705
    %v732 = vunpack.c.h.b16 %v705
    %v733 = vunpack.c.l.b16 %v706
    %v734 = vunpack.c.h.b16 %v706
    %v735 = vunpack.c.l.b16 %v707
    %v736 = vunpack.c.h.b16 %v707
    %v737 = vunpack.c.l.b16 %v708
    %v738 = vunpack.c.h.b16 %v708
    %v739 = vunpack.c.l.b16 %v709
    %v740 = vunpack.c.h.b16 %v709
    %v741 = vunpack.c.l.b16 %v710
    %v742 = vunpack.c.h.b16 %v710
    %v743 = vunpack.c.l.b16 %v711
    %v744 = vunpack.c.h.b16 %v711
    %v745 = vunpack.c.l.b16 %v712
    %v746 = vunpack.c.h.b16 %v712
    %v747 = vunpack.c.l.b16 %v713
    %v748 = vunpack.c.h.b16 %v713
    %v749 = vunpack.c.l.b16 %v714
    %v750 = vunpack.c.h.b16 %v714
    %v751 = vpack.c.b16 %v729, %v727
    %v752 = vpack.c.b16 %v730, %v728
    %v753 = vpack.c.b16 %v733, %v731
    %v754 = vpack.c.b16 %v734, %v732
    %v755 = vpack.c.b16 %v737, %v735
    %v756 = vpack.c.b16 %v738, %v736
    %v757 = vpack.c.b16 %v741, %v739
    %v758 = vpack.c.b16 %v742, %v740
    %v759 = vpack.c.b16 %v745, %v743
    %v760 = vpack.c.b16 %v746, %v744
    %v761 = vpack.c.b16 %v749, %v747
    %v762 = vpack.c.b16 %v750, %v748
    %v776 = vsel %vm451, %v700, 0
    %v779 = vsel %vm451, %v701, 0
    %781 = vmatprep.subr.bf16.mxu0 %v752
    %782 = vmatpush1.bf16.msra.mxu0 %v751
    %783 = vmatprep.subr.bf16.mxu0 %v754
    %784 = vmatpush1.bf16.msra.mxu0 %v753
    %785 = vmatprep.subr.bf16.mxu0 %v756
    %786 = vmatpush1.bf16.msra.mxu0 %v755
    %787 = vmatprep.subr.bf16.mxu0 %v758
    %788 = vmatpush1.bf16.msra.mxu0 %v757
    %789 = vmatprep.subr.bf16.mxu0 %v760
    %790 = vmatpush1.bf16.msra.mxu0 %v759
    %791 = vmatprep.subr.bf16.mxu0 %v762
    %792 = vmatpush1.bf16.msra.mxu0 %v761
    %793 = vmatprep.subr.bf16.mxu0 0
    %794 = vmatpush1.bf16.msra.mxu0 0
    %795 = vmatprep.subr.bf16.mxu0 0
    %796 = vmatpush1.bf16.msra.mxu0 0
    %797 = vmatprep.subr.bf16.mxu0 0
    %798 = vmatpush1.bf16.msra.mxu0 0
    %799 = vmatprep.subr.bf16.mxu0 0
    %800 = vmatpush1.bf16.msra.mxu0 0
    %801 = vmatprep.subr.bf16.mxu0 0
    %802 = vmatpush1.bf16.msra.mxu0 0
    %803 = vmatprep.subr.bf16.mxu0 0
    %804 = vmatpush1.bf16.msra.mxu0 0
    %805 = vmatprep.subr.bf16.mxu0 0
    %806 = vmatpush1.bf16.msra.mxu0 0
    %807 = vmatprep.subr.bf16.mxu0 0
    %808 = vmatpush1.bf16.msra.mxu0 0
    %809 = vmatprep.subr.bf16.mxu0 0
    %810 = vmatpush1.bf16.msra.mxu0 0
    %811 = vmatprep.subr.bf16.mxu0 0
    %812 = vmatpush1.bf16.msra.mxu0 0
    %813 = vmatprep.mubr.bf16.mxu0 0
    %814 = vmatmul.mubr.bf16.gmra.mrb[0].mxu0 %v776
    %v815 = vpop.f32.mrb[0].mxu0
    %v816 = vadd.f32 0.0, %v815
    %v817 = vpop.f32.mrb[0].mxu0
    %v818 = vadd.f32 0.0, %v817
    %v819 = vpop.f32.mrb[0].mxu0
    %v820 = vadd.f32 0.0, %v819
    %v821 = vpop.f32.mrb[0].mxu0
    %v822 = vadd.f32 0.0, %v821
    %823 = vmatprep.mubr.bf16.mxu0 0
    %824 = vmatmul.mubr.bf16.gmra.mrb[0].mxu0 %v779
    %v825 = vpop.f32.mrb[0].mxu0
    %v826 = vadd.f32 0.0, %v825
    %v827 = vpop.f32.mrb[0].mxu0
    %v828 = vadd.f32 0.0, %v827
    %v829 = vpop.f32.mrb[0].mxu0
    %v830 = vadd.f32 0.0, %v829
    %v831 = vpop.f32.mrb[0].mxu0
    %v832 = vadd.f32 0.0, %v831
    %833 = vdwg.mxu0
    %v834 = vadd.f32 %v612, %v816
    %v835 = vadd.f32 %v614, %v818
    %v836 = vadd.f32 %v616, %v820
    %v837 = vadd.f32 %v618, %v822
    %v838 = vadd.f32 %v622, %v826
    %v839 = vadd.f32 %v624, %v828
    %v840 = vadd.f32 %v626, %v830
    %v841 = vadd.f32 %v628, %v832
    %s842 = scalar_lea.vmem [#allocation5], 48
    %v843 = vld [vmem:[%s842] sm:$0xf]
    %v844 = vld [vmem:[%s842 + $0x4] sm:$0xf]
    %v845 = vld [vmem:[%s842 + $0x8] sm:$0xf]
    %v846 = vld [vmem:[%s842 + $0xc] sm:$0xf]
    %v851 = vunpack.c.l.b16 %v843
    %v852 = vunpack.c.l.b16 %v844
    %v853 = vunpack.c.l.b16 %v845
    %v854 = vunpack.c.l.b16 %v846
    %v855 = vpack.c.b16 %v852, %v851
    %v856 = vpack.c.b16 %v854, %v853
    %v858 = vsel %vm236, %v855, 0
    %v861 = vsel %vm236, %v856, 0
    %863 = vmatprep.subr.bf16.mxu0 0
    %864 = vmatpush1.bf16.msra.mxu0 %v218
    %865 = vmatprep.subr.bf16.mxu0 0
    %866 = vmatpush1.bf16.msra.mxu0 %v219
    %867 = vmatprep.subr.bf16.mxu0 0
    %868 = vmatpush1.bf16.msra.mxu0 %v220
    %869 = vmatprep.subr.bf16.mxu0 0
    %870 = vmatpush1.bf16.msra.mxu0 %v221
    %871 = vmatprep.subr.bf16.mxu0 0
    %872 = vmatpush1.bf16.msra.mxu0 0
    %873 = vmatprep.subr.bf16.mxu0 0
    %874 = vmatpush1.bf16.msra.mxu0 0
    %875 = vmatprep.subr.bf16.mxu0 0
    %876 = vmatpush1.bf16.msra.mxu0 0
    %877 = vmatprep.subr.bf16.mxu0 0
    %878 = vmatpush1.bf16.msra.mxu0 0
    %879 = vmatprep.subr.bf16.mxu0 0
    %880 = vmatpush1.bf16.msra.mxu0 0
    %881 = vmatprep.subr.bf16.mxu0 0
    %882 = vmatpush1.bf16.msra.mxu0 0
    %883 = vmatprep.subr.bf16.mxu0 0
    %884 = vmatpush1.bf16.msra.mxu0 0
    %885 = vmatprep.subr.bf16.mxu0 0
    %886 = vmatpush1.bf16.msra.mxu0 0
    %887 = vmatprep.subr.bf16.mxu0 0
    %888 = vmatpush1.bf16.msra.mxu0 0
    %889 = vmatprep.subr.bf16.mxu0 0
    %890 = vmatpush1.bf16.msra.mxu0 0
    %891 = vmatprep.subr.bf16.mxu0 0
    %892 = vmatpush1.bf16.msra.mxu0 0
    %893 = vmatprep.subr.bf16.mxu0 0
    %894 = vmatpush1.bf16.msra.mxu0 0
    %895 = vmatprep.mubr.bf16.mxu0 0
    %896 = vmatmul.mubr.bf16.gmra.mrb[0].mxu0 %v858
    %v897 = vpop.f32.mrb[0].mxu0
    %v898 = vadd.f32 0.0, %v897
    %v899 = vpop.f32.mrb[0].mxu0
    %v900 = vpop.f32.mrb[0].mxu0
    %v901 = vadd.f32 0.0, %v900
    %v902 = vpop.f32.mrb[0].mxu0
    %903 = vmatprep.mubr.bf16.mxu0 0
    %904 = vmatmul.mubr.bf16.gmra.mrb[0].mxu0 %v861
    %v905 = vpop.f32.mrb[0].mxu0
    %v906 = vadd.f32 0.0, %v905
    %v907 = vpop.f32.mrb[0].mxu0
    %v908 = vpop.f32.mrb[0].mxu0
    %v909 = vadd.f32 0.0, %v908
    %v910 = vpop.f32.mrb[0].mxu0
    %911 = vdwg.mxu0
    %v912 = vpack.c.bf16 %v901, %v898
    %v913 = vpack.c.bf16 %v909, %v906
    %s914 = scalar_lea.vmem [#allocation2], 288
    %v915 = vld [vmem:[%s914] sm:$0xff]
    %v916 = vld [vmem:[%s914 + $0x8] sm:$0xff]
    %v917 = vld [vmem:[%s914 + $0x10] sm:$0xff]
    %v918 = vld [vmem:[%s914 + $0x18] sm:$0xff]
    %v919 = vld [vmem:[%s914 + $0x20] sm:$0xff]
    %v920 = vld [vmem:[%s914 + $0x28] sm:$0xff]
    %v921 = vld [vmem:[%s914 + $0x30] sm:$0xff]
    %v922 = vld [vmem:[%s914 + $0x38] sm:$0xff]
    %v923 = vld [vmem:[%s914 + $0x40] sm:$0xff]
    %v924 = vld [vmem:[%s914 + $0x48] sm:$0xff]
    %v925 = vld [vmem:[%s914 + $0x50] sm:$0xff]
    %v926 = vld [vmem:[%s914 + $0x58] sm:$0xff]
    %v939 = vunpack.c.l.b16 %v915
    %v940 = vunpack.c.h.b16 %v915
    %v941 = vunpack.c.l.b16 %v916
    %v942 = vunpack.c.h.b16 %v916
    %v943 = vunpack.c.l.b16 %v917
    %v944 = vunpack.c.h.b16 %v917
    %v945 = vunpack.c.l.b16 %v918
    %v946 = vunpack.c.h.b16 %v918
    %v947 = vunpack.c.l.b16 %v919
    %v948 = vunpack.c.h.b16 %v919
    %v949 = vunpack.c.l.b16 %v920
    %v950 = vunpack.c.h.b16 %v920
    %v951 = vunpack.c.l.b16 %v921
    %v952 = vunpack.c.h.b16 %v921
    %v953 = vunpack.c.l.b16 %v922
    %v954 = vunpack.c.h.b16 %v922
    %v955 = vunpack.c.l.b16 %v923
    %v956 = vunpack.c.h.b16 %v923
    %v957 = vunpack.c.l.b16 %v924
    %v958 = vunpack.c.h.b16 %v924
    %v959 = vunpack.c.l.b16 %v925
    %v960 = vunpack.c.h.b16 %v925
    %v961 = vunpack.c.l.b16 %v926
    %v962 = vunpack.c.h.b16 %v926
    %v963 = vpack.c.b16 %v941, %v939
    %v964 = vpack.c.b16 %v942, %v940
    %v965 = vpack.c.b16 %v945, %v943
    %v966 = vpack.c.b16 %v946, %v944
    %v967 = vpack.c.b16 %v949, %v947
    %v968 = vpack.c.b16 %v950, %v948
    %v969 = vpack.c.b16 %v953, %v951
    %v970 = vpack.c.b16 %v954, %v952
    %v971 = vpack.c.b16 %v957, %v955
    %v972 = vpack.c.b16 %v958, %v956
    %v973 = vpack.c.b16 %v961, %v959
    %v974 = vpack.c.b16 %v962, %v960
    %v988 = vsel %vm451, %v912, 0
    %v991 = vsel %vm451, %v913, 0
    %993 = vmatprep.subr.bf16.mxu0 %v964
    %994 = vmatpush1.bf16.msra.mxu0 %v963
    %995 = vmatprep.subr.bf16.mxu0 %v966
    %996 = vmatpush1.bf16.msra.mxu0 %v965
    %997 = vmatprep.subr.bf16.mxu0 %v968
    %998 = vmatpush1.bf16.msra.mxu0 %v967
    %999 = vmatprep.subr.bf16.mxu0 %v970
    %1000 = vmatpush1.bf16.msra.mxu0 %v969
    %1001 = vmatprep.subr.bf16.mxu0 %v972
    %1002 = vmatpush1.bf16.msra.mxu0 %v971
    %1003 = vmatprep.subr.bf16.mxu0 %v974
    %1004 = vmatpush1.bf16.msra.mxu0 %v973
    %1005 = vmatprep.subr.bf16.mxu0 0
    %1006 = vmatpush1.bf16.msra.mxu0 0
    %1007 = vmatprep.subr.bf16.mxu0 0
    %1008 = vmatpush1.bf16.msra.mxu0 0
    %1009 = vmatprep.subr.bf16.mxu0 0
    %1010 = vmatpush1.bf16.msra.mxu0 0
    %1011 = vmatprep.subr.bf16.mxu0 0
    %1012 = vmatpush1.bf16.msra.mxu0 0
    %1013 = vmatprep.subr.bf16.mxu0 0
    %1014 = vmatpush1.bf16.msra.mxu0 0
    %1015 = vmatprep.subr.bf16.mxu0 0
    %1016 = vmatpush1.bf16.msra.mxu0 0
    %1017 = vmatprep.subr.bf16.mxu0 0
    %1018 = vmatpush1.bf16.msra.mxu0 0
    %1019 = vmatprep.subr.bf16.mxu0 0
    %1020 = vmatpush1.bf16.msra.mxu0 0
    %1021 = vmatprep.subr.bf16.mxu0 0
    %1022 = vmatpush1.bf16.msra.mxu0 0
    %1023 = vmatprep.subr.bf16.mxu0 0
    %1024 = vmatpush1.bf16.msra.mxu0 0
    %1025 = vmatprep.mubr.bf16.mxu0 0
    %1026 = vmatmul.mubr.bf16.gmra.mrb[0].mxu0 %v988
    %v1027 = vpop.f32.mrb[0].mxu0
    %v1028 = vadd.f32 0.0, %v1027
    %v1029 = vpop.f32.mrb[0].mxu0
    %v1030 = vadd.f32 0.0, %v1029
    %v1031 = vpop.f32.mrb[0].mxu0
    %v1032 = vadd.f32 0.0, %v1031
    %v1033 = vpop.f32.mrb[0].mxu0
    %v1034 = vadd.f32 0.0, %v1033
    %1035 = vmatprep.mubr.bf16.mxu0 0
    %1036 = vmatmul.mubr.bf16.gmra.mrb[0].mxu0 %v991
    %v1037 = vpop.f32.mrb[0].mxu0
    %v1038 = vadd.f32 0.0, %v1037
    %v1039 = vpop.f32.mrb[0].mxu0
    %v1040 = vadd.f32 0.0, %v1039
    %v1041 = vpop.f32.mrb[0].mxu0
    %v1042 = vadd.f32 0.0, %v1041
    %v1043 = vpop.f32.mrb[0].mxu0
    %v1044 = vadd.f32 0.0, %v1043
    %1045 = vdwg.mxu0
    %v1046 = vadd.f32 %v834, %v1028
    %v1047 = vadd.f32 %v835, %v1030
    %v1048 = vadd.f32 %v836, %v1032
    %v1049 = vadd.f32 %v837, %v1034
    %v1050 = vadd.f32 %v838, %v1038
    %v1051 = vadd.f32 %v839, %v1040
    %v1052 = vadd.f32 %v840, %v1042
    %v1053 = vadd.f32 %v841, %v1044
    %v1054 = vld [vmem:[#allocation7] sm:$0x3]
    %v1056 = vlaneseq
    %v1057 = vshrl.u32 %v1056, 7
    %v1058 = vsub.s32 0, %v1057
    %v1059 = vrot.slane %v1054, %v1058
    %v1060 = vlaneseq
    %v1061 = vshrl.u32 %v1060, 7
    %v1062 = vsub.s32 1, %v1061
    %v1063 = vrot.slane %v1054, %v1062
    %v1066 = vadd.f32 %v1046, %v1059
    %v1067 = vadd.f32 %v1047, %v1063
    %v1068 = vadd.f32 %v1048, %v1059
    %v1069 = vadd.f32 %v1049, %v1063
    %v1070 = vadd.f32 %v1050, %v1059
    %v1071 = vadd.f32 %v1051, %v1063
    %v1072 = vadd.f32 %v1052, %v1059
    %v1073 = vadd.f32 %v1053, %v1063
    %v1074 = vmax.f32 %v1066, 0.0
    %v1075 = vmax.f32 %v1067, 0.0
    %v1076 = vmax.f32 %v1068, 0.0
    %v1077 = vmax.f32 %v1069, 0.0
    %v1078 = vmax.f32 %v1070, 0.0
    %v1079 = vmax.f32 %v1071, 0.0
    %v1080 = vmax.f32 %v1072, 0.0
    %v1081 = vmax.f32 %v1073, 0.0
    %v1082 = vpack.c.bf16 %v1076, %v1074
    %v1083 = vpack.c.bf16 %v1077, %v1075
    %v1084 = vpack.c.bf16 %v1080, %v1078
    %v1085 = vpack.c.bf16 %v1081, %v1079
    %v1086 = vld [vmem:[#allocation8] sm:$0xf]
    %v1087 = vld [vmem:[#allocation8 + $0x4] sm:$0xf]
    %v1090 = vunpack.c.l.b16 %v1086
    %v1091 = vunpack.c.l.b16 %v1087
    %v1092 = vpack.c.b16 %v1091, %v1090
    %vm1093 = vcmask 261120
    %v1095 = vsel %vm1093, %v1092, 0
    %1097 = vmatprep.subr.bf16.mxu0 %v1083
    %1098 = vmatpush1.bf16.msra.mxu0 %v1082
    %1099 = vmatprep.subr.bf16.mxu0 %v1085
    %1100 = vmatpush1.bf16.msra.mxu0 %v1084
    %1101 = vmatprep.subr.bf16.mxu0 0
    %1102 = vmatpush1.bf16.msra.mxu0 0
    %1103 = vmatprep.subr.bf16.mxu0 0
    %1104 = vmatpush1.bf16.msra.mxu0 0
    %1105 = vmatprep.subr.bf16.mxu0 0
    %1106 = vmatpush1.bf16.msra.mxu0 0
    %1107 = vmatprep.subr.bf16.mxu0 0
    %1108 = vmatpush1.bf16.msra.mxu0 0
    %1109 = vmatprep.subr.bf16.mxu0 0
    %1110 = vmatpush1.bf16.msra.mxu0 0
    %1111 = vmatprep.subr.bf16.mxu0 0
    %1112 = vmatpush1.bf16.msra.mxu0 0
    %1113 = vmatprep.subr.bf16.mxu0 0
    %1114 = vmatpush1.bf16.msra.mxu0 0
    %1115 = vmatprep.subr.bf16.mxu0 0
    %1116 = vmatpush1.bf16.msra.mxu0 0
    %1117 = vmatprep.subr.bf16.mxu0 0
    %1118 = vmatpush1.bf16.msra.mxu0 0
    %1119 = vmatprep.subr.bf16.mxu0 0
    %1120 = vmatpush1.bf16.msra.mxu0 0
    %1121 = vmatprep.subr.bf16.mxu0 0
    %1122 = vmatpush1.bf16.msra.mxu0 0
    %1123 = vmatprep.subr.bf16.mxu0 0
    %1124 = vmatpush1.bf16.msra.mxu0 0
    %1125 = vmatprep.subr.bf16.mxu0 0
    %1126 = vmatpush1.bf16.msra.mxu0 0
    %1127 = vmatprep.subr.bf16.mxu0 0
    %1128 = vmatpush1.bf16.msra.mxu0 0
    %1129 = vmatprep.mubr.bf16.mxu0 0
    %1130 = vmatmul.mubr.bf16.gmra.mrb[0].mxu0 %v1095
    %v1131 = vpop.f32.mrb[0].mxu0
    %v1132 = vadd.f32 0.0, %v1131
    %v1133 = vpop.f32.mrb[0].mxu0
    %v1134 = vadd.f32 0.0, %v1133
    %v1135 = vpop.f32.mrb[0].mxu0
    %v1136 = vadd.f32 0.0, %v1135
    %v1137 = vpop.f32.mrb[0].mxu0
    %v1138 = vadd.f32 0.0, %v1137
    %1139 = vdwg.mxu0
    %v1140 = vpack.c.bf16 %v1136, %v1132
    %v1141 = vpack.c.bf16 %v1138, %v1134
    %v1142 = vld [vmem:[%s4] sm:$0xff]
    %v1143 = vld [vmem:[%s4 + $0x8] sm:$0xff]
    %v1144 = vld [vmem:[%s4 + $0x10] sm:$0xff]
    %v1145 = vld [vmem:[%s4 + $0x18] sm:$0xff]
    %v1146 = vld [vmem:[%s4 + $0x20] sm:$0xff]
    %v1147 = vld [vmem:[%s4 + $0x28] sm:$0xff]
    %v1148 = vld [vmem:[%s4 + $0x30] sm:$0xff]
    %v1149 = vld [vmem:[%s4 + $0x38] sm:$0xff]
    %v1150 = vld [vmem:[%s4 + $0x40] sm:$0xff]
    %v1151 = vld [vmem:[%s4 + $0x48] sm:$0xff]
    %v1152 = vld [vmem:[%s4 + $0x50] sm:$0xff]
    %v1153 = vld [vmem:[%s4 + $0x58] sm:$0xff]
    %v1154 = vld [vmem:[%s4 + $0x60] sm:$0xff]
    %v1155 = vld [vmem:[%s4 + $0x68] sm:$0xff]
    %v1156 = vld [vmem:[%s4 + $0x70] sm:$0xff]
    %v1157 = vld [vmem:[%s4 + $0x78] sm:$0xff]
    %v1158 = vld [vmem:[%s4 + $0x80] sm:$0xff]
    %v1159 = vld [vmem:[%s4 + $0x88] sm:$0xff]
    %v1160 = vld [vmem:[%s4 + $0x90] sm:$0xff]
    %v1161 = vld [vmem:[%s4 + $0x98] sm:$0xff]
    %v1162 = vld [vmem:[%s4 + $0xa0] sm:$0xff]
    %v1163 = vld [vmem:[%s4 + $0xa8] sm:$0xff]
    %v1164 = vld [vmem:[%s4 + $0xb0] sm:$0xff]
    %v1165 = vld [vmem:[%s4 + $0xb8] sm:$0xff]
    %s1166 = scalar_lea.vmem [#allocation8], 8
    %v1167 = vld [vmem:[%s1166] sm:$0xf]
    %v1168 = vld [vmem:[%s1166 + $0x4] sm:$0xf]
    %v1171 = vunpack.c.l.b16 %v1167
    %v1172 = vunpack.c.l.b16 %v1168
    %v1173 = vpack.c.b16 %v1172, %v1171
    %v1175 = vsel %vm1093, %v1173, 0
    %1177 = vmatprep.subr.bf16.mxu0 %v1083
    %1178 = vmatpush1.bf16.msra.mxu0 %v1082
    %1179 = vmatprep.subr.bf16.mxu0 %v1085
    %1180 = vmatpush1.bf16.msra.mxu0 %v1084
    %1181 = vmatprep.subr.bf16.mxu0 0
    %1182 = vmatpush1.bf16.msra.mxu0 0
    %1183 = vmatprep.subr.bf16.mxu0 0
    %1184 = vmatpush1.bf16.msra.mxu0 0
    %1185 = vmatprep.subr.bf16.mxu0 0
    %1186 = vmatpush1.bf16.msra.mxu0 0
    %1187 = vmatprep.subr.bf16.mxu0 0
    %1188 = vmatpush1.bf16.msra.mxu0 0
    %1189 = vmatprep.subr.bf16.mxu0 0
    %1190 = vmatpush1.bf16.msra.mxu0 0
    %1191 = vmatprep.subr.bf16.mxu0 0
    %1192 = vmatpush1.bf16.msra.mxu0 0
    %1193 = vmatprep.subr.bf16.mxu0 0
    %1194 = vmatpush1.bf16.msra.mxu0 0
    %1195 = vmatprep.subr.bf16.mxu0 0
    %1196 = vmatpush1.bf16.msra.mxu0 0
    %1197 = vmatprep.subr.bf16.mxu0 0
    %1198 = vmatpush1.bf16.msra.mxu0 0
    %1199 = vmatprep.subr.bf16.mxu0 0
    %1200 = vmatpush1.bf16.msra.mxu0 0
    %1201 = vmatprep.subr.bf16.mxu0 0
    %1202 = vmatpush1.bf16.msra.mxu0 0
    %1203 = vmatprep.subr.bf16.mxu0 0
    %1204 = vmatpush1.bf16.msra.mxu0 0
    %1205 = vmatprep.subr.bf16.mxu0 0
    %1206 = vmatpush1.bf16.msra.mxu0 0
    %1207 = vmatprep.subr.bf16.mxu0 0
    %1208 = vmatpush1.bf16.msra.mxu0 0
    %1209 = vmatprep.mubr.bf16.mxu0 0
    %1210 = vmatmul.mubr.bf16.gmra.mrb[0].mxu0 %v1175
    %v1211 = vpop.f32.mrb[0].mxu0
    %v1212 = vadd.f32 0.0, %v1211
    %v1213 = vpop.f32.mrb[0].mxu0
    %v1214 = vadd.f32 0.0, %v1213
    %v1215 = vpop.f32.mrb[0].mxu0
    %v1216 = vadd.f32 0.0, %v1215
    %v1217 = vpop.f32.mrb[0].mxu0
    %v1218 = vadd.f32 0.0, %v1217
    %1219 = vdwg.mxu0
    %v1220 = vpack.c.bf16 %v1216, %v1212
    %v1221 = vpack.c.bf16 %v1218, %v1214
    %s1222 = scalar_lea.vmem %s4, 192
    %v1223 = vld [vmem:[%s1222] sm:$0xff]
    %v1224 = vld [vmem:[%s1222 + $0x8] sm:$0xff]
    %v1225 = vld [vmem:[%s1222 + $0x10] sm:$0xff]
    %v1226 = vld [vmem:[%s1222 + $0x18] sm:$0xff]
    %v1227 = vld [vmem:[%s1222 + $0x20] sm:$0xff]
    %v1228 = vld [vmem:[%s1222 + $0x28] sm:$0xff]
    %v1229 = vld [vmem:[%s1222 + $0x30] sm:$0xff]
    %v1230 = vld [vmem:[%s1222 + $0x38] sm:$0xff]
    %v1231 = vld [vmem:[%s1222 + $0x40] sm:$0xff]
    %v1232 = vld [vmem:[%s1222 + $0x48] sm:$0xff]
    %v1233 = vld [vmem:[%s1222 + $0x50] sm:$0xff]
    %v1234 = vld [vmem:[%s1222 + $0x58] sm:$0xff]
    %v1235 = vld [vmem:[%s1222 + $0x60] sm:$0xff]
    %v1236 = vld [vmem:[%s1222 + $0x68] sm:$0xff]
    %v1237 = vld [vmem:[%s1222 + $0x70] sm:$0xff]
    %v1238 = vld [vmem:[%s1222 + $0x78] sm:$0xff]
    %v1239 = vld [vmem:[%s1222 + $0x80] sm:$0xff]
    %v1240 = vld [vmem:[%s1222 + $0x88] sm:$0xff]
    %v1241 = vld [vmem:[%s1222 + $0x90] sm:$0xff]
    %v1242 = vld [vmem:[%s1222 + $0x98] sm:$0xff]
    %v1243 = vld [vmem:[%s1222 + $0xa0] sm:$0xff]
    %v1244 = vld [vmem:[%s1222 + $0xa8] sm:$0xff]
    %v1245 = vld [vmem:[%s1222 + $0xb0] sm:$0xff]
    %v1246 = vld [vmem:[%s1222 + $0xb8] sm:$0xff]
    %v1271 = vunpack.c.l.b16 %v1223
    %v1272 = vunpack.c.h.b16 %v1223
    %v1273 = vunpack.c.l.b16 %v1224
    %v1274 = vunpack.c.h.b16 %v1224
    %v1275 = vunpack.c.l.b16 %v1225
    %v1276 = vunpack.c.h.b16 %v1225
    %v1277 = vunpack.c.l.b16 %v1226
    %v1278 = vunpack.c.h.b16 %v1226
    %v1279 = vunpack.c.l.b16 %v1227
    %v1280 = vunpack.c.h.b16 %v1227
    %v1281 = vunpack.c.l.b16 %v1228
    %v1282 = vunpack.c.h.b16 %v1228
    %v1283 = vunpack.c.l.b16 %v1229
    %v1284 = vunpack.c.h.b16 %v1229
    %v1285 = vunpack.c.l.b16 %v1230
    %v1286 = vunpack.c.h.b16 %v1230
    %v1287 = vunpack.c.l.b16 %v1231
    %v1288 = vunpack.c.h.b16 %v1231
    %v1289 = vunpack.c.l.b16 %v1232
    %v1290 = vunpack.c.h.b16 %v1232
    %v1291 = vunpack.c.l.b16 %v1233
    %v1292 = vunpack.c.h.b16 %v1233
    %v1293 = vunpack.c.l.b16 %v1234
    %v1294 = vunpack.c.h.b16 %v1234
    %v1295 = vunpack.c.l.b16 %v1235
    %v1296 = vunpack.c.h.b16 %v1235
    %v1297 = vunpack.c.l.b16 %v1236
    %v1298 = vunpack.c.h.b16 %v1236
    %v1299 = vunpack.c.l.b16 %v1237
    %v1300 = vunpack.c.h.b16 %v1237
    %v1301 = vunpack.c.l.b16 %v1238
    %v1302 = vunpack.c.h.b16 %v1238
    %v1303 = vunpack.c.l.b16 %v1239
    %v1304 = vunpack.c.h.b16 %v1239
    %v1305 = vunpack.c.l.b16 %v1240
    %v1306 = vunpack.c.h.b16 %v1240
    %v1307 = vunpack.c.l.b16 %v1241
    %v1308 = vunpack.c.h.b16 %v1241
    %v1309 = vunpack.c.l.b16 %v1242
    %v1310 = vunpack.c.h.b16 %v1242
    %v1311 = vunpack.c.l.b16 %v1243
    %v1312 = vunpack.c.h.b16 %v1243
    %v1313 = vunpack.c.l.b16 %v1244
    %v1314 = vunpack.c.h.b16 %v1244
    %v1315 = vunpack.c.l.b16 %v1245
    %v1316 = vunpack.c.h.b16 %v1245
    %v1317 = vunpack.c.l.b16 %v1246
    %v1318 = vunpack.c.h.b16 %v1246
    %v1319 = vpack.c.b16 %v1273, %v1271
    %v1320 = vpack.c.b16 %v1274, %v1272
    %v1321 = vpack.c.b16 %v1277, %v1275
    %v1322 = vpack.c.b16 %v1278, %v1276
    %v1323 = vpack.c.b16 %v1281, %v1279
    %v1324 = vpack.c.b16 %v1282, %v1280
    %v1325 = vpack.c.b16 %v1285, %v1283
    %v1326 = vpack.c.b16 %v1286, %v1284
    %v1327 = vpack.c.b16 %v1289, %v1287
    %v1328 = vpack.c.b16 %v1290, %v1288
    %v1329 = vpack.c.b16 %v1293, %v1291
    %v1330 = vpack.c.b16 %v1294, %v1292
    %v1331 = vpack.c.b16 %v1297, %v1295
    %v1332 = vpack.c.b16 %v1298, %v1296
    %v1333 = vpack.c.b16 %v1301, %v1299
    %v1334 = vpack.c.b16 %v1302, %v1300
    %v1335 = vpack.c.b16 %v1305, %v1303
    %v1336 = vpack.c.b16 %v1306, %v1304
    %v1337 = vpack.c.b16 %v1309, %v1307
    %v1338 = vpack.c.b16 %v1310, %v1308
    %v1339 = vpack.c.b16 %v1313, %v1311
    %v1340 = vpack.c.b16 %v1314, %v1312
    %v1341 = vpack.c.b16 %v1317, %v1315
    %v1342 = vpack.c.b16 %v1318, %v1316
    %v1368 = vsel %vm236, %v1221, 0
    %1370 = vmatprep.subr.bf16.mxu0 %v1320
    %1371 = vmatpush1.bf16.msra.mxu0 %v1319
    %1372 = vmatprep.subr.bf16.mxu0 %v1322
    %1373 = vmatpush1.bf16.msra.mxu0 %v1321
    %1374 = vmatprep.subr.bf16.mxu0 %v1324
    %1375 = vmatpush1.bf16.msra.mxu0 %v1323
    %1376 = vmatprep.subr.bf16.mxu0 %v1326
    %1377 = vmatpush1.bf16.msra.mxu0 %v1325
    %1378 = vmatprep.subr.bf16.mxu0 %v1328
    %1379 = vmatpush1.bf16.msra.mxu0 %v1327
    %1380 = vmatprep.subr.bf16.mxu0 %v1330
    %1381 = vmatpush1.bf16.msra.mxu0 %v1329
    %1382 = vmatprep.subr.bf16.mxu0 %v1332
    %1383 = vmatpush1.bf16.msra.mxu0 %v1331
    %1384 = vmatprep.subr.bf16.mxu0 %v1334
    %1385 = vmatpush1.bf16.msra.mxu0 %v1333
    %1386 = vmatprep.subr.bf16.mxu0 %v1336
    %1387 = vmatpush1.bf16.msra.mxu0 %v1335
    %1388 = vmatprep.subr.bf16.mxu0 %v1338
    %1389 = vmatpush1.bf16.msra.mxu0 %v1337
    %1390 = vmatprep.subr.bf16.mxu0 %v1340
    %1391 = vmatpush1.bf16.msra.mxu0 %v1339
    %1392 = vmatprep.subr.bf16.mxu0 %v1342
    %1393 = vmatpush1.bf16.msra.mxu0 %v1341
    %1394 = vmatprep.subr.bf16.mxu0 0
    %1395 = vmatpush1.bf16.msra.mxu0 0
    %1396 = vmatprep.subr.bf16.mxu0 0
    %1397 = vmatpush1.bf16.msra.mxu0 0
    %1398 = vmatprep.subr.bf16.mxu0 0
    %1399 = vmatpush1.bf16.msra.mxu0 0
    %1400 = vmatprep.subr.bf16.mxu0 0
    %1401 = vmatpush1.bf16.msra.mxu0 0
    %1402 = vmatprep.mubr.bf16.mxu0 %v1368
    %1403 = vmatmul.mubr.bf16.gmra.mrb[0].mxu0 %v1220
    %v1404 = vpop.f32.mrb[0].mxu0
    %v1405 = vadd.f32 0.0, %v1404
    %v1406 = vpop.f32.mrb[0].mxu0
    %v1407 = vadd.f32 0.0, %v1406
    %v1408 = vpop.f32.mrb[0].mxu0
    %v1409 = vadd.f32 0.0, %v1408
    %v1410 = vpop.f32.mrb[0].mxu0
    %v1411 = vadd.f32 0.0, %v1410
    %1412 = vdwg.mxu0
    %v1437 = vunpack.c.l.b16 %v1142
    %v1438 = vunpack.c.h.b16 %v1142
    %v1439 = vunpack.c.l.b16 %v1143
    %v1440 = vunpack.c.h.b16 %v1143
    %v1441 = vunpack.c.l.b16 %v1144
    %v1442 = vunpack.c.h.b16 %v1144
    %v1443 = vunpack.c.l.b16 %v1145
    %v1444 = vunpack.c.h.b16 %v1145
    %v1445 = vunpack.c.l.b16 %v1146
    %v1446 = vunpack.c.h.b16 %v1146
    %v1447 = vunpack.c.l.b16 %v1147
    %v1448 = vunpack.c.h.b16 %v1147
    %v1449 = vunpack.c.l.b16 %v1148
    %v1450 = vunpack.c.h.b16 %v1148
    %v1451 = vunpack.c.l.b16 %v1149
    %v1452 = vunpack.c.h.b16 %v1149
    %v1453 = vunpack.c.l.b16 %v1150
    %v1454 = vunpack.c.h.b16 %v1150
    %v1455 = vunpack.c.l.b16 %v1151
    %v1456 = vunpack.c.h.b16 %v1151
    %v1457 = vunpack.c.l.b16 %v1152
    %v1458 = vunpack.c.h.b16 %v1152
    %v1459 = vunpack.c.l.b16 %v1153
    %v1460 = vunpack.c.h.b16 %v1153
    %v1461 = vunpack.c.l.b16 %v1154
    %v1462 = vunpack.c.h.b16 %v1154
    %v1463 = vunpack.c.l.b16 %v1155
    %v1464 = vunpack.c.h.b16 %v1155
    %v1465 = vunpack.c.l.b16 %v1156
    %v1466 = vunpack.c.h.b16 %v1156
    %v1467 = vunpack.c.l.b16 %v1157
    %v1468 = vunpack.c.h.b16 %v1157
    %v1469 = vunpack.c.l.b16 %v1158
    %v1470 = vunpack.c.h.b16 %v1158
    %v1471 = vunpack.c.l.b16 %v1159
    %v1472 = vunpack.c.h.b16 %v1159
    %v1473 = vunpack.c.l.b16 %v1160
    %v1474 = vunpack.c.h.b16 %v1160
    %v1475 = vunpack.c.l.b16 %v1161
    %v1476 = vunpack.c.h.b16 %v1161
    %v1477 = vunpack.c.l.b16 %v1162
    %v1478 = vunpack.c.h.b16 %v1162
    %v1479 = vunpack.c.l.b16 %v1163
    %v1480 = vunpack.c.h.b16 %v1163
    %v1481 = vunpack.c.l.b16 %v1164
    %v1482 = vunpack.c.h.b16 %v1164
    %v1483 = vunpack.c.l.b16 %v1165
    %v1484 = vunpack.c.h.b16 %v1165
    %v1485 = vpack.c.b16 %v1439, %v1437
    %v1486 = vpack.c.b16 %v1440, %v1438
    %v1487 = vpack.c.b16 %v1443, %v1441
    %v1488 = vpack.c.b16 %v1444, %v1442
    %v1489 = vpack.c.b16 %v1447, %v1445
    %v1490 = vpack.c.b16 %v1448, %v1446
    %v1491 = vpack.c.b16 %v1451, %v1449
    %v1492 = vpack.c.b16 %v1452, %v1450
    %v1493 = vpack.c.b16 %v1455, %v1453
    %v1494 = vpack.c.b16 %v1456, %v1454
    %v1495 = vpack.c.b16 %v1459, %v1457
    %v1496 = vpack.c.b16 %v1460, %v1458
    %v1497 = vpack.c.b16 %v1463, %v1461
    %v1498 = vpack.c.b16 %v1464, %v1462
    %v1499 = vpack.c.b16 %v1467, %v1465
    %v1500 = vpack.c.b16 %v1468, %v1466
    %v1501 = vpack.c.b16 %v1471, %v1469
    %v1502 = vpack.c.b16 %v1472, %v1470
    %v1503 = vpack.c.b16 %v1475, %v1473
    %v1504 = vpack.c.b16 %v1476, %v1474
    %v1505 = vpack.c.b16 %v1479, %v1477
    %v1506 = vpack.c.b16 %v1480, %v1478
    %v1507 = vpack.c.b16 %v1483, %v1481
    %v1508 = vpack.c.b16 %v1484, %v1482
    %v1534 = vsel %vm236, %v1141, 0
    %1536 = vmatprep.subr.bf16.mxu0 %v1486
    %1537 = vmatpush1.bf16.msra.mxu0 %v1485
    %1538 = vmatprep.subr.bf16.mxu0 %v1488
    %1539 = vmatpush1.bf16.msra.mxu0 %v1487
    %1540 = vmatprep.subr.bf16.mxu0 %v1490
    %1541 = vmatpush1.bf16.msra.mxu0 %v1489
    %1542 = vmatprep.subr.bf16.mxu0 %v1492
    %1543 = vmatpush1.bf16.msra.mxu0 %v1491
    %1544 = vmatprep.subr.bf16.mxu0 %v1494
    %1545 = vmatpush1.bf16.msra.mxu0 %v1493
    %1546 = vmatprep.subr.bf16.mxu0 %v1496
    %1547 = vmatpush1.bf16.msra.mxu0 %v1495
    %1548 = vmatprep.subr.bf16.mxu0 %v1498
    %1549 = vmatpush1.bf16.msra.mxu0 %v1497
    %1550 = vmatprep.subr.bf16.mxu0 %v1500
    %1551 = vmatpush1.bf16.msra.mxu0 %v1499
    %1552 = vmatprep.subr.bf16.mxu0 %v1502
    %1553 = vmatpush1.bf16.msra.mxu0 %v1501
    %1554 = vmatprep.subr.bf16.mxu0 %v1504
    %1555 = vmatpush1.bf16.msra.mxu0 %v1503
    %1556 = vmatprep.subr.bf16.mxu0 %v1506
    %1557 = vmatpush1.bf16.msra.mxu0 %v1505
    %1558 = vmatprep.subr.bf16.mxu0 %v1508
    %1559 = vmatpush1.bf16.msra.mxu0 %v1507
    %1560 = vmatprep.subr.bf16.mxu0 0
    %1561 = vmatpush1.bf16.msra.mxu0 0
    %1562 = vmatprep.subr.bf16.mxu0 0
    %1563 = vmatpush1.bf16.msra.mxu0 0
    %1564 = vmatprep.subr.bf16.mxu0 0
    %1565 = vmatpush1.bf16.msra.mxu0 0
    %1566 = vmatprep.subr.bf16.mxu0 0
    %1567 = vmatpush1.bf16.msra.mxu0 0
    %1568 = vmatprep.mubr.bf16.mxu0 %v1534
    %1569 = vmatmul.mubr.bf16.gmra.mrb[0].mxu0 %v1140
    %v1570 = vpop.f32.mrb[0].mxu0
    %v1571 = vadd.f32 %v1405, %v1570
    %v1572 = vpop.f32.mrb[0].mxu0
    %v1573 = vadd.f32 %v1407, %v1572
    %v1574 = vpop.f32.mrb[0].mxu0
    %v1575 = vadd.f32 %v1409, %v1574
    %v1576 = vpop.f32.mrb[0].mxu0
    %v1577 = vadd.f32 %v1411, %v1576
    %1578 = vdwg.mxu0
    %s1579 = scalar_lea.vmem [#allocation8], 16
    %v1580 = vld [vmem:[%s1579] sm:$0xf]
    %v1581 = vld [vmem:[%s1579 + $0x4] sm:$0xf]
    %v1584 = vunpack.c.l.b16 %v1580
    %v1585 = vunpack.c.l.b16 %v1581
    %v1586 = vpack.c.b16 %v1585, %v1584
    %v1588 = vsel %vm1093, %v1586, 0
    %1590 = vmatprep.subr.bf16.mxu0 %v1083
    %1591 = vmatpush1.bf16.msra.mxu0 %v1082
    %1592 = vmatprep.subr.bf16.mxu0 %v1085
    %1593 = vmatpush1.bf16.msra.mxu0 %v1084
    %1594 = vmatprep.subr.bf16.mxu0 0
    %1595 = vmatpush1.bf16.msra.mxu0 0
    %1596 = vmatprep.subr.bf16.mxu0 0
    %1597 = vmatpush1.bf16.msra.mxu0 0
    %1598 = vmatprep.subr.bf16.mxu0 0
    %1599 = vmatpush1.bf16.msra.mxu0 0
    %1600 = vmatprep.subr.bf16.mxu0 0
    %1601 = vmatpush1.bf16.msra.mxu0 0
    %1602 = vmatprep.subr.bf16.mxu0 0
    %1603 = vmatpush1.bf16.msra.mxu0 0
    %1604 = vmatprep.subr.bf16.mxu0 0
    %1605 = vmatpush1.bf16.msra.mxu0 0
    %1606 = vmatprep.subr.bf16.mxu0 0
    %1607 = vmatpush1.bf16.msra.mxu0 0
    %1608 = vmatprep.subr.bf16.mxu0 0
    %1609 = vmatpush1.bf16.msra.mxu0 0
    %1610 = vmatprep.subr.bf16.mxu0 0
    %1611 = vmatpush1.bf16.msra.mxu0 0
    %1612 = vmatprep.subr.bf16.mxu0 0
    %1613 = vmatpush1.bf16.msra.mxu0 0
    %1614 = vmatprep.subr.bf16.mxu0 0
    %1615 = vmatpush1.bf16.msra.mxu0 0
    %1616 = vmatprep.subr.bf16.mxu0 0
    %1617 = vmatpush1.bf16.msra.mxu0 0
    %1618 = vmatprep.subr.bf16.mxu0 0
    %1619 = vmatpush1.bf16.msra.mxu0 0
    %1620 = vmatprep.subr.bf16.mxu0 0
    %1621 = vmatpush1.bf16.msra.mxu0 0
    %1622 = vmatprep.mubr.bf16.mxu0 0
    %1623 = vmatmul.mubr.bf16.gmra.mrb[0].mxu0 %v1588
    %v1624 = vpop.f32.mrb[0].mxu0
    %v1625 = vadd.f32 0.0, %v1624
    %v1626 = vpop.f32.mrb[0].mxu0
    %v1627 = vadd.f32 0.0, %v1626
    %v1628 = vpop.f32.mrb[0].mxu0
    %v1629 = vadd.f32 0.0, %v1628
    %v1630 = vpop.f32.mrb[0].mxu0
    %v1631 = vadd.f32 0.0, %v1630
    %1632 = vdwg.mxu0
    %v1633 = vpack.c.bf16 %v1629, %v1625
    %v1634 = vpack.c.bf16 %v1631, %v1627
    %s1635 = scalar_lea.vmem %s4, 384
    %v1636 = vld [vmem:[%s1635] sm:$0xff]
    %v1637 = vld [vmem:[%s1635 + $0x8] sm:$0xff]
    %v1638 = vld [vmem:[%s1635 + $0x10] sm:$0xff]
    %v1639 = vld [vmem:[%s1635 + $0x18] sm:$0xff]
    %v1640 = vld [vmem:[%s1635 + $0x20] sm:$0xff]
    %v1641 = vld [vmem:[%s1635 + $0x28] sm:$0xff]
    %v1642 = vld [vmem:[%s1635 + $0x30] sm:$0xff]
    %v1643 = vld [vmem:[%s1635 + $0x38] sm:$0xff]
    %v1644 = vld [vmem:[%s1635 + $0x40] sm:$0xff]
    %v1645 = vld [vmem:[%s1635 + $0x48] sm:$0xff]
    %v1646 = vld [vmem:[%s1635 + $0x50] sm:$0xff]
    %v1647 = vld [vmem:[%s1635 + $0x58] sm:$0xff]
    %v1648 = vld [vmem:[%s1635 + $0x60] sm:$0xff]
    %v1649 = vld [vmem:[%s1635 + $0x68] sm:$0xff]
    %v1650 = vld [vmem:[%s1635 + $0x70] sm:$0xff]
    %v1651 = vld [vmem:[%s1635 + $0x78] sm:$0xff]
    %v1652 = vld [vmem:[%s1635 + $0x80] sm:$0xff]
    %v1653 = vld [vmem:[%s1635 + $0x88] sm:$0xff]
    %v1654 = vld [vmem:[%s1635 + $0x90] sm:$0xff]
    %v1655 = vld [vmem:[%s1635 + $0x98] sm:$0xff]
    %v1656 = vld [vmem:[%s1635 + $0xa0] sm:$0xff]
    %v1657 = vld [vmem:[%s1635 + $0xa8] sm:$0xff]
    %v1658 = vld [vmem:[%s1635 + $0xb0] sm:$0xff]
    %v1659 = vld [vmem:[%s1635 + $0xb8] sm:$0xff]
    %v1684 = vunpack.c.l.b16 %v1636
    %v1685 = vunpack.c.h.b16 %v1636
    %v1686 = vunpack.c.l.b16 %v1637
    %v1687 = vunpack.c.h.b16 %v1637
    %v1688 = vunpack.c.l.b16 %v1638
    %v1689 = vunpack.c.h.b16 %v1638
    %v1690 = vunpack.c.l.b16 %v1639
    %v1691 = vunpack.c.h.b16 %v1639
    %v1692 = vunpack.c.l.b16 %v1640
    %v1693 = vunpack.c.h.b16 %v1640
    %v1694 = vunpack.c.l.b16 %v1641
    %v1695 = vunpack.c.h.b16 %v1641
    %v1696 = vunpack.c.l.b16 %v1642
    %v1697 = vunpack.c.h.b16 %v1642
    %v1698 = vunpack.c.l.b16 %v1643
    %v1699 = vunpack.c.h.b16 %v1643
    %v1700 = vunpack.c.l.b16 %v1644
    %v1701 = vunpack.c.h.b16 %v1644
    %v1702 = vunpack.c.l.b16 %v1645
    %v1703 = vunpack.c.h.b16 %v1645
    %v1704 = vunpack.c.l.b16 %v1646
    %v1705 = vunpack.c.h.b16 %v1646
    %v1706 = vunpack.c.l.b16 %v1647
    %v1707 = vunpack.c.h.b16 %v1647
    %v1708 = vunpack.c.l.b16 %v1648
    %v1709 = vunpack.c.h.b16 %v1648
    %v1710 = vunpack.c.l.b16 %v1649
    %v1711 = vunpack.c.h.b16 %v1649
    %v1712 = vunpack.c.l.b16 %v1650
    %v1713 = vunpack.c.h.b16 %v1650
    %v1714 = vunpack.c.l.b16 %v1651
    %v1715 = vunpack.c.h.b16 %v1651
    %v1716 = vunpack.c.l.b16 %v1652
    %v1717 = vunpack.c.h.b16 %v1652
    %v1718 = vunpack.c.l.b16 %v1653
    %v1719 = vunpack.c.h.b16 %v1653
    %v1720 = vunpack.c.l.b16 %v1654
    %v1721 = vunpack.c.h.b16 %v1654
    %v1722 = vunpack.c.l.b16 %v1655
    %v1723 = vunpack.c.h.b16 %v1655
    %v1724 = vunpack.c.l.b16 %v1656
    %v1725 = vunpack.c.h.b16 %v1656
    %v1726 = vunpack.c.l.b16 %v1657
    %v1727 = vunpack.c.h.b16 %v1657
    %v1728 = vunpack.c.l.b16 %v1658
    %v1729 = vunpack.c.h.b16 %v1658
    %v1730 = vunpack.c.l.b16 %v1659
    %v1731 = vunpack.c.h.b16 %v1659
    %v1732 = vpack.c.b16 %v1686, %v1684
    %v1733 = vpack.c.b16 %v1687, %v1685
    %v1734 = vpack.c.b16 %v1690, %v1688
    %v1735 = vpack.c.b16 %v1691, %v1689
    %v1736 = vpack.c.b16 %v1694, %v1692
    %v1737 = vpack.c.b16 %v1695, %v1693
    %v1738 = vpack.c.b16 %v1698, %v1696
    %v1739 = vpack.c.b16 %v1699, %v1697
    %v1740 = vpack.c.b16 %v1702, %v1700
    %v1741 = vpack.c.b16 %v1703, %v1701
    %v1742 = vpack.c.b16 %v1706, %v1704
    %v1743 = vpack.c.b16 %v1707, %v1705
    %v1744 = vpack.c.b16 %v1710, %v1708
    %v1745 = vpack.c.b16 %v1711, %v1709
    %v1746 = vpack.c.b16 %v1714, %v1712
    %v1747 = vpack.c.b16 %v1715, %v1713
    %v1748 = vpack.c.b16 %v1718, %v1716
    %v1749 = vpack.c.b16 %v1719, %v1717
    %v1750 = vpack.c.b16 %v1722, %v1720
    %v1751 = vpack.c.b16 %v1723, %v1721
    %v1752 = vpack.c.b16 %v1726, %v1724
    %v1753 = vpack.c.b16 %v1727, %v1725
    %v1754 = vpack.c.b16 %v1730, %v1728
    %v1755 = vpack.c.b16 %v1731, %v1729
    %v1781 = vsel %vm236, %v1634, 0
    %1783 = vmatprep.subr.bf16.mxu0 %v1733
    %1784 = vmatpush1.bf16.msra.mxu0 %v1732
    %1785 = vmatprep.subr.bf16.mxu0 %v1735
    %1786 = vmatpush1.bf16.msra.mxu0 %v1734
    %1787 = vmatprep.subr.bf16.mxu0 %v1737
    %1788 = vmatpush1.bf16.msra.mxu0 %v1736
    %1789 = vmatprep.subr.bf16.mxu0 %v1739
    %1790 = vmatpush1.bf16.msra.mxu0 %v1738
    %1791 = vmatprep.subr.bf16.mxu0 %v1741
    %1792 = vmatpush1.bf16.msra.mxu0 %v1740
    %1793 = vmatprep.subr.bf16.mxu0 %v1743
    %1794 = vmatpush1.bf16.msra.mxu0 %v1742
    %1795 = vmatprep.subr.bf16.mxu0 %v1745
    %1796 = vmatpush1.bf16.msra.mxu0 %v1744
    %1797 = vmatprep.subr.bf16.mxu0 %v1747
    %1798 = vmatpush1.bf16.msra.mxu0 %v1746
    %1799 = vmatprep.subr.bf16.mxu0 %v1749
    %1800 = vmatpush1.bf16.msra.mxu0 %v1748
    %1801 = vmatprep.subr.bf16.mxu0 %v1751
    %1802 = vmatpush1.bf16.msra.mxu0 %v1750
    %1803 = vmatprep.subr.bf16.mxu0 %v1753
    %1804 = vmatpush1.bf16.msra.mxu0 %v1752
    %1805 = vmatprep.subr.bf16.mxu0 %v1755
    %1806 = vmatpush1.bf16.msra.mxu0 %v1754
    %1807 = vmatprep.subr.bf16.mxu0 0
    %1808 = vmatpush1.bf16.msra.mxu0 0
    %1809 = vmatprep.subr.bf16.mxu0 0
    %1810 = vmatpush1.bf16.msra.mxu0 0
    %1811 = vmatprep.subr.bf16.mxu0 0
    %1812 = vmatpush1.bf16.msra.mxu0 0
    %1813 = vmatprep.subr.bf16.mxu0 0
    %1814 = vmatpush1.bf16.msra.mxu0 0
    %1815 = vmatprep.mubr.bf16.mxu0 %v1781
    %1816 = vmatmul.mubr.bf16.gmra.mrb[0].mxu0 %v1633
    %v1817 = vpop.f32.mrb[0].mxu0
    %v1818 = vadd.f32 0.0, %v1817
    %v1819 = vpop.f32.mrb[0].mxu0
    %v1820 = vadd.f32 0.0, %v1819
    %v1821 = vpop.f32.mrb[0].mxu0
    %v1822 = vadd.f32 0.0, %v1821
    %v1823 = vpop.f32.mrb[0].mxu0
    %v1824 = vadd.f32 0.0, %v1823
    %1825 = vdwg.mxu0
    %v1826 = vadd.f32 %v1571, %v1818
    %v1827 = vadd.f32 %v1573, %v1820
    %v1828 = vadd.f32 %v1575, %v1822
    %v1829 = vadd.f32 %v1577, %v1824
    %s1830 = scalar_lea.vmem [#allocation8], 24
    %v1831 = vld [vmem:[%s1830] sm:$0xf]
    %v1832 = vld [vmem:[%s1830 + $0x4] sm:$0xf]
    %v1835 = vunpack.c.l.b16 %v1831
    %v1836 = vunpack.c.l.b16 %v1832
    %v1837 = vpack.c.b16 %v1836, %v1835
    %v1839 = vsel %vm1093, %v1837, 0
    %1841 = vmatprep.subr.bf16.mxu0 %v1083
    %1842 = vmatpush1.bf16.msra.mxu0 %v1082
    %1843 = vmatprep.subr.bf16.mxu0 %v1085
    %1844 = vmatpush1.bf16.msra.mxu0 %v1084
    %1845 = vmatprep.subr.bf16.mxu0 0
    %1846 = vmatpush1.bf16.msra.mxu0 0
    %1847 = vmatprep.subr.bf16.mxu0 0
    %1848 = vmatpush1.bf16.msra.mxu0 0
    %1849 = vmatprep.subr.bf16.mxu0 0
    %1850 = vmatpush1.bf16.msra.mxu0 0
    %1851 = vmatprep.subr.bf16.mxu0 0
    %1852 = vmatpush1.bf16.msra.mxu0 0
    %1853 = vmatprep.subr.bf16.mxu0 0
    %1854 = vmatpush1.bf16.msra.mxu0 0
    %1855 = vmatprep.subr.bf16.mxu0 0
    %1856 = vmatpush1.bf16.msra.mxu0 0
    %1857 = vmatprep.subr.bf16.mxu0 0
    %1858 = vmatpush1.bf16.msra.mxu0 0
    %1859 = vmatprep.subr.bf16.mxu0 0
    %1860 = vmatpush1.bf16.msra.mxu0 0
    %1861 = vmatprep.subr.bf16.mxu0 0
    %1862 = vmatpush1.bf16.msra.mxu0 0
    %1863 = vmatprep.subr.bf16.mxu0 0
    %1864 = vmatpush1.bf16.msra.mxu0 0
    %1865 = vmatprep.subr.bf16.mxu0 0
    %1866 = vmatpush1.bf16.msra.mxu0 0
    %1867 = vmatprep.subr.bf16.mxu0 0
    %1868 = vmatpush1.bf16.msra.mxu0 0
    %1869 = vmatprep.subr.bf16.mxu0 0
    %1870 = vmatpush1.bf16.msra.mxu0 0
    %1871 = vmatprep.subr.bf16.mxu0 0
    %1872 = vmatpush1.bf16.msra.mxu0 0
    %1873 = vmatprep.mubr.bf16.mxu0 0
    %1874 = vmatmul.mubr.bf16.gmra.mrb[0].mxu0 %v1839
    %v1875 = vpop.f32.mrb[0].mxu0
    %v1876 = vadd.f32 0.0, %v1875
    %v1877 = vpop.f32.mrb[0].mxu0
    %v1878 = vadd.f32 0.0, %v1877
    %v1879 = vpop.f32.mrb[0].mxu0
    %v1880 = vadd.f32 0.0, %v1879
    %v1881 = vpop.f32.mrb[0].mxu0
    %v1882 = vadd.f32 0.0, %v1881
    %1883 = vdwg.mxu0
    %v1884 = vpack.c.bf16 %v1880, %v1876
    %v1885 = vpack.c.bf16 %v1882, %v1878
    %s1886 = scalar_lea.vmem %s4, 576
    %v1887 = vld [vmem:[%s1886] sm:$0xff]
    %v1888 = vld [vmem:[%s1886 + $0x8] sm:$0xff]
    %v1889 = vld [vmem:[%s1886 + $0x10] sm:$0xff]
    %v1890 = vld [vmem:[%s1886 + $0x18] sm:$0xff]
    %v1891 = vld [vmem:[%s1886 + $0x20] sm:$0xff]
    %v1892 = vld [vmem:[%s1886 + $0x28] sm:$0xff]
    %v1893 = vld [vmem:[%s1886 + $0x30] sm:$0xff]
    %v1894 = vld [vmem:[%s1886 + $0x38] sm:$0xff]
    %v1895 = vld [vmem:[%s1886 + $0x40] sm:$0xff]
    %v1896 = vld [vmem:[%s1886 + $0x48] sm:$0xff]
    %v1897 = vld [vmem:[%s1886 + $0x50] sm:$0xff]
    %v1898 = vld [vmem:[%s1886 + $0x58] sm:$0xff]
    %v1899 = vld [vmem:[%s1886 + $0x60] sm:$0xff]
    %v1900 = vld [vmem:[%s1886 + $0x68] sm:$0xff]
    %v1901 = vld [vmem:[%s1886 + $0x70] sm:$0xff]
    %v1902 = vld [vmem:[%s1886 + $0x78] sm:$0xff]
    %v1903 = vld [vmem:[%s1886 + $0x80] sm:$0xff]
    %v1904 = vld [vmem:[%s1886 + $0x88] sm:$0xff]
    %v1905 = vld [vmem:[%s1886 + $0x90] sm:$0xff]
    %v1906 = vld [vmem:[%s1886 + $0x98] sm:$0xff]
    %v1907 = vld [vmem:[%s1886 + $0xa0] sm:$0xff]
    %v1908 = vld [vmem:[%s1886 + $0xa8] sm:$0xff]
    %v1909 = vld [vmem:[%s1886 + $0xb0] sm:$0xff]
    %v1910 = vld [vmem:[%s1886 + $0xb8] sm:$0xff]
    %v1935 = vunpack.c.l.b16 %v1887
    %v1936 = vunpack.c.h.b16 %v1887
    %v1937 = vunpack.c.l.b16 %v1888
    %v1938 = vunpack.c.h.b16 %v1888
    %v1939 = vunpack.c.l.b16 %v1889
    %v1940 = vunpack.c.h.b16 %v1889
    %v1941 = vunpack.c.l.b16 %v1890
    %v1942 = vunpack.c.h.b16 %v1890
    %v1943 = vunpack.c.l.b16 %v1891
    %v1944 = vunpack.c.h.b16 %v1891
    %v1945 = vunpack.c.l.b16 %v1892
    %v1946 = vunpack.c.h.b16 %v1892
    %v1947 = vunpack.c.l.b16 %v1893
    %v1948 = vunpack.c.h.b16 %v1893
    %v1949 = vunpack.c.l.b16 %v1894
    %v1950 = vunpack.c.h.b16 %v1894
    %v1951 = vunpack.c.l.b16 %v1895
    %v1952 = vunpack.c.h.b16 %v1895
    %v1953 = vunpack.c.l.b16 %v1896
    %v1954 = vunpack.c.h.b16 %v1896
    %v1955 = vunpack.c.l.b16 %v1897
    %v1956 = vunpack.c.h.b16 %v1897
    %v1957 = vunpack.c.l.b16 %v1898
    %v1958 = vunpack.c.h.b16 %v1898
    %v1959 = vunpack.c.l.b16 %v1899
    %v1960 = vunpack.c.h.b16 %v1899
    %v1961 = vunpack.c.l.b16 %v1900
    %v1962 = vunpack.c.h.b16 %v1900
    %v1963 = vunpack.c.l.b16 %v1901
    %v1964 = vunpack.c.h.b16 %v1901
    %v1965 = vunpack.c.l.b16 %v1902
    %v1966 = vunpack.c.h.b16 %v1902
    %v1967 = vunpack.c.l.b16 %v1903
    %v1968 = vunpack.c.h.b16 %v1903
    %v1969 = vunpack.c.l.b16 %v1904
    %v1970 = vunpack.c.h.b16 %v1904
    %v1971 = vunpack.c.l.b16 %v1905
    %v1972 = vunpack.c.h.b16 %v1905
    %v1973 = vunpack.c.l.b16 %v1906
    %v1974 = vunpack.c.h.b16 %v1906
    %v1975 = vunpack.c.l.b16 %v1907
    %v1976 = vunpack.c.h.b16 %v1907
    %v1977 = vunpack.c.l.b16 %v1908
    %v1978 = vunpack.c.h.b16 %v1908
    %v1979 = vunpack.c.l.b16 %v1909
    %v1980 = vunpack.c.h.b16 %v1909
    %v1981 = vunpack.c.l.b16 %v1910
    %v1982 = vunpack.c.h.b16 %v1910
    %v1983 = vpack.c.b16 %v1937, %v1935
    %v1984 = vpack.c.b16 %v1938, %v1936
    %v1985 = vpack.c.b16 %v1941, %v1939
    %v1986 = vpack.c.b16 %v1942, %v1940
    %v1987 = vpack.c.b16 %v1945, %v1943
    %v1988 = vpack.c.b16 %v1946, %v1944
    %v1989 = vpack.c.b16 %v1949, %v1947
    %v1990 = vpack.c.b16 %v1950, %v1948
    %v1991 = vpack.c.b16 %v1953, %v1951
    %v1992 = vpack.c.b16 %v1954, %v1952
    %v1993 = vpack.c.b16 %v1957, %v1955
    %v1994 = vpack.c.b16 %v1958, %v1956
    %v1995 = vpack.c.b16 %v1961, %v1959
    %v1996 = vpack.c.b16 %v1962, %v1960
    %v1997 = vpack.c.b16 %v1965, %v1963
    %v1998 = vpack.c.b16 %v1966, %v1964
    %v1999 = vpack.c.b16 %v1969, %v1967
    %v2000 = vpack.c.b16 %v1970, %v1968
    %v2001 = vpack.c.b16 %v1973, %v1971
    %v2002 = vpack.c.b16 %v1974, %v1972
    %v2003 = vpack.c.b16 %v1977, %v1975
    %v2004 = vpack.c.b16 %v1978, %v1976
    %v2005 = vpack.c.b16 %v1981, %v1979
    %v2006 = vpack.c.b16 %v1982, %v1980
    %v2032 = vsel %vm236, %v1885, 0
    %2034 = vmatprep.subr.bf16.mxu0 %v1984
    %2035 = vmatpush1.bf16.msra.mxu0 %v1983
    %2036 = vmatprep.subr.bf16.mxu0 %v1986
    %2037 = vmatpush1.bf16.msra.mxu0 %v1985
    %2038 = vmatprep.subr.bf16.mxu0 %v1988
    %2039 = vmatpush1.bf16.msra.mxu0 %v1987
    %2040 = vmatprep.subr.bf16.mxu0 %v1990
    %2041 = vmatpush1.bf16.msra.mxu0 %v1989
    %2042 = vmatprep.subr.bf16.mxu0 %v1992
    %2043 = vmatpush1.bf16.msra.mxu0 %v1991
    %2044 = vmatprep.subr.bf16.mxu0 %v1994
    %2045 = vmatpush1.bf16.msra.mxu0 %v1993
    %2046 = vmatprep.subr.bf16.mxu0 %v1996
    %2047 = vmatpush1.bf16.msra.mxu0 %v1995
    %2048 = vmatprep.subr.bf16.mxu0 %v1998
    %2049 = vmatpush1.bf16.msra.mxu0 %v1997
    %2050 = vmatprep.subr.bf16.mxu0 %v2000
    %2051 = vmatpush1.bf16.msra.mxu0 %v1999
    %2052 = vmatprep.subr.bf16.mxu0 %v2002
    %2053 = vmatpush1.bf16.msra.mxu0 %v2001
    %2054 = vmatprep.subr.bf16.mxu0 %v2004
    %2055 = vmatpush1.bf16.msra.mxu0 %v2003
    %2056 = vmatprep.subr.bf16.mxu0 %v2006
    %2057 = vmatpush1.bf16.msra.mxu0 %v2005
    %2058 = vmatprep.subr.bf16.mxu0 0
    %2059 = vmatpush1.bf16.msra.mxu0 0
    %2060 = vmatprep.subr.bf16.mxu0 0
    %2061 = vmatpush1.bf16.msra.mxu0 0
    %2062 = vmatprep.subr.bf16.mxu0 0
    %2063 = vmatpush1.bf16.msra.mxu0 0
    %2064 = vmatprep.subr.bf16.mxu0 0
    %2065 = vmatpush1.bf16.msra.mxu0 0
    %2066 = vmatprep.mubr.bf16.mxu0 %v2032
    %2067 = vmatmul.mubr.bf16.gmra.mrb[0].mxu0 %v1884
    %v2068 = vpop.f32.mrb[0].mxu0
    %v2069 = vadd.f32 0.0, %v2068
    %v2070 = vpop.f32.mrb[0].mxu0
    %v2071 = vadd.f32 0.0, %v2070
    %v2072 = vpop.f32.mrb[0].mxu0
    %v2073 = vadd.f32 0.0, %v2072
    %v2074 = vpop.f32.mrb[0].mxu0
    %v2075 = vadd.f32 0.0, %v2074
    %2076 = vdwg.mxu0
    %v2077 = vadd.f32 %v1826, %v2069
    %v2078 = vadd.f32 %v1827, %v2071
    %v2079 = vadd.f32 %v1828, %v2073
    %v2080 = vadd.f32 %v1829, %v2075
    %v2081 = vld [vmem:[#allocation10] sm:$0x3]
    %v2083 = vlaneseq
    %v2084 = vshrl.u32 %v2083, 7
    %v2085 = vsub.s32 0, %v2084
    %v2086 = vrot.slane %v2081, %v2085
    %v2087 = vlaneseq
    %v2088 = vshrl.u32 %v2087, 7
    %v2089 = vsub.s32 1, %v2088
    %v2090 = vrot.slane %v2081, %v2089
    %v2093 = vadd.f32 %v2077, %v2086
    %v2094 = vadd.f32 %v2078, %v2090
    %v2095 = vadd.f32 %v2079, %v2086
    %v2096 = vadd.f32 %v2080, %v2090
    %v2097 = vmax.f32 %v2093, 0.0
    %v2098 = vmax.f32 %v2094, 0.0
    %v2099 = vmax.f32 %v2095, 0.0
    %v2100 = vmax.f32 %v2096, 0.0
    %v2101 = vpack.c.bf16 %v2099, %v2097
    %v2102 = vpack.c.bf16 %v2100, %v2098
    %v2103 = vld [vmem:[#allocation11] sm:$0xf]
    %vm2104 = vcmask 130048
    %v2106 = vsel %vm2104, %v2103, 0
    %2108 = vmatprep.subr.bf16.mxu0 %v2102
    %2109 = vmatpush1.bf16.msra.mxu0 %v2101
    %2110 = vmatprep.subr.bf16.mxu0 0
    %2111 = vmatpush1.bf16.msra.mxu0 0
    %2112 = vmatprep.subr.bf16.mxu0 0
    %2113 = vmatpush1.bf16.msra.mxu0 0
    %2114 = vmatprep.subr.bf16.mxu0 0
    %2115 = vmatpush1.bf16.msra.mxu0 0
    %2116 = vmatprep.subr.bf16.mxu0 0
    %2117 = vmatpush1.bf16.msra.mxu0 0
    %2118 = vmatprep.subr.bf16.mxu0 0
    %2119 = vmatpush1.bf16.msra.mxu0 0
    %2120 = vmatprep.subr.bf16.mxu0 0
    %2121 = vmatpush1.bf16.msra.mxu0 0
    %2122 = vmatprep.subr.bf16.mxu0 0
    %2123 = vmatpush1.bf16.msra.mxu0 0
    %2124 = vmatprep.subr.bf16.mxu0 0
    %2125 = vmatpush1.bf16.msra.mxu0 0
    %2126 = vmatprep.subr.bf16.mxu0 0
    %2127 = vmatpush1.bf16.msra.mxu0 0
    %2128 = vmatprep.subr.bf16.mxu0 0
    %2129 = vmatpush1.bf16.msra.mxu0 0
    %2130 = vmatprep.subr.bf16.mxu0 0
    %2131 = vmatpush1.bf16.msra.mxu0 0
    %2132 = vmatprep.subr.bf16.mxu0 0
    %2133 = vmatpush1.bf16.msra.mxu0 0
    %2134 = vmatprep.subr.bf16.mxu0 0
    %2135 = vmatpush1.bf16.msra.mxu0 0
    %2136 = vmatprep.subr.bf16.mxu0 0
    %2137 = vmatpush1.bf16.msra.mxu0 0
    %2138 = vmatprep.subr.bf16.mxu0 0
    %2139 = vmatpush1.bf16.msra.mxu0 0
    %2140 = vmatprep.mubr.bf16.mxu0 0
    %2141 = vmatmul.mubr.bf16.gmra.mrb[0].mxu0 %v2106
    %v2142 = vpop.f32.mrb[0].mxu0
    %v2143 = vadd.f32 0.0, %v2142
    %v2144 = vpop.f32.mrb[0].mxu0
    %v2145 = vadd.f32 0.0, %v2144
    %v2146 = vpop.f32.mrb[0].mxu0
    %v2147 = vpop.f32.mrb[0].mxu0
    %2148 = vdwg.mxu0
    %v2149 = vpack.c.bf16 %v2143, %v2143
    %v2150 = vpack.c.bf16 %v2145, %v2145
    %v2151 = vld [vmem:[%s7] sm:$0xff]
    %v2152 = vld [vmem:[%s7 + $0x8] sm:$0xff]
    %v2153 = vld [vmem:[%s7 + $0x10] sm:$0xff]
    %v2154 = vld [vmem:[%s7 + $0x18] sm:$0xff]
    %v2155 = vld [vmem:[%s7 + $0x20] sm:$0xff]
    %v2156 = vld [vmem:[%s7 + $0x28] sm:$0xff]
    %v2157 = vld [vmem:[%s7 + $0x30] sm:$0xff]
    %v2158 = vld [vmem:[%s7 + $0x38] sm:$0xff]
    %v2159 = vld [vmem:[%s7 + $0x40] sm:$0xff]
    %v2160 = vld [vmem:[%s7 + $0x48] sm:$0xff]
    %v2161 = vld [vmem:[%s7 + $0x50] sm:$0xff]
    %v2162 = vld [vmem:[%s7 + $0x58] sm:$0xff]
    %v2163 = vld [vmem:[%s7 + $0x60] sm:$0xff]
    %v2164 = vld [vmem:[%s7 + $0x68] sm:$0xff]
    %v2165 = vld [vmem:[%s7 + $0x70] sm:$0xff]
    %v2166 = vld [vmem:[%s7 + $0x78] sm:$0xff]
    %v2167 = vld [vmem:[%s7 + $0x80] sm:$0xff]
    %v2168 = vld [vmem:[%s7 + $0x88] sm:$0xff]
    %v2169 = vld [vmem:[%s7 + $0x90] sm:$0xff]
    %v2170 = vld [vmem:[%s7 + $0x98] sm:$0xff]
    %v2171 = vld [vmem:[%s7 + $0xa0] sm:$0xff]
    %v2172 = vld [vmem:[%s7 + $0xa8] sm:$0xff]
    %v2173 = vld [vmem:[%s7 + $0xb0] sm:$0xff]
    %v2174 = vld [vmem:[%s7 + $0xb8] sm:$0xff]
    %s2175 = scalar_lea.vmem [#allocation11], 4
    %v2176 = vld [vmem:[%s2175] sm:$0xf]
    %v2178 = vsel %vm2104, %v2176, 0
    %2180 = vmatprep.subr.bf16.mxu0 %v2102
    %2181 = vmatpush1.bf16.msra.mxu0 %v2101
    %2182 = vmatprep.subr.bf16.mxu0 0
    %2183 = vmatpush1.bf16.msra.mxu0 0
    %2184 = vmatprep.subr.bf16.mxu0 0
    %2185 = vmatpush1.bf16.msra.mxu0 0
    %2186 = vmatprep.subr.bf16.mxu0 0
    %2187 = vmatpush1.bf16.msra.mxu0 0
    %2188 = vmatprep.subr.bf16.mxu0 0
    %2189 = vmatpush1.bf16.msra.mxu0 0
    %2190 = vmatprep.subr.bf16.mxu0 0
    %2191 = vmatpush1.bf16.msra.mxu0 0
    %2192 = vmatprep.subr.bf16.mxu0 0
    %2193 = vmatpush1.bf16.msra.mxu0 0
    %2194 = vmatprep.subr.bf16.mxu0 0
    %2195 = vmatpush1.bf16.msra.mxu0 0
    %2196 = vmatprep.subr.bf16.mxu0 0
    %2197 = vmatpush1.bf16.msra.mxu0 0
    %2198 = vmatprep.subr.bf16.mxu0 0
    %2199 = vmatpush1.bf16.msra.mxu0 0
    %2200 = vmatprep.subr.bf16.mxu0 0
    %2201 = vmatpush1.bf16.msra.mxu0 0
    %2202 = vmatprep.subr.bf16.mxu0 0
    %2203 = vmatpush1.bf16.msra.mxu0 0
    %2204 = vmatprep.subr.bf16.mxu0 0
    %2205 = vmatpush1.bf16.msra.mxu0 0
    %2206 = vmatprep.subr.bf16.mxu0 0
    %2207 = vmatpush1.bf16.msra.mxu0 0
    %2208 = vmatprep.subr.bf16.mxu0 0
    %2209 = vmatpush1.bf16.msra.mxu0 0
    %2210 = vmatprep.subr.bf16.mxu0 0
    %2211 = vmatpush1.bf16.msra.mxu0 0
    %2212 = vmatprep.mubr.bf16.mxu0 0
    %2213 = vmatmul.mubr.bf16.gmra.mrb[0].mxu0 %v2178
    %v2214 = vpop.f32.mrb[0].mxu0
    %v2215 = vadd.f32 0.0, %v2214
    %v2216 = vpop.f32.mrb[0].mxu0
    %v2217 = vadd.f32 0.0, %v2216
    %v2218 = vpop.f32.mrb[0].mxu0
    %v2219 = vpop.f32.mrb[0].mxu0
    %2220 = vdwg.mxu0
    %v2221 = vpack.c.bf16 %v2215, %v2215
    %v2222 = vpack.c.bf16 %v2217, %v2217
    %s2223 = scalar_lea.vmem %s7, 192
    %v2224 = vld [vmem:[%s2223] sm:$0xff]
    %v2225 = vld [vmem:[%s2223 + $0x8] sm:$0xff]
    %v2226 = vld [vmem:[%s2223 + $0x10] sm:$0xff]
    %v2227 = vld [vmem:[%s2223 + $0x18] sm:$0xff]
    %v2228 = vld [vmem:[%s2223 + $0x20] sm:$0xff]
    %v2229 = vld [vmem:[%s2223 + $0x28] sm:$0xff]
    %v2230 = vld [vmem:[%s2223 + $0x30] sm:$0xff]
    %v2231 = vld [vmem:[%s2223 + $0x38] sm:$0xff]
    %v2232 = vld [vmem:[%s2223 + $0x40] sm:$0xff]
    %v2233 = vld [vmem:[%s2223 + $0x48] sm:$0xff]
    %v2234 = vld [vmem:[%s2223 + $0x50] sm:$0xff]
    %v2235 = vld [vmem:[%s2223 + $0x58] sm:$0xff]
    %v2236 = vld [vmem:[%s2223 + $0x60] sm:$0xff]
    %v2237 = vld [vmem:[%s2223 + $0x68] sm:$0xff]
    %v2238 = vld [vmem:[%s2223 + $0x70] sm:$0xff]
    %v2239 = vld [vmem:[%s2223 + $0x78] sm:$0xff]
    %v2240 = vld [vmem:[%s2223 + $0x80] sm:$0xff]
    %v2241 = vld [vmem:[%s2223 + $0x88] sm:$0xff]
    %v2242 = vld [vmem:[%s2223 + $0x90] sm:$0xff]
    %v2243 = vld [vmem:[%s2223 + $0x98] sm:$0xff]
    %v2244 = vld [vmem:[%s2223 + $0xa0] sm:$0xff]
    %v2245 = vld [vmem:[%s2223 + $0xa8] sm:$0xff]
    %v2246 = vld [vmem:[%s2223 + $0xb0] sm:$0xff]
    %v2247 = vld [vmem:[%s2223 + $0xb8] sm:$0xff]
    %v2272 = vunpack.c.l.b16 %v2224
    %v2273 = vunpack.c.h.b16 %v2224
    %v2274 = vunpack.c.l.b16 %v2225
    %v2275 = vunpack.c.h.b16 %v2225
    %v2276 = vunpack.c.l.b16 %v2226
    %v2277 = vunpack.c.h.b16 %v2226
    %v2278 = vunpack.c.l.b16 %v2227
    %v2279 = vunpack.c.h.b16 %v2227
    %v2280 = vunpack.c.l.b16 %v2228
    %v2281 = vunpack.c.h.b16 %v2228
    %v2282 = vunpack.c.l.b16 %v2229
    %v2283 = vunpack.c.h.b16 %v2229
    %v2284 = vunpack.c.l.b16 %v2230
    %v2285 = vunpack.c.h.b16 %v2230
    %v2286 = vunpack.c.l.b16 %v2231
    %v2287 = vunpack.c.h.b16 %v2231
    %v2288 = vunpack.c.l.b16 %v2232
    %v2289 = vunpack.c.h.b16 %v2232
    %v2290 = vunpack.c.l.b16 %v2233
    %v2291 = vunpack.c.h.b16 %v2233
    %v2292 = vunpack.c.l.b16 %v2234
    %v2293 = vunpack.c.h.b16 %v2234
    %v2294 = vunpack.c.l.b16 %v2235
    %v2295 = vunpack.c.h.b16 %v2235
    %v2296 = vunpack.c.l.b16 %v2236
    %v2297 = vunpack.c.h.b16 %v2236
    %v2298 = vunpack.c.l.b16 %v2237
    %v2299 = vunpack.c.h.b16 %v2237
    %v2300 = vunpack.c.l.b16 %v2238
    %v2301 = vunpack.c.h.b16 %v2238
    %v2302 = vunpack.c.l.b16 %v2239
    %v2303 = vunpack.c.h.b16 %v2239
    %v2304 = vunpack.c.l.b16 %v2240
    %v2305 = vunpack.c.h.b16 %v2240
    %v2306 = vunpack.c.l.b16 %v2241
    %v2307 = vunpack.c.h.b16 %v2241
    %v2308 = vunpack.c.l.b16 %v2242
    %v2309 = vunpack.c.h.b16 %v2242
    %v2310 = vunpack.c.l.b16 %v2243
    %v2311 = vunpack.c.h.b16 %v2243
    %v2312 = vunpack.c.l.b16 %v2244
    %v2313 = vunpack.c.h.b16 %v2244
    %v2314 = vunpack.c.l.b16 %v2245
    %v2315 = vunpack.c.h.b16 %v2245
    %v2316 = vunpack.c.l.b16 %v2246
    %v2317 = vunpack.c.h.b16 %v2246
    %v2318 = vunpack.c.l.b16 %v2247
    %v2319 = vunpack.c.h.b16 %v2247
    %v2320 = vpack.c.b16 %v2274, %v2272
    %v2321 = vpack.c.b16 %v2275, %v2273
    %v2322 = vpack.c.b16 %v2278, %v2276
    %v2323 = vpack.c.b16 %v2279, %v2277
    %v2324 = vpack.c.b16 %v2282, %v2280
    %v2325 = vpack.c.b16 %v2283, %v2281
    %v2326 = vpack.c.b16 %v2286, %v2284
    %v2327 = vpack.c.b16 %v2287, %v2285
    %v2328 = vpack.c.b16 %v2290, %v2288
    %v2329 = vpack.c.b16 %v2291, %v2289
    %v2330 = vpack.c.b16 %v2294, %v2292
    %v2331 = vpack.c.b16 %v2295, %v2293
    %v2332 = vpack.c.b16 %v2298, %v2296
    %v2333 = vpack.c.b16 %v2299, %v2297
    %v2334 = vpack.c.b16 %v2302, %v2300
    %v2335 = vpack.c.b16 %v2303, %v2301
    %v2336 = vpack.c.b16 %v2306, %v2304
    %v2337 = vpack.c.b16 %v2307, %v2305
    %v2338 = vpack.c.b16 %v2310, %v2308
    %v2339 = vpack.c.b16 %v2311, %v2309
    %v2340 = vpack.c.b16 %v2314, %v2312
    %v2341 = vpack.c.b16 %v2315, %v2313
    %v2342 = vpack.c.b16 %v2318, %v2316
    %v2343 = vpack.c.b16 %v2319, %v2317
    %v2369 = vsel %vm236, %v2222, 0
    %2371 = vmatprep.subr.bf16.mxu0 %v2321
    %2372 = vmatpush1.bf16.msra.mxu0 %v2320
    %2373 = vmatprep.subr.bf16.mxu0 %v2323
    %2374 = vmatpush1.bf16.msra.mxu0 %v2322
    %2375 = vmatprep.subr.bf16.mxu0 %v2325
    %2376 = vmatpush1.bf16.msra.mxu0 %v2324
    %2377 = vmatprep.subr.bf16.mxu0 %v2327
    %2378 = vmatpush1.bf16.msra.mxu0 %v2326
    %2379 = vmatprep.subr.bf16.mxu0 %v2329
    %2380 = vmatpush1.bf16.msra.mxu0 %v2328
    %2381 = vmatprep.subr.bf16.mxu0 %v2331
    %2382 = vmatpush1.bf16.msra.mxu0 %v2330
    %2383 = vmatprep.subr.bf16.mxu0 %v2333
    %2384 = vmatpush1.bf16.msra.mxu0 %v2332
    %2385 = vmatprep.subr.bf16.mxu0 %v2335
    %2386 = vmatpush1.bf16.msra.mxu0 %v2334
    %2387 = vmatprep.subr.bf16.mxu0 %v2337
    %2388 = vmatpush1.bf16.msra.mxu0 %v2336
    %2389 = vmatprep.subr.bf16.mxu0 %v2339
    %2390 = vmatpush1.bf16.msra.mxu0 %v2338
    %2391 = vmatprep.subr.bf16.mxu0 %v2341
    %2392 = vmatpush1.bf16.msra.mxu0 %v2340
    %2393 = vmatprep.subr.bf16.mxu0 %v2343
    %2394 = vmatpush1.bf16.msra.mxu0 %v2342
    %2395 = vmatprep.subr.bf16.mxu0 0
    %2396 = vmatpush1.bf16.msra.mxu0 0
    %2397 = vmatprep.subr.bf16.mxu0 0
    %2398 = vmatpush1.bf16.msra.mxu0 0
    %2399 = vmatprep.subr.bf16.mxu0 0
    %2400 = vmatpush1.bf16.msra.mxu0 0
    %2401 = vmatprep.subr.bf16.mxu0 0
    %2402 = vmatpush1.bf16.msra.mxu0 0
    %2403 = vmatprep.mubr.bf16.mxu0 %v2369
    %2404 = vmatmul.mubr.bf16.gmra.mrb[0].mxu0 %v2221
    %v2405 = vpop.f32.mrb[0].mxu0
    %v2406 = vadd.f32 0.0, %v2405
    %v2407 = vpop.f32.mrb[0].mxu0
    %v2408 = vadd.f32 0.0, %v2407
    %v2409 = vpop.f32.mrb[0].mxu0
    %v2410 = vpop.f32.mrb[0].mxu0
    %2411 = vdwg.mxu0
    %v2436 = vunpack.c.l.b16 %v2151
    %v2437 = vunpack.c.h.b16 %v2151
    %v2438 = vunpack.c.l.b16 %v2152
    %v2439 = vunpack.c.h.b16 %v2152
    %v2440 = vunpack.c.l.b16 %v2153
    %v2441 = vunpack.c.h.b16 %v2153
    %v2442 = vunpack.c.l.b16 %v2154
    %v2443 = vunpack.c.h.b16 %v2154
    %v2444 = vunpack.c.l.b16 %v2155
    %v2445 = vunpack.c.h.b16 %v2155
    %v2446 = vunpack.c.l.b16 %v2156
    %v2447 = vunpack.c.h.b16 %v2156
    %v2448 = vunpack.c.l.b16 %v2157
    %v2449 = vunpack.c.h.b16 %v2157
    %v2450 = vunpack.c.l.b16 %v2158
    %v2451 = vunpack.c.h.b16 %v2158
    %v2452 = vunpack.c.l.b16 %v2159
    %v2453 = vunpack.c.h.b16 %v2159
    %v2454 = vunpack.c.l.b16 %v2160
    %v2455 = vunpack.c.h.b16 %v2160
    %v2456 = vunpack.c.l.b16 %v2161
    %v2457 = vunpack.c.h.b16 %v2161
    %v2458 = vunpack.c.l.b16 %v2162
    %v2459 = vunpack.c.h.b16 %v2162
    %v2460 = vunpack.c.l.b16 %v2163
    %v2461 = vunpack.c.h.b16 %v2163
    %v2462 = vunpack.c.l.b16 %v2164
    %v2463 = vunpack.c.h.b16 %v2164
    %v2464 = vunpack.c.l.b16 %v2165
    %v2465 = vunpack.c.h.b16 %v2165
    %v2466 = vunpack.c.l.b16 %v2166
    %v2467 = vunpack.c.h.b16 %v2166
    %v2468 = vunpack.c.l.b16 %v2167
    %v2469 = vunpack.c.h.b16 %v2167
    %v2470 = vunpack.c.l.b16 %v2168
    %v2471 = vunpack.c.h.b16 %v2168
    %v2472 = vunpack.c.l.b16 %v2169
    %v2473 = vunpack.c.h.b16 %v2169
    %v2474 = vunpack.c.l.b16 %v2170
    %v2475 = vunpack.c.h.b16 %v2170
    %v2476 = vunpack.c.l.b16 %v2171
    %v2477 = vunpack.c.h.b16 %v2171
    %v2478 = vunpack.c.l.b16 %v2172
    %v2479 = vunpack.c.h.b16 %v2172
    %v2480 = vunpack.c.l.b16 %v2173
    %v2481 = vunpack.c.h.b16 %v2173
    %v2482 = vunpack.c.l.b16 %v2174
    %v2483 = vunpack.c.h.b16 %v2174
    %v2484 = vpack.c.b16 %v2438, %v2436
    %v2485 = vpack.c.b16 %v2439, %v2437
    %v2486 = vpack.c.b16 %v2442, %v2440
    %v2487 = vpack.c.b16 %v2443, %v2441
    %v2488 = vpack.c.b16 %v2446, %v2444
    %v2489 = vpack.c.b16 %v2447, %v2445
    %v2490 = vpack.c.b16 %v2450, %v2448
    %v2491 = vpack.c.b16 %v2451, %v2449
    %v2492 = vpack.c.b16 %v2454, %v2452
    %v2493 = vpack.c.b16 %v2455, %v2453
    %v2494 = vpack.c.b16 %v2458, %v2456
    %v2495 = vpack.c.b16 %v2459, %v2457
    %v2496 = vpack.c.b16 %v2462, %v2460
    %v2497 = vpack.c.b16 %v2463, %v2461
    %v2498 = vpack.c.b16 %v2466, %v2464
    %v2499 = vpack.c.b16 %v2467, %v2465
    %v2500 = vpack.c.b16 %v2470, %v2468
    %v2501 = vpack.c.b16 %v2471, %v2469
    %v2502 = vpack.c.b16 %v2474, %v2472
    %v2503 = vpack.c.b16 %v2475, %v2473
    %v2504 = vpack.c.b16 %v2478, %v2476
    %v2505 = vpack.c.b16 %v2479, %v2477
    %v2506 = vpack.c.b16 %v2482, %v2480
    %v2507 = vpack.c.b16 %v2483, %v2481
    %v2533 = vsel %vm236, %v2150, 0
    %2535 = vmatprep.subr.bf16.mxu0 %v2485
    %2536 = vmatpush1.bf16.msra.mxu0 %v2484
    %2537 = vmatprep.subr.bf16.mxu0 %v2487
    %2538 = vmatpush1.bf16.msra.mxu0 %v2486
    %2539 = vmatprep.subr.bf16.mxu0 %v2489
    %2540 = vmatpush1.bf16.msra.mxu0 %v2488
    %2541 = vmatprep.subr.bf16.mxu0 %v2491
    %2542 = vmatpush1.bf16.msra.mxu0 %v2490
    %2543 = vmatprep.subr.bf16.mxu0 %v2493
    %2544 = vmatpush1.bf16.msra.mxu0 %v2492
    %2545 = vmatprep.subr.bf16.mxu0 %v2495
    %2546 = vmatpush1.bf16.msra.mxu0 %v2494
    %2547 = vmatprep.subr.bf16.mxu0 %v2497
    %2548 = vmatpush1.bf16.msra.mxu0 %v2496
    %2549 = vmatprep.subr.bf16.mxu0 %v2499
    %2550 = vmatpush1.bf16.msra.mxu0 %v2498
    %2551 = vmatprep.subr.bf16.mxu0 %v2501
    %2552 = vmatpush1.bf16.msra.mxu0 %v2500
    %2553 = vmatprep.subr.bf16.mxu0 %v2503
    %2554 = vmatpush1.bf16.msra.mxu0 %v2502
    %2555 = vmatprep.subr.bf16.mxu0 %v2505
    %2556 = vmatpush1.bf16.msra.mxu0 %v2504
    %2557 = vmatprep.subr.bf16.mxu0 %v2507
    %2558 = vmatpush1.bf16.msra.mxu0 %v2506
    %2559 = vmatprep.subr.bf16.mxu0 0
    %2560 = vmatpush1.bf16.msra.mxu0 0
    %2561 = vmatprep.subr.bf16.mxu0 0
    %2562 = vmatpush1.bf16.msra.mxu0 0
    %2563 = vmatprep.subr.bf16.mxu0 0
    %2564 = vmatpush1.bf16.msra.mxu0 0
    %2565 = vmatprep.subr.bf16.mxu0 0
    %2566 = vmatpush1.bf16.msra.mxu0 0
    %2567 = vmatprep.mubr.bf16.mxu0 %v2533
    %2568 = vmatmul.mubr.bf16.gmra.mrb[0].mxu0 %v2149
    %v2569 = vpop.f32.mrb[0].mxu0
    %v2570 = vadd.f32 %v2406, %v2569
    %v2571 = vpop.f32.mrb[0].mxu0
    %v2572 = vadd.f32 %v2408, %v2571
    %v2573 = vpop.f32.mrb[0].mxu0
    %v2574 = vpop.f32.mrb[0].mxu0
    %2575 = vdwg.mxu0
    %s2576 = scalar_lea.vmem [#allocation11], 8
    %v2577 = vld [vmem:[%s2576] sm:$0xf]
    %v2579 = vsel %vm2104, %v2577, 0
    %2581 = vmatprep.subr.bf16.mxu0 %v2102
    %2582 = vmatpush1.bf16.msra.mxu0 %v2101
    %2583 = vmatprep.subr.bf16.mxu0 0
    %2584 = vmatpush1.bf16.msra.mxu0 0
    %2585 = vmatprep.subr.bf16.mxu0 0
    %2586 = vmatpush1.bf16.msra.mxu0 0
    %2587 = vmatprep.subr.bf16.mxu0 0
    %2588 = vmatpush1.bf16.msra.mxu0 0
    %2589 = vmatprep.subr.bf16.mxu0 0
    %2590 = vmatpush1.bf16.msra.mxu0 0
    %2591 = vmatprep.subr.bf16.mxu0 0
    %2592 = vmatpush1.bf16.msra.mxu0 0
    %2593 = vmatprep.subr.bf16.mxu0 0
    %2594 = vmatpush1.bf16.msra.mxu0 0
    %2595 = vmatprep.subr.bf16.mxu0 0
    %2596 = vmatpush1.bf16.msra.mxu0 0
    %2597 = vmatprep.subr.bf16.mxu0 0
    %2598 = vmatpush1.bf16.msra.mxu0 0
    %2599 = vmatprep.subr.bf16.mxu0 0
    %2600 = vmatpush1.bf16.msra.mxu0 0
    %2601 = vmatprep.subr.bf16.mxu0 0
    %2602 = vmatpush1.bf16.msra.mxu0 0
    %2603 = vmatprep.subr.bf16.mxu0 0
    %2604 = vmatpush1.bf16.msra.mxu0 0
    %2605 = vmatprep.subr.bf16.mxu0 0
    %2606 = vmatpush1.bf16.msra.mxu0 0
    %2607 = vmatprep.subr.bf16.mxu0 0
    %2608 = vmatpush1.bf16.msra.mxu0 0
    %2609 = vmatprep.subr.bf16.mxu0 0
    %2610 = vmatpush1.bf16.msra.mxu0 0
    %2611 = vmatprep.subr.bf16.mxu0 0
    %2612 = vmatpush1.bf16.msra.mxu0 0
    %2613 = vmatprep.mubr.bf16.mxu0 0
    %2614 = vmatmul.mubr.bf16.gmra.mrb[0].mxu0 %v2579
    %v2615 = vpop.f32.mrb[0].mxu0
    %v2616 = vadd.f32 0.0, %v2615
    %v2617 = vpop.f32.mrb[0].mxu0
    %v2618 = vadd.f32 0.0, %v2617
    %v2619 = vpop.f32.mrb[0].mxu0
    %v2620 = vpop.f32.mrb[0].mxu0
    %2621 = vdwg.mxu0
    %v2622 = vpack.c.bf16 %v2616, %v2616
    %v2623 = vpack.c.bf16 %v2618, %v2618
    %s2624 = scalar_lea.vmem %s7, 384
    %v2625 = vld [vmem:[%s2624] sm:$0xff]
    %v2626 = vld [vmem:[%s2624 + $0x8] sm:$0xff]
    %v2627 = vld [vmem:[%s2624 + $0x10] sm:$0xff]
    %v2628 = vld [vmem:[%s2624 + $0x18] sm:$0xff]
    %v2629 = vld [vmem:[%s2624 + $0x20] sm:$0xff]
    %v2630 = vld [vmem:[%s2624 + $0x28] sm:$0xff]
    %v2631 = vld [vmem:[%s2624 + $0x30] sm:$0xff]
    %v2632 = vld [vmem:[%s2624 + $0x38] sm:$0xff]
    %v2633 = vld [vmem:[%s2624 + $0x40] sm:$0xff]
    %v2634 = vld [vmem:[%s2624 + $0x48] sm:$0xff]
    %v2635 = vld [vmem:[%s2624 + $0x50] sm:$0xff]
    %v2636 = vld [vmem:[%s2624 + $0x58] sm:$0xff]
    %v2637 = vld [vmem:[%s2624 + $0x60] sm:$0xff]
    %v2638 = vld [vmem:[%s2624 + $0x68] sm:$0xff]
    %v2639 = vld [vmem:[%s2624 + $0x70] sm:$0xff]
    %v2640 = vld [vmem:[%s2624 + $0x78] sm:$0xff]
    %v2641 = vld [vmem:[%s2624 + $0x80] sm:$0xff]
    %v2642 = vld [vmem:[%s2624 + $0x88] sm:$0xff]
    %v2643 = vld [vmem:[%s2624 + $0x90] sm:$0xff]
    %v2644 = vld [vmem:[%s2624 + $0x98] sm:$0xff]
    %v2645 = vld [vmem:[%s2624 + $0xa0] sm:$0xff]
    %v2646 = vld [vmem:[%s2624 + $0xa8] sm:$0xff]
    %v2647 = vld [vmem:[%s2624 + $0xb0] sm:$0xff]
    %v2648 = vld [vmem:[%s2624 + $0xb8] sm:$0xff]
    %v2673 = vunpack.c.l.b16 %v2625
    %v2674 = vunpack.c.h.b16 %v2625
    %v2675 = vunpack.c.l.b16 %v2626
    %v2676 = vunpack.c.h.b16 %v2626
    %v2677 = vunpack.c.l.b16 %v2627
    %v2678 = vunpack.c.h.b16 %v2627
    %v2679 = vunpack.c.l.b16 %v2628
    %v2680 = vunpack.c.h.b16 %v2628
    %v2681 = vunpack.c.l.b16 %v2629
    %v2682 = vunpack.c.h.b16 %v2629
    %v2683 = vunpack.c.l.b16 %v2630
    %v2684 = vunpack.c.h.b16 %v2630
    %v2685 = vunpack.c.l.b16 %v2631
    %v2686 = vunpack.c.h.b16 %v2631
    %v2687 = vunpack.c.l.b16 %v2632
    %v2688 = vunpack.c.h.b16 %v2632
    %v2689 = vunpack.c.l.b16 %v2633
    %v2690 = vunpack.c.h.b16 %v2633
    %v2691 = vunpack.c.l.b16 %v2634
    %v2692 = vunpack.c.h.b16 %v2634
    %v2693 = vunpack.c.l.b16 %v2635
    %v2694 = vunpack.c.h.b16 %v2635
    %v2695 = vunpack.c.l.b16 %v2636
    %v2696 = vunpack.c.h.b16 %v2636
    %v2697 = vunpack.c.l.b16 %v2637
    %v2698 = vunpack.c.h.b16 %v2637
    %v2699 = vunpack.c.l.b16 %v2638
    %v2700 = vunpack.c.h.b16 %v2638
    %v2701 = vunpack.c.l.b16 %v2639
    %v2702 = vunpack.c.h.b16 %v2639
    %v2703 = vunpack.c.l.b16 %v2640
    %v2704 = vunpack.c.h.b16 %v2640
    %v2705 = vunpack.c.l.b16 %v2641
    %v2706 = vunpack.c.h.b16 %v2641
    %v2707 = vunpack.c.l.b16 %v2642
    %v2708 = vunpack.c.h.b16 %v2642
    %v2709 = vunpack.c.l.b16 %v2643
    %v2710 = vunpack.c.h.b16 %v2643
    %v2711 = vunpack.c.l.b16 %v2644
    %v2712 = vunpack.c.h.b16 %v2644
    %v2713 = vunpack.c.l.b16 %v2645
    %v2714 = vunpack.c.h.b16 %v2645
    %v2715 = vunpack.c.l.b16 %v2646
    %v2716 = vunpack.c.h.b16 %v2646
    %v2717 = vunpack.c.l.b16 %v2647
    %v2718 = vunpack.c.h.b16 %v2647
    %v2719 = vunpack.c.l.b16 %v2648
    %v2720 = vunpack.c.h.b16 %v2648
    %v2721 = vpack.c.b16 %v2675, %v2673
    %v2722 = vpack.c.b16 %v2676, %v2674
    %v2723 = vpack.c.b16 %v2679, %v2677
    %v2724 = vpack.c.b16 %v2680, %v2678
    %v2725 = vpack.c.b16 %v2683, %v2681
    %v2726 = vpack.c.b16 %v2684, %v2682
    %v2727 = vpack.c.b16 %v2687, %v2685
    %v2728 = vpack.c.b16 %v2688, %v2686
    %v2729 = vpack.c.b16 %v2691, %v2689
    %v2730 = vpack.c.b16 %v2692, %v2690
    %v2731 = vpack.c.b16 %v2695, %v2693
    %v2732 = vpack.c.b16 %v2696, %v2694
    %v2733 = vpack.c.b16 %v2699, %v2697
    %v2734 = vpack.c.b16 %v2700, %v2698
    %v2735 = vpack.c.b16 %v2703, %v2701
    %v2736 = vpack.c.b16 %v2704, %v2702
    %v2737 = vpack.c.b16 %v2707, %v2705
    %v2738 = vpack.c.b16 %v2708, %v2706
    %v2739 = vpack.c.b16 %v2711, %v2709
    %v2740 = vpack.c.b16 %v2712, %v2710
    %v2741 = vpack.c.b16 %v2715, %v2713
    %v2742 = vpack.c.b16 %v2716, %v2714
    %v2743 = vpack.c.b16 %v2719, %v2717
    %v2744 = vpack.c.b16 %v2720, %v2718
    %v2770 = vsel %vm236, %v2623, 0
    %2772 = vmatprep.subr.bf16.mxu0 %v2722
    %2773 = vmatpush1.bf16.msra.mxu0 %v2721
    %2774 = vmatprep.subr.bf16.mxu0 %v2724
    %2775 = vmatpush1.bf16.msra.mxu0 %v2723
    %2776 = vmatprep.subr.bf16.mxu0 %v2726
    %2777 = vmatpush1.bf16.msra.mxu0 %v2725
    %2778 = vmatprep.subr.bf16.mxu0 %v2728
    %2779 = vmatpush1.bf16.msra.mxu0 %v2727
    %2780 = vmatprep.subr.bf16.mxu0 %v2730
    %2781 = vmatpush1.bf16.msra.mxu0 %v2729
    %2782 = vmatprep.subr.bf16.mxu0 %v2732
    %2783 = vmatpush1.bf16.msra.mxu0 %v2731
    %2784 = vmatprep.subr.bf16.mxu0 %v2734
    %2785 = vmatpush1.bf16.msra.mxu0 %v2733
    %2786 = vmatprep.subr.bf16.mxu0 %v2736
    %2787 = vmatpush1.bf16.msra.mxu0 %v2735
    %2788 = vmatprep.subr.bf16.mxu0 %v2738
    %2789 = vmatpush1.bf16.msra.mxu0 %v2737
    %2790 = vmatprep.subr.bf16.mxu0 %v2740
    %2791 = vmatpush1.bf16.msra.mxu0 %v2739
    %2792 = vmatprep.subr.bf16.mxu0 %v2742
    %2793 = vmatpush1.bf16.msra.mxu0 %v2741
    %2794 = vmatprep.subr.bf16.mxu0 %v2744
    %2795 = vmatpush1.bf16.msra.mxu0 %v2743
    %2796 = vmatprep.subr.bf16.mxu0 0
    %2797 = vmatpush1.bf16.msra.mxu0 0
    %2798 = vmatprep.subr.bf16.mxu0 0
    %2799 = vmatpush1.bf16.msra.mxu0 0
    %2800 = vmatprep.subr.bf16.mxu0 0
    %2801 = vmatpush1.bf16.msra.mxu0 0
    %2802 = vmatprep.subr.bf16.mxu0 0
    %2803 = vmatpush1.bf16.msra.mxu0 0
    %2804 = vmatprep.mubr.bf16.mxu0 %v2770
    %2805 = vmatmul.mubr.bf16.gmra.mrb[0].mxu0 %v2622
    %v2806 = vpop.f32.mrb[0].mxu0
    %v2807 = vadd.f32 0.0, %v2806
    %v2808 = vpop.f32.mrb[0].mxu0
    %v2809 = vadd.f32 0.0, %v2808
    %v2810 = vpop.f32.mrb[0].mxu0
    %v2811 = vpop.f32.mrb[0].mxu0
    %2812 = vdwg.mxu0
    %v2813 = vadd.f32 %v2570, %v2807
    %v2814 = vadd.f32 %v2572, %v2809
    %s2815 = scalar_lea.vmem [#allocation11], 12
    %v2816 = vld [vmem:[%s2815] sm:$0xf]
    %v2818 = vsel %vm2104, %v2816, 0
    %2820 = vmatprep.subr.bf16.mxu0 %v2102
    %2821 = vmatpush1.bf16.msra.mxu0 %v2101
    %2822 = vmatprep.subr.bf16.mxu0 0
    %2823 = vmatpush1.bf16.msra.mxu0 0
    %2824 = vmatprep.subr.bf16.mxu0 0
    %2825 = vmatpush1.bf16.msra.mxu0 0
    %2826 = vmatprep.subr.bf16.mxu0 0
    %2827 = vmatpush1.bf16.msra.mxu0 0
    %2828 = vmatprep.subr.bf16.mxu0 0
    %2829 = vmatpush1.bf16.msra.mxu0 0
    %2830 = vmatprep.subr.bf16.mxu0 0
    %2831 = vmatpush1.bf16.msra.mxu0 0
    %2832 = vmatprep.subr.bf16.mxu0 0
    %2833 = vmatpush1.bf16.msra.mxu0 0
    %2834 = vmatprep.subr.bf16.mxu0 0
    %2835 = vmatpush1.bf16.msra.mxu0 0
    %2836 = vmatprep.subr.bf16.mxu0 0
    %2837 = vmatpush1.bf16.msra.mxu0 0
    %2838 = vmatprep.subr.bf16.mxu0 0
    %2839 = vmatpush1.bf16.msra.mxu0 0
    %2840 = vmatprep.subr.bf16.mxu0 0
    %2841 = vmatpush1.bf16.msra.mxu0 0
    %2842 = vmatprep.subr.bf16.mxu0 0
    %2843 = vmatpush1.bf16.msra.mxu0 0
    %2844 = vmatprep.subr.bf16.mxu0 0
    %2845 = vmatpush1.bf16.msra.mxu0 0
    %2846 = vmatprep.subr.bf16.mxu0 0
    %2847 = vmatpush1.bf16.msra.mxu0 0
    %2848 = vmatprep.subr.bf16.mxu0 0
    %2849 = vmatpush1.bf16.msra.mxu0 0
    %2850 = vmatprep.subr.bf16.mxu0 0
    %2851 = vmatpush1.bf16.msra.mxu0 0
    %2852 = vmatprep.mubr.bf16.mxu0 0
    %2853 = vmatmul.mubr.bf16.gmra.mrb[0].mxu0 %v2818
    %v2854 = vpop.f32.mrb[0].mxu0
    %v2855 = vadd.f32 0.0, %v2854
    %v2856 = vpop.f32.mrb[0].mxu0
    %v2857 = vadd.f32 0.0, %v2856
    %v2858 = vpop.f32.mrb[0].mxu0
    %v2859 = vpop.f32.mrb[0].mxu0
    %2860 = vdwg.mxu0
    %v2861 = vpack.c.bf16 %v2855, %v2855
    %v2862 = vpack.c.bf16 %v2857, %v2857
    %s2863 = scalar_lea.vmem %s7, 576
    %v2864 = vld [vmem:[%s2863] sm:$0xff]
    %v2865 = vld [vmem:[%s2863 + $0x8] sm:$0xff]
    %v2866 = vld [vmem:[%s2863 + $0x10] sm:$0xff]
    %v2867 = vld [vmem:[%s2863 + $0x18] sm:$0xff]
    %v2868 = vld [vmem:[%s2863 + $0x20] sm:$0xff]
    %v2869 = vld [vmem:[%s2863 + $0x28] sm:$0xff]
    %v2870 = vld [vmem:[%s2863 + $0x30] sm:$0xff]
    %v2871 = vld [vmem:[%s2863 + $0x38] sm:$0xff]
    %v2872 = vld [vmem:[%s2863 + $0x40] sm:$0xff]
    %v2873 = vld [vmem:[%s2863 + $0x48] sm:$0xff]
    %v2874 = vld [vmem:[%s2863 + $0x50] sm:$0xff]
    %v2875 = vld [vmem:[%s2863 + $0x58] sm:$0xff]
    %v2876 = vld [vmem:[%s2863 + $0x60] sm:$0xff]
    %v2877 = vld [vmem:[%s2863 + $0x68] sm:$0xff]
    %v2878 = vld [vmem:[%s2863 + $0x70] sm:$0xff]
    %v2879 = vld [vmem:[%s2863 + $0x78] sm:$0xff]
    %v2880 = vld [vmem:[%s2863 + $0x80] sm:$0xff]
    %v2881 = vld [vmem:[%s2863 + $0x88] sm:$0xff]
    %v2882 = vld [vmem:[%s2863 + $0x90] sm:$0xff]
    %v2883 = vld [vmem:[%s2863 + $0x98] sm:$0xff]
    %v2884 = vld [vmem:[%s2863 + $0xa0] sm:$0xff]
    %v2885 = vld [vmem:[%s2863 + $0xa8] sm:$0xff]
    %v2886 = vld [vmem:[%s2863 + $0xb0] sm:$0xff]
    %v2887 = vld [vmem:[%s2863 + $0xb8] sm:$0xff]
    %v2912 = vunpack.c.l.b16 %v2864
    %v2913 = vunpack.c.h.b16 %v2864
    %v2914 = vunpack.c.l.b16 %v2865
    %v2915 = vunpack.c.h.b16 %v2865
    %v2916 = vunpack.c.l.b16 %v2866
    %v2917 = vunpack.c.h.b16 %v2866
    %v2918 = vunpack.c.l.b16 %v2867
    %v2919 = vunpack.c.h.b16 %v2867
    %v2920 = vunpack.c.l.b16 %v2868
    %v2921 = vunpack.c.h.b16 %v2868
    %v2922 = vunpack.c.l.b16 %v2869
    %v2923 = vunpack.c.h.b16 %v2869
    %v2924 = vunpack.c.l.b16 %v2870
    %v2925 = vunpack.c.h.b16 %v2870
    %v2926 = vunpack.c.l.b16 %v2871
    %v2927 = vunpack.c.h.b16 %v2871
    %v2928 = vunpack.c.l.b16 %v2872
    %v2929 = vunpack.c.h.b16 %v2872
    %v2930 = vunpack.c.l.b16 %v2873
    %v2931 = vunpack.c.h.b16 %v2873
    %v2932 = vunpack.c.l.b16 %v2874
    %v2933 = vunpack.c.h.b16 %v2874
    %v2934 = vunpack.c.l.b16 %v2875
    %v2935 = vunpack.c.h.b16 %v2875
    %v2936 = vunpack.c.l.b16 %v2876
    %v2937 = vunpack.c.h.b16 %v2876
    %v2938 = vunpack.c.l.b16 %v2877
    %v2939 = vunpack.c.h.b16 %v2877
    %v2940 = vunpack.c.l.b16 %v2878
    %v2941 = vunpack.c.h.b16 %v2878
    %v2942 = vunpack.c.l.b16 %v2879
    %v2943 = vunpack.c.h.b16 %v2879
    %v2944 = vunpack.c.l.b16 %v2880
    %v2945 = vunpack.c.h.b16 %v2880
    %v2946 = vunpack.c.l.b16 %v2881
    %v2947 = vunpack.c.h.b16 %v2881
    %v2948 = vunpack.c.l.b16 %v2882
    %v2949 = vunpack.c.h.b16 %v2882
    %v2950 = vunpack.c.l.b16 %v2883
    %v2951 = vunpack.c.h.b16 %v2883
    %v2952 = vunpack.c.l.b16 %v2884
    %v2953 = vunpack.c.h.b16 %v2884
    %v2954 = vunpack.c.l.b16 %v2885
    %v2955 = vunpack.c.h.b16 %v2885
    %v2956 = vunpack.c.l.b16 %v2886
    %v2957 = vunpack.c.h.b16 %v2886
    %v2958 = vunpack.c.l.b16 %v2887
    %v2959 = vunpack.c.h.b16 %v2887
    %v2960 = vpack.c.b16 %v2914, %v2912
    %v2961 = vpack.c.b16 %v2915, %v2913
    %v2962 = vpack.c.b16 %v2918, %v2916
    %v2963 = vpack.c.b16 %v2919, %v2917
    %v2964 = vpack.c.b16 %v2922, %v2920
    %v2965 = vpack.c.b16 %v2923, %v2921
    %v2966 = vpack.c.b16 %v2926, %v2924
    %v2967 = vpack.c.b16 %v2927, %v2925
    %v2968 = vpack.c.b16 %v2930, %v2928
    %v2969 = vpack.c.b16 %v2931, %v2929
    %v2970 = vpack.c.b16 %v2934, %v2932
    %v2971 = vpack.c.b16 %v2935, %v2933
    %v2972 = vpack.c.b16 %v2938, %v2936
    %v2973 = vpack.c.b16 %v2939, %v2937
    %v2974 = vpack.c.b16 %v2942, %v2940
    %v2975 = vpack.c.b16 %v2943, %v2941
    %v2976 = vpack.c.b16 %v2946, %v2944
    %v2977 = vpack.c.b16 %v2947, %v2945
    %v2978 = vpack.c.b16 %v2950, %v2948
    %v2979 = vpack.c.b16 %v2951, %v2949
    %v2980 = vpack.c.b16 %v2954, %v2952
    %v2981 = vpack.c.b16 %v2955, %v2953
    %v2982 = vpack.c.b16 %v2958, %v2956
    %v2983 = vpack.c.b16 %v2959, %v2957
    %v3009 = vsel %vm236, %v2862, 0
    %3011 = vmatprep.subr.bf16.mxu0 %v2961
    %3012 = vmatpush1.bf16.msra.mxu0 %v2960
    %3013 = vmatprep.subr.bf16.mxu0 %v2963
    %3014 = vmatpush1.bf16.msra.mxu0 %v2962
    %3015 = vmatprep.subr.bf16.mxu0 %v2965
    %3016 = vmatpush1.bf16.msra.mxu0 %v2964
    %3017 = vmatprep.subr.bf16.mxu0 %v2967
    %3018 = vmatpush1.bf16.msra.mxu0 %v2966
    %3019 = vmatprep.subr.bf16.mxu0 %v2969
    %3020 = vmatpush1.bf16.msra.mxu0 %v2968
    %3021 = vmatprep.subr.bf16.mxu0 %v2971
    %3022 = vmatpush1.bf16.msra.mxu0 %v2970
    %3023 = vmatprep.subr.bf16.mxu0 %v2973
    %3024 = vmatpush1.bf16.msra.mxu0 %v2972
    %3025 = vmatprep.subr.bf16.mxu0 %v2975
    %3026 = vmatpush1.bf16.msra.mxu0 %v2974
    %3027 = vmatprep.subr.bf16.mxu0 %v2977
    %3028 = vmatpush1.bf16.msra.mxu0 %v2976
    %3029 = vmatprep.subr.bf16.mxu0 %v2979
    %3030 = vmatpush1.bf16.msra.mxu0 %v2978
    %3031 = vmatprep.subr.bf16.mxu0 %v2981
    %3032 = vmatpush1.bf16.msra.mxu0 %v2980
    %3033 = vmatprep.subr.bf16.mxu0 %v2983
    %3034 = vmatpush1.bf16.msra.mxu0 %v2982
    %3035 = vmatprep.subr.bf16.mxu0 0
    %3036 = vmatpush1.bf16.msra.mxu0 0
    %3037 = vmatprep.subr.bf16.mxu0 0
    %3038 = vmatpush1.bf16.msra.mxu0 0
    %3039 = vmatprep.subr.bf16.mxu0 0
    %3040 = vmatpush1.bf16.msra.mxu0 0
    %3041 = vmatprep.subr.bf16.mxu0 0
    %3042 = vmatpush1.bf16.msra.mxu0 0
    %3043 = vmatprep.mubr.bf16.mxu0 %v3009
    %3044 = vmatmul.mubr.bf16.gmra.mrb[0].mxu0 %v2861
    %v3045 = vpop.f32.mrb[0].mxu0
    %v3046 = vadd.f32 0.0, %v3045
    %v3047 = vpop.f32.mrb[0].mxu0
    %v3048 = vadd.f32 0.0, %v3047
    %v3049 = vpop.f32.mrb[0].mxu0
    %v3050 = vpop.f32.mrb[0].mxu0
    %3051 = vdwg.mxu0
    %v3052 = vadd.f32 %v2813, %v3046
    %v3053 = vadd.f32 %v2814, %v3048
    %v3054 = vld [vmem:[#allocation13] sm:$0x3]
    %v3056 = vlaneseq
    %v3057 = vshrl.u32 %v3056, 7
    %v3058 = vsub.s32 0, %v3057
    %v3059 = vrot.slane %v3054, %v3058
    %v3060 = vlaneseq
    %v3061 = vshrl.u32 %v3060, 7
    %v3062 = vsub.s32 1, %v3061
    %v3063 = vrot.slane %v3054, %v3062
    %v3066 = vadd.f32 %v3052, %v3059
    %v3067 = vadd.f32 %v3053, %v3063
    %v3068 = vmax.f32 %v3066, 0.0
    %v3069 = vmax.f32 %v3067, 0.0
    %v3070 = vpack.c.bf16 %v3068, %v3068
    %v3071 = vpack.c.bf16 %v3069, %v3069
    %v3072 = vld [vmem:[%s11] sm:$0x1]
    %vm3073 = vcmask 64512
    %v3075 = vsel %vm3073, %v3072, 0
    %vm3077 = vcmask 1043456
    %v3079 = vsel %vm3077, %v3070, 0
    %v3082 = vsel %vm3077, %v3071, 0
    %3084 = vmatprep.subr.bf16.mxu0 %v3082
    %3085 = vmatpush1.bf16.msra.mxu0 %v3079
    %3086 = vmatprep.subr.bf16.mxu0 0
    %3087 = vmatpush1.bf16.msra.mxu0 0
    %3088 = vmatprep.subr.bf16.mxu0 0
    %3089 = vmatpush1.bf16.msra.mxu0 0
    %3090 = vmatprep.subr.bf16.mxu0 0
    %3091 = vmatpush1.bf16.msra.mxu0 0
    %3092 = vmatprep.subr.bf16.mxu0 0
    %3093 = vmatpush1.bf16.msra.mxu0 0
    %3094 = vmatprep.subr.bf16.mxu0 0
    %3095 = vmatpush1.bf16.msra.mxu0 0
    %3096 = vmatprep.subr.bf16.mxu0 0
    %3097 = vmatpush1.bf16.msra.mxu0 0
    %3098 = vmatprep.subr.bf16.mxu0 0
    %3099 = vmatpush1.bf16.msra.mxu0 0
    %3100 = vmatprep.subr.bf16.mxu0 0
    %3101 = vmatpush1.bf16.msra.mxu0 0
    %3102 = vmatprep.subr.bf16.mxu0 0
    %3103 = vmatpush1.bf16.msra.mxu0 0
    %3104 = vmatprep.subr.bf16.mxu0 0
    %3105 = vmatpush1.bf16.msra.mxu0 0
    %3106 = vmatprep.subr.bf16.mxu0 0
    %3107 = vmatpush1.bf16.msra.mxu0 0
    %3108 = vmatprep.subr.bf16.mxu0 0
    %3109 = vmatpush1.bf16.msra.mxu0 0
    %3110 = vmatprep.subr.bf16.mxu0 0
    %3111 = vmatpush1.bf16.msra.mxu0 0
    %3112 = vmatprep.subr.bf16.mxu0 0
    %3113 = vmatpush1.bf16.msra.mxu0 0
    %3114 = vmatprep.subr.bf16.mxu0 0
    %3115 = vmatpush1.bf16.msra.mxu0 0
    %3116 = vmatprep.mubr.bf16.mxu0 0
    %3117 = vmatmul.mubr.bf16.gmra.mrb[0].mxu0 %v3075
    %v3118 = vpop.f32.mrb[0].mxu0
    %v3119 = vadd.f32 0.0, %v3118
    %v3120 = vpop.f32.mrb[0].mxu0
    %v3121 = vadd.f32 0.0, %v3120
    %v3122 = vpop.f32.mrb[0].mxu0
    %v3123 = vpop.f32.mrb[0].mxu0
    %3124 = vdwg.mxu0
    %v3125 = vpack.c.bf16 %v3119, %v3119
    %v3126 = vpack.c.bf16 %v3121, %v3121
    %v3127 = vld [vmem:[%s10] sm:$0xff]
    %v3128 = vld [vmem:[%s10 + $0x8] sm:$0xff]
    %v3129 = vld [vmem:[%s10 + $0x10] sm:$0xff]
    %v3130 = vld [vmem:[%s10 + $0x18] sm:$0xff]
    %v3131 = vld [vmem:[%s10 + $0x20] sm:$0xff]
    %v3132 = vld [vmem:[%s10 + $0x28] sm:$0xff]
    %v3133 = vld [vmem:[%s10 + $0x30] sm:$0xff]
    %v3134 = vld [vmem:[%s10 + $0x38] sm:$0xff]
    %v3135 = vld [vmem:[%s10 + $0x40] sm:$0xff]
    %v3136 = vld [vmem:[%s10 + $0x48] sm:$0xff]
    %v3137 = vld [vmem:[%s10 + $0x50] sm:$0xff]
    %v3138 = vld [vmem:[%s10 + $0x58] sm:$0xff]
    %v3139 = vld [vmem:[%s10 + $0x60] sm:$0xff]
    %v3140 = vld [vmem:[%s10 + $0x68] sm:$0xff]
    %v3141 = vld [vmem:[%s10 + $0x70] sm:$0xff]
    %v3142 = vld [vmem:[%s10 + $0x78] sm:$0xff]
    %v3143 = vld [vmem:[%s10 + $0x80] sm:$0xff]
    %v3144 = vld [vmem:[%s10 + $0x88] sm:$0xff]
    %v3145 = vld [vmem:[%s10 + $0x90] sm:$0xff]
    %v3146 = vld [vmem:[%s10 + $0x98] sm:$0xff]
    %v3147 = vld [vmem:[%s10 + $0xa0] sm:$0xff]
    %v3148 = vld [vmem:[%s10 + $0xa8] sm:$0xff]
    %v3149 = vld [vmem:[%s10 + $0xb0] sm:$0xff]
    %v3150 = vld [vmem:[%s10 + $0xb8] sm:$0xff]
    %v3151 = vld [vmem:[%s10 + $0xc0] sm:$0xff]
    %v3152 = vld [vmem:[%s10 + $0xc8] sm:$0xff]
    %v3153 = vld [vmem:[%s10 + $0xd0] sm:$0xff]
    %v3154 = vld [vmem:[%s10 + $0xd8] sm:$0xff]
    %v3155 = vld [vmem:[%s10 + $0xe0] sm:$0xff]
    %v3156 = vld [vmem:[%s10 + $0xe8] sm:$0xff]
    %v3157 = vld [vmem:[%s10 + $0xf0] sm:$0xff]
    %v3158 = vld [vmem:[%s10 + $0xf8] sm:$0xff]
    %v3159 = vld [vmem:[%s10 + $0x100] sm:$0xff]
    %v3160 = vld [vmem:[%s10 + $0x108] sm:$0xff]
    %v3161 = vld [vmem:[%s10 + $0x110] sm:$0xff]
    %v3162 = vld [vmem:[%s10 + $0x118] sm:$0xff]
    %v3163 = vld [vmem:[%s10 + $0x120] sm:$0xff]
    %v3164 = vld [vmem:[%s10 + $0x128] sm:$0xff]
    %v3165 = vld [vmem:[%s10 + $0x130] sm:$0xff]
    %v3166 = vld [vmem:[%s10 + $0x138] sm:$0xff]
    %v3167 = vld [vmem:[%s10 + $0x140] sm:$0xff]
    %v3168 = vld [vmem:[%s10 + $0x148] sm:$0xff]
    %v3169 = vld [vmem:[%s10 + $0x150] sm:$0xff]
    %v3170 = vld [vmem:[%s10 + $0x158] sm:$0xff]
    %v3171 = vld [vmem:[%s10 + $0x160] sm:$0xff]
    %v3172 = vld [vmem:[%s10 + $0x168] sm:$0xff]
    %v3173 = vld [vmem:[%s10 + $0x170] sm:$0xff]
    %v3174 = vld [vmem:[%s10 + $0x178] sm:$0xff]
    %s3175 = scalar_lea.vmem %s11, 1
    %v3176 = vld [vmem:[%s3175] sm:$0x1]
    %v3178 = vsel %vm3073, %v3176, 0
    %3180 = vmatprep.subr.bf16.mxu0 %v3082
    %3181 = vmatpush1.bf16.msra.mxu0 %v3079
    %3182 = vmatprep.subr.bf16.mxu0 0
    %3183 = vmatpush1.bf16.msra.mxu0 0
    %3184 = vmatprep.subr.bf16.mxu0 0
    %3185 = vmatpush1.bf16.msra.mxu0 0
    %3186 = vmatprep.subr.bf16.mxu0 0
    %3187 = vmatpush1.bf16.msra.mxu0 0
    %3188 = vmatprep.subr.bf16.mxu0 0
    %3189 = vmatpush1.bf16.msra.mxu0 0
    %3190 = vmatprep.subr.bf16.mxu0 0
    %3191 = vmatpush1.bf16.msra.mxu0 0
    %3192 = vmatprep.subr.bf16.mxu0 0
    %3193 = vmatpush1.bf16.msra.mxu0 0
    %3194 = vmatprep.subr.bf16.mxu0 0
    %3195 = vmatpush1.bf16.msra.mxu0 0
    %3196 = vmatprep.subr.bf16.mxu0 0
    %3197 = vmatpush1.bf16.msra.mxu0 0
    %3198 = vmatprep.subr.bf16.mxu0 0
    %3199 = vmatpush1.bf16.msra.mxu0 0
    %3200 = vmatprep.subr.bf16.mxu0 0
    %3201 = vmatpush1.bf16.msra.mxu0 0
    %3202 = vmatprep.subr.bf16.mxu0 0
    %3203 = vmatpush1.bf16.msra.mxu0 0
    %3204 = vmatprep.subr.bf16.mxu0 0
    %3205 = vmatpush1.bf16.msra.mxu0 0
    %3206 = vmatprep.subr.bf16.mxu0 0
    %3207 = vmatpush1.bf16.msra.mxu0 0
    %3208 = vmatprep.subr.bf16.mxu0 0
    %3209 = vmatpush1.bf16.msra.mxu0 0
    %3210 = vmatprep.subr.bf16.mxu0 0
    %3211 = vmatpush1.bf16.msra.mxu0 0
    %3212 = vmatprep.mubr.bf16.mxu0 0
    %3213 = vmatmul.mubr.bf16.gmra.mrb[0].mxu0 %v3178
    %v3214 = vpop.f32.mrb[0].mxu0
    %v3215 = vadd.f32 0.0, %v3214
    %v3216 = vpop.f32.mrb[0].mxu0
    %v3217 = vadd.f32 0.0, %v3216
    %v3218 = vpop.f32.mrb[0].mxu0
    %v3219 = vpop.f32.mrb[0].mxu0
    %3220 = vdwg.mxu0
    %v3221 = vpack.c.bf16 %v3215, %v3215
    %v3222 = vpack.c.bf16 %v3217, %v3217
    %s3223 = scalar_lea.vmem %s10, 384
    %v3224 = vld [vmem:[%s3223] sm:$0xff]
    %v3225 = vld [vmem:[%s3223 + $0x8] sm:$0xff]
    %v3226 = vld [vmem:[%s3223 + $0x10] sm:$0xff]
    %v3227 = vld [vmem:[%s3223 + $0x18] sm:$0xff]
    %v3228 = vld [vmem:[%s3223 + $0x20] sm:$0xff]
    %v3229 = vld [vmem:[%s3223 + $0x28] sm:$0xff]
    %v3230 = vld [vmem:[%s3223 + $0x30] sm:$0xff]
    %v3231 = vld [vmem:[%s3223 + $0x38] sm:$0xff]
    %v3232 = vld [vmem:[%s3223 + $0x40] sm:$0xff]
    %v3233 = vld [vmem:[%s3223 + $0x48] sm:$0xff]
    %v3234 = vld [vmem:[%s3223 + $0x50] sm:$0xff]
    %v3235 = vld [vmem:[%s3223 + $0x58] sm:$0xff]
    %v3236 = vld [vmem:[%s3223 + $0x60] sm:$0xff]
    %v3237 = vld [vmem:[%s3223 + $0x68] sm:$0xff]
    %v3238 = vld [vmem:[%s3223 + $0x70] sm:$0xff]
    %v3239 = vld [vmem:[%s3223 + $0x78] sm:$0xff]
    %v3240 = vld [vmem:[%s3223 + $0x80] sm:$0xff]
    %v3241 = vld [vmem:[%s3223 + $0x88] sm:$0xff]
    %v3242 = vld [vmem:[%s3223 + $0x90] sm:$0xff]
    %v3243 = vld [vmem:[%s3223 + $0x98] sm:$0xff]
    %v3244 = vld [vmem:[%s3223 + $0xa0] sm:$0xff]
    %v3245 = vld [vmem:[%s3223 + $0xa8] sm:$0xff]
    %v3246 = vld [vmem:[%s3223 + $0xb0] sm:$0xff]
    %v3247 = vld [vmem:[%s3223 + $0xb8] sm:$0xff]
    %v3248 = vld [vmem:[%s3223 + $0xc0] sm:$0xff]
    %v3249 = vld [vmem:[%s3223 + $0xc8] sm:$0xff]
    %v3250 = vld [vmem:[%s3223 + $0xd0] sm:$0xff]
    %v3251 = vld [vmem:[%s3223 + $0xd8] sm:$0xff]
    %v3252 = vld [vmem:[%s3223 + $0xe0] sm:$0xff]
    %v3253 = vld [vmem:[%s3223 + $0xe8] sm:$0xff]
    %v3254 = vld [vmem:[%s3223 + $0xf0] sm:$0xff]
    %v3255 = vld [vmem:[%s3223 + $0xf8] sm:$0xff]
    %v3256 = vld [vmem:[%s3223 + $0x100] sm:$0xff]
    %v3257 = vld [vmem:[%s3223 + $0x108] sm:$0xff]
    %v3258 = vld [vmem:[%s3223 + $0x110] sm:$0xff]
    %v3259 = vld [vmem:[%s3223 + $0x118] sm:$0xff]
    %v3260 = vld [vmem:[%s3223 + $0x120] sm:$0xff]
    %v3261 = vld [vmem:[%s3223 + $0x128] sm:$0xff]
    %v3262 = vld [vmem:[%s3223 + $0x130] sm:$0xff]
    %v3263 = vld [vmem:[%s3223 + $0x138] sm:$0xff]
    %v3264 = vld [vmem:[%s3223 + $0x140] sm:$0xff]
    %v3265 = vld [vmem:[%s3223 + $0x148] sm:$0xff]
    %v3266 = vld [vmem:[%s3223 + $0x150] sm:$0xff]
    %v3267 = vld [vmem:[%s3223 + $0x158] sm:$0xff]
    %v3268 = vld [vmem:[%s3223 + $0x160] sm:$0xff]
    %v3269 = vld [vmem:[%s3223 + $0x168] sm:$0xff]
    %v3270 = vld [vmem:[%s3223 + $0x170] sm:$0xff]
    %v3271 = vld [vmem:[%s3223 + $0x178] sm:$0xff]
    %v3320 = vunpack.c.l.b16 %v3224
    %v3321 = vunpack.c.h.b16 %v3224
    %v3322 = vunpack.c.l.b16 %v3225
    %v3323 = vunpack.c.h.b16 %v3225
    %v3324 = vunpack.c.l.b16 %v3226
    %v3325 = vunpack.c.h.b16 %v3226
    %v3326 = vunpack.c.l.b16 %v3227
    %v3327 = vunpack.c.h.b16 %v3227
    %v3328 = vunpack.c.l.b16 %v3228
    %v3329 = vunpack.c.h.b16 %v3228
    %v3330 = vunpack.c.l.b16 %v3229
    %v3331 = vunpack.c.h.b16 %v3229
    %v3332 = vunpack.c.l.b16 %v3230
    %v3333 = vunpack.c.h.b16 %v3230
    %v3334 = vunpack.c.l.b16 %v3231
    %v3335 = vunpack.c.h.b16 %v3231
    %v3336 = vunpack.c.l.b16 %v3232
    %v3337 = vunpack.c.h.b16 %v3232
    %v3338 = vunpack.c.l.b16 %v3233
    %v3339 = vunpack.c.h.b16 %v3233
    %v3340 = vunpack.c.l.b16 %v3234
    %v3341 = vunpack.c.h.b16 %v3234
    %v3342 = vunpack.c.l.b16 %v3235
    %v3343 = vunpack.c.h.b16 %v3235
    %v3344 = vunpack.c.l.b16 %v3236
    %v3345 = vunpack.c.h.b16 %v3236
    %v3346 = vunpack.c.l.b16 %v3237
    %v3347 = vunpack.c.h.b16 %v3237
    %v3348 = vunpack.c.l.b16 %v3238
    %v3349 = vunpack.c.h.b16 %v3238
    %v3350 = vunpack.c.l.b16 %v3239
    %v3351 = vunpack.c.h.b16 %v3239
    %v3352 = vunpack.c.l.b16 %v3240
    %v3353 = vunpack.c.h.b16 %v3240
    %v3354 = vunpack.c.l.b16 %v3241
    %v3355 = vunpack.c.h.b16 %v3241
    %v3356 = vunpack.c.l.b16 %v3242
    %v3357 = vunpack.c.h.b16 %v3242
    %v3358 = vunpack.c.l.b16 %v3243
    %v3359 = vunpack.c.h.b16 %v3243
    %v3360 = vunpack.c.l.b16 %v3244
    %v3361 = vunpack.c.h.b16 %v3244
    %v3362 = vunpack.c.l.b16 %v3245
    %v3363 = vunpack.c.h.b16 %v3245
    %v3364 = vunpack.c.l.b16 %v3246
    %v3365 = vunpack.c.h.b16 %v3246
    %v3366 = vunpack.c.l.b16 %v3247
    %v3367 = vunpack.c.h.b16 %v3247
    %v3368 = vunpack.c.l.b16 %v3248
    %v3369 = vunpack.c.h.b16 %v3248
    %v3370 = vunpack.c.l.b16 %v3249
    %v3371 = vunpack.c.h.b16 %v3249
    %v3372 = vunpack.c.l.b16 %v3250
    %v3373 = vunpack.c.h.b16 %v3250
    %v3374 = vunpack.c.l.b16 %v3251
    %v3375 = vunpack.c.h.b16 %v3251
    %v3376 = vunpack.c.l.b16 %v3252
    %v3377 = vunpack.c.h.b16 %v3252
    %v3378 = vunpack.c.l.b16 %v3253
    %v3379 = vunpack.c.h.b16 %v3253
    %v3380 = vunpack.c.l.b16 %v3254
    %v3381 = vunpack.c.h.b16 %v3254
    %v3382 = vunpack.c.l.b16 %v3255
    %v3383 = vunpack.c.h.b16 %v3255
    %v3384 = vunpack.c.l.b16 %v3256
    %v3385 = vunpack.c.h.b16 %v3256
    %v3386 = vunpack.c.l.b16 %v3257
    %v3387 = vunpack.c.h.b16 %v3257
    %v3388 = vunpack.c.l.b16 %v3258
    %v3389 = vunpack.c.h.b16 %v3258
    %v3390 = vunpack.c.l.b16 %v3259
    %v3391 = vunpack.c.h.b16 %v3259
    %v3392 = vunpack.c.l.b16 %v3260
    %v3393 = vunpack.c.h.b16 %v3260
    %v3394 = vunpack.c.l.b16 %v3261
    %v3395 = vunpack.c.h.b16 %v3261
    %v3396 = vunpack.c.l.b16 %v3262
    %v3397 = vunpack.c.h.b16 %v3262
    %v3398 = vunpack.c.l.b16 %v3263
    %v3399 = vunpack.c.h.b16 %v3263
    %v3400 = vunpack.c.l.b16 %v3264
    %v3401 = vunpack.c.h.b16 %v3264
    %v3402 = vunpack.c.l.b16 %v3265
    %v3403 = vunpack.c.h.b16 %v3265
    %v3404 = vunpack.c.l.b16 %v3266
    %v3405 = vunpack.c.h.b16 %v3266
    %v3406 = vunpack.c.l.b16 %v3267
    %v3407 = vunpack.c.h.b16 %v3267
    %v3408 = vunpack.c.l.b16 %v3268
    %v3409 = vunpack.c.h.b16 %v3268
    %v3410 = vunpack.c.l.b16 %v3269
    %v3411 = vunpack.c.h.b16 %v3269
    %v3412 = vunpack.c.l.b16 %v3270
    %v3413 = vunpack.c.h.b16 %v3270
    %v3414 = vunpack.c.l.b16 %v3271
    %v3415 = vunpack.c.h.b16 %v3271
    %v3416 = vpack.c.b16 %v3324, %v3320
    %v3417 = vpack.c.b16 %v3325, %v3321
    %v3418 = vpack.c.b16 %v3326, %v3322
    %v3419 = vpack.c.b16 %v3327, %v3323
    %v3420 = vpack.c.b16 %v3332, %v3328
    %v3421 = vpack.c.b16 %v3333, %v3329
    %v3422 = vpack.c.b16 %v3334, %v3330
    %v3423 = vpack.c.b16 %v3335, %v3331
    %v3424 = vpack.c.b16 %v3340, %v3336
    %v3425 = vpack.c.b16 %v3341, %v3337
    %v3426 = vpack.c.b16 %v3342, %v3338
    %v3427 = vpack.c.b16 %v3343, %v3339
    %v3428 = vpack.c.b16 %v3348, %v3344
    %v3429 = vpack.c.b16 %v3349, %v3345
    %v3430 = vpack.c.b16 %v3350, %v3346
    %v3431 = vpack.c.b16 %v3351, %v3347
    %v3432 = vpack.c.b16 %v3356, %v3352
    %v3433 = vpack.c.b16 %v3357, %v3353
    %v3434 = vpack.c.b16 %v3358, %v3354
    %v3435 = vpack.c.b16 %v3359, %v3355
    %v3436 = vpack.c.b16 %v3364, %v3360
    %v3437 = vpack.c.b16 %v3365, %v3361
    %v3438 = vpack.c.b16 %v3366, %v3362
    %v3439 = vpack.c.b16 %v3367, %v3363
    %v3440 = vpack.c.b16 %v3372, %v3368
    %v3441 = vpack.c.b16 %v3373, %v3369
    %v3442 = vpack.c.b16 %v3374, %v3370
    %v3443 = vpack.c.b16 %v3375, %v3371
    %v3444 = vpack.c.b16 %v3380, %v3376
    %v3445 = vpack.c.b16 %v3381, %v3377
    %v3446 = vpack.c.b16 %v3382, %v3378
    %v3447 = vpack.c.b16 %v3383, %v3379
    %v3448 = vpack.c.b16 %v3388, %v3384
    %v3449 = vpack.c.b16 %v3389, %v3385
    %v3450 = vpack.c.b16 %v3390, %v3386
    %v3451 = vpack.c.b16 %v3391, %v3387
    %v3452 = vpack.c.b16 %v3396, %v3392
    %v3453 = vpack.c.b16 %v3397, %v3393
    %v3454 = vpack.c.b16 %v3398, %v3394
    %v3455 = vpack.c.b16 %v3399, %v3395
    %v3456 = vpack.c.b16 %v3404, %v3400
    %v3457 = vpack.c.b16 %v3405, %v3401
    %v3458 = vpack.c.b16 %v3406, %v3402
    %v3459 = vpack.c.b16 %v3407, %v3403
    %v3460 = vpack.c.b16 %v3412, %v3408
    %v3461 = vpack.c.b16 %v3413, %v3409
    %v3462 = vpack.c.b16 %v3414, %v3410
    %v3463 = vpack.c.b16 %v3415, %v3411
    %v3513 = vsel %vm236, %v3222, 0
    %3515 = vmatprep.subr.bf16.mxu0 %v3417
    %3516 = vmatpush1.bf16.msra.mxu0 %v3416
    %3517 = vmatprep.subr.bf16.mxu0 %v3421
    %3518 = vmatpush1.bf16.msra.mxu0 %v3420
    %3519 = vmatprep.subr.bf16.mxu0 %v3425
    %3520 = vmatpush1.bf16.msra.mxu0 %v3424
    %3521 = vmatprep.subr.bf16.mxu0 %v3429
    %3522 = vmatpush1.bf16.msra.mxu0 %v3428
    %3523 = vmatprep.subr.bf16.mxu0 %v3433
    %3524 = vmatpush1.bf16.msra.mxu0 %v3432
    %3525 = vmatprep.subr.bf16.mxu0 %v3437
    %3526 = vmatpush1.bf16.msra.mxu0 %v3436
    %3527 = vmatprep.subr.bf16.mxu0 %v3441
    %3528 = vmatpush1.bf16.msra.mxu0 %v3440
    %3529 = vmatprep.subr.bf16.mxu0 %v3445
    %3530 = vmatpush1.bf16.msra.mxu0 %v3444
    %3531 = vmatprep.subr.bf16.mxu0 %v3449
    %3532 = vmatpush1.bf16.msra.mxu0 %v3448
    %3533 = vmatprep.subr.bf16.mxu0 %v3453
    %3534 = vmatpush1.bf16.msra.mxu0 %v3452
    %3535 = vmatprep.subr.bf16.mxu0 %v3457
    %3536 = vmatpush1.bf16.msra.mxu0 %v3456
    %3537 = vmatprep.subr.bf16.mxu0 %v3461
    %3538 = vmatpush1.bf16.msra.mxu0 %v3460
    %3539 = vmatprep.subr.bf16.mxu0 0
    %3540 = vmatpush1.bf16.msra.mxu0 0
    %3541 = vmatprep.subr.bf16.mxu0 0
    %3542 = vmatpush1.bf16.msra.mxu0 0
    %3543 = vmatprep.subr.bf16.mxu0 0
    %3544 = vmatpush1.bf16.msra.mxu0 0
    %3545 = vmatprep.subr.bf16.mxu0 0
    %3546 = vmatpush1.bf16.msra.mxu0 0
    %3547 = vmatprep.mubr.bf16.mxu0 %v3513
    %3548 = vmatmul.mubr.bf16.gmra.mrb[0].mxu0 %v3221
    %v3549 = vpop.f32.mrb[0].mxu0
    %v3550 = vadd.f32 0.0, %v3549
    %v3551 = vpop.f32.mrb[0].mxu0
    %v3552 = vadd.f32 0.0, %v3551
    %v3553 = vpop.f32.mrb[0].mxu0
    %v3554 = vpop.f32.mrb[0].mxu0
    %3555 = vdwg.mxu0
    %3556 = vmatprep.subr.bf16.mxu0 %v3419
    %3557 = vmatpush1.bf16.msra.mxu0 %v3418
    %3558 = vmatprep.subr.bf16.mxu0 %v3423
    %3559 = vmatpush1.bf16.msra.mxu0 %v3422
    %3560 = vmatprep.subr.bf16.mxu0 %v3427
    %3561 = vmatpush1.bf16.msra.mxu0 %v3426
    %3562 = vmatprep.subr.bf16.mxu0 %v3431
    %3563 = vmatpush1.bf16.msra.mxu0 %v3430
    %3564 = vmatprep.subr.bf16.mxu0 %v3435
    %3565 = vmatpush1.bf16.msra.mxu0 %v3434
    %3566 = vmatprep.subr.bf16.mxu0 %v3439
    %3567 = vmatpush1.bf16.msra.mxu0 %v3438
    %3568 = vmatprep.subr.bf16.mxu0 %v3443
    %3569 = vmatpush1.bf16.msra.mxu0 %v3442
    %3570 = vmatprep.subr.bf16.mxu0 %v3447
    %3571 = vmatpush1.bf16.msra.mxu0 %v3446
    %3572 = vmatprep.subr.bf16.mxu0 %v3451
    %3573 = vmatpush1.bf16.msra.mxu0 %v3450
    %3574 = vmatprep.subr.bf16.mxu0 %v3455
    %3575 = vmatpush1.bf16.msra.mxu0 %v3454
    %3576 = vmatprep.subr.bf16.mxu0 %v3459
    %3577 = vmatpush1.bf16.msra.mxu0 %v3458
    %3578 = vmatprep.subr.bf16.mxu0 %v3463
    %3579 = vmatpush1.bf16.msra.mxu0 %v3462
    %3580 = vmatprep.subr.bf16.mxu0 0
    %3581 = vmatpush1.bf16.msra.mxu0 0
    %3582 = vmatprep.subr.bf16.mxu0 0
    %3583 = vmatpush1.bf16.msra.mxu0 0
    %3584 = vmatprep.subr.bf16.mxu0 0
    %3585 = vmatpush1.bf16.msra.mxu0 0
    %3586 = vmatprep.subr.bf16.mxu0 0
    %3587 = vmatpush1.bf16.msra.mxu0 0
    %3588 = vmatprep.mubr.bf16.mxu0 %v3513
    %3589 = vmatmul.mubr.bf16.gmra.mrb[0].mxu0 %v3221
    %v3590 = vpop.f32.mrb[0].mxu0
    %v3591 = vadd.f32 0.0, %v3590
    %v3592 = vpop.f32.mrb[0].mxu0
    %v3593 = vadd.f32 0.0, %v3592
    %v3594 = vpop.f32.mrb[0].mxu0
    %v3595 = vpop.f32.mrb[0].mxu0
    %3596 = vdwg.mxu0
    %v3645 = vunpack.c.l.b16 %v3127
    %v3646 = vunpack.c.h.b16 %v3127
    %v3647 = vunpack.c.l.b16 %v3128
    %v3648 = vunpack.c.h.b16 %v3128
    %v3649 = vunpack.c.l.b16 %v3129
    %v3650 = vunpack.c.h.b16 %v3129
    %v3651 = vunpack.c.l.b16 %v3130
    %v3652 = vunpack.c.h.b16 %v3130
    %v3653 = vunpack.c.l.b16 %v3131
    %v3654 = vunpack.c.h.b16 %v3131
    %v3655 = vunpack.c.l.b16 %v3132
    %v3656 = vunpack.c.h.b16 %v3132
    %v3657 = vunpack.c.l.b16 %v3133
    %v3658 = vunpack.c.h.b16 %v3133
    %v3659 = vunpack.c.l.b16 %v3134
    %v3660 = vunpack.c.h.b16 %v3134
    %v3661 = vunpack.c.l.b16 %v3135
    %v3662 = vunpack.c.h.b16 %v3135
    %v3663 = vunpack.c.l.b16 %v3136
    %v3664 = vunpack.c.h.b16 %v3136
    %v3665 = vunpack.c.l.b16 %v3137
    %v3666 = vunpack.c.h.b16 %v3137
    %v3667 = vunpack.c.l.b16 %v3138
    %v3668 = vunpack.c.h.b16 %v3138
    %v3669 = vunpack.c.l.b16 %v3139
    %v3670 = vunpack.c.h.b16 %v3139
    %v3671 = vunpack.c.l.b16 %v3140
    %v3672 = vunpack.c.h.b16 %v3140
    %v3673 = vunpack.c.l.b16 %v3141
    %v3674 = vunpack.c.h.b16 %v3141
    %v3675 = vunpack.c.l.b16 %v3142
    %v3676 = vunpack.c.h.b16 %v3142
    %v3677 = vunpack.c.l.b16 %v3143
    %v3678 = vunpack.c.h.b16 %v3143
    %v3679 = vunpack.c.l.b16 %v3144
    %v3680 = vunpack.c.h.b16 %v3144
    %v3681 = vunpack.c.l.b16 %v3145
    %v3682 = vunpack.c.h.b16 %v3145
    %v3683 = vunpack.c.l.b16 %v3146
    %v3684 = vunpack.c.h.b16 %v3146
    %v3685 = vunpack.c.l.b16 %v3147
    %v3686 = vunpack.c.h.b16 %v3147
    %v3687 = vunpack.c.l.b16 %v3148
    %v3688 = vunpack.c.h.b16 %v3148
    %v3689 = vunpack.c.l.b16 %v3149
    %v3690 = vunpack.c.h.b16 %v3149
    %v3691 = vunpack.c.l.b16 %v3150
    %v3692 = vunpack.c.h.b16 %v3150
    %v3693 = vunpack.c.l.b16 %v3151
    %v3694 = vunpack.c.h.b16 %v3151
    %v3695 = vunpack.c.l.b16 %v3152
    %v3696 = vunpack.c.h.b16 %v3152
    %v3697 = vunpack.c.l.b16 %v3153
    %v3698 = vunpack.c.h.b16 %v3153
    %v3699 = vunpack.c.l.b16 %v3154
    %v3700 = vunpack.c.h.b16 %v3154
    %v3701 = vunpack.c.l.b16 %v3155
    %v3702 = vunpack.c.h.b16 %v3155
    %v3703 = vunpack.c.l.b16 %v3156
    %v3704 = vunpack.c.h.b16 %v3156
    %v3705 = vunpack.c.l.b16 %v3157
    %v3706 = vunpack.c.h.b16 %v3157
    %v3707 = vunpack.c.l.b16 %v3158
    %v3708 = vunpack.c.h.b16 %v3158
    %v3709 = vunpack.c.l.b16 %v3159
    %v3710 = vunpack.c.h.b16 %v3159
    %v3711 = vunpack.c.l.b16 %v3160
    %v3712 = vunpack.c.h.b16 %v3160
    %v3713 = vunpack.c.l.b16 %v3161
    %v3714 = vunpack.c.h.b16 %v3161
    %v3715 = vunpack.c.l.b16 %v3162
    %v3716 = vunpack.c.h.b16 %v3162
    %v3717 = vunpack.c.l.b16 %v3163
    %v3718 = vunpack.c.h.b16 %v3163
    %v3719 = vunpack.c.l.b16 %v3164
    %v3720 = vunpack.c.h.b16 %v3164
    %v3721 = vunpack.c.l.b16 %v3165
    %v3722 = vunpack.c.h.b16 %v3165
    %v3723 = vunpack.c.l.b16 %v3166
    %v3724 = vunpack.c.h.b16 %v3166
    %v3725 = vunpack.c.l.b16 %v3167
    %v3726 = vunpack.c.h.b16 %v3167
    %v3727 = vunpack.c.l.b16 %v3168
    %v3728 = vunpack.c.h.b16 %v3168
    %v3729 = vunpack.c.l.b16 %v3169
    %v3730 = vunpack.c.h.b16 %v3169
    %v3731 = vunpack.c.l.b16 %v3170
    %v3732 = vunpack.c.h.b16 %v3170
    %v3733 = vunpack.c.l.b16 %v3171
    %v3734 = vunpack.c.h.b16 %v3171
    %v3735 = vunpack.c.l.b16 %v3172
    %v3736 = vunpack.c.h.b16 %v3172
    %v3737 = vunpack.c.l.b16 %v3173
    %v3738 = vunpack.c.h.b16 %v3173
    %v3739 = vunpack.c.l.b16 %v3174
    %v3740 = vunpack.c.h.b16 %v3174
    %v3741 = vpack.c.b16 %v3649, %v3645
    %v3742 = vpack.c.b16 %v3650, %v3646
    %v3743 = vpack.c.b16 %v3651, %v3647
    %v3744 = vpack.c.b16 %v3652, %v3648
    %v3745 = vpack.c.b16 %v3657, %v3653
    %v3746 = vpack.c.b16 %v3658, %v3654
    %v3747 = vpack.c.b16 %v3659, %v3655
    %v3748 = vpack.c.b16 %v3660, %v3656
    %v3749 = vpack.c.b16 %v3665, %v3661
    %v3750 = vpack.c.b16 %v3666, %v3662
    %v3751 = vpack.c.b16 %v3667, %v3663
    %v3752 = vpack.c.b16 %v3668, %v3664
    %v3753 = vpack.c.b16 %v3673, %v3669
    %v3754 = vpack.c.b16 %v3674, %v3670
    %v3755 = vpack.c.b16 %v3675, %v3671
    %v3756 = vpack.c.b16 %v3676, %v3672
    %v3757 = vpack.c.b16 %v3681, %v3677
    %v3758 = vpack.c.b16 %v3682, %v3678
    %v3759 = vpack.c.b16 %v3683, %v3679
    %v3760 = vpack.c.b16 %v3684, %v3680
    %v3761 = vpack.c.b16 %v3689, %v3685
    %v3762 = vpack.c.b16 %v3690, %v3686
    %v3763 = vpack.c.b16 %v3691, %v3687
    %v3764 = vpack.c.b16 %v3692, %v3688
    %v3765 = vpack.c.b16 %v3697, %v3693
    %v3766 = vpack.c.b16 %v3698, %v3694
    %v3767 = vpack.c.b16 %v3699, %v3695
    %v3768 = vpack.c.b16 %v3700, %v3696
    %v3769 = vpack.c.b16 %v3705, %v3701
    %v3770 = vpack.c.b16 %v3706, %v3702
    %v3771 = vpack.c.b16 %v3707, %v3703
    %v3772 = vpack.c.b16 %v3708, %v3704
    %v3773 = vpack.c.b16 %v3713, %v3709
    %v3774 = vpack.c.b16 %v3714, %v3710
    %v3775 = vpack.c.b16 %v3715, %v3711
    %v3776 = vpack.c.b16 %v3716, %v3712
    %v3777 = vpack.c.b16 %v3721, %v3717
    %v3778 = vpack.c.b16 %v3722, %v3718
    %v3779 = vpack.c.b16 %v3723, %v3719
    %v3780 = vpack.c.b16 %v3724, %v3720
    %v3781 = vpack.c.b16 %v3729, %v3725
    %v3782 = vpack.c.b16 %v3730, %v3726
    %v3783 = vpack.c.b16 %v3731, %v3727
    %v3784 = vpack.c.b16 %v3732, %v3728
    %v3785 = vpack.c.b16 %v3737, %v3733
    %v3786 = vpack.c.b16 %v3738, %v3734
    %v3787 = vpack.c.b16 %v3739, %v3735
    %v3788 = vpack.c.b16 %v3740, %v3736
    %v3838 = vsel %vm236, %v3126, 0
    %3840 = vmatprep.subr.bf16.mxu0 %v3742
    %3841 = vmatpush1.bf16.msra.mxu0 %v3741
    %3842 = vmatprep.subr.bf16.mxu0 %v3746
    %3843 = vmatpush1.bf16.msra.mxu0 %v3745
    %3844 = vmatprep.subr.bf16.mxu0 %v3750
    %3845 = vmatpush1.bf16.msra.mxu0 %v3749
    %3846 = vmatprep.subr.bf16.mxu0 %v3754
    %3847 = vmatpush1.bf16.msra.mxu0 %v3753
    %3848 = vmatprep.subr.bf16.mxu0 %v3758
    %3849 = vmatpush1.bf16.msra.mxu0 %v3757
    %3850 = vmatprep.subr.bf16.mxu0 %v3762
    %3851 = vmatpush1.bf16.msra.mxu0 %v3761
    %3852 = vmatprep.subr.bf16.mxu0 %v3766
    %3853 = vmatpush1.bf16.msra.mxu0 %v3765
    %3854 = vmatprep.subr.bf16.mxu0 %v3770
    %3855 = vmatpush1.bf16.msra.mxu0 %v3769
    %3856 = vmatprep.subr.bf16.mxu0 %v3774
    %3857 = vmatpush1.bf16.msra.mxu0 %v3773
    %3858 = vmatprep.subr.bf16.mxu0 %v3778
    %3859 = vmatpush1.bf16.msra.mxu0 %v3777
    %3860 = vmatprep.subr.bf16.mxu0 %v3782
    %3861 = vmatpush1.bf16.msra.mxu0 %v3781
    %3862 = vmatprep.subr.bf16.mxu0 %v3786
    %3863 = vmatpush1.bf16.msra.mxu0 %v3785
    %3864 = vmatprep.subr.bf16.mxu0 0
    %3865 = vmatpush1.bf16.msra.mxu0 0
    %3866 = vmatprep.subr.bf16.mxu0 0
    %3867 = vmatpush1.bf16.msra.mxu0 0
    %3868 = vmatprep.subr.bf16.mxu0 0
    %3869 = vmatpush1.bf16.msra.mxu0 0
    %3870 = vmatprep.subr.bf16.mxu0 0
    %3871 = vmatpush1.bf16.msra.mxu0 0
    %3872 = vmatprep.mubr.bf16.mxu0 %v3838
    %3873 = vmatmul.mubr.bf16.gmra.mrb[0].mxu0 %v3125
    %v3874 = vpop.f32.mrb[0].mxu0
    %v3875 = vadd.f32 %v3550, %v3874
    %v3876 = vpop.f32.mrb[0].mxu0
    %v3877 = vadd.f32 %v3552, %v3876
    %v3878 = vpop.f32.mrb[0].mxu0
    %v3879 = vpop.f32.mrb[0].mxu0
    %3880 = vdwg.mxu0
    %3881 = vmatprep.subr.bf16.mxu0 %v3744
    %3882 = vmatpush1.bf16.msra.mxu0 %v3743
    %3883 = vmatprep.subr.bf16.mxu0 %v3748
    %3884 = vmatpush1.bf16.msra.mxu0 %v3747
    %3885 = vmatprep.subr.bf16.mxu0 %v3752
    %3886 = vmatpush1.bf16.msra.mxu0 %v3751
    %3887 = vmatprep.subr.bf16.mxu0 %v3756
    %3888 = vmatpush1.bf16.msra.mxu0 %v3755
    %3889 = vmatprep.subr.bf16.mxu0 %v3760
    %3890 = vmatpush1.bf16.msra.mxu0 %v3759
    %3891 = vmatprep.subr.bf16.mxu0 %v3764
    %3892 = vmatpush1.bf16.msra.mxu0 %v3763
    %3893 = vmatprep.subr.bf16.mxu0 %v3768
    %3894 = vmatpush1.bf16.msra.mxu0 %v3767
    %3895 = vmatprep.subr.bf16.mxu0 %v3772
    %3896 = vmatpush1.bf16.msra.mxu0 %v3771
    %3897 = vmatprep.subr.bf16.mxu0 %v3776
    %3898 = vmatpush1.bf16.msra.mxu0 %v3775
    %3899 = vmatprep.subr.bf16.mxu0 %v3780
    %3900 = vmatpush1.bf16.msra.mxu0 %v3779
    %3901 = vmatprep.subr.bf16.mxu0 %v3784
    %3902 = vmatpush1.bf16.msra.mxu0 %v3783
    %3903 = vmatprep.subr.bf16.mxu0 %v3788
    %3904 = vmatpush1.bf16.msra.mxu0 %v3787
    %3905 = vmatprep.subr.bf16.mxu0 0
    %3906 = vmatpush1.bf16.msra.mxu0 0
    %3907 = vmatprep.subr.bf16.mxu0 0
    %3908 = vmatpush1.bf16.msra.mxu0 0
    %3909 = vmatprep.subr.bf16.mxu0 0
    %3910 = vmatpush1.bf16.msra.mxu0 0
    %3911 = vmatprep.subr.bf16.mxu0 0
    %3912 = vmatpush1.bf16.msra.mxu0 0
    %3913 = vmatprep.mubr.bf16.mxu0 %v3838
    %3914 = vmatmul.mubr.bf16.gmra.mrb[0].mxu0 %v3125
    %v3915 = vpop.f32.mrb[0].mxu0
    %v3916 = vadd.f32 %v3591, %v3915
    %v3917 = vpop.f32.mrb[0].mxu0
    %v3918 = vadd.f32 %v3593, %v3917
    %v3919 = vpop.f32.mrb[0].mxu0
    %v3920 = vpop.f32.mrb[0].mxu0
    %3921 = vdwg.mxu0
    %s3922 = scalar_lea.vmem %s11, 2
    %v3923 = vld [vmem:[%s3922] sm:$0x1]
    %v3925 = vsel %vm3073, %v3923, 0
    %3927 = vmatprep.subr.bf16.mxu0 %v3082
    %3928 = vmatpush1.bf16.msra.mxu0 %v3079
    %3929 = vmatprep.subr.bf16.mxu0 0
    %3930 = vmatpush1.bf16.msra.mxu0 0
    %3931 = vmatprep.subr.bf16.mxu0 0
    %3932 = vmatpush1.bf16.msra.mxu0 0
    %3933 = vmatprep.subr.bf16.mxu0 0
    %3934 = vmatpush1.bf16.msra.mxu0 0
    %3935 = vmatprep.subr.bf16.mxu0 0
    %3936 = vmatpush1.bf16.msra.mxu0 0
    %3937 = vmatprep.subr.bf16.mxu0 0
    %3938 = vmatpush1.bf16.msra.mxu0 0
    %3939 = vmatprep.subr.bf16.mxu0 0
    %3940 = vmatpush1.bf16.msra.mxu0 0
    %3941 = vmatprep.subr.bf16.mxu0 0
    %3942 = vmatpush1.bf16.msra.mxu0 0
    %3943 = vmatprep.subr.bf16.mxu0 0
    %3944 = vmatpush1.bf16.msra.mxu0 0
    %3945 = vmatprep.subr.bf16.mxu0 0
    %3946 = vmatpush1.bf16.msra.mxu0 0
    %3947 = vmatprep.subr.bf16.mxu0 0
    %3948 = vmatpush1.bf16.msra.mxu0 0
    %3949 = vmatprep.subr.bf16.mxu0 0
    %3950 = vmatpush1.bf16.msra.mxu0 0
    %3951 = vmatprep.subr.bf16.mxu0 0
    %3952 = vmatpush1.bf16.msra.mxu0 0
    %3953 = vmatprep.subr.bf16.mxu0 0
    %3954 = vmatpush1.bf16.msra.mxu0 0
    %3955 = vmatprep.subr.bf16.mxu0 0
    %3956 = vmatpush1.bf16.msra.mxu0 0
    %3957 = vmatprep.subr.bf16.mxu0 0
    %3958 = vmatpush1.bf16.msra.mxu0 0
    %3959 = vmatprep.mubr.bf16.mxu0 0
    %3960 = vmatmul.mubr.bf16.gmra.mrb[0].mxu0 %v3925
    %v3961 = vpop.f32.mrb[0].mxu0
    %v3962 = vadd.f32 0.0, %v3961
    %v3963 = vpop.f32.mrb[0].mxu0
    %v3964 = vadd.f32 0.0, %v3963
    %v3965 = vpop.f32.mrb[0].mxu0
    %v3966 = vpop.f32.mrb[0].mxu0
    %3967 = vdwg.mxu0
    %v3968 = vpack.c.bf16 %v3962, %v3962
    %v3969 = vpack.c.bf16 %v3964, %v3964
    %s3970 = scalar_lea.vmem %s10, 768
    %v3971 = vld [vmem:[%s3970] sm:$0xff]
    %v3972 = vld [vmem:[%s3970 + $0x8] sm:$0xff]
    %v3973 = vld [vmem:[%s3970 + $0x10] sm:$0xff]
    %v3974 = vld [vmem:[%s3970 + $0x18] sm:$0xff]
    %v3975 = vld [vmem:[%s3970 + $0x20] sm:$0xff]
    %v3976 = vld [vmem:[%s3970 + $0x28] sm:$0xff]
    %v3977 = vld [vmem:[%s3970 + $0x30] sm:$0xff]
    %v3978 = vld [vmem:[%s3970 + $0x38] sm:$0xff]
    %v3979 = vld [vmem:[%s3970 + $0x40] sm:$0xff]
    %v3980 = vld [vmem:[%s3970 + $0x48] sm:$0xff]
    %v3981 = vld [vmem:[%s3970 + $0x50] sm:$0xff]
    %v3982 = vld [vmem:[%s3970 + $0x58] sm:$0xff]
    %v3983 = vld [vmem:[%s3970 + $0x60] sm:$0xff]
    %v3984 = vld [vmem:[%s3970 + $0x68] sm:$0xff]
    %v3985 = vld [vmem:[%s3970 + $0x70] sm:$0xff]
    %v3986 = vld [vmem:[%s3970 + $0x78] sm:$0xff]
    %v3987 = vld [vmem:[%s3970 + $0x80] sm:$0xff]
    %v3988 = vld [vmem:[%s3970 + $0x88] sm:$0xff]
    %v3989 = vld [vmem:[%s3970 + $0x90] sm:$0xff]
    %v3990 = vld [vmem:[%s3970 + $0x98] sm:$0xff]
    %v3991 = vld [vmem:[%s3970 + $0xa0] sm:$0xff]
    %v3992 = vld [vmem:[%s3970 + $0xa8] sm:$0xff]
    %v3993 = vld [vmem:[%s3970 + $0xb0] sm:$0xff]
    %v3994 = vld [vmem:[%s3970 + $0xb8] sm:$0xff]
    %v3995 = vld [vmem:[%s3970 + $0xc0] sm:$0xff]
    %v3996 = vld [vmem:[%s3970 + $0xc8] sm:$0xff]
    %v3997 = vld [vmem:[%s3970 + $0xd0] sm:$0xff]
    %v3998 = vld [vmem:[%s3970 + $0xd8] sm:$0xff]
    %v3999 = vld [vmem:[%s3970 + $0xe0] sm:$0xff]
    %v4000 = vld [vmem:[%s3970 + $0xe8] sm:$0xff]
    %v4001 = vld [vmem:[%s3970 + $0xf0] sm:$0xff]
    %v4002 = vld [vmem:[%s3970 + $0xf8] sm:$0xff]
    %v4003 = vld [vmem:[%s3970 + $0x100] sm:$0xff]
    %v4004 = vld [vmem:[%s3970 + $0x108] sm:$0xff]
    %v4005 = vld [vmem:[%s3970 + $0x110] sm:$0xff]
    %v4006 = vld [vmem:[%s3970 + $0x118] sm:$0xff]
    %v4007 = vld [vmem:[%s3970 + $0x120] sm:$0xff]
    %v4008 = vld [vmem:[%s3970 + $0x128] sm:$0xff]
    %v4009 = vld [vmem:[%s3970 + $0x130] sm:$0xff]
    %v4010 = vld [vmem:[%s3970 + $0x138] sm:$0xff]
    %v4011 = vld [vmem:[%s3970 + $0x140] sm:$0xff]
    %v4012 = vld [vmem:[%s3970 + $0x148] sm:$0xff]
    %v4013 = vld [vmem:[%s3970 + $0x150] sm:$0xff]
    %v4014 = vld [vmem:[%s3970 + $0x158] sm:$0xff]
    %v4015 = vld [vmem:[%s3970 + $0x160] sm:$0xff]
    %v4016 = vld [vmem:[%s3970 + $0x168] sm:$0xff]
    %v4017 = vld [vmem:[%s3970 + $0x170] sm:$0xff]
    %v4018 = vld [vmem:[%s3970 + $0x178] sm:$0xff]
    %v4067 = vunpack.c.l.b16 %v3971
    %v4068 = vunpack.c.h.b16 %v3971
    %v4069 = vunpack.c.l.b16 %v3972
    %v4070 = vunpack.c.h.b16 %v3972
    %v4071 = vunpack.c.l.b16 %v3973
    %v4072 = vunpack.c.h.b16 %v3973
    %v4073 = vunpack.c.l.b16 %v3974
    %v4074 = vunpack.c.h.b16 %v3974
    %v4075 = vunpack.c.l.b16 %v3975
    %v4076 = vunpack.c.h.b16 %v3975
    %v4077 = vunpack.c.l.b16 %v3976
    %v4078 = vunpack.c.h.b16 %v3976
    %v4079 = vunpack.c.l.b16 %v3977
    %v4080 = vunpack.c.h.b16 %v3977
    %v4081 = vunpack.c.l.b16 %v3978
    %v4082 = vunpack.c.h.b16 %v3978
    %v4083 = vunpack.c.l.b16 %v3979
    %v4084 = vunpack.c.h.b16 %v3979
    %v4085 = vunpack.c.l.b16 %v3980
    %v4086 = vunpack.c.h.b16 %v3980
    %v4087 = vunpack.c.l.b16 %v3981
    %v4088 = vunpack.c.h.b16 %v3981
    %v4089 = vunpack.c.l.b16 %v3982
    %v4090 = vunpack.c.h.b16 %v3982
    %v4091 = vunpack.c.l.b16 %v3983
    %v4092 = vunpack.c.h.b16 %v3983
    %v4093 = vunpack.c.l.b16 %v3984
    %v4094 = vunpack.c.h.b16 %v3984
    %v4095 = vunpack.c.l.b16 %v3985
    %v4096 = vunpack.c.h.b16 %v3985
    %v4097 = vunpack.c.l.b16 %v3986
    %v4098 = vunpack.c.h.b16 %v3986
    %v4099 = vunpack.c.l.b16 %v3987
    %v4100 = vunpack.c.h.b16 %v3987
    %v4101 = vunpack.c.l.b16 %v3988
    %v4102 = vunpack.c.h.b16 %v3988
    %v4103 = vunpack.c.l.b16 %v3989
    %v4104 = vunpack.c.h.b16 %v3989
    %v4105 = vunpack.c.l.b16 %v3990
    %v4106 = vunpack.c.h.b16 %v3990
    %v4107 = vunpack.c.l.b16 %v3991
    %v4108 = vunpack.c.h.b16 %v3991
    %v4109 = vunpack.c.l.b16 %v3992
    %v4110 = vunpack.c.h.b16 %v3992
    %v4111 = vunpack.c.l.b16 %v3993
    %v4112 = vunpack.c.h.b16 %v3993
    %v4113 = vunpack.c.l.b16 %v3994
    %v4114 = vunpack.c.h.b16 %v3994
    %v4115 = vunpack.c.l.b16 %v3995
    %v4116 = vunpack.c.h.b16 %v3995
    %v4117 = vunpack.c.l.b16 %v3996
    %v4118 = vunpack.c.h.b16 %v3996
    %v4119 = vunpack.c.l.b16 %v3997
    %v4120 = vunpack.c.h.b16 %v3997
    %v4121 = vunpack.c.l.b16 %v3998
    %v4122 = vunpack.c.h.b16 %v3998
    %v4123 = vunpack.c.l.b16 %v3999
    %v4124 = vunpack.c.h.b16 %v3999
    %v4125 = vunpack.c.l.b16 %v4000
    %v4126 = vunpack.c.h.b16 %v4000
    %v4127 = vunpack.c.l.b16 %v4001
    %v4128 = vunpack.c.h.b16 %v4001
    %v4129 = vunpack.c.l.b16 %v4002
    %v4130 = vunpack.c.h.b16 %v4002
    %v4131 = vunpack.c.l.b16 %v4003
    %v4132 = vunpack.c.h.b16 %v4003
    %v4133 = vunpack.c.l.b16 %v4004
    %v4134 = vunpack.c.h.b16 %v4004
    %v4135 = vunpack.c.l.b16 %v4005
    %v4136 = vunpack.c.h.b16 %v4005
    %v4137 = vunpack.c.l.b16 %v4006
    %v4138 = vunpack.c.h.b16 %v4006
    %v4139 = vunpack.c.l.b16 %v4007
    %v4140 = vunpack.c.h.b16 %v4007
    %v4141 = vunpack.c.l.b16 %v4008
    %v4142 = vunpack.c.h.b16 %v4008
    %v4143 = vunpack.c.l.b16 %v4009
    %v4144 = vunpack.c.h.b16 %v4009
    %v4145 = vunpack.c.l.b16 %v4010
    %v4146 = vunpack.c.h.b16 %v4010
    %v4147 = vunpack.c.l.b16 %v4011
    %v4148 = vunpack.c.h.b16 %v4011
    %v4149 = vunpack.c.l.b16 %v4012
    %v4150 = vunpack.c.h.b16 %v4012
    %v4151 = vunpack.c.l.b16 %v4013
    %v4152 = vunpack.c.h.b16 %v4013
    %v4153 = vunpack.c.l.b16 %v4014
    %v4154 = vunpack.c.h.b16 %v4014
    %v4155 = vunpack.c.l.b16 %v4015
    %v4156 = vunpack.c.h.b16 %v4015
    %v4157 = vunpack.c.l.b16 %v4016
    %v4158 = vunpack.c.h.b16 %v4016
    %v4159 = vunpack.c.l.b16 %v4017
    %v4160 = vunpack.c.h.b16 %v4017
    %v4161 = vunpack.c.l.b16 %v4018
    %v4162 = vunpack.c.h.b16 %v4018
    %v4163 = vpack.c.b16 %v4071, %v4067
    %v4164 = vpack.c.b16 %v4072, %v4068
    %v4165 = vpack.c.b16 %v4073, %v4069
    %v4166 = vpack.c.b16 %v4074, %v4070
    %v4167 = vpack.c.b16 %v4079, %v4075
    %v4168 = vpack.c.b16 %v4080, %v4076
    %v4169 = vpack.c.b16 %v4081, %v4077
    %v4170 = vpack.c.b16 %v4082, %v4078
    %v4171 = vpack.c.b16 %v4087, %v4083
    %v4172 = vpack.c.b16 %v4088, %v4084
    %v4173 = vpack.c.b16 %v4089, %v4085
    %v4174 = vpack.c.b16 %v4090, %v4086
    %v4175 = vpack.c.b16 %v4095, %v4091
    %v4176 = vpack.c.b16 %v4096, %v4092
    %v4177 = vpack.c.b16 %v4097, %v4093
    %v4178 = vpack.c.b16 %v4098, %v4094
    %v4179 = vpack.c.b16 %v4103, %v4099
    %v4180 = vpack.c.b16 %v4104, %v4100
    %v4181 = vpack.c.b16 %v4105, %v4101
    %v4182 = vpack.c.b16 %v4106, %v4102
    %v4183 = vpack.c.b16 %v4111, %v4107
    %v4184 = vpack.c.b16 %v4112, %v4108
    %v4185 = vpack.c.b16 %v4113, %v4109
    %v4186 = vpack.c.b16 %v4114, %v4110
    %v4187 = vpack.c.b16 %v4119, %v4115
    %v4188 = vpack.c.b16 %v4120, %v4116
    %v4189 = vpack.c.b16 %v4121, %v4117
    %v4190 = vpack.c.b16 %v4122, %v4118
    %v4191 = vpack.c.b16 %v4127, %v4123
    %v4192 = vpack.c.b16 %v4128, %v4124
    %v4193 = vpack.c.b16 %v4129, %v4125
    %v4194 = vpack.c.b16 %v4130, %v4126
    %v4195 = vpack.c.b16 %v4135, %v4131
    %v4196 = vpack.c.b16 %v4136, %v4132
    %v4197 = vpack.c.b16 %v4137, %v4133
    %v4198 = vpack.c.b16 %v4138, %v4134
    %v4199 = vpack.c.b16 %v4143, %v4139
    %v4200 = vpack.c.b16 %v4144, %v4140
    %v4201 = vpack.c.b16 %v4145, %v4141
    %v4202 = vpack.c.b16 %v4146, %v4142
    %v4203 = vpack.c.b16 %v4151, %v4147
    %v4204 = vpack.c.b16 %v4152, %v4148
    %v4205 = vpack.c.b16 %v4153, %v4149
    %v4206 = vpack.c.b16 %v4154, %v4150
    %v4207 = vpack.c.b16 %v4159, %v4155
    %v4208 = vpack.c.b16 %v4160, %v4156
    %v4209 = vpack.c.b16 %v4161, %v4157
    %v4210 = vpack.c.b16 %v4162, %v4158
    %v4260 = vsel %vm236, %v3969, 0
    %4262 = vmatprep.subr.bf16.mxu0 %v4164
    %4263 = vmatpush1.bf16.msra.mxu0 %v4163
    %4264 = vmatprep.subr.bf16.mxu0 %v4168
    %4265 = vmatpush1.bf16.msra.mxu0 %v4167
    %4266 = vmatprep.subr.bf16.mxu0 %v4172
    %4267 = vmatpush1.bf16.msra.mxu0 %v4171
    %4268 = vmatprep.subr.bf16.mxu0 %v4176
    %4269 = vmatpush1.bf16.msra.mxu0 %v4175
    %4270 = vmatprep.subr.bf16.mxu0 %v4180
    %4271 = vmatpush1.bf16.msra.mxu0 %v4179
    %4272 = vmatprep.subr.bf16.mxu0 %v4184
    %4273 = vmatpush1.bf16.msra.mxu0 %v4183
    %4274 = vmatprep.subr.bf16.mxu0 %v4188
    %4275 = vmatpush1.bf16.msra.mxu0 %v4187
    %4276 = vmatprep.subr.bf16.mxu0 %v4192
    %4277 = vmatpush1.bf16.msra.mxu0 %v4191
    %4278 = vmatprep.subr.bf16.mxu0 %v4196
    %4279 = vmatpush1.bf16.msra.mxu0 %v4195
    %4280 = vmatprep.subr.bf16.mxu0 %v4200
    %4281 = vmatpush1.bf16.msra.mxu0 %v4199
    %4282 = vmatprep.subr.bf16.mxu0 %v4204
    %4283 = vmatpush1.bf16.msra.mxu0 %v4203
    %4284 = vmatprep.subr.bf16.mxu0 %v4208
    %4285 = vmatpush1.bf16.msra.mxu0 %v4207
    %4286 = vmatprep.subr.bf16.mxu0 0
    %4287 = vmatpush1.bf16.msra.mxu0 0
    %4288 = vmatprep.subr.bf16.mxu0 0
    %4289 = vmatpush1.bf16.msra.mxu0 0
    %4290 = vmatprep.subr.bf16.mxu0 0
    %4291 = vmatpush1.bf16.msra.mxu0 0
    %4292 = vmatprep.subr.bf16.mxu0 0
    %4293 = vmatpush1.bf16.msra.mxu0 0
    %4294 = vmatprep.mubr.bf16.mxu0 %v4260
    %4295 = vmatmul.mubr.bf16.gmra.mrb[0].mxu0 %v3968
    %v4296 = vpop.f32.mrb[0].mxu0
    %v4297 = vadd.f32 0.0, %v4296
    %v4298 = vpop.f32.mrb[0].mxu0
    %v4299 = vadd.f32 0.0, %v4298
    %v4300 = vpop.f32.mrb[0].mxu0
    %v4301 = vpop.f32.mrb[0].mxu0
    %4302 = vdwg.mxu0
    %4303 = vmatprep.subr.bf16.mxu0 %v4166
    %4304 = vmatpush1.bf16.msra.mxu0 %v4165
    %4305 = vmatprep.subr.bf16.mxu0 %v4170
    %4306 = vmatpush1.bf16.msra.mxu0 %v4169
    %4307 = vmatprep.subr.bf16.mxu0 %v4174
    %4308 = vmatpush1.bf16.msra.mxu0 %v4173
    %4309 = vmatprep.subr.bf16.mxu0 %v4178
    %4310 = vmatpush1.bf16.msra.mxu0 %v4177
    %4311 = vmatprep.subr.bf16.mxu0 %v4182
    %4312 = vmatpush1.bf16.msra.mxu0 %v4181
    %4313 = vmatprep.subr.bf16.mxu0 %v4186
    %4314 = vmatpush1.bf16.msra.mxu0 %v4185
    %4315 = vmatprep.subr.bf16.mxu0 %v4190
    %4316 = vmatpush1.bf16.msra.mxu0 %v4189
    %4317 = vmatprep.subr.bf16.mxu0 %v4194
    %4318 = vmatpush1.bf16.msra.mxu0 %v4193
    %4319 = vmatprep.subr.bf16.mxu0 %v4198
    %4320 = vmatpush1.bf16.msra.mxu0 %v4197
    %4321 = vmatprep.subr.bf16.mxu0 %v4202
    %4322 = vmatpush1.bf16.msra.mxu0 %v4201
    %4323 = vmatprep.subr.bf16.mxu0 %v4206
    %4324 = vmatpush1.bf16.msra.mxu0 %v4205
    %4325 = vmatprep.subr.bf16.mxu0 %v4210
    %4326 = vmatpush1.bf16.msra.mxu0 %v4209
    %4327 = vmatprep.subr.bf16.mxu0 0
    %4328 = vmatpush1.bf16.msra.mxu0 0
    %4329 = vmatprep.subr.bf16.mxu0 0
    %4330 = vmatpush1.bf16.msra.mxu0 0
    %4331 = vmatprep.subr.bf16.mxu0 0
    %4332 = vmatpush1.bf16.msra.mxu0 0
    %4333 = vmatprep.subr.bf16.mxu0 0
    %4334 = vmatpush1.bf16.msra.mxu0 0
    %4335 = vmatprep.mubr.bf16.mxu0 %v4260
    %4336 = vmatmul.mubr.bf16.gmra.mrb[0].mxu0 %v3968
    %v4337 = vpop.f32.mrb[0].mxu0
    %v4338 = vadd.f32 0.0, %v4337
    %v4339 = vpop.f32.mrb[0].mxu0
    %v4340 = vadd.f32 0.0, %v4339
    %v4341 = vpop.f32.mrb[0].mxu0
    %v4342 = vpop.f32.mrb[0].mxu0
    %4343 = vdwg.mxu0
    %v4344 = vadd.f32 %v3875, %v4297
    %v4345 = vadd.f32 %v3877, %v4299
    %v4346 = vadd.f32 %v3916, %v4338
    %v4347 = vadd.f32 %v3918, %v4340
    %s4348 = scalar_lea.vmem %s11, 3
    %v4349 = vld [vmem:[%s4348] sm:$0x1]
    %v4351 = vsel %vm3073, %v4349, 0
    %4353 = vmatprep.subr.bf16.mxu0 %v3082
    %4354 = vmatpush1.bf16.msra.mxu0 %v3079
    %4355 = vmatprep.subr.bf16.mxu0 0
    %4356 = vmatpush1.bf16.msra.mxu0 0
    %4357 = vmatprep.subr.bf16.mxu0 0
    %4358 = vmatpush1.bf16.msra.mxu0 0
    %4359 = vmatprep.subr.bf16.mxu0 0
    %4360 = vmatpush1.bf16.msra.mxu0 0
    %4361 = vmatprep.subr.bf16.mxu0 0
    %4362 = vmatpush1.bf16.msra.mxu0 0
    %4363 = vmatprep.subr.bf16.mxu0 0
    %4364 = vmatpush1.bf16.msra.mxu0 0
    %4365 = vmatprep.subr.bf16.mxu0 0
    %4366 = vmatpush1.bf16.msra.mxu0 0
    %4367 = vmatprep.subr.bf16.mxu0 0
    %4368 = vmatpush1.bf16.msra.mxu0 0
    %4369 = vmatprep.subr.bf16.mxu0 0
    %4370 = vmatpush1.bf16.msra.mxu0 0
    %4371 = vmatprep.subr.bf16.mxu0 0
    %4372 = vmatpush1.bf16.msra.mxu0 0
    %4373 = vmatprep.subr.bf16.mxu0 0
    %4374 = vmatpush1.bf16.msra.mxu0 0
    %4375 = vmatprep.subr.bf16.mxu0 0
    %4376 = vmatpush1.bf16.msra.mxu0 0
    %4377 = vmatprep.subr.bf16.mxu0 0
    %4378 = vmatpush1.bf16.msra.mxu0 0
    %4379 = vmatprep.subr.bf16.mxu0 0
    %4380 = vmatpush1.bf16.msra.mxu0 0
    %4381 = vmatprep.subr.bf16.mxu0 0
    %4382 = vmatpush1.bf16.msra.mxu0 0
    %4383 = vmatprep.subr.bf16.mxu0 0
    %4384 = vmatpush1.bf16.msra.mxu0 0
    %4385 = vmatprep.mubr.bf16.mxu0 0
    %4386 = vmatmul.mubr.bf16.gmra.mrb[0].mxu0 %v4351
    %v4387 = vpop.f32.mrb[0].mxu0
    %v4388 = vadd.f32 0.0, %v4387
    %v4389 = vpop.f32.mrb[0].mxu0
    %v4390 = vadd.f32 0.0, %v4389
    %v4391 = vpop.f32.mrb[0].mxu0
    %v4392 = vpop.f32.mrb[0].mxu0
    %4393 = vdwg.mxu0
    %v4394 = vpack.c.bf16 %v4388, %v4388
    %v4395 = vpack.c.bf16 %v4390, %v4390
    %s4396 = scalar_lea.vmem %s10, 1152
    %v4397 = vld [vmem:[%s4396] sm:$0xff]
    %v4398 = vld [vmem:[%s4396 + $0x8] sm:$0xff]
    %v4399 = vld [vmem:[%s4396 + $0x10] sm:$0xff]
    %v4400 = vld [vmem:[%s4396 + $0x18] sm:$0xff]
    %v4401 = vld [vmem:[%s4396 + $0x20] sm:$0xff]
    %v4402 = vld [vmem:[%s4396 + $0x28] sm:$0xff]
    %v4403 = vld [vmem:[%s4396 + $0x30] sm:$0xff]
    %v4404 = vld [vmem:[%s4396 + $0x38] sm:$0xff]
    %v4405 = vld [vmem:[%s4396 + $0x40] sm:$0xff]
    %v4406 = vld [vmem:[%s4396 + $0x48] sm:$0xff]
    %v4407 = vld [vmem:[%s4396 + $0x50] sm:$0xff]
    %v4408 = vld [vmem:[%s4396 + $0x58] sm:$0xff]
    %v4409 = vld [vmem:[%s4396 + $0x60] sm:$0xff]
    %v4410 = vld [vmem:[%s4396 + $0x68] sm:$0xff]
    %v4411 = vld [vmem:[%s4396 + $0x70] sm:$0xff]
    %v4412 = vld [vmem:[%s4396 + $0x78] sm:$0xff]
    %v4413 = vld [vmem:[%s4396 + $0x80] sm:$0xff]
    %v4414 = vld [vmem:[%s4396 + $0x88] sm:$0xff]
    %v4415 = vld [vmem:[%s4396 + $0x90] sm:$0xff]
    %v4416 = vld [vmem:[%s4396 + $0x98] sm:$0xff]
    %v4417 = vld [vmem:[%s4396 + $0xa0] sm:$0xff]
    %v4418 = vld [vmem:[%s4396 + $0xa8] sm:$0xff]
    %v4419 = vld [vmem:[%s4396 + $0xb0] sm:$0xff]
    %v4420 = vld [vmem:[%s4396 + $0xb8] sm:$0xff]
    %v4421 = vld [vmem:[%s4396 + $0xc0] sm:$0xff]
    %v4422 = vld [vmem:[%s4396 + $0xc8] sm:$0xff]
    %v4423 = vld [vmem:[%s4396 + $0xd0] sm:$0xff]
    %v4424 = vld [vmem:[%s4396 + $0xd8] sm:$0xff]
    %v4425 = vld [vmem:[%s4396 + $0xe0] sm:$0xff]
    %v4426 = vld [vmem:[%s4396 + $0xe8] sm:$0xff]
    %v4427 = vld [vmem:[%s4396 + $0xf0] sm:$0xff]
    %v4428 = vld [vmem:[%s4396 + $0xf8] sm:$0xff]
    %v4429 = vld [vmem:[%s4396 + $0x100] sm:$0xff]
    %v4430 = vld [vmem:[%s4396 + $0x108] sm:$0xff]
    %v4431 = vld [vmem:[%s4396 + $0x110] sm:$0xff]
    %v4432 = vld [vmem:[%s4396 + $0x118] sm:$0xff]
    %v4433 = vld [vmem:[%s4396 + $0x120] sm:$0xff]
    %v4434 = vld [vmem:[%s4396 + $0x128] sm:$0xff]
    %v4435 = vld [vmem:[%s4396 + $0x130] sm:$0xff]
    %v4436 = vld [vmem:[%s4396 + $0x138] sm:$0xff]
    %v4437 = vld [vmem:[%s4396 + $0x140] sm:$0xff]
    %v4438 = vld [vmem:[%s4396 + $0x148] sm:$0xff]
    %v4439 = vld [vmem:[%s4396 + $0x150] sm:$0xff]
    %v4440 = vld [vmem:[%s4396 + $0x158] sm:$0xff]
    %v4441 = vld [vmem:[%s4396 + $0x160] sm:$0xff]
    %v4442 = vld [vmem:[%s4396 + $0x168] sm:$0xff]
    %v4443 = vld [vmem:[%s4396 + $0x170] sm:$0xff]
    %v4444 = vld [vmem:[%s4396 + $0x178] sm:$0xff]
    %v4493 = vunpack.c.l.b16 %v4397
    %v4494 = vunpack.c.h.b16 %v4397
    %v4495 = vunpack.c.l.b16 %v4398
    %v4496 = vunpack.c.h.b16 %v4398
    %v4497 = vunpack.c.l.b16 %v4399
    %v4498 = vunpack.c.h.b16 %v4399
    %v4499 = vunpack.c.l.b16 %v4400
    %v4500 = vunpack.c.h.b16 %v4400
    %v4501 = vunpack.c.l.b16 %v4401
    %v4502 = vunpack.c.h.b16 %v4401
    %v4503 = vunpack.c.l.b16 %v4402
    %v4504 = vunpack.c.h.b16 %v4402
    %v4505 = vunpack.c.l.b16 %v4403
    %v4506 = vunpack.c.h.b16 %v4403
    %v4507 = vunpack.c.l.b16 %v4404
    %v4508 = vunpack.c.h.b16 %v4404
    %v4509 = vunpack.c.l.b16 %v4405
    %v4510 = vunpack.c.h.b16 %v4405
    %v4511 = vunpack.c.l.b16 %v4406
    %v4512 = vunpack.c.h.b16 %v4406
    %v4513 = vunpack.c.l.b16 %v4407
    %v4514 = vunpack.c.h.b16 %v4407
    %v4515 = vunpack.c.l.b16 %v4408
    %v4516 = vunpack.c.h.b16 %v4408
    %v4517 = vunpack.c.l.b16 %v4409
    %v4518 = vunpack.c.h.b16 %v4409
    %v4519 = vunpack.c.l.b16 %v4410
    %v4520 = vunpack.c.h.b16 %v4410
    %v4521 = vunpack.c.l.b16 %v4411
    %v4522 = vunpack.c.h.b16 %v4411
    %v4523 = vunpack.c.l.b16 %v4412
    %v4524 = vunpack.c.h.b16 %v4412
    %v4525 = vunpack.c.l.b16 %v4413
    %v4526 = vunpack.c.h.b16 %v4413
    %v4527 = vunpack.c.l.b16 %v4414
    %v4528 = vunpack.c.h.b16 %v4414
    %v4529 = vunpack.c.l.b16 %v4415
    %v4530 = vunpack.c.h.b16 %v4415
    %v4531 = vunpack.c.l.b16 %v4416
    %v4532 = vunpack.c.h.b16 %v4416
    %v4533 = vunpack.c.l.b16 %v4417
    %v4534 = vunpack.c.h.b16 %v4417
    %v4535 = vunpack.c.l.b16 %v4418
    %v4536 = vunpack.c.h.b16 %v4418
    %v4537 = vunpack.c.l.b16 %v4419
    %v4538 = vunpack.c.h.b16 %v4419
    %v4539 = vunpack.c.l.b16 %v4420
    %v4540 = vunpack.c.h.b16 %v4420
    %v4541 = vunpack.c.l.b16 %v4421
    %v4542 = vunpack.c.h.b16 %v4421
    %v4543 = vunpack.c.l.b16 %v4422
    %v4544 = vunpack.c.h.b16 %v4422
    %v4545 = vunpack.c.l.b16 %v4423
    %v4546 = vunpack.c.h.b16 %v4423
    %v4547 = vunpack.c.l.b16 %v4424
    %v4548 = vunpack.c.h.b16 %v4424
    %v4549 = vunpack.c.l.b16 %v4425
    %v4550 = vunpack.c.h.b16 %v4425
    %v4551 = vunpack.c.l.b16 %v4426
    %v4552 = vunpack.c.h.b16 %v4426
    %v4553 = vunpack.c.l.b16 %v4427
    %v4554 = vunpack.c.h.b16 %v4427
    %v4555 = vunpack.c.l.b16 %v4428
    %v4556 = vunpack.c.h.b16 %v4428
    %v4557 = vunpack.c.l.b16 %v4429
    %v4558 = vunpack.c.h.b16 %v4429
    %v4559 = vunpack.c.l.b16 %v4430
    %v4560 = vunpack.c.h.b16 %v4430
    %v4561 = vunpack.c.l.b16 %v4431
    %v4562 = vunpack.c.h.b16 %v4431
    %v4563 = vunpack.c.l.b16 %v4432
    %v4564 = vunpack.c.h.b16 %v4432
    %v4565 = vunpack.c.l.b16 %v4433
    %v4566 = vunpack.c.h.b16 %v4433
    %v4567 = vunpack.c.l.b16 %v4434
    %v4568 = vunpack.c.h.b16 %v4434
    %v4569 = vunpack.c.l.b16 %v4435
    %v4570 = vunpack.c.h.b16 %v4435
    %v4571 = vunpack.c.l.b16 %v4436
    %v4572 = vunpack.c.h.b16 %v4436
    %v4573 = vunpack.c.l.b16 %v4437
    %v4574 = vunpack.c.h.b16 %v4437
    %v4575 = vunpack.c.l.b16 %v4438
    %v4576 = vunpack.c.h.b16 %v4438
    %v4577 = vunpack.c.l.b16 %v4439
    %v4578 = vunpack.c.h.b16 %v4439
    %v4579 = vunpack.c.l.b16 %v4440
    %v4580 = vunpack.c.h.b16 %v4440
    %v4581 = vunpack.c.l.b16 %v4441
    %v4582 = vunpack.c.h.b16 %v4441
    %v4583 = vunpack.c.l.b16 %v4442
    %v4584 = vunpack.c.h.b16 %v4442
    %v4585 = vunpack.c.l.b16 %v4443
    %v4586 = vunpack.c.h.b16 %v4443
    %v4587 = vunpack.c.l.b16 %v4444
    %v4588 = vunpack.c.h.b16 %v4444
    %v4589 = vpack.c.b16 %v4497, %v4493
    %v4590 = vpack.c.b16 %v4498, %v4494
    %v4591 = vpack.c.b16 %v4499, %v4495
    %v4592 = vpack.c.b16 %v4500, %v4496
    %v4593 = vpack.c.b16 %v4505, %v4501
    %v4594 = vpack.c.b16 %v4506, %v4502
    %v4595 = vpack.c.b16 %v4507, %v4503
    %v4596 = vpack.c.b16 %v4508, %v4504
    %v4597 = vpack.c.b16 %v4513, %v4509
    %v4598 = vpack.c.b16 %v4514, %v4510
    %v4599 = vpack.c.b16 %v4515, %v4511
    %v4600 = vpack.c.b16 %v4516, %v4512
    %v4601 = vpack.c.b16 %v4521, %v4517
    %v4602 = vpack.c.b16 %v4522, %v4518
    %v4603 = vpack.c.b16 %v4523, %v4519
    %v4604 = vpack.c.b16 %v4524, %v4520
    %v4605 = vpack.c.b16 %v4529, %v4525
    %v4606 = vpack.c.b16 %v4530, %v4526
    %v4607 = vpack.c.b16 %v4531, %v4527
    %v4608 = vpack.c.b16 %v4532, %v4528
    %v4609 = vpack.c.b16 %v4537, %v4533
    %v4610 = vpack.c.b16 %v4538, %v4534
    %v4611 = vpack.c.b16 %v4539, %v4535
    %v4612 = vpack.c.b16 %v4540, %v4536
    %v4613 = vpack.c.b16 %v4545, %v4541
    %v4614 = vpack.c.b16 %v4546, %v4542
    %v4615 = vpack.c.b16 %v4547, %v4543
    %v4616 = vpack.c.b16 %v4548, %v4544
    %v4617 = vpack.c.b16 %v4553, %v4549
    %v4618 = vpack.c.b16 %v4554, %v4550
    %v4619 = vpack.c.b16 %v4555, %v4551
    %v4620 = vpack.c.b16 %v4556, %v4552
    %v4621 = vpack.c.b16 %v4561, %v4557
    %v4622 = vpack.c.b16 %v4562, %v4558
    %v4623 = vpack.c.b16 %v4563, %v4559
    %v4624 = vpack.c.b16 %v4564, %v4560
    %v4625 = vpack.c.b16 %v4569, %v4565
    %v4626 = vpack.c.b16 %v4570, %v4566
    %v4627 = vpack.c.b16 %v4571, %v4567
    %v4628 = vpack.c.b16 %v4572, %v4568
    %v4629 = vpack.c.b16 %v4577, %v4573
    %v4630 = vpack.c.b16 %v4578, %v4574
    %v4631 = vpack.c.b16 %v4579, %v4575
    %v4632 = vpack.c.b16 %v4580, %v4576
    %v4633 = vpack.c.b16 %v4585, %v4581
    %v4634 = vpack.c.b16 %v4586, %v4582
    %v4635 = vpack.c.b16 %v4587, %v4583
    %v4636 = vpack.c.b16 %v4588, %v4584
    %v4686 = vsel %vm236, %v4395, 0
    %4688 = vmatprep.subr.bf16.mxu0 %v4590
    %4689 = vmatpush1.bf16.msra.mxu0 %v4589
    %4690 = vmatprep.subr.bf16.mxu0 %v4594
    %4691 = vmatpush1.bf16.msra.mxu0 %v4593
    %4692 = vmatprep.subr.bf16.mxu0 %v4598
    %4693 = vmatpush1.bf16.msra.mxu0 %v4597
    %4694 = vmatprep.subr.bf16.mxu0 %v4602
    %4695 = vmatpush1.bf16.msra.mxu0 %v4601
    %4696 = vmatprep.subr.bf16.mxu0 %v4606
    %4697 = vmatpush1.bf16.msra.mxu0 %v4605
    %4698 = vmatprep.subr.bf16.mxu0 %v4610
    %4699 = vmatpush1.bf16.msra.mxu0 %v4609
    %4700 = vmatprep.subr.bf16.mxu0 %v4614
    %4701 = vmatpush1.bf16.msra.mxu0 %v4613
    %4702 = vmatprep.subr.bf16.mxu0 %v4618
    %4703 = vmatpush1.bf16.msra.mxu0 %v4617
    %4704 = vmatprep.subr.bf16.mxu0 %v4622
    %4705 = vmatpush1.bf16.msra.mxu0 %v4621
    %4706 = vmatprep.subr.bf16.mxu0 %v4626
    %4707 = vmatpush1.bf16.msra.mxu0 %v4625
    %4708 = vmatprep.subr.bf16.mxu0 %v4630
    %4709 = vmatpush1.bf16.msra.mxu0 %v4629
    %4710 = vmatprep.subr.bf16.mxu0 %v4634
    %4711 = vmatpush1.bf16.msra.mxu0 %v4633
    %4712 = vmatprep.subr.bf16.mxu0 0
    %4713 = vmatpush1.bf16.msra.mxu0 0
    %4714 = vmatprep.subr.bf16.mxu0 0
    %4715 = vmatpush1.bf16.msra.mxu0 0
    %4716 = vmatprep.subr.bf16.mxu0 0
    %4717 = vmatpush1.bf16.msra.mxu0 0
    %4718 = vmatprep.subr.bf16.mxu0 0
    %4719 = vmatpush1.bf16.msra.mxu0 0
    %4720 = vmatprep.mubr.bf16.mxu0 %v4686
    %4721 = vmatmul.mubr.bf16.gmra.mrb[0].mxu0 %v4394
    %v4722 = vpop.f32.mrb[0].mxu0
    %v4723 = vadd.f32 0.0, %v4722
    %v4724 = vpop.f32.mrb[0].mxu0
    %v4725 = vadd.f32 0.0, %v4724
    %v4726 = vpop.f32.mrb[0].mxu0
    %v4727 = vpop.f32.mrb[0].mxu0
    %4728 = vdwg.mxu0
    %4729 = vmatprep.subr.bf16.mxu0 %v4592
    %4730 = vmatpush1.bf16.msra.mxu0 %v4591
    %4731 = vmatprep.subr.bf16.mxu0 %v4596
    %4732 = vmatpush1.bf16.msra.mxu0 %v4595
    %4733 = vmatprep.subr.bf16.mxu0 %v4600
    %4734 = vmatpush1.bf16.msra.mxu0 %v4599
    %4735 = vmatprep.subr.bf16.mxu0 %v4604
    %4736 = vmatpush1.bf16.msra.mxu0 %v4603
    %4737 = vmatprep.subr.bf16.mxu0 %v4608
    %4738 = vmatpush1.bf16.msra.mxu0 %v4607
    %4739 = vmatprep.subr.bf16.mxu0 %v4612
    %4740 = vmatpush1.bf16.msra.mxu0 %v4611
    %4741 = vmatprep.subr.bf16.mxu0 %v4616
    %4742 = vmatpush1.bf16.msra.mxu0 %v4615
    %4743 = vmatprep.subr.bf16.mxu0 %v4620
    %4744 = vmatpush1.bf16.msra.mxu0 %v4619
    %4745 = vmatprep.subr.bf16.mxu0 %v4624
    %4746 = vmatpush1.bf16.msra.mxu0 %v4623
    %4747 = vmatprep.subr.bf16.mxu0 %v4628
    %4748 = vmatpush1.bf16.msra.mxu0 %v4627
    %4749 = vmatprep.subr.bf16.mxu0 %v4632
    %4750 = vmatpush1.bf16.msra.mxu0 %v4631
    %4751 = vmatprep.subr.bf16.mxu0 %v4636
    %4752 = vmatpush1.bf16.msra.mxu0 %v4635
    %4753 = vmatprep.subr.bf16.mxu0 0
    %4754 = vmatpush1.bf16.msra.mxu0 0
    %4755 = vmatprep.subr.bf16.mxu0 0
    %4756 = vmatpush1.bf16.msra.mxu0 0
    %4757 = vmatprep.subr.bf16.mxu0 0
    %4758 = vmatpush1.bf16.msra.mxu0 0
    %4759 = vmatprep.subr.bf16.mxu0 0
    %4760 = vmatpush1.bf16.msra.mxu0 0
    %4761 = vmatprep.mubr.bf16.mxu0 %v4686
    %4762 = vmatmul.mubr.bf16.gmra.mrb[0].mxu0 %v4394
    %v4763 = vpop.f32.mrb[0].mxu0
    %v4764 = vadd.f32 0.0, %v4763
    %v4765 = vpop.f32.mrb[0].mxu0
    %v4766 = vadd.f32 0.0, %v4765
    %v4767 = vpop.f32.mrb[0].mxu0
    %v4768 = vpop.f32.mrb[0].mxu0
    %4769 = vdwg.mxu0
    %v4770 = vadd.f32 %v4344, %v4723
    %v4771 = vadd.f32 %v4345, %v4725
    %v4772 = vadd.f32 %v4346, %v4764
    %v4773 = vadd.f32 %v4347, %v4766
    %v4774 = vld [vmem:[%s12] sm:$0xf]
    %v4776 = vlaneseq
    %v4777 = vshrl.u32 %v4776, 7
    %v4778 = vsub.s32 0, %v4777
    %v4779 = vrot.slane %v4774, %v4778
    %v4780 = vlaneseq
    %v4781 = vshrl.u32 %v4780, 7
    %v4782 = vsub.s32 1, %v4781
    %v4783 = vrot.slane %v4774, %v4782
    %v4784 = vlaneseq
    %v4785 = vshrl.u32 %v4784, 7
    %v4786 = vsub.s32 2, %v4785
    %v4787 = vrot.slane %v4774, %v4786
    %v4788 = vlaneseq
    %v4789 = vshrl.u32 %v4788, 7
    %v4790 = vsub.s32 3, %v4789
    %v4791 = vrot.slane %v4774, %v4790
    %v4796 = vadd.f32 %v4770, %v4779
    %v4797 = vadd.f32 %v4771, %v4783
    %v4798 = vadd.f32 %v4772, %v4787
    %v4799 = vadd.f32 %v4773, %v4791
    %v4804 = vcombine.low %v4796, %v4797
    %v4805 = vcombine.low %v4798, %v4799
    %v4807 = vunpack.c.l.s4 1983009808
    %v4808 = vunpack.c.0.s8 %v4807
    %v4809 = vlaneseq
    %v4810 = vshrl.u32 %v4809, 7
    %v4811 = vsub.s32 %v4808, %v4810
    %v4812 = vrot.slane %v4804, %v4811
    %v4814 = vunpack.c.l.s4 1983009808
    %v4815 = vunpack.c.0.s8 %v4814
    %v4816 = vlaneseq
    %v4817 = vshrl.u32 %v4816, 7
    %v4818 = vsub.s32 %v4815, %v4817
    %v4819 = vrot.slane %v4805, %v4818
    %v4820 = vcombine.low %v4812, %v4819
    %4822 = vst [vmem:[#allocation19] sm:$0xff] %v4820
    %v4823 = vpack.c.bf16 %v4796, %v4796
    %v4824 = vpack.c.bf16 %v4797, %v4797
    %v4825 = vpack.c.bf16 %v4798, %v4798
    %v4826 = vpack.c.bf16 %v4799, %v4799
    %v4827 = vld [vmem:[%s13] sm:$0xff]
    %v4828 = vld [vmem:[%s13 + $0x8] sm:$0xff]
    %v4829 = vld [vmem:[%s13 + $0x10] sm:$0xff]
    %v4830 = vld [vmem:[%s13 + $0x18] sm:$0xff]
    %v4831 = vld [vmem:[%s13 + $0x20] sm:$0xff]
    %v4832 = vld [vmem:[%s13 + $0x28] sm:$0xff]
    %v4833 = vld [vmem:[%s13 + $0x30] sm:$0xff]
    %v4834 = vld [vmem:[%s13 + $0x38] sm:$0xff]
    %v4835 = vld [vmem:[%s13 + $0x40] sm:$0xff]
    %v4836 = vld [vmem:[%s13 + $0x48] sm:$0xff]
    %v4837 = vld [vmem:[%s13 + $0x50] sm:$0xff]
    %v4838 = vld [vmem:[%s13 + $0x58] sm:$0xff]
    %v4839 = vld [vmem:[%s13 + $0x60] sm:$0xff]
    %v4840 = vld [vmem:[%s13 + $0x68] sm:$0xff]
    %v4841 = vld [vmem:[%s13 + $0x70] sm:$0xff]
    %v4842 = vld [vmem:[%s13 + $0x78] sm:$0xff]
    %v4843 = vld [vmem:[%s13 + $0x80] sm:$0xff]
    %v4844 = vld [vmem:[%s13 + $0x88] sm:$0xff]
    %v4845 = vld [vmem:[%s13 + $0x90] sm:$0xff]
    %v4846 = vld [vmem:[%s13 + $0x98] sm:$0xff]
    %v4847 = vld [vmem:[%s13 + $0xa0] sm:$0xff]
    %v4848 = vld [vmem:[%s13 + $0xa8] sm:$0xff]
    %v4849 = vld [vmem:[%s13 + $0xb0] sm:$0xff]
    %v4850 = vld [vmem:[%s13 + $0xb8] sm:$0xff]
    %v4851 = vld [vmem:[%s13 + $0xc0] sm:$0xff]
    %v4852 = vld [vmem:[%s13 + $0xc8] sm:$0xff]
    %v4853 = vld [vmem:[%s13 + $0xd0] sm:$0xff]
    %v4854 = vld [vmem:[%s13 + $0xd8] sm:$0xff]
    %v4855 = vld [vmem:[%s13 + $0xe0] sm:$0xff]
    %v4856 = vld [vmem:[%s13 + $0xe8] sm:$0xff]
    %v4857 = vld [vmem:[%s13 + $0xf0] sm:$0xff]
    %v4858 = vld [vmem:[%s13 + $0xf8] sm:$0xff]
    %v4859 = vld [vmem:[%s13 + $0x100] sm:$0xff]
    %v4860 = vld [vmem:[%s13 + $0x108] sm:$0xff]
    %v4861 = vld [vmem:[%s13 + $0x110] sm:$0xff]
    %v4862 = vld [vmem:[%s13 + $0x118] sm:$0xff]
    %v4863 = vld [vmem:[%s13 + $0x120] sm:$0xff]
    %v4864 = vld [vmem:[%s13 + $0x128] sm:$0xff]
    %v4865 = vld [vmem:[%s13 + $0x130] sm:$0xff]
    %v4866 = vld [vmem:[%s13 + $0x138] sm:$0xff]
    %v4867 = vld [vmem:[%s13 + $0x140] sm:$0xff]
    %v4868 = vld [vmem:[%s13 + $0x148] sm:$0xff]
    %v4869 = vld [vmem:[%s13 + $0x150] sm:$0xff]
    %v4870 = vld [vmem:[%s13 + $0x158] sm:$0xff]
    %v4871 = vld [vmem:[%s13 + $0x160] sm:$0xff]
    %v4872 = vld [vmem:[%s13 + $0x168] sm:$0xff]
    %v4873 = vld [vmem:[%s13 + $0x170] sm:$0xff]
    %v4874 = vld [vmem:[%s13 + $0x178] sm:$0xff]
    %v4875 = vld [vmem:[%s13 + $0x180] sm:$0xff]
    %v4876 = vld [vmem:[%s13 + $0x188] sm:$0xff]
    %v4877 = vld [vmem:[%s13 + $0x190] sm:$0xff]
    %v4878 = vld [vmem:[%s13 + $0x198] sm:$0xff]
    %v4879 = vld [vmem:[%s13 + $0x1a0] sm:$0xff]
    %v4880 = vld [vmem:[%s13 + $0x1a8] sm:$0xff]
    %v4881 = vld [vmem:[%s13 + $0x1b0] sm:$0xff]
    %v4882 = vld [vmem:[%s13 + $0x1b8] sm:$0xff]
    %v4883 = vld [vmem:[%s13 + $0x1c0] sm:$0xff]
    %v4884 = vld [vmem:[%s13 + $0x1c8] sm:$0xff]
    %v4885 = vld [vmem:[%s13 + $0x1d0] sm:$0xff]
    %v4886 = vld [vmem:[%s13 + $0x1d8] sm:$0xff]
    %v4887 = vld [vmem:[%s13 + $0x1e0] sm:$0xff]
    %v4888 = vld [vmem:[%s13 + $0x1e8] sm:$0xff]
    %v4889 = vld [vmem:[%s13 + $0x1f0] sm:$0xff]
    %v4890 = vld [vmem:[%s13 + $0x1f8] sm:$0xff]
    %v4891 = vld [vmem:[%s15] sm:$0x3]
    %v4893 = vlaneseq
    %v4894 = vshrl.u32 %v4893, 7
    %v4895 = vsub.s32 0, %v4894
    %v4896 = vrot.slane %v4891, %v4895
    %v4897 = vlaneseq
    %v4898 = vshrl.u32 %v4897, 7
    %v4899 = vsub.s32 1, %v4898
    %v4900 = vrot.slane %v4891, %v4899
    %v4967 = vunpack.c.l.b16 %v4827
    %v4968 = vunpack.c.h.b16 %v4827
    %v4969 = vunpack.c.l.b16 %v4828
    %v4970 = vunpack.c.h.b16 %v4828
    %v4971 = vunpack.c.l.b16 %v4829
    %v4972 = vunpack.c.h.b16 %v4829
    %v4973 = vunpack.c.l.b16 %v4830
    %v4974 = vunpack.c.h.b16 %v4830
    %v4975 = vunpack.c.l.b16 %v4831
    %v4976 = vunpack.c.h.b16 %v4831
    %v4977 = vunpack.c.l.b16 %v4832
    %v4978 = vunpack.c.h.b16 %v4832
    %v4979 = vunpack.c.l.b16 %v4833
    %v4980 = vunpack.c.h.b16 %v4833
    %v4981 = vunpack.c.l.b16 %v4834
    %v4982 = vunpack.c.h.b16 %v4834
    %v4983 = vunpack.c.l.b16 %v4835
    %v4984 = vunpack.c.h.b16 %v4835
    %v4985 = vunpack.c.l.b16 %v4836
    %v4986 = vunpack.c.h.b16 %v4836
    %v4987 = vunpack.c.l.b16 %v4837
    %v4988 = vunpack.c.h.b16 %v4837
    %v4989 = vunpack.c.l.b16 %v4838
    %v4990 = vunpack.c.h.b16 %v4838
    %v4991 = vunpack.c.l.b16 %v4839
    %v4992 = vunpack.c.h.b16 %v4839
    %v4993 = vunpack.c.l.b16 %v4840
    %v4994 = vunpack.c.h.b16 %v4840
    %v4995 = vunpack.c.l.b16 %v4841
    %v4996 = vunpack.c.h.b16 %v4841
    %v4997 = vunpack.c.l.b16 %v4842
    %v4998 = vunpack.c.h.b16 %v4842
    %v4999 = vunpack.c.l.b16 %v4843
    %v5000 = vunpack.c.h.b16 %v4843
    %v5001 = vunpack.c.l.b16 %v4844
    %v5002 = vunpack.c.h.b16 %v4844
    %v5003 = vunpack.c.l.b16 %v4845
    %v5004 = vunpack.c.h.b16 %v4845
    %v5005 = vunpack.c.l.b16 %v4846
    %v5006 = vunpack.c.h.b16 %v4846
    %v5007 = vunpack.c.l.b16 %v4847
    %v5008 = vunpack.c.h.b16 %v4847
    %v5009 = vunpack.c.l.b16 %v4848
    %v5010 = vunpack.c.h.b16 %v4848
    %v5011 = vunpack.c.l.b16 %v4849
    %v5012 = vunpack.c.h.b16 %v4849
    %v5013 = vunpack.c.l.b16 %v4850
    %v5014 = vunpack.c.h.b16 %v4850
    %v5015 = vunpack.c.l.b16 %v4851
    %v5016 = vunpack.c.h.b16 %v4851
    %v5017 = vunpack.c.l.b16 %v4852
    %v5018 = vunpack.c.h.b16 %v4852
    %v5019 = vunpack.c.l.b16 %v4853
    %v5020 = vunpack.c.h.b16 %v4853
    %v5021 = vunpack.c.l.b16 %v4854
    %v5022 = vunpack.c.h.b16 %v4854
    %v5023 = vunpack.c.l.b16 %v4855
    %v5024 = vunpack.c.h.b16 %v4855
    %v5025 = vunpack.c.l.b16 %v4856
    %v5026 = vunpack.c.h.b16 %v4856
    %v5027 = vunpack.c.l.b16 %v4857
    %v5028 = vunpack.c.h.b16 %v4857
    %v5029 = vunpack.c.l.b16 %v4858
    %v5030 = vunpack.c.h.b16 %v4858
    %v5031 = vunpack.c.l.b16 %v4859
    %v5032 = vunpack.c.h.b16 %v4859
    %v5033 = vunpack.c.l.b16 %v4860
    %v5034 = vunpack.c.h.b16 %v4860
    %v5035 = vunpack.c.l.b16 %v4861
    %v5036 = vunpack.c.h.b16 %v4861
    %v5037 = vunpack.c.l.b16 %v4862
    %v5038 = vunpack.c.h.b16 %v4862
    %v5039 = vunpack.c.l.b16 %v4863
    %v5040 = vunpack.c.h.b16 %v4863
    %v5041 = vunpack.c.l.b16 %v4864
    %v5042 = vunpack.c.h.b16 %v4864
    %v5043 = vunpack.c.l.b16 %v4865
    %v5044 = vunpack.c.h.b16 %v4865
    %v5045 = vunpack.c.l.b16 %v4866
    %v5046 = vunpack.c.h.b16 %v4866
    %v5047 = vunpack.c.l.b16 %v4867
    %v5048 = vunpack.c.h.b16 %v4867
    %v5049 = vunpack.c.l.b16 %v4868
    %v5050 = vunpack.c.h.b16 %v4868
    %v5051 = vunpack.c.l.b16 %v4869
    %v5052 = vunpack.c.h.b16 %v4869
    %v5053 = vunpack.c.l.b16 %v4870
    %v5054 = vunpack.c.h.b16 %v4870
    %v5055 = vunpack.c.l.b16 %v4871
    %v5056 = vunpack.c.h.b16 %v4871
    %v5057 = vunpack.c.l.b16 %v4872
    %v5058 = vunpack.c.h.b16 %v4872
    %v5059 = vunpack.c.l.b16 %v4873
    %v5060 = vunpack.c.h.b16 %v4873
    %v5061 = vunpack.c.l.b16 %v4874
    %v5062 = vunpack.c.h.b16 %v4874
    %v5063 = vunpack.c.l.b16 %v4875
    %v5064 = vunpack.c.h.b16 %v4875
    %v5065 = vunpack.c.l.b16 %v4876
    %v5066 = vunpack.c.h.b16 %v4876
    %v5067 = vunpack.c.l.b16 %v4877
    %v5068 = vunpack.c.h.b16 %v4877
    %v5069 = vunpack.c.l.b16 %v4878
    %v5070 = vunpack.c.h.b16 %v4878
    %v5071 = vunpack.c.l.b16 %v4879
    %v5072 = vunpack.c.h.b16 %v4879
    %v5073 = vunpack.c.l.b16 %v4880
    %v5074 = vunpack.c.h.b16 %v4880
    %v5075 = vunpack.c.l.b16 %v4881
    %v5076 = vunpack.c.h.b16 %v4881
    %v5077 = vunpack.c.l.b16 %v4882
    %v5078 = vunpack.c.h.b16 %v4882
    %v5079 = vunpack.c.l.b16 %v4883
    %v5080 = vunpack.c.h.b16 %v4883
    %v5081 = vunpack.c.l.b16 %v4884
    %v5082 = vunpack.c.h.b16 %v4884
    %v5083 = vunpack.c.l.b16 %v4885
    %v5084 = vunpack.c.h.b16 %v4885
    %v5085 = vunpack.c.l.b16 %v4886
    %v5086 = vunpack.c.h.b16 %v4886
    %v5087 = vunpack.c.l.b16 %v4887
    %v5088 = vunpack.c.h.b16 %v4887
    %v5089 = vunpack.c.l.b16 %v4888
    %v5090 = vunpack.c.h.b16 %v4888
    %v5091 = vunpack.c.l.b16 %v4889
    %v5092 = vunpack.c.h.b16 %v4889
    %v5093 = vunpack.c.l.b16 %v4890
    %v5094 = vunpack.c.h.b16 %v4890
    %v5095 = vpack.c.b16 %v4969, %v4967
    %v5096 = vpack.c.b16 %v4970, %v4968
    %v5097 = vpack.c.b16 %v4973, %v4971
    %v5098 = vpack.c.b16 %v4974, %v4972
    %v5099 = vpack.c.b16 %v4977, %v4975
    %v5100 = vpack.c.b16 %v4978, %v4976
    %v5101 = vpack.c.b16 %v4981, %v4979
    %v5102 = vpack.c.b16 %v4982, %v4980
    %v5103 = vpack.c.b16 %v4985, %v4983
    %v5104 = vpack.c.b16 %v4986, %v4984
    %v5105 = vpack.c.b16 %v4989, %v4987
    %v5106 = vpack.c.b16 %v4990, %v4988
    %v5107 = vpack.c.b16 %v4993, %v4991
    %v5108 = vpack.c.b16 %v4994, %v4992
    %v5109 = vpack.c.b16 %v4997, %v4995
    %v5110 = vpack.c.b16 %v4998, %v4996
    %v5111 = vpack.c.b16 %v5001, %v4999
    %v5112 = vpack.c.b16 %v5002, %v5000
    %v5113 = vpack.c.b16 %v5005, %v5003
    %v5114 = vpack.c.b16 %v5006, %v5004
    %v5115 = vpack.c.b16 %v5009, %v5007
    %v5116 = vpack.c.b16 %v5010, %v5008
    %v5117 = vpack.c.b16 %v5013, %v5011
    %v5118 = vpack.c.b16 %v5014, %v5012
    %v5119 = vpack.c.b16 %v5017, %v5015
    %v5120 = vpack.c.b16 %v5018, %v5016
    %v5121 = vpack.c.b16 %v5021, %v5019
    %v5122 = vpack.c.b16 %v5022, %v5020
    %v5123 = vpack.c.b16 %v5025, %v5023
    %v5124 = vpack.c.b16 %v5026, %v5024
    %v5125 = vpack.c.b16 %v5029, %v5027
    %v5126 = vpack.c.b16 %v5030, %v5028
    %v5127 = vpack.c.b16 %v5033, %v5031
    %v5128 = vpack.c.b16 %v5034, %v5032
    %v5129 = vpack.c.b16 %v5037, %v5035
    %v5130 = vpack.c.b16 %v5038, %v5036
    %v5131 = vpack.c.b16 %v5041, %v5039
    %v5132 = vpack.c.b16 %v5042, %v5040
    %v5133 = vpack.c.b16 %v5045, %v5043
    %v5134 = vpack.c.b16 %v5046, %v5044
    %v5135 = vpack.c.b16 %v5049, %v5047
    %v5136 = vpack.c.b16 %v5050, %v5048
    %v5137 = vpack.c.b16 %v5053, %v5051
    %v5138 = vpack.c.b16 %v5054, %v5052
    %v5139 = vpack.c.b16 %v5057, %v5055
    %v5140 = vpack.c.b16 %v5058, %v5056
    %v5141 = vpack.c.b16 %v5061, %v5059
    %v5142 = vpack.c.b16 %v5062, %v5060
    %v5143 = vpack.c.b16 %v5065, %v5063
    %v5144 = vpack.c.b16 %v5066, %v5064
    %v5145 = vpack.c.b16 %v5069, %v5067
    %v5146 = vpack.c.b16 %v5070, %v5068
    %v5147 = vpack.c.b16 %v5073, %v5071
    %v5148 = vpack.c.b16 %v5074, %v5072
    %v5149 = vpack.c.b16 %v5077, %v5075
    %v5150 = vpack.c.b16 %v5078, %v5076
    %v5151 = vpack.c.b16 %v5081, %v5079
    %v5152 = vpack.c.b16 %v5082, %v5080
    %v5153 = vpack.c.b16 %v5085, %v5083
    %v5154 = vpack.c.b16 %v5086, %v5084
    %v5155 = vpack.c.b16 %v5089, %v5087
    %v5156 = vpack.c.b16 %v5090, %v5088
    %v5157 = vpack.c.b16 %v5093, %v5091
    %v5158 = vpack.c.b16 %v5094, %v5092
    %5223 = vmatprep.subr.bf16.mxu0 %v5096
    %5224 = vmatpush1.bf16.msra.mxu0 %v5095
    %5225 = vmatprep.subr.bf16.mxu0 %v5098
    %5226 = vmatpush1.bf16.msra.mxu0 %v5097
    %5227 = vmatprep.subr.bf16.mxu0 %v5100
    %5228 = vmatpush1.bf16.msra.mxu0 %v5099
    %5229 = vmatprep.subr.bf16.mxu0 %v5102
    %5230 = vmatpush1.bf16.msra.mxu0 %v5101
    %5231 = vmatprep.subr.bf16.mxu0 %v5104
    %5232 = vmatpush1.bf16.msra.mxu0 %v5103
    %5233 = vmatprep.subr.bf16.mxu0 %v5106
    %5234 = vmatpush1.bf16.msra.mxu0 %v5105
    %5235 = vmatprep.subr.bf16.mxu0 %v5108
    %5236 = vmatpush1.bf16.msra.mxu0 %v5107
    %5237 = vmatprep.subr.bf16.mxu0 %v5110
    %5238 = vmatpush1.bf16.msra.mxu0 %v5109
    %5239 = vmatprep.subr.bf16.mxu0 %v5112
    %5240 = vmatpush1.bf16.msra.mxu0 %v5111
    %5241 = vmatprep.subr.bf16.mxu0 %v5114
    %5242 = vmatpush1.bf16.msra.mxu0 %v5113
    %5243 = vmatprep.subr.bf16.mxu0 %v5116
    %5244 = vmatpush1.bf16.msra.mxu0 %v5115
    %5245 = vmatprep.subr.bf16.mxu0 %v5118
    %5246 = vmatpush1.bf16.msra.mxu0 %v5117
    %5247 = vmatprep.subr.bf16.mxu0 %v5120
    %5248 = vmatpush1.bf16.msra.mxu0 %v5119
    %5249 = vmatprep.subr.bf16.mxu0 %v5122
    %5250 = vmatpush1.bf16.msra.mxu0 %v5121
    %5251 = vmatprep.subr.bf16.mxu0 %v5124
    %5252 = vmatpush1.bf16.msra.mxu0 %v5123
    %5253 = vmatprep.subr.bf16.mxu0 %v5126
    %5254 = vmatpush1.bf16.msra.mxu0 %v5125
    %5255 = vmatprep.mubr.bf16.mxu0 %v4824
    %5256 = vmatmul.mubr.bf16.gmra.mrb[0].mxu0 %v4823
    %v5257 = vpop.f32.mrb[0].mxu0
    %v5258 = vadd.f32 %v4896, %v5257
    %v5259 = vpop.f32.mrb[0].mxu0
    %v5260 = vadd.f32 %v4900, %v5259
    %v5261 = vpop.f32.mrb[0].mxu0
    %v5262 = vpop.f32.mrb[0].mxu0
    %5263 = vdwg.mxu0
    %5264 = vmatprep.subr.bf16.mxu0 %v5128
    %5265 = vmatpush1.bf16.msra.mxu0 %v5127
    %5266 = vmatprep.subr.bf16.mxu0 %v5130
    %5267 = vmatpush1.bf16.msra.mxu0 %v5129
    %5268 = vmatprep.subr.bf16.mxu0 %v5132
    %5269 = vmatpush1.bf16.msra.mxu0 %v5131
    %5270 = vmatprep.subr.bf16.mxu0 %v5134
    %5271 = vmatpush1.bf16.msra.mxu0 %v5133
    %5272 = vmatprep.subr.bf16.mxu0 %v5136
    %5273 = vmatpush1.bf16.msra.mxu0 %v5135
    %5274 = vmatprep.subr.bf16.mxu0 %v5138
    %5275 = vmatpush1.bf16.msra.mxu0 %v5137
    %5276 = vmatprep.subr.bf16.mxu0 %v5140
    %5277 = vmatpush1.bf16.msra.mxu0 %v5139
    %5278 = vmatprep.subr.bf16.mxu0 %v5142
    %5279 = vmatpush1.bf16.msra.mxu0 %v5141
    %5280 = vmatprep.subr.bf16.mxu0 %v5144
    %5281 = vmatpush1.bf16.msra.mxu0 %v5143
    %5282 = vmatprep.subr.bf16.mxu0 %v5146
    %5283 = vmatpush1.bf16.msra.mxu0 %v5145
    %5284 = vmatprep.subr.bf16.mxu0 %v5148
    %5285 = vmatpush1.bf16.msra.mxu0 %v5147
    %5286 = vmatprep.subr.bf16.mxu0 %v5150
    %5287 = vmatpush1.bf16.msra.mxu0 %v5149
    %5288 = vmatprep.subr.bf16.mxu0 %v5152
    %5289 = vmatpush1.bf16.msra.mxu0 %v5151
    %5290 = vmatprep.subr.bf16.mxu0 %v5154
    %5291 = vmatpush1.bf16.msra.mxu0 %v5153
    %5292 = vmatprep.subr.bf16.mxu0 %v5156
    %5293 = vmatpush1.bf16.msra.mxu0 %v5155
    %5294 = vmatprep.subr.bf16.mxu0 %v5158
    %5295 = vmatpush1.bf16.msra.mxu0 %v5157
    %5296 = vmatprep.mubr.bf16.mxu0 %v4826
    %5297 = vmatmul.mubr.bf16.gmra.mrb[0].mxu0 %v4825
    %v5298 = vpop.f32.mrb[0].mxu0
    %v5299 = vadd.f32 %v5258, %v5298
    %v5300 = vpop.f32.mrb[0].mxu0
    %v5301 = vadd.f32 %v5260, %v5300
    %v5302 = vpop.f32.mrb[0].mxu0
    %v5303 = vpop.f32.mrb[0].mxu0
    %5304 = vdwg.mxu0
    %v5305 = vld [vmem:[%s14] sm:$0xf]
    %v5306 = vpack.c.bf16 %v5299, %v5299
    %v5307 = vpack.c.bf16 %v5301, %v5301
    %s5308 = scalar_lea.vmem %s13, 512
    %v5309 = vld [vmem:[%s5308] sm:$0xff]
    %v5310 = vld [vmem:[%s5308 + $0x8] sm:$0xff]
    %v5311 = vld [vmem:[%s5308 + $0x10] sm:$0xff]
    %v5312 = vld [vmem:[%s5308 + $0x18] sm:$0xff]
    %v5313 = vld [vmem:[%s5308 + $0x20] sm:$0xff]
    %v5314 = vld [vmem:[%s5308 + $0x28] sm:$0xff]
    %v5315 = vld [vmem:[%s5308 + $0x30] sm:$0xff]
    %v5316 = vld [vmem:[%s5308 + $0x38] sm:$0xff]
    %v5317 = vld [vmem:[%s5308 + $0x40] sm:$0xff]
    %v5318 = vld [vmem:[%s5308 + $0x48] sm:$0xff]
    %v5319 = vld [vmem:[%s5308 + $0x50] sm:$0xff]
    %v5320 = vld [vmem:[%s5308 + $0x58] sm:$0xff]
    %v5321 = vld [vmem:[%s5308 + $0x60] sm:$0xff]
    %v5322 = vld [vmem:[%s5308 + $0x68] sm:$0xff]
    %v5323 = vld [vmem:[%s5308 + $0x70] sm:$0xff]
    %v5324 = vld [vmem:[%s5308 + $0x78] sm:$0xff]
    %v5325 = vld [vmem:[%s5308 + $0x80] sm:$0xff]
    %v5326 = vld [vmem:[%s5308 + $0x88] sm:$0xff]
    %v5327 = vld [vmem:[%s5308 + $0x90] sm:$0xff]
    %v5328 = vld [vmem:[%s5308 + $0x98] sm:$0xff]
    %v5329 = vld [vmem:[%s5308 + $0xa0] sm:$0xff]
    %v5330 = vld [vmem:[%s5308 + $0xa8] sm:$0xff]
    %v5331 = vld [vmem:[%s5308 + $0xb0] sm:$0xff]
    %v5332 = vld [vmem:[%s5308 + $0xb8] sm:$0xff]
    %v5333 = vld [vmem:[%s5308 + $0xc0] sm:$0xff]
    %v5334 = vld [vmem:[%s5308 + $0xc8] sm:$0xff]
    %v5335 = vld [vmem:[%s5308 + $0xd0] sm:$0xff]
    %v5336 = vld [vmem:[%s5308 + $0xd8] sm:$0xff]
    %v5337 = vld [vmem:[%s5308 + $0xe0] sm:$0xff]
    %v5338 = vld [vmem:[%s5308 + $0xe8] sm:$0xff]
    %v5339 = vld [vmem:[%s5308 + $0xf0] sm:$0xff]
    %v5340 = vld [vmem:[%s5308 + $0xf8] sm:$0xff]
    %v5341 = vld [vmem:[%s5308 + $0x100] sm:$0xff]
    %v5342 = vld [vmem:[%s5308 + $0x108] sm:$0xff]
    %v5343 = vld [vmem:[%s5308 + $0x110] sm:$0xff]
    %v5344 = vld [vmem:[%s5308 + $0x118] sm:$0xff]
    %v5345 = vld [vmem:[%s5308 + $0x120] sm:$0xff]
    %v5346 = vld [vmem:[%s5308 + $0x128] sm:$0xff]
    %v5347 = vld [vmem:[%s5308 + $0x130] sm:$0xff]
    %v5348 = vld [vmem:[%s5308 + $0x138] sm:$0xff]
    %v5349 = vld [vmem:[%s5308 + $0x140] sm:$0xff]
    %v5350 = vld [vmem:[%s5308 + $0x148] sm:$0xff]
    %v5351 = vld [vmem:[%s5308 + $0x150] sm:$0xff]
    %v5352 = vld [vmem:[%s5308 + $0x158] sm:$0xff]
    %v5353 = vld [vmem:[%s5308 + $0x160] sm:$0xff]
    %v5354 = vld [vmem:[%s5308 + $0x168] sm:$0xff]
    %v5355 = vld [vmem:[%s5308 + $0x170] sm:$0xff]
    %v5356 = vld [vmem:[%s5308 + $0x178] sm:$0xff]
    %v5357 = vld [vmem:[%s5308 + $0x180] sm:$0xff]
    %v5358 = vld [vmem:[%s5308 + $0x188] sm:$0xff]
    %v5359 = vld [vmem:[%s5308 + $0x190] sm:$0xff]
    %v5360 = vld [vmem:[%s5308 + $0x198] sm:$0xff]
    %v5361 = vld [vmem:[%s5308 + $0x1a0] sm:$0xff]
    %v5362 = vld [vmem:[%s5308 + $0x1a8] sm:$0xff]
    %v5363 = vld [vmem:[%s5308 + $0x1b0] sm:$0xff]
    %v5364 = vld [vmem:[%s5308 + $0x1b8] sm:$0xff]
    %v5365 = vld [vmem:[%s5308 + $0x1c0] sm:$0xff]
    %v5366 = vld [vmem:[%s5308 + $0x1c8] sm:$0xff]
    %v5367 = vld [vmem:[%s5308 + $0x1d0] sm:$0xff]
    %v5368 = vld [vmem:[%s5308 + $0x1d8] sm:$0xff]
    %v5369 = vld [vmem:[%s5308 + $0x1e0] sm:$0xff]
    %v5370 = vld [vmem:[%s5308 + $0x1e8] sm:$0xff]
    %v5371 = vld [vmem:[%s5308 + $0x1f0] sm:$0xff]
    %v5372 = vld [vmem:[%s5308 + $0x1f8] sm:$0xff]
    %s5373 = scalar_lea.vmem %s15, 2
    %v5374 = vld [vmem:[%s5373] sm:$0x3]
    %v5376 = vlaneseq
    %v5377 = vshrl.u32 %v5376, 7
    %v5378 = vsub.s32 0, %v5377
    %v5379 = vrot.slane %v5374, %v5378
    %v5380 = vlaneseq
    %v5381 = vshrl.u32 %v5380, 7
    %v5382 = vsub.s32 1, %v5381
    %v5383 = vrot.slane %v5374, %v5382
    %v5450 = vunpack.c.l.b16 %v5309
    %v5451 = vunpack.c.h.b16 %v5309
    %v5452 = vunpack.c.l.b16 %v5310
    %v5453 = vunpack.c.h.b16 %v5310
    %v5454 = vunpack.c.l.b16 %v5311
    %v5455 = vunpack.c.h.b16 %v5311
    %v5456 = vunpack.c.l.b16 %v5312
    %v5457 = vunpack.c.h.b16 %v5312
    %v5458 = vunpack.c.l.b16 %v5313
    %v5459 = vunpack.c.h.b16 %v5313
    %v5460 = vunpack.c.l.b16 %v5314
    %v5461 = vunpack.c.h.b16 %v5314
    %v5462 = vunpack.c.l.b16 %v5315
    %v5463 = vunpack.c.h.b16 %v5315
    %v5464 = vunpack.c.l.b16 %v5316
    %v5465 = vunpack.c.h.b16 %v5316
    %v5466 = vunpack.c.l.b16 %v5317
    %v5467 = vunpack.c.h.b16 %v5317
    %v5468 = vunpack.c.l.b16 %v5318
    %v5469 = vunpack.c.h.b16 %v5318
    %v5470 = vunpack.c.l.b16 %v5319
    %v5471 = vunpack.c.h.b16 %v5319
    %v5472 = vunpack.c.l.b16 %v5320
    %v5473 = vunpack.c.h.b16 %v5320
    %v5474 = vunpack.c.l.b16 %v5321
    %v5475 = vunpack.c.h.b16 %v5321
    %v5476 = vunpack.c.l.b16 %v5322
    %v5477 = vunpack.c.h.b16 %v5322
    %v5478 = vunpack.c.l.b16 %v5323
    %v5479 = vunpack.c.h.b16 %v5323
    %v5480 = vunpack.c.l.b16 %v5324
    %v5481 = vunpack.c.h.b16 %v5324
    %v5482 = vunpack.c.l.b16 %v5325
    %v5483 = vunpack.c.h.b16 %v5325
    %v5484 = vunpack.c.l.b16 %v5326
    %v5485 = vunpack.c.h.b16 %v5326
    %v5486 = vunpack.c.l.b16 %v5327
    %v5487 = vunpack.c.h.b16 %v5327
    %v5488 = vunpack.c.l.b16 %v5328
    %v5489 = vunpack.c.h.b16 %v5328
    %v5490 = vunpack.c.l.b16 %v5329
    %v5491 = vunpack.c.h.b16 %v5329
    %v5492 = vunpack.c.l.b16 %v5330
    %v5493 = vunpack.c.h.b16 %v5330
    %v5494 = vunpack.c.l.b16 %v5331
    %v5495 = vunpack.c.h.b16 %v5331
    %v5496 = vunpack.c.l.b16 %v5332
    %v5497 = vunpack.c.h.b16 %v5332
    %v5498 = vunpack.c.l.b16 %v5333
    %v5499 = vunpack.c.h.b16 %v5333
    %v5500 = vunpack.c.l.b16 %v5334
    %v5501 = vunpack.c.h.b16 %v5334
    %v5502 = vunpack.c.l.b16 %v5335
    %v5503 = vunpack.c.h.b16 %v5335
    %v5504 = vunpack.c.l.b16 %v5336
    %v5505 = vunpack.c.h.b16 %v5336
    %v5506 = vunpack.c.l.b16 %v5337
    %v5507 = vunpack.c.h.b16 %v5337
    %v5508 = vunpack.c.l.b16 %v5338
    %v5509 = vunpack.c.h.b16 %v5338
    %v5510 = vunpack.c.l.b16 %v5339
    %v5511 = vunpack.c.h.b16 %v5339
    %v5512 = vunpack.c.l.b16 %v5340
    %v5513 = vunpack.c.h.b16 %v5340
    %v5514 = vunpack.c.l.b16 %v5341
    %v5515 = vunpack.c.h.b16 %v5341
    %v5516 = vunpack.c.l.b16 %v5342
    %v5517 = vunpack.c.h.b16 %v5342
    %v5518 = vunpack.c.l.b16 %v5343
    %v5519 = vunpack.c.h.b16 %v5343
    %v5520 = vunpack.c.l.b16 %v5344
    %v5521 = vunpack.c.h.b16 %v5344
    %v5522 = vunpack.c.l.b16 %v5345
    %v5523 = vunpack.c.h.b16 %v5345
    %v5524 = vunpack.c.l.b16 %v5346
    %v5525 = vunpack.c.h.b16 %v5346
    %v5526 = vunpack.c.l.b16 %v5347
    %v5527 = vunpack.c.h.b16 %v5347
    %v5528 = vunpack.c.l.b16 %v5348
    %v5529 = vunpack.c.h.b16 %v5348
    %v5530 = vunpack.c.l.b16 %v5349
    %v5531 = vunpack.c.h.b16 %v5349
    %v5532 = vunpack.c.l.b16 %v5350
    %v5533 = vunpack.c.h.b16 %v5350
    %v5534 = vunpack.c.l.b16 %v5351
    %v5535 = vunpack.c.h.b16 %v5351
    %v5536 = vunpack.c.l.b16 %v5352
    %v5537 = vunpack.c.h.b16 %v5352
    %v5538 = vunpack.c.l.b16 %v5353
    %v5539 = vunpack.c.h.b16 %v5353
    %v5540 = vunpack.c.l.b16 %v5354
    %v5541 = vunpack.c.h.b16 %v5354
    %v5542 = vunpack.c.l.b16 %v5355
    %v5543 = vunpack.c.h.b16 %v5355
    %v5544 = vunpack.c.l.b16 %v5356
    %v5545 = vunpack.c.h.b16 %v5356
    %v5546 = vunpack.c.l.b16 %v5357
    %v5547 = vunpack.c.h.b16 %v5357
    %v5548 = vunpack.c.l.b16 %v5358
    %v5549 = vunpack.c.h.b16 %v5358
    %v5550 = vunpack.c.l.b16 %v5359
    %v5551 = vunpack.c.h.b16 %v5359
    %v5552 = vunpack.c.l.b16 %v5360
    %v5553 = vunpack.c.h.b16 %v5360
    %v5554 = vunpack.c.l.b16 %v5361
    %v5555 = vunpack.c.h.b16 %v5361
    %v5556 = vunpack.c.l.b16 %v5362
    %v5557 = vunpack.c.h.b16 %v5362
    %v5558 = vunpack.c.l.b16 %v5363
    %v5559 = vunpack.c.h.b16 %v5363
    %v5560 = vunpack.c.l.b16 %v5364
    %v5561 = vunpack.c.h.b16 %v5364
    %v5562 = vunpack.c.l.b16 %v5365
    %v5563 = vunpack.c.h.b16 %v5365
    %v5564 = vunpack.c.l.b16 %v5366
    %v5565 = vunpack.c.h.b16 %v5366
    %v5566 = vunpack.c.l.b16 %v5367
    %v5567 = vunpack.c.h.b16 %v5367
    %v5568 = vunpack.c.l.b16 %v5368
    %v5569 = vunpack.c.h.b16 %v5368
    %v5570 = vunpack.c.l.b16 %v5369
    %v5571 = vunpack.c.h.b16 %v5369
    %v5572 = vunpack.c.l.b16 %v5370
    %v5573 = vunpack.c.h.b16 %v5370
    %v5574 = vunpack.c.l.b16 %v5371
    %v5575 = vunpack.c.h.b16 %v5371
    %v5576 = vunpack.c.l.b16 %v5372
    %v5577 = vunpack.c.h.b16 %v5372
    %v5578 = vpack.c.b16 %v5452, %v5450
    %v5579 = vpack.c.b16 %v5453, %v5451
    %v5580 = vpack.c.b16 %v5456, %v5454
    %v5581 = vpack.c.b16 %v5457, %v5455
    %v5582 = vpack.c.b16 %v5460, %v5458
    %v5583 = vpack.c.b16 %v5461, %v5459
    %v5584 = vpack.c.b16 %v5464, %v5462
    %v5585 = vpack.c.b16 %v5465, %v5463
    %v5586 = vpack.c.b16 %v5468, %v5466
    %v5587 = vpack.c.b16 %v5469, %v5467
    %v5588 = vpack.c.b16 %v5472, %v5470
    %v5589 = vpack.c.b16 %v5473, %v5471
    %v5590 = vpack.c.b16 %v5476, %v5474
    %v5591 = vpack.c.b16 %v5477, %v5475
    %v5592 = vpack.c.b16 %v5480, %v5478
    %v5593 = vpack.c.b16 %v5481, %v5479
    %v5594 = vpack.c.b16 %v5484, %v5482
    %v5595 = vpack.c.b16 %v5485, %v5483
    %v5596 = vpack.c.b16 %v5488, %v5486
    %v5597 = vpack.c.b16 %v5489, %v5487
    %v5598 = vpack.c.b16 %v5492, %v5490
    %v5599 = vpack.c.b16 %v5493, %v5491
    %v5600 = vpack.c.b16 %v5496, %v5494
    %v5601 = vpack.c.b16 %v5497, %v5495
    %v5602 = vpack.c.b16 %v5500, %v5498
    %v5603 = vpack.c.b16 %v5501, %v5499
    %v5604 = vpack.c.b16 %v5504, %v5502
    %v5605 = vpack.c.b16 %v5505, %v5503
    %v5606 = vpack.c.b16 %v5508, %v5506
    %v5607 = vpack.c.b16 %v5509, %v5507
    %v5608 = vpack.c.b16 %v5512, %v5510
    %v5609 = vpack.c.b16 %v5513, %v5511
    %v5610 = vpack.c.b16 %v5516, %v5514
    %v5611 = vpack.c.b16 %v5517, %v5515
    %v5612 = vpack.c.b16 %v5520, %v5518
    %v5613 = vpack.c.b16 %v5521, %v5519
    %v5614 = vpack.c.b16 %v5524, %v5522
    %v5615 = vpack.c.b16 %v5525, %v5523
    %v5616 = vpack.c.b16 %v5528, %v5526
    %v5617 = vpack.c.b16 %v5529, %v5527
    %v5618 = vpack.c.b16 %v5532, %v5530
    %v5619 = vpack.c.b16 %v5533, %v5531
    %v5620 = vpack.c.b16 %v5536, %v5534
    %v5621 = vpack.c.b16 %v5537, %v5535
    %v5622 = vpack.c.b16 %v5540, %v5538
    %v5623 = vpack.c.b16 %v5541, %v5539
    %v5624 = vpack.c.b16 %v5544, %v5542
    %v5625 = vpack.c.b16 %v5545, %v5543
    %v5626 = vpack.c.b16 %v5548, %v5546
    %v5627 = vpack.c.b16 %v5549, %v5547
    %v5628 = vpack.c.b16 %v5552, %v5550
    %v5629 = vpack.c.b16 %v5553, %v5551
    %v5630 = vpack.c.b16 %v5556, %v5554
    %v5631 = vpack.c.b16 %v5557, %v5555
    %v5632 = vpack.c.b16 %v5560, %v5558
    %v5633 = vpack.c.b16 %v5561, %v5559
    %v5634 = vpack.c.b16 %v5564, %v5562
    %v5635 = vpack.c.b16 %v5565, %v5563
    %v5636 = vpack.c.b16 %v5568, %v5566
    %v5637 = vpack.c.b16 %v5569, %v5567
    %v5638 = vpack.c.b16 %v5572, %v5570
    %v5639 = vpack.c.b16 %v5573, %v5571
    %v5640 = vpack.c.b16 %v5576, %v5574
    %v5641 = vpack.c.b16 %v5577, %v5575
    %5706 = vmatprep.subr.bf16.mxu0 %v5579
    %5707 = vmatpush1.bf16.msra.mxu0 %v5578
    %5708 = vmatprep.subr.bf16.mxu0 %v5581
    %5709 = vmatpush1.bf16.msra.mxu0 %v5580
    %5710 = vmatprep.subr.bf16.mxu0 %v5583
    %5711 = vmatpush1.bf16.msra.mxu0 %v5582
    %5712 = vmatprep.subr.bf16.mxu0 %v5585
    %5713 = vmatpush1.bf16.msra.mxu0 %v5584
    %5714 = vmatprep.subr.bf16.mxu0 %v5587
    %5715 = vmatpush1.bf16.msra.mxu0 %v5586
    %5716 = vmatprep.subr.bf16.mxu0 %v5589
    %5717 = vmatpush1.bf16.msra.mxu0 %v5588
    %5718 = vmatprep.subr.bf16.mxu0 %v5591
    %5719 = vmatpush1.bf16.msra.mxu0 %v5590
    %5720 = vmatprep.subr.bf16.mxu0 %v5593
    %5721 = vmatpush1.bf16.msra.mxu0 %v5592
    %5722 = vmatprep.subr.bf16.mxu0 %v5595
    %5723 = vmatpush1.bf16.msra.mxu0 %v5594
    %5724 = vmatprep.subr.bf16.mxu0 %v5597
    %5725 = vmatpush1.bf16.msra.mxu0 %v5596
    %5726 = vmatprep.subr.bf16.mxu0 %v5599
    %5727 = vmatpush1.bf16.msra.mxu0 %v5598
    %5728 = vmatprep.subr.bf16.mxu0 %v5601
    %5729 = vmatpush1.bf16.msra.mxu0 %v5600
    %5730 = vmatprep.subr.bf16.mxu0 %v5603
    %5731 = vmatpush1.bf16.msra.mxu0 %v5602
    %5732 = vmatprep.subr.bf16.mxu0 %v5605
    %5733 = vmatpush1.bf16.msra.mxu0 %v5604
    %5734 = vmatprep.subr.bf16.mxu0 %v5607
    %5735 = vmatpush1.bf16.msra.mxu0 %v5606
    %5736 = vmatprep.subr.bf16.mxu0 %v5609
    %5737 = vmatpush1.bf16.msra.mxu0 %v5608
    %5738 = vmatprep.mubr.bf16.mxu0 %v4824
    %5739 = vmatmul.mubr.bf16.gmra.mrb[0].mxu0 %v4823
    %v5740 = vpop.f32.mrb[0].mxu0
    %v5741 = vadd.f32 %v5379, %v5740
    %v5742 = vpop.f32.mrb[0].mxu0
    %v5743 = vadd.f32 %v5383, %v5742
    %v5744 = vpop.f32.mrb[0].mxu0
    %v5745 = vpop.f32.mrb[0].mxu0
    %5746 = vdwg.mxu0
    %5747 = vmatprep.subr.bf16.mxu0 %v5611
    %5748 = vmatpush1.bf16.msra.mxu0 %v5610
    %5749 = vmatprep.subr.bf16.mxu0 %v5613
    %5750 = vmatpush1.bf16.msra.mxu0 %v5612
    %5751 = vmatprep.subr.bf16.mxu0 %v5615
    %5752 = vmatpush1.bf16.msra.mxu0 %v5614
    %5753 = vmatprep.subr.bf16.mxu0 %v5617
    %5754 = vmatpush1.bf16.msra.mxu0 %v5616
    %5755 = vmatprep.subr.bf16.mxu0 %v5619
    %5756 = vmatpush1.bf16.msra.mxu0 %v5618
    %5757 = vmatprep.subr.bf16.mxu0 %v5621
    %5758 = vmatpush1.bf16.msra.mxu0 %v5620
    %5759 = vmatprep.subr.bf16.mxu0 %v5623
    %5760 = vmatpush1.bf16.msra.mxu0 %v5622
    %5761 = vmatprep.subr.bf16.mxu0 %v5625
    %5762 = vmatpush1.bf16.msra.mxu0 %v5624
    %5763 = vmatprep.subr.bf16.mxu0 %v5627
    %5764 = vmatpush1.bf16.msra.mxu0 %v5626
    %5765 = vmatprep.subr.bf16.mxu0 %v5629
    %5766 = vmatpush1.bf16.msra.mxu0 %v5628
    %5767 = vmatprep.subr.bf16.mxu0 %v5631
    %5768 = vmatpush1.bf16.msra.mxu0 %v5630
    %5769 = vmatprep.subr.bf16.mxu0 %v5633
    %5770 = vmatpush1.bf16.msra.mxu0 %v5632
    %5771 = vmatprep.subr.bf16.mxu0 %v5635
    %5772 = vmatpush1.bf16.msra.mxu0 %v5634
    %5773 = vmatprep.subr.bf16.mxu0 %v5637
    %5774 = vmatpush1.bf16.msra.mxu0 %v5636
    %5775 = vmatprep.subr.bf16.mxu0 %v5639
    %5776 = vmatpush1.bf16.msra.mxu0 %v5638
    %5777 = vmatprep.subr.bf16.mxu0 %v5641
    %5778 = vmatpush1.bf16.msra.mxu0 %v5640
    %5779 = vmatprep.mubr.bf16.mxu0 %v4826
    %5780 = vmatmul.mubr.bf16.gmra.mrb[0].mxu0 %v4825
    %v5781 = vpop.f32.mrb[0].mxu0
    %v5782 = vadd.f32 %v5741, %v5781
    %v5783 = vpop.f32.mrb[0].mxu0
    %v5784 = vadd.f32 %v5743, %v5783
    %v5785 = vpop.f32.mrb[0].mxu0
    %v5786 = vpop.f32.mrb[0].mxu0
    %5787 = vdwg.mxu0
    %s5788 = scalar_lea.vmem %s14, 4
    %v5789 = vld [vmem:[%s5788] sm:$0xf]
    %v5790 = vpack.c.bf16 %v5782, %v5782
    %v5791 = vpack.c.bf16 %v5784, %v5784
    %vm5792 = vcmask 15360
    %v5794 = vsel %vm5792, %v5789, 0
    %vm5796 = vcmask 1040384
    %v5798 = vsel %vm5796, %v5790, 0
    %v5801 = vsel %vm5796, %v5791, 0
    %5803 = vmatprep.subr.bf16.mxu0 %v5801
    %5804 = vmatpush1.bf16.msra.mxu0 %v5798
    %5805 = vmatprep.subr.bf16.mxu0 0
    %5806 = vmatpush1.bf16.msra.mxu0 0
    %5807 = vmatprep.subr.bf16.mxu0 0
    %5808 = vmatpush1.bf16.msra.mxu0 0
    %5809 = vmatprep.subr.bf16.mxu0 0
    %5810 = vmatpush1.bf16.msra.mxu0 0
    %5811 = vmatprep.subr.bf16.mxu0 0
    %5812 = vmatpush1.bf16.msra.mxu0 0
    %5813 = vmatprep.subr.bf16.mxu0 0
    %5814 = vmatpush1.bf16.msra.mxu0 0
    %5815 = vmatprep.subr.bf16.mxu0 0
    %5816 = vmatpush1.bf16.msra.mxu0 0
    %5817 = vmatprep.subr.bf16.mxu0 0
    %5818 = vmatpush1.bf16.msra.mxu0 0
    %5819 = vmatprep.subr.bf16.mxu0 0
    %5820 = vmatpush1.bf16.msra.mxu0 0
    %5821 = vmatprep.subr.bf16.mxu0 0
    %5822 = vmatpush1.bf16.msra.mxu0 0
    %5823 = vmatprep.subr.bf16.mxu0 0
    %5824 = vmatpush1.bf16.msra.mxu0 0
    %5825 = vmatprep.subr.bf16.mxu0 0
    %5826 = vmatpush1.bf16.msra.mxu0 0
    %5827 = vmatprep.subr.bf16.mxu0 0
    %5828 = vmatpush1.bf16.msra.mxu0 0
    %5829 = vmatprep.subr.bf16.mxu0 0
    %5830 = vmatpush1.bf16.msra.mxu0 0
    %5831 = vmatprep.subr.bf16.mxu0 0
    %5832 = vmatpush1.bf16.msra.mxu0 0
    %5833 = vmatprep.subr.bf16.mxu0 0
    %5834 = vmatpush1.bf16.msra.mxu0 0
    %5835 = vmatprep.mubr.bf16.mxu0 0
    %5836 = vmatmul.mubr.bf16.gmra.mrb[0].mxu0 %v5794
    %v5837 = vpop.f32.mrb[0].mxu0
    %v5838 = vadd.f32 0.0, %v5837
    %v5839 = vpop.f32.mrb[0].mxu0
    %v5840 = vadd.f32 0.0, %v5839
    %v5841 = vpop.f32.mrb[0].mxu0
    %v5842 = vpop.f32.mrb[0].mxu0
    %5843 = vdwg.mxu0
    %v5845 = vsel %vm5792, %v5305, 0
    %v5848 = vsel %vm5796, %v5306, 0
    %v5851 = vsel %vm5796, %v5307, 0
    %5853 = vmatprep.subr.bf16.mxu0 %v5851
    %5854 = vmatpush1.bf16.msra.mxu0 %v5848
    %5855 = vmatprep.subr.bf16.mxu0 0
    %5856 = vmatpush1.bf16.msra.mxu0 0
    %5857 = vmatprep.subr.bf16.mxu0 0
    %5858 = vmatpush1.bf16.msra.mxu0 0
    %5859 = vmatprep.subr.bf16.mxu0 0
    %5860 = vmatpush1.bf16.msra.mxu0 0
    %5861 = vmatprep.subr.bf16.mxu0 0
    %5862 = vmatpush1.bf16.msra.mxu0 0
    %5863 = vmatprep.subr.bf16.mxu0 0
    %5864 = vmatpush1.bf16.msra.mxu0 0
    %5865 = vmatprep.subr.bf16.mxu0 0
    %5866 = vmatpush1.bf16.msra.mxu0 0
    %5867 = vmatprep.subr.bf16.mxu0 0
    %5868 = vmatpush1.bf16.msra.mxu0 0
    %5869 = vmatprep.subr.bf16.mxu0 0
    %5870 = vmatpush1.bf16.msra.mxu0 0
    %5871 = vmatprep.subr.bf16.mxu0 0
    %5872 = vmatpush1.bf16.msra.mxu0 0
    %5873 = vmatprep.subr.bf16.mxu0 0
    %5874 = vmatpush1.bf16.msra.mxu0 0
    %5875 = vmatprep.subr.bf16.mxu0 0
    %5876 = vmatpush1.bf16.msra.mxu0 0
    %5877 = vmatprep.subr.bf16.mxu0 0
    %5878 = vmatpush1.bf16.msra.mxu0 0
    %5879 = vmatprep.subr.bf16.mxu0 0
    %5880 = vmatpush1.bf16.msra.mxu0 0
    %5881 = vmatprep.subr.bf16.mxu0 0
    %5882 = vmatpush1.bf16.msra.mxu0 0
    %5883 = vmatprep.subr.bf16.mxu0 0
    %5884 = vmatpush1.bf16.msra.mxu0 0
    %5885 = vmatprep.mubr.bf16.mxu0 0
    %5886 = vmatmul.mubr.bf16.gmra.mrb[0].mxu0 %v5845
    %v5887 = vpop.f32.mrb[0].mxu0
    %v5888 = vadd.f32 %v5838, %v5887
    %v5889 = vpop.f32.mrb[0].mxu0
    %v5890 = vadd.f32 %v5840, %v5889
    %v5891 = vpop.f32.mrb[0].mxu0
    %v5892 = vpop.f32.mrb[0].mxu0
    %5893 = vdwg.mxu0
    %s5894 = scalar_lea.vmem %s13, 1024
    %v5895 = vld [vmem:[%s5894] sm:$0xff]
    %v5896 = vld [vmem:[%s5894 + $0x8] sm:$0xff]
    %v5897 = vld [vmem:[%s5894 + $0x10] sm:$0xff]
    %v5898 = vld [vmem:[%s5894 + $0x18] sm:$0xff]
    %v5899 = vld [vmem:[%s5894 + $0x20] sm:$0xff]
    %v5900 = vld [vmem:[%s5894 + $0x28] sm:$0xff]
    %v5901 = vld [vmem:[%s5894 + $0x30] sm:$0xff]
    %v5902 = vld [vmem:[%s5894 + $0x38] sm:$0xff]
    %v5903 = vld [vmem:[%s5894 + $0x40] sm:$0xff]
    %v5904 = vld [vmem:[%s5894 + $0x48] sm:$0xff]
    %v5905 = vld [vmem:[%s5894 + $0x50] sm:$0xff]
    %v5906 = vld [vmem:[%s5894 + $0x58] sm:$0xff]
    %v5907 = vld [vmem:[%s5894 + $0x60] sm:$0xff]
    %v5908 = vld [vmem:[%s5894 + $0x68] sm:$0xff]
    %v5909 = vld [vmem:[%s5894 + $0x70] sm:$0xff]
    %v5910 = vld [vmem:[%s5894 + $0x78] sm:$0xff]
    %v5911 = vld [vmem:[%s5894 + $0x80] sm:$0xff]
    %v5912 = vld [vmem:[%s5894 + $0x88] sm:$0xff]
    %v5913 = vld [vmem:[%s5894 + $0x90] sm:$0xff]
    %v5914 = vld [vmem:[%s5894 + $0x98] sm:$0xff]
    %v5915 = vld [vmem:[%s5894 + $0xa0] sm:$0xff]
    %v5916 = vld [vmem:[%s5894 + $0xa8] sm:$0xff]
    %v5917 = vld [vmem:[%s5894 + $0xb0] sm:$0xff]
    %v5918 = vld [vmem:[%s5894 + $0xb8] sm:$0xff]
    %v5919 = vld [vmem:[%s5894 + $0xc0] sm:$0xff]
    %v5920 = vld [vmem:[%s5894 + $0xc8] sm:$0xff]
    %v5921 = vld [vmem:[%s5894 + $0xd0] sm:$0xff]
    %v5922 = vld [vmem:[%s5894 + $0xd8] sm:$0xff]
    %v5923 = vld [vmem:[%s5894 + $0xe0] sm:$0xff]
    %v5924 = vld [vmem:[%s5894 + $0xe8] sm:$0xff]
    %v5925 = vld [vmem:[%s5894 + $0xf0] sm:$0xff]
    %v5926 = vld [vmem:[%s5894 + $0xf8] sm:$0xff]
    %v5927 = vld [vmem:[%s5894 + $0x100] sm:$0xff]
    %v5928 = vld [vmem:[%s5894 + $0x108] sm:$0xff]
    %v5929 = vld [vmem:[%s5894 + $0x110] sm:$0xff]
    %v5930 = vld [vmem:[%s5894 + $0x118] sm:$0xff]
    %v5931 = vld [vmem:[%s5894 + $0x120] sm:$0xff]
    %v5932 = vld [vmem:[%s5894 + $0x128] sm:$0xff]
    %v5933 = vld [vmem:[%s5894 + $0x130] sm:$0xff]
    %v5934 = vld [vmem:[%s5894 + $0x138] sm:$0xff]
    %v5935 = vld [vmem:[%s5894 + $0x140] sm:$0xff]
    %v5936 = vld [vmem:[%s5894 + $0x148] sm:$0xff]
    %v5937 = vld [vmem:[%s5894 + $0x150] sm:$0xff]
    %v5938 = vld [vmem:[%s5894 + $0x158] sm:$0xff]
    %v5939 = vld [vmem:[%s5894 + $0x160] sm:$0xff]
    %v5940 = vld [vmem:[%s5894 + $0x168] sm:$0xff]
    %v5941 = vld [vmem:[%s5894 + $0x170] sm:$0xff]
    %v5942 = vld [vmem:[%s5894 + $0x178] sm:$0xff]
    %v5943 = vld [vmem:[%s5894 + $0x180] sm:$0xff]
    %v5944 = vld [vmem:[%s5894 + $0x188] sm:$0xff]
    %v5945 = vld [vmem:[%s5894 + $0x190] sm:$0xff]
    %v5946 = vld [vmem:[%s5894 + $0x198] sm:$0xff]
    %v5947 = vld [vmem:[%s5894 + $0x1a0] sm:$0xff]
    %v5948 = vld [vmem:[%s5894 + $0x1a8] sm:$0xff]
    %v5949 = vld [vmem:[%s5894 + $0x1b0] sm:$0xff]
    %v5950 = vld [vmem:[%s5894 + $0x1b8] sm:$0xff]
    %v5951 = vld [vmem:[%s5894 + $0x1c0] sm:$0xff]
    %v5952 = vld [vmem:[%s5894 + $0x1c8] sm:$0xff]
    %v5953 = vld [vmem:[%s5894 + $0x1d0] sm:$0xff]
    %v5954 = vld [vmem:[%s5894 + $0x1d8] sm:$0xff]
    %v5955 = vld [vmem:[%s5894 + $0x1e0] sm:$0xff]
    %v5956 = vld [vmem:[%s5894 + $0x1e8] sm:$0xff]
    %v5957 = vld [vmem:[%s5894 + $0x1f0] sm:$0xff]
    %v5958 = vld [vmem:[%s5894 + $0x1f8] sm:$0xff]
    %s5959 = scalar_lea.vmem %s15, 4
    %v5960 = vld [vmem:[%s5959] sm:$0x3]
    %v5962 = vlaneseq
    %v5963 = vshrl.u32 %v5962, 7
    %v5964 = vsub.s32 0, %v5963
    %v5965 = vrot.slane %v5960, %v5964
    %v5966 = vlaneseq
    %v5967 = vshrl.u32 %v5966, 7
    %v5968 = vsub.s32 1, %v5967
    %v5969 = vrot.slane %v5960, %v5968
    %v6036 = vunpack.c.l.b16 %v5895
    %v6037 = vunpack.c.h.b16 %v5895
    %v6038 = vunpack.c.l.b16 %v5896
    %v6039 = vunpack.c.h.b16 %v5896
    %v6040 = vunpack.c.l.b16 %v5897
    %v6041 = vunpack.c.h.b16 %v5897
    %v6042 = vunpack.c.l.b16 %v5898
    %v6043 = vunpack.c.h.b16 %v5898
    %v6044 = vunpack.c.l.b16 %v5899
    %v6045 = vunpack.c.h.b16 %v5899
    %v6046 = vunpack.c.l.b16 %v5900
    %v6047 = vunpack.c.h.b16 %v5900
    %v6048 = vunpack.c.l.b16 %v5901
    %v6049 = vunpack.c.h.b16 %v5901
    %v6050 = vunpack.c.l.b16 %v5902
    %v6051 = vunpack.c.h.b16 %v5902
    %v6052 = vunpack.c.l.b16 %v5903
    %v6053 = vunpack.c.h.b16 %v5903
    %v6054 = vunpack.c.l.b16 %v5904
    %v6055 = vunpack.c.h.b16 %v5904
    %v6056 = vunpack.c.l.b16 %v5905
    %v6057 = vunpack.c.h.b16 %v5905
    %v6058 = vunpack.c.l.b16 %v5906
    %v6059 = vunpack.c.h.b16 %v5906
    %v6060 = vunpack.c.l.b16 %v5907
    %v6061 = vunpack.c.h.b16 %v5907
    %v6062 = vunpack.c.l.b16 %v5908
    %v6063 = vunpack.c.h.b16 %v5908
    %v6064 = vunpack.c.l.b16 %v5909
    %v6065 = vunpack.c.h.b16 %v5909
    %v6066 = vunpack.c.l.b16 %v5910
    %v6067 = vunpack.c.h.b16 %v5910
    %v6068 = vunpack.c.l.b16 %v5911
    %v6069 = vunpack.c.h.b16 %v5911
    %v6070 = vunpack.c.l.b16 %v5912
    %v6071 = vunpack.c.h.b16 %v5912
    %v6072 = vunpack.c.l.b16 %v5913
    %v6073 = vunpack.c.h.b16 %v5913
    %v6074 = vunpack.c.l.b16 %v5914
    %v6075 = vunpack.c.h.b16 %v5914
    %v6076 = vunpack.c.l.b16 %v5915
    %v6077 = vunpack.c.h.b16 %v5915
    %v6078 = vunpack.c.l.b16 %v5916
    %v6079 = vunpack.c.h.b16 %v5916
    %v6080 = vunpack.c.l.b16 %v5917
    %v6081 = vunpack.c.h.b16 %v5917
    %v6082 = vunpack.c.l.b16 %v5918
    %v6083 = vunpack.c.h.b16 %v5918
    %v6084 = vunpack.c.l.b16 %v5919
    %v6085 = vunpack.c.h.b16 %v5919
    %v6086 = vunpack.c.l.b16 %v5920
    %v6087 = vunpack.c.h.b16 %v5920
    %v6088 = vunpack.c.l.b16 %v5921
    %v6089 = vunpack.c.h.b16 %v5921
    %v6090 = vunpack.c.l.b16 %v5922
    %v6091 = vunpack.c.h.b16 %v5922
    %v6092 = vunpack.c.l.b16 %v5923
    %v6093 = vunpack.c.h.b16 %v5923
    %v6094 = vunpack.c.l.b16 %v5924
    %v6095 = vunpack.c.h.b16 %v5924
    %v6096 = vunpack.c.l.b16 %v5925
    %v6097 = vunpack.c.h.b16 %v5925
    %v6098 = vunpack.c.l.b16 %v5926
    %v6099 = vunpack.c.h.b16 %v5926
    %v6100 = vunpack.c.l.b16 %v5927
    %v6101 = vunpack.c.h.b16 %v5927
    %v6102 = vunpack.c.l.b16 %v5928
    %v6103 = vunpack.c.h.b16 %v5928
    %v6104 = vunpack.c.l.b16 %v5929
    %v6105 = vunpack.c.h.b16 %v5929
    %v6106 = vunpack.c.l.b16 %v5930
    %v6107 = vunpack.c.h.b16 %v5930
    %v6108 = vunpack.c.l.b16 %v5931
    %v6109 = vunpack.c.h.b16 %v5931
    %v6110 = vunpack.c.l.b16 %v5932
    %v6111 = vunpack.c.h.b16 %v5932
    %v6112 = vunpack.c.l.b16 %v5933
    %v6113 = vunpack.c.h.b16 %v5933
    %v6114 = vunpack.c.l.b16 %v5934
    %v6115 = vunpack.c.h.b16 %v5934
    %v6116 = vunpack.c.l.b16 %v5935
    %v6117 = vunpack.c.h.b16 %v5935
    %v6118 = vunpack.c.l.b16 %v5936
    %v6119 = vunpack.c.h.b16 %v5936
    %v6120 = vunpack.c.l.b16 %v5937
    %v6121 = vunpack.c.h.b16 %v5937
    %v6122 = vunpack.c.l.b16 %v5938
    %v6123 = vunpack.c.h.b16 %v5938
    %v6124 = vunpack.c.l.b16 %v5939
    %v6125 = vunpack.c.h.b16 %v5939
    %v6126 = vunpack.c.l.b16 %v5940
    %v6127 = vunpack.c.h.b16 %v5940
    %v6128 = vunpack.c.l.b16 %v5941
    %v6129 = vunpack.c.h.b16 %v5941
    %v6130 = vunpack.c.l.b16 %v5942
    %v6131 = vunpack.c.h.b16 %v5942
    %v6132 = vunpack.c.l.b16 %v5943
    %v6133 = vunpack.c.h.b16 %v5943
    %v6134 = vunpack.c.l.b16 %v5944
    %v6135 = vunpack.c.h.b16 %v5944
    %v6136 = vunpack.c.l.b16 %v5945
    %v6137 = vunpack.c.h.b16 %v5945
    %v6138 = vunpack.c.l.b16 %v5946
    %v6139 = vunpack.c.h.b16 %v5946
    %v6140 = vunpack.c.l.b16 %v5947
    %v6141 = vunpack.c.h.b16 %v5947
    %v6142 = vunpack.c.l.b16 %v5948
    %v6143 = vunpack.c.h.b16 %v5948
    %v6144 = vunpack.c.l.b16 %v5949
    %v6145 = vunpack.c.h.b16 %v5949
    %v6146 = vunpack.c.l.b16 %v5950
    %v6147 = vunpack.c.h.b16 %v5950
    %v6148 = vunpack.c.l.b16 %v5951
    %v6149 = vunpack.c.h.b16 %v5951
    %v6150 = vunpack.c.l.b16 %v5952
    %v6151 = vunpack.c.h.b16 %v5952
    %v6152 = vunpack.c.l.b16 %v5953
    %v6153 = vunpack.c.h.b16 %v5953
    %v6154 = vunpack.c.l.b16 %v5954
    %v6155 = vunpack.c.h.b16 %v5954
    %v6156 = vunpack.c.l.b16 %v5955
    %v6157 = vunpack.c.h.b16 %v5955
    %v6158 = vunpack.c.l.b16 %v5956
    %v6159 = vunpack.c.h.b16 %v5956
    %v6160 = vunpack.c.l.b16 %v5957
    %v6161 = vunpack.c.h.b16 %v5957
    %v6162 = vunpack.c.l.b16 %v5958
    %v6163 = vunpack.c.h.b16 %v5958
    %v6164 = vpack.c.b16 %v6038, %v6036
    %v6165 = vpack.c.b16 %v6039, %v6037
    %v6166 = vpack.c.b16 %v6042, %v6040
    %v6167 = vpack.c.b16 %v6043, %v6041
    %v6168 = vpack.c.b16 %v6046, %v6044
    %v6169 = vpack.c.b16 %v6047, %v6045
    %v6170 = vpack.c.b16 %v6050, %v6048
    %v6171 = vpack.c.b16 %v6051, %v6049
    %v6172 = vpack.c.b16 %v6054, %v6052
    %v6173 = vpack.c.b16 %v6055, %v6053
    %v6174 = vpack.c.b16 %v6058, %v6056
    %v6175 = vpack.c.b16 %v6059, %v6057
    %v6176 = vpack.c.b16 %v6062, %v6060
    %v6177 = vpack.c.b16 %v6063, %v6061
    %v6178 = vpack.c.b16 %v6066, %v6064
    %v6179 = vpack.c.b16 %v6067, %v6065
    %v6180 = vpack.c.b16 %v6070, %v6068
    %v6181 = vpack.c.b16 %v6071, %v6069
    %v6182 = vpack.c.b16 %v6074, %v6072
    %v6183 = vpack.c.b16 %v6075, %v6073
    %v6184 = vpack.c.b16 %v6078, %v6076
    %v6185 = vpack.c.b16 %v6079, %v6077
    %v6186 = vpack.c.b16 %v6082, %v6080
    %v6187 = vpack.c.b16 %v6083, %v6081
    %v6188 = vpack.c.b16 %v6086, %v6084
    %v6189 = vpack.c.b16 %v6087, %v6085
    %v6190 = vpack.c.b16 %v6090, %v6088
    %v6191 = vpack.c.b16 %v6091, %v6089
    %v6192 = vpack.c.b16 %v6094, %v6092
    %v6193 = vpack.c.b16 %v6095, %v6093
    %v6194 = vpack.c.b16 %v6098, %v6096
    %v6195 = vpack.c.b16 %v6099, %v6097
    %v6196 = vpack.c.b16 %v6102, %v6100
    %v6197 = vpack.c.b16 %v6103, %v6101
    %v6198 = vpack.c.b16 %v6106, %v6104
    %v6199 = vpack.c.b16 %v6107, %v6105
    %v6200 = vpack.c.b16 %v6110, %v6108
    %v6201 = vpack.c.b16 %v6111, %v6109
    %v6202 = vpack.c.b16 %v6114, %v6112
    %v6203 = vpack.c.b16 %v6115, %v6113
    %v6204 = vpack.c.b16 %v6118, %v6116
    %v6205 = vpack.c.b16 %v6119, %v6117
    %v6206 = vpack.c.b16 %v6122, %v6120
    %v6207 = vpack.c.b16 %v6123, %v6121
    %v6208 = vpack.c.b16 %v6126, %v6124
    %v6209 = vpack.c.b16 %v6127, %v6125
    %v6210 = vpack.c.b16 %v6130, %v6128
    %v6211 = vpack.c.b16 %v6131, %v6129
    %v6212 = vpack.c.b16 %v6134, %v6132
    %v6213 = vpack.c.b16 %v6135, %v6133
    %v6214 = vpack.c.b16 %v6138, %v6136
    %v6215 = vpack.c.b16 %v6139, %v6137
    %v6216 = vpack.c.b16 %v6142, %v6140
    %v6217 = vpack.c.b16 %v6143, %v6141
    %v6218 = vpack.c.b16 %v6146, %v6144
    %v6219 = vpack.c.b16 %v6147, %v6145
    %v6220 = vpack.c.b16 %v6150, %v6148
    %v6221 = vpack.c.b16 %v6151, %v6149
    %v6222 = vpack.c.b16 %v6154, %v6152
    %v6223 = vpack.c.b16 %v6155, %v6153
    %v6224 = vpack.c.b16 %v6158, %v6156
    %v6225 = vpack.c.b16 %v6159, %v6157
    %v6226 = vpack.c.b16 %v6162, %v6160
    %v6227 = vpack.c.b16 %v6163, %v6161
    %6292 = vmatprep.subr.bf16.mxu0 %v6165
    %6293 = vmatpush1.bf16.msra.mxu0 %v6164
    %6294 = vmatprep.subr.bf16.mxu0 %v6167
    %6295 = vmatpush1.bf16.msra.mxu0 %v6166
    %6296 = vmatprep.subr.bf16.mxu0 %v6169
    %6297 = vmatpush1.bf16.msra.mxu0 %v6168
    %6298 = vmatprep.subr.bf16.mxu0 %v6171
    %6299 = vmatpush1.bf16.msra.mxu0 %v6170
    %6300 = vmatprep.subr.bf16.mxu0 %v6173
    %6301 = vmatpush1.bf16.msra.mxu0 %v6172
    %6302 = vmatprep.subr.bf16.mxu0 %v6175
    %6303 = vmatpush1.bf16.msra.mxu0 %v6174
    %6304 = vmatprep.subr.bf16.mxu0 %v6177
    %6305 = vmatpush1.bf16.msra.mxu0 %v6176
    %6306 = vmatprep.subr.bf16.mxu0 %v6179
    %6307 = vmatpush1.bf16.msra.mxu0 %v6178
    %6308 = vmatprep.subr.bf16.mxu0 %v6181
    %6309 = vmatpush1.bf16.msra.mxu0 %v6180
    %6310 = vmatprep.subr.bf16.mxu0 %v6183
    %6311 = vmatpush1.bf16.msra.mxu0 %v6182
    %6312 = vmatprep.subr.bf16.mxu0 %v6185
    %6313 = vmatpush1.bf16.msra.mxu0 %v6184
    %6314 = vmatprep.subr.bf16.mxu0 %v6187
    %6315 = vmatpush1.bf16.msra.mxu0 %v6186
    %6316 = vmatprep.subr.bf16.mxu0 %v6189
    %6317 = vmatpush1.bf16.msra.mxu0 %v6188
    %6318 = vmatprep.subr.bf16.mxu0 %v6191
    %6319 = vmatpush1.bf16.msra.mxu0 %v6190
    %6320 = vmatprep.subr.bf16.mxu0 %v6193
    %6321 = vmatpush1.bf16.msra.mxu0 %v6192
    %6322 = vmatprep.subr.bf16.mxu0 %v6195
    %6323 = vmatpush1.bf16.msra.mxu0 %v6194
    %6324 = vmatprep.mubr.bf16.mxu0 %v4824
    %6325 = vmatmul.mubr.bf16.gmra.mrb[0].mxu0 %v4823
    %v6326 = vpop.f32.mrb[0].mxu0
    %v6327 = vadd.f32 %v5965, %v6326
    %v6328 = vpop.f32.mrb[0].mxu0
    %v6329 = vadd.f32 %v5969, %v6328
    %v6330 = vpop.f32.mrb[0].mxu0
    %v6331 = vpop.f32.mrb[0].mxu0
    %6332 = vdwg.mxu0
    %6333 = vmatprep.subr.bf16.mxu0 %v6197
    %6334 = vmatpush1.bf16.msra.mxu0 %v6196
    %6335 = vmatprep.subr.bf16.mxu0 %v6199
    %6336 = vmatpush1.bf16.msra.mxu0 %v6198
    %6337 = vmatprep.subr.bf16.mxu0 %v6201
    %6338 = vmatpush1.bf16.msra.mxu0 %v6200
    %6339 = vmatprep.subr.bf16.mxu0 %v6203
    %6340 = vmatpush1.bf16.msra.mxu0 %v6202
    %6341 = vmatprep.subr.bf16.mxu0 %v6205
    %6342 = vmatpush1.bf16.msra.mxu0 %v6204
    %6343 = vmatprep.subr.bf16.mxu0 %v6207
    %6344 = vmatpush1.bf16.msra.mxu0 %v6206
    %6345 = vmatprep.subr.bf16.mxu0 %v6209
    %6346 = vmatpush1.bf16.msra.mxu0 %v6208
    %6347 = vmatprep.subr.bf16.mxu0 %v6211
    %6348 = vmatpush1.bf16.msra.mxu0 %v6210
    %6349 = vmatprep.subr.bf16.mxu0 %v6213
    %6350 = vmatpush1.bf16.msra.mxu0 %v6212
    %6351 = vmatprep.subr.bf16.mxu0 %v6215
    %6352 = vmatpush1.bf16.msra.mxu0 %v6214
    %6353 = vmatprep.subr.bf16.mxu0 %v6217
    %6354 = vmatpush1.bf16.msra.mxu0 %v6216
    %6355 = vmatprep.subr.bf16.mxu0 %v6219
    %6356 = vmatpush1.bf16.msra.mxu0 %v6218
    %6357 = vmatprep.subr.bf16.mxu0 %v6221
    %6358 = vmatpush1.bf16.msra.mxu0 %v6220
    %6359 = vmatprep.subr.bf16.mxu0 %v6223
    %6360 = vmatpush1.bf16.msra.mxu0 %v6222
    %6361 = vmatprep.subr.bf16.mxu0 %v6225
    %6362 = vmatpush1.bf16.msra.mxu0 %v6224
    %6363 = vmatprep.subr.bf16.mxu0 %v6227
    %6364 = vmatpush1.bf16.msra.mxu0 %v6226
    %6365 = vmatprep.mubr.bf16.mxu0 %v4826
    %6366 = vmatmul.mubr.bf16.gmra.mrb[0].mxu0 %v4825
    %v6367 = vpop.f32.mrb[0].mxu0
    %v6368 = vadd.f32 %v6327, %v6367
    %v6369 = vpop.f32.mrb[0].mxu0
    %v6370 = vadd.f32 %v6329, %v6369
    %v6371 = vpop.f32.mrb[0].mxu0
    %v6372 = vpop.f32.mrb[0].mxu0
    %6373 = vdwg.mxu0
    %s6374 = scalar_lea.vmem %s14, 8
    %v6375 = vld [vmem:[%s6374] sm:$0xf]
    %v6376 = vpack.c.bf16 %v6368, %v6368
    %v6377 = vpack.c.bf16 %v6370, %v6370
    %v6379 = vsel %vm5792, %v6375, 0
    %v6382 = vsel %vm5796, %v6376, 0
    %v6385 = vsel %vm5796, %v6377, 0
    %6387 = vmatprep.subr.bf16.mxu0 %v6385
    %6388 = vmatpush1.bf16.msra.mxu0 %v6382
    %6389 = vmatprep.subr.bf16.mxu0 0
    %6390 = vmatpush1.bf16.msra.mxu0 0
    %6391 = vmatprep.subr.bf16.mxu0 0
    %6392 = vmatpush1.bf16.msra.mxu0 0
    %6393 = vmatprep.subr.bf16.mxu0 0
    %6394 = vmatpush1.bf16.msra.mxu0 0
    %6395 = vmatprep.subr.bf16.mxu0 0
    %6396 = vmatpush1.bf16.msra.mxu0 0
    %6397 = vmatprep.subr.bf16.mxu0 0
    %6398 = vmatpush1.bf16.msra.mxu0 0
    %6399 = vmatprep.subr.bf16.mxu0 0
    %6400 = vmatpush1.bf16.msra.mxu0 0
    %6401 = vmatprep.subr.bf16.mxu0 0
    %6402 = vmatpush1.bf16.msra.mxu0 0
    %6403 = vmatprep.subr.bf16.mxu0 0
    %6404 = vmatpush1.bf16.msra.mxu0 0
    %6405 = vmatprep.subr.bf16.mxu0 0
    %6406 = vmatpush1.bf16.msra.mxu0 0
    %6407 = vmatprep.subr.bf16.mxu0 0
    %6408 = vmatpush1.bf16.msra.mxu0 0
    %6409 = vmatprep.subr.bf16.mxu0 0
    %6410 = vmatpush1.bf16.msra.mxu0 0
    %6411 = vmatprep.subr.bf16.mxu0 0
    %6412 = vmatpush1.bf16.msra.mxu0 0
    %6413 = vmatprep.subr.bf16.mxu0 0
    %6414 = vmatpush1.bf16.msra.mxu0 0
    %6415 = vmatprep.subr.bf16.mxu0 0
    %6416 = vmatpush1.bf16.msra.mxu0 0
    %6417 = vmatprep.subr.bf16.mxu0 0
    %6418 = vmatpush1.bf16.msra.mxu0 0
    %6419 = vmatprep.mubr.bf16.mxu0 0
    %6420 = vmatmul.mubr.bf16.gmra.mrb[0].mxu0 %v6379
    %v6421 = vpop.f32.mrb[0].mxu0
    %v6422 = vadd.f32 0.0, %v6421
    %v6423 = vpop.f32.mrb[0].mxu0
    %v6424 = vadd.f32 0.0, %v6423
    %v6425 = vpop.f32.mrb[0].mxu0
    %v6426 = vpop.f32.mrb[0].mxu0
    %6427 = vdwg.mxu0
    %v6428 = vadd.f32 %v5888, %v6422
    %v6429 = vadd.f32 %v5890, %v6424
    %s6430 = scalar_lea.vmem %s13, 1536
    %v6431 = vld [vmem:[%s6430] sm:$0xff]
    %v6432 = vld [vmem:[%s6430 + $0x8] sm:$0xff]
    %v6433 = vld [vmem:[%s6430 + $0x10] sm:$0xff]
    %v6434 = vld [vmem:[%s6430 + $0x18] sm:$0xff]
    %v6435 = vld [vmem:[%s6430 + $0x20] sm:$0xff]
    %v6436 = vld [vmem:[%s6430 + $0x28] sm:$0xff]
    %v6437 = vld [vmem:[%s6430 + $0x30] sm:$0xff]
    %v6438 = vld [vmem:[%s6430 + $0x38] sm:$0xff]
    %v6439 = vld [vmem:[%s6430 + $0x40] sm:$0xff]
    %v6440 = vld [vmem:[%s6430 + $0x48] sm:$0xff]
    %v6441 = vld [vmem:[%s6430 + $0x50] sm:$0xff]
    %v6442 = vld [vmem:[%s6430 + $0x58] sm:$0xff]
    %v6443 = vld [vmem:[%s6430 + $0x60] sm:$0xff]
    %v6444 = vld [vmem:[%s6430 + $0x68] sm:$0xff]
    %v6445 = vld [vmem:[%s6430 + $0x70] sm:$0xff]
    %v6446 = vld [vmem:[%s6430 + $0x78] sm:$0xff]
    %v6447 = vld [vmem:[%s6430 + $0x80] sm:$0xff]
    %v6448 = vld [vmem:[%s6430 + $0x88] sm:$0xff]
    %v6449 = vld [vmem:[%s6430 + $0x90] sm:$0xff]
    %v6450 = vld [vmem:[%s6430 + $0x98] sm:$0xff]
    %v6451 = vld [vmem:[%s6430 + $0xa0] sm:$0xff]
    %v6452 = vld [vmem:[%s6430 + $0xa8] sm:$0xff]
    %v6453 = vld [vmem:[%s6430 + $0xb0] sm:$0xff]
    %v6454 = vld [vmem:[%s6430 + $0xb8] sm:$0xff]
    %v6455 = vld [vmem:[%s6430 + $0xc0] sm:$0xff]
    %v6456 = vld [vmem:[%s6430 + $0xc8] sm:$0xff]
    %v6457 = vld [vmem:[%s6430 + $0xd0] sm:$0xff]
    %v6458 = vld [vmem:[%s6430 + $0xd8] sm:$0xff]
    %v6459 = vld [vmem:[%s6430 + $0xe0] sm:$0xff]
    %v6460 = vld [vmem:[%s6430 + $0xe8] sm:$0xff]
    %v6461 = vld [vmem:[%s6430 + $0xf0] sm:$0xff]
    %v6462 = vld [vmem:[%s6430 + $0xf8] sm:$0xff]
    %v6463 = vld [vmem:[%s6430 + $0x100] sm:$0xff]
    %v6464 = vld [vmem:[%s6430 + $0x108] sm:$0xff]
    %v6465 = vld [vmem:[%s6430 + $0x110] sm:$0xff]
    %v6466 = vld [vmem:[%s6430 + $0x118] sm:$0xff]
    %v6467 = vld [vmem:[%s6430 + $0x120] sm:$0xff]
    %v6468 = vld [vmem:[%s6430 + $0x128] sm:$0xff]
    %v6469 = vld [vmem:[%s6430 + $0x130] sm:$0xff]
    %v6470 = vld [vmem:[%s6430 + $0x138] sm:$0xff]
    %v6471 = vld [vmem:[%s6430 + $0x140] sm:$0xff]
    %v6472 = vld [vmem:[%s6430 + $0x148] sm:$0xff]
    %v6473 = vld [vmem:[%s6430 + $0x150] sm:$0xff]
    %v6474 = vld [vmem:[%s6430 + $0x158] sm:$0xff]
    %v6475 = vld [vmem:[%s6430 + $0x160] sm:$0xff]
    %v6476 = vld [vmem:[%s6430 + $0x168] sm:$0xff]
    %v6477 = vld [vmem:[%s6430 + $0x170] sm:$0xff]
    %v6478 = vld [vmem:[%s6430 + $0x178] sm:$0xff]
    %v6479 = vld [vmem:[%s6430 + $0x180] sm:$0xff]
    %v6480 = vld [vmem:[%s6430 + $0x188] sm:$0xff]
    %v6481 = vld [vmem:[%s6430 + $0x190] sm:$0xff]
    %v6482 = vld [vmem:[%s6430 + $0x198] sm:$0xff]
    %v6483 = vld [vmem:[%s6430 + $0x1a0] sm:$0xff]
    %v6484 = vld [vmem:[%s6430 + $0x1a8] sm:$0xff]
    %v6485 = vld [vmem:[%s6430 + $0x1b0] sm:$0xff]
    %v6486 = vld [vmem:[%s6430 + $0x1b8] sm:$0xff]
    %v6487 = vld [vmem:[%s6430 + $0x1c0] sm:$0xff]
    %v6488 = vld [vmem:[%s6430 + $0x1c8] sm:$0xff]
    %v6489 = vld [vmem:[%s6430 + $0x1d0] sm:$0xff]
    %v6490 = vld [vmem:[%s6430 + $0x1d8] sm:$0xff]
    %v6491 = vld [vmem:[%s6430 + $0x1e0] sm:$0xff]
    %v6492 = vld [vmem:[%s6430 + $0x1e8] sm:$0xff]
    %v6493 = vld [vmem:[%s6430 + $0x1f0] sm:$0xff]
    %v6494 = vld [vmem:[%s6430 + $0x1f8] sm:$0xff]
    %s6495 = scalar_lea.vmem %s15, 6
    %v6496 = vld [vmem:[%s6495] sm:$0x3]
    %v6498 = vlaneseq
    %v6499 = vshrl.u32 %v6498, 7
    %v6500 = vsub.s32 0, %v6499
    %v6501 = vrot.slane %v6496, %v6500
    %v6502 = vlaneseq
    %v6503 = vshrl.u32 %v6502, 7
    %v6504 = vsub.s32 1, %v6503
    %v6505 = vrot.slane %v6496, %v6504
    %v6572 = vunpack.c.l.b16 %v6431
    %v6573 = vunpack.c.h.b16 %v6431
    %v6574 = vunpack.c.l.b16 %v6432
    %v6575 = vunpack.c.h.b16 %v6432
    %v6576 = vunpack.c.l.b16 %v6433
    %v6577 = vunpack.c.h.b16 %v6433
    %v6578 = vunpack.c.l.b16 %v6434
    %v6579 = vunpack.c.h.b16 %v6434
    %v6580 = vunpack.c.l.b16 %v6435
    %v6581 = vunpack.c.h.b16 %v6435
    %v6582 = vunpack.c.l.b16 %v6436
    %v6583 = vunpack.c.h.b16 %v6436
    %v6584 = vunpack.c.l.b16 %v6437
    %v6585 = vunpack.c.h.b16 %v6437
    %v6586 = vunpack.c.l.b16 %v6438
    %v6587 = vunpack.c.h.b16 %v6438
    %v6588 = vunpack.c.l.b16 %v6439
    %v6589 = vunpack.c.h.b16 %v6439
    %v6590 = vunpack.c.l.b16 %v6440
    %v6591 = vunpack.c.h.b16 %v6440
    %v6592 = vunpack.c.l.b16 %v6441
    %v6593 = vunpack.c.h.b16 %v6441
    %v6594 = vunpack.c.l.b16 %v6442
    %v6595 = vunpack.c.h.b16 %v6442
    %v6596 = vunpack.c.l.b16 %v6443
    %v6597 = vunpack.c.h.b16 %v6443
    %v6598 = vunpack.c.l.b16 %v6444
    %v6599 = vunpack.c.h.b16 %v6444
    %v6600 = vunpack.c.l.b16 %v6445
    %v6601 = vunpack.c.h.b16 %v6445
    %v6602 = vunpack.c.l.b16 %v6446
    %v6603 = vunpack.c.h.b16 %v6446
    %v6604 = vunpack.c.l.b16 %v6447
    %v6605 = vunpack.c.h.b16 %v6447
    %v6606 = vunpack.c.l.b16 %v6448
    %v6607 = vunpack.c.h.b16 %v6448
    %v6608 = vunpack.c.l.b16 %v6449
    %v6609 = vunpack.c.h.b16 %v6449
    %v6610 = vunpack.c.l.b16 %v6450
    %v6611 = vunpack.c.h.b16 %v6450
    %v6612 = vunpack.c.l.b16 %v6451
    %v6613 = vunpack.c.h.b16 %v6451
    %v6614 = vunpack.c.l.b16 %v6452
    %v6615 = vunpack.c.h.b16 %v6452
    %v6616 = vunpack.c.l.b16 %v6453
    %v6617 = vunpack.c.h.b16 %v6453
    %v6618 = vunpack.c.l.b16 %v6454
    %v6619 = vunpack.c.h.b16 %v6454
    %v6620 = vunpack.c.l.b16 %v6455
    %v6621 = vunpack.c.h.b16 %v6455
    %v6622 = vunpack.c.l.b16 %v6456
    %v6623 = vunpack.c.h.b16 %v6456
    %v6624 = vunpack.c.l.b16 %v6457
    %v6625 = vunpack.c.h.b16 %v6457
    %v6626 = vunpack.c.l.b16 %v6458
    %v6627 = vunpack.c.h.b16 %v6458
    %v6628 = vunpack.c.l.b16 %v6459
    %v6629 = vunpack.c.h.b16 %v6459
    %v6630 = vunpack.c.l.b16 %v6460
    %v6631 = vunpack.c.h.b16 %v6460
    %v6632 = vunpack.c.l.b16 %v6461
    %v6633 = vunpack.c.h.b16 %v6461
    %v6634 = vunpack.c.l.b16 %v6462
    %v6635 = vunpack.c.h.b16 %v6462
    %v6636 = vunpack.c.l.b16 %v6463
    %v6637 = vunpack.c.h.b16 %v6463
    %v6638 = vunpack.c.l.b16 %v6464
    %v6639 = vunpack.c.h.b16 %v6464
    %v6640 = vunpack.c.l.b16 %v6465
    %v6641 = vunpack.c.h.b16 %v6465
    %v6642 = vunpack.c.l.b16 %v6466
    %v6643 = vunpack.c.h.b16 %v6466
    %v6644 = vunpack.c.l.b16 %v6467
    %v6645 = vunpack.c.h.b16 %v6467
    %v6646 = vunpack.c.l.b16 %v6468
    %v6647 = vunpack.c.h.b16 %v6468
    %v6648 = vunpack.c.l.b16 %v6469
    %v6649 = vunpack.c.h.b16 %v6469
    %v6650 = vunpack.c.l.b16 %v6470
    %v6651 = vunpack.c.h.b16 %v6470
    %v6652 = vunpack.c.l.b16 %v6471
    %v6653 = vunpack.c.h.b16 %v6471
    %v6654 = vunpack.c.l.b16 %v6472
    %v6655 = vunpack.c.h.b16 %v6472
    %v6656 = vunpack.c.l.b16 %v6473
    %v6657 = vunpack.c.h.b16 %v6473
    %v6658 = vunpack.c.l.b16 %v6474
    %v6659 = vunpack.c.h.b16 %v6474
    %v6660 = vunpack.c.l.b16 %v6475
    %v6661 = vunpack.c.h.b16 %v6475
    %v6662 = vunpack.c.l.b16 %v6476
    %v6663 = vunpack.c.h.b16 %v6476
    %v6664 = vunpack.c.l.b16 %v6477
    %v6665 = vunpack.c.h.b16 %v6477
    %v6666 = vunpack.c.l.b16 %v6478
    %v6667 = vunpack.c.h.b16 %v6478
    %v6668 = vunpack.c.l.b16 %v6479
    %v6669 = vunpack.c.h.b16 %v6479
    %v6670 = vunpack.c.l.b16 %v6480
    %v6671 = vunpack.c.h.b16 %v6480
    %v6672 = vunpack.c.l.b16 %v6481
    %v6673 = vunpack.c.h.b16 %v6481
    %v6674 = vunpack.c.l.b16 %v6482
    %v6675 = vunpack.c.h.b16 %v6482
    %v6676 = vunpack.c.l.b16 %v6483
    %v6677 = vunpack.c.h.b16 %v6483
    %v6678 = vunpack.c.l.b16 %v6484
    %v6679 = vunpack.c.h.b16 %v6484
    %v6680 = vunpack.c.l.b16 %v6485
    %v6681 = vunpack.c.h.b16 %v6485
    %v6682 = vunpack.c.l.b16 %v6486
    %v6683 = vunpack.c.h.b16 %v6486
    %v6684 = vunpack.c.l.b16 %v6487
    %v6685 = vunpack.c.h.b16 %v6487
    %v6686 = vunpack.c.l.b16 %v6488
    %v6687 = vunpack.c.h.b16 %v6488
    %v6688 = vunpack.c.l.b16 %v6489
    %v6689 = vunpack.c.h.b16 %v6489
    %v6690 = vunpack.c.l.b16 %v6490
    %v6691 = vunpack.c.h.b16 %v6490
    %v6692 = vunpack.c.l.b16 %v6491
    %v6693 = vunpack.c.h.b16 %v6491
    %v6694 = vunpack.c.l.b16 %v6492
    %v6695 = vunpack.c.h.b16 %v6492
    %v6696 = vunpack.c.l.b16 %v6493
    %v6697 = vunpack.c.h.b16 %v6493
    %v6698 = vunpack.c.l.b16 %v6494
    %v6699 = vunpack.c.h.b16 %v6494
    %v6700 = vpack.c.b16 %v6574, %v6572
    %v6701 = vpack.c.b16 %v6575, %v6573
    %v6702 = vpack.c.b16 %v6578, %v6576
    %v6703 = vpack.c.b16 %v6579, %v6577
    %v6704 = vpack.c.b16 %v6582, %v6580
    %v6705 = vpack.c.b16 %v6583, %v6581
    %v6706 = vpack.c.b16 %v6586, %v6584
    %v6707 = vpack.c.b16 %v6587, %v6585
    %v6708 = vpack.c.b16 %v6590, %v6588
    %v6709 = vpack.c.b16 %v6591, %v6589
    %v6710 = vpack.c.b16 %v6594, %v6592
    %v6711 = vpack.c.b16 %v6595, %v6593
    %v6712 = vpack.c.b16 %v6598, %v6596
    %v6713 = vpack.c.b16 %v6599, %v6597
    %v6714 = vpack.c.b16 %v6602, %v6600
    %v6715 = vpack.c.b16 %v6603, %v6601
    %v6716 = vpack.c.b16 %v6606, %v6604
    %v6717 = vpack.c.b16 %v6607, %v6605
    %v6718 = vpack.c.b16 %v6610, %v6608
    %v6719 = vpack.c.b16 %v6611, %v6609
    %v6720 = vpack.c.b16 %v6614, %v6612
    %v6721 = vpack.c.b16 %v6615, %v6613
    %v6722 = vpack.c.b16 %v6618, %v6616
    %v6723 = vpack.c.b16 %v6619, %v6617
    %v6724 = vpack.c.b16 %v6622, %v6620
    %v6725 = vpack.c.b16 %v6623, %v6621
    %v6726 = vpack.c.b16 %v6626, %v6624
    %v6727 = vpack.c.b16 %v6627, %v6625
    %v6728 = vpack.c.b16 %v6630, %v6628
    %v6729 = vpack.c.b16 %v6631, %v6629
    %v6730 = vpack.c.b16 %v6634, %v6632
    %v6731 = vpack.c.b16 %v6635, %v6633
    %v6732 = vpack.c.b16 %v6638, %v6636
    %v6733 = vpack.c.b16 %v6639, %v6637
    %v6734 = vpack.c.b16 %v6642, %v6640
    %v6735 = vpack.c.b16 %v6643, %v6641
    %v6736 = vpack.c.b16 %v6646, %v6644
    %v6737 = vpack.c.b16 %v6647, %v6645
    %v6738 = vpack.c.b16 %v6650, %v6648
    %v6739 = vpack.c.b16 %v6651, %v6649
    %v6740 = vpack.c.b16 %v6654, %v6652
    %v6741 = vpack.c.b16 %v6655, %v6653
    %v6742 = vpack.c.b16 %v6658, %v6656
    %v6743 = vpack.c.b16 %v6659, %v6657
    %v6744 = vpack.c.b16 %v6662, %v6660
    %v6745 = vpack.c.b16 %v6663, %v6661
    %v6746 = vpack.c.b16 %v6666, %v6664
    %v6747 = vpack.c.b16 %v6667, %v6665
    %v6748 = vpack.c.b16 %v6670, %v6668
    %v6749 = vpack.c.b16 %v6671, %v6669
    %v6750 = vpack.c.b16 %v6674, %v6672
    %v6751 = vpack.c.b16 %v6675, %v6673
    %v6752 = vpack.c.b16 %v6678, %v6676
    %v6753 = vpack.c.b16 %v6679, %v6677
    %v6754 = vpack.c.b16 %v6682, %v6680
    %v6755 = vpack.c.b16 %v6683, %v6681
    %v6756 = vpack.c.b16 %v6686, %v6684
    %v6757 = vpack.c.b16 %v6687, %v6685
    %v6758 = vpack.c.b16 %v6690, %v6688
    %v6759 = vpack.c.b16 %v6691, %v6689
    %v6760 = vpack.c.b16 %v6694, %v6692
    %v6761 = vpack.c.b16 %v6695, %v6693
    %v6762 = vpack.c.b16 %v6698, %v6696
    %v6763 = vpack.c.b16 %v6699, %v6697
    %6828 = vmatprep.subr.bf16.mxu0 %v6701
    %6829 = vmatpush1.bf16.msra.mxu0 %v6700
    %6830 = vmatprep.subr.bf16.mxu0 %v6703
    %6831 = vmatpush1.bf16.msra.mxu0 %v6702
    %6832 = vmatprep.subr.bf16.mxu0 %v6705
    %6833 = vmatpush1.bf16.msra.mxu0 %v6704
    %6834 = vmatprep.subr.bf16.mxu0 %v6707
    %6835 = vmatpush1.bf16.msra.mxu0 %v6706
    %6836 = vmatprep.subr.bf16.mxu0 %v6709
    %6837 = vmatpush1.bf16.msra.mxu0 %v6708
    %6838 = vmatprep.subr.bf16.mxu0 %v6711
    %6839 = vmatpush1.bf16.msra.mxu0 %v6710
    %6840 = vmatprep.subr.bf16.mxu0 %v6713
    %6841 = vmatpush1.bf16.msra.mxu0 %v6712
    %6842 = vmatprep.subr.bf16.mxu0 %v6715
    %6843 = vmatpush1.bf16.msra.mxu0 %v6714
    %6844 = vmatprep.subr.bf16.mxu0 %v6717
    %6845 = vmatpush1.bf16.msra.mxu0 %v6716
    %6846 = vmatprep.subr.bf16.mxu0 %v6719
    %6847 = vmatpush1.bf16.msra.mxu0 %v6718
    %6848 = vmatprep.subr.bf16.mxu0 %v6721
    %6849 = vmatpush1.bf16.msra.mxu0 %v6720
    %6850 = vmatprep.subr.bf16.mxu0 %v6723
    %6851 = vmatpush1.bf16.msra.mxu0 %v6722
    %6852 = vmatprep.subr.bf16.mxu0 %v6725
    %6853 = vmatpush1.bf16.msra.mxu0 %v6724
    %6854 = vmatprep.subr.bf16.mxu0 %v6727
    %6855 = vmatpush1.bf16.msra.mxu0 %v6726
    %6856 = vmatprep.subr.bf16.mxu0 %v6729
    %6857 = vmatpush1.bf16.msra.mxu0 %v6728
    %6858 = vmatprep.subr.bf16.mxu0 %v6731
    %6859 = vmatpush1.bf16.msra.mxu0 %v6730
    %6860 = vmatprep.mubr.bf16.mxu0 %v4824
    %6861 = vmatmul.mubr.bf16.gmra.mrb[0].mxu0 %v4823
    %v6862 = vpop.f32.mrb[0].mxu0
    %v6863 = vadd.f32 %v6501, %v6862
    %v6864 = vpop.f32.mrb[0].mxu0
    %v6865 = vadd.f32 %v6505, %v6864
    %v6866 = vpop.f32.mrb[0].mxu0
    %v6867 = vpop.f32.mrb[0].mxu0
    %6868 = vdwg.mxu0
    %6869 = vmatprep.subr.bf16.mxu0 %v6733
    %6870 = vmatpush1.bf16.msra.mxu0 %v6732
    %6871 = vmatprep.subr.bf16.mxu0 %v6735
    %6872 = vmatpush1.bf16.msra.mxu0 %v6734
    %6873 = vmatprep.subr.bf16.mxu0 %v6737
    %6874 = vmatpush1.bf16.msra.mxu0 %v6736
    %6875 = vmatprep.subr.bf16.mxu0 %v6739
    %6876 = vmatpush1.bf16.msra.mxu0 %v6738
    %6877 = vmatprep.subr.bf16.mxu0 %v6741
    %6878 = vmatpush1.bf16.msra.mxu0 %v6740
    %6879 = vmatprep.subr.bf16.mxu0 %v6743
    %6880 = vmatpush1.bf16.msra.mxu0 %v6742
    %6881 = vmatprep.subr.bf16.mxu0 %v6745
    %6882 = vmatpush1.bf16.msra.mxu0 %v6744
    %6883 = vmatprep.subr.bf16.mxu0 %v6747
    %6884 = vmatpush1.bf16.msra.mxu0 %v6746
    %6885 = vmatprep.subr.bf16.mxu0 %v6749
    %6886 = vmatpush1.bf16.msra.mxu0 %v6748
    %6887 = vmatprep.subr.bf16.mxu0 %v6751
    %6888 = vmatpush1.bf16.msra.mxu0 %v6750
    %6889 = vmatprep.subr.bf16.mxu0 %v6753
    %6890 = vmatpush1.bf16.msra.mxu0 %v6752
    %6891 = vmatprep.subr.bf16.mxu0 %v6755
    %6892 = vmatpush1.bf16.msra.mxu0 %v6754
    %6893 = vmatprep.subr.bf16.mxu0 %v6757
    %6894 = vmatpush1.bf16.msra.mxu0 %v6756
    %6895 = vmatprep.subr.bf16.mxu0 %v6759
    %6896 = vmatpush1.bf16.msra.mxu0 %v6758
    %6897 = vmatprep.subr.bf16.mxu0 %v6761
    %6898 = vmatpush1.bf16.msra.mxu0 %v6760
    %6899 = vmatprep.subr.bf16.mxu0 %v6763
    %6900 = vmatpush1.bf16.msra.mxu0 %v6762
    %6901 = vmatprep.mubr.bf16.mxu0 %v4826
    %6902 = vmatmul.mubr.bf16.gmra.mrb[0].mxu0 %v4825
    %v6903 = vpop.f32.mrb[0].mxu0
    %v6904 = vadd.f32 %v6863, %v6903
    %v6905 = vpop.f32.mrb[0].mxu0
    %v6906 = vadd.f32 %v6865, %v6905
    %v6907 = vpop.f32.mrb[0].mxu0
    %v6908 = vpop.f32.mrb[0].mxu0
    %6909 = vdwg.mxu0
    %s6910 = scalar_lea.vmem %s14, 12
    %v6911 = vld [vmem:[%s6910] sm:$0xf]
    %v6912 = vpack.c.bf16 %v6904, %v6904
    %v6913 = vpack.c.bf16 %v6906, %v6906
    %v6915 = vsel %vm5792, %v6911, 0
    %v6918 = vsel %vm5796, %v6912, 0
    %v6921 = vsel %vm5796, %v6913, 0
    %6923 = vmatprep.subr.bf16.mxu0 %v6921
    %6924 = vmatpush1.bf16.msra.mxu0 %v6918
    %6925 = vmatprep.subr.bf16.mxu0 0
    %6926 = vmatpush1.bf16.msra.mxu0 0
    %6927 = vmatprep.subr.bf16.mxu0 0
    %6928 = vmatpush1.bf16.msra.mxu0 0
    %6929 = vmatprep.subr.bf16.mxu0 0
    %6930 = vmatpush1.bf16.msra.mxu0 0
    %6931 = vmatprep.subr.bf16.mxu0 0
    %6932 = vmatpush1.bf16.msra.mxu0 0
    %6933 = vmatprep.subr.bf16.mxu0 0
    %6934 = vmatpush1.bf16.msra.mxu0 0
    %6935 = vmatprep.subr.bf16.mxu0 0
    %6936 = vmatpush1.bf16.msra.mxu0 0
    %6937 = vmatprep.subr.bf16.mxu0 0
    %6938 = vmatpush1.bf16.msra.mxu0 0
    %6939 = vmatprep.subr.bf16.mxu0 0
    %6940 = vmatpush1.bf16.msra.mxu0 0
    %6941 = vmatprep.subr.bf16.mxu0 0
    %6942 = vmatpush1.bf16.msra.mxu0 0
    %6943 = vmatprep.subr.bf16.mxu0 0
    %6944 = vmatpush1.bf16.msra.mxu0 0
    %6945 = vmatprep.subr.bf16.mxu0 0
    %6946 = vmatpush1.bf16.msra.mxu0 0
    %6947 = vmatprep.subr.bf16.mxu0 0
    %6948 = vmatpush1.bf16.msra.mxu0 0
    %6949 = vmatprep.subr.bf16.mxu0 0
    %6950 = vmatpush1.bf16.msra.mxu0 0
    %6951 = vmatprep.subr.bf16.mxu0 0
    %6952 = vmatpush1.bf16.msra.mxu0 0
    %6953 = vmatprep.subr.bf16.mxu0 0
    %6954 = vmatpush1.bf16.msra.mxu0 0
    %6955 = vmatprep.mubr.bf16.mxu0 0
    %6956 = vmatmul.mubr.bf16.gmra.mrb[0].mxu0 %v6915
    %v6957 = vpop.f32.mrb[0].mxu0
    %v6958 = vadd.f32 0.0, %v6957
    %v6959 = vpop.f32.mrb[0].mxu0
    %v6960 = vadd.f32 0.0, %v6959
    %v6961 = vpop.f32.mrb[0].mxu0
    %v6962 = vpop.f32.mrb[0].mxu0
    %6963 = vdwg.mxu0
    %v6964 = vadd.f32 %v6428, %v6958
    %v6965 = vadd.f32 %v6429, %v6960
    %v6966 = vpack.c.bf16 %v6964, %v6964
    %v6967 = vpack.c.bf16 %v6965, %v6965
    %v6968 = vld [vmem:[%s17] sm:$0xf]
    %v6969 = vld [vmem:[%s17 + $0x4] sm:$0xf]
    %v6972 = vunpack.c.l.b16 %v6968
    %v6973 = vunpack.c.l.b16 %v6969
    %v6974 = vpack.c.b16 %v6973, %v6972
    %v6976 = vsel %vm3073, %v6974, 0
    %v6979 = vsel %vm3077, %v6966, 0
    %v6982 = vsel %vm3077, %v6967, 0
    %6984 = vmatprep.subr.bf16.mxu0 %v6982
    %6985 = vmatpush1.bf16.msra.mxu0 %v6979
    %6986 = vmatprep.subr.bf16.mxu0 0
    %6987 = vmatpush1.bf16.msra.mxu0 0
    %6988 = vmatprep.subr.bf16.mxu0 0
    %6989 = vmatpush1.bf16.msra.mxu0 0
    %6990 = vmatprep.subr.bf16.mxu0 0
    %6991 = vmatpush1.bf16.msra.mxu0 0
    %6992 = vmatprep.subr.bf16.mxu0 0
    %6993 = vmatpush1.bf16.msra.mxu0 0
    %6994 = vmatprep.subr.bf16.mxu0 0
    %6995 = vmatpush1.bf16.msra.mxu0 0
    %6996 = vmatprep.subr.bf16.mxu0 0
    %6997 = vmatpush1.bf16.msra.mxu0 0
    %6998 = vmatprep.subr.bf16.mxu0 0
    %6999 = vmatpush1.bf16.msra.mxu0 0
    %7000 = vmatprep.subr.bf16.mxu0 0
    %7001 = vmatpush1.bf16.msra.mxu0 0
    %7002 = vmatprep.subr.bf16.mxu0 0
    %7003 = vmatpush1.bf16.msra.mxu0 0
    %7004 = vmatprep.subr.bf16.mxu0 0
    %7005 = vmatpush1.bf16.msra.mxu0 0
    %7006 = vmatprep.subr.bf16.mxu0 0
    %7007 = vmatpush1.bf16.msra.mxu0 0
    %7008 = vmatprep.subr.bf16.mxu0 0
    %7009 = vmatpush1.bf16.msra.mxu0 0
    %7010 = vmatprep.subr.bf16.mxu0 0
    %7011 = vmatpush1.bf16.msra.mxu0 0
    %7012 = vmatprep.subr.bf16.mxu0 0
    %7013 = vmatpush1.bf16.msra.mxu0 0
    %7014 = vmatprep.subr.bf16.mxu0 0
    %7015 = vmatpush1.bf16.msra.mxu0 0
    %7016 = vmatprep.mubr.bf16.mxu0 0
    %7017 = vmatmul.mubr.bf16.gmra.mrb[0].mxu0 %v6976
    %v7018 = vpop.f32.mrb[0].mxu0
    %v7019 = vadd.f32 0.0, %v7018
    %v7020 = vpop.f32.mrb[0].mxu0
    %v7021 = vadd.f32 0.0, %v7020
    %v7022 = vpop.f32.mrb[0].mxu0
    %v7023 = vadd.f32 0.0, %v7022
    %v7024 = vpop.f32.mrb[0].mxu0
    %v7025 = vadd.f32 0.0, %v7024
    %7026 = vdwg.mxu0
    %v7027 = vpack.c.bf16 %v7023, %v7019
    %v7028 = vpack.c.bf16 %v7025, %v7021
    %v7029 = vld [vmem:[%s16] sm:$0xff]
    %v7030 = vld [vmem:[%s16 + $0x8] sm:$0xff]
    %v7031 = vld [vmem:[%s16 + $0x10] sm:$0xff]
    %v7032 = vld [vmem:[%s16 + $0x18] sm:$0xff]
    %v7033 = vld [vmem:[%s16 + $0x20] sm:$0xff]
    %v7034 = vld [vmem:[%s16 + $0x28] sm:$0xff]
    %v7035 = vld [vmem:[%s16 + $0x30] sm:$0xff]
    %v7036 = vld [vmem:[%s16 + $0x38] sm:$0xff]
    %v7037 = vld [vmem:[%s16 + $0x40] sm:$0xff]
    %v7038 = vld [vmem:[%s16 + $0x48] sm:$0xff]
    %v7039 = vld [vmem:[%s16 + $0x50] sm:$0xff]
    %v7040 = vld [vmem:[%s16 + $0x58] sm:$0xff]
    %v7041 = vld [vmem:[%s16 + $0x60] sm:$0xff]
    %v7042 = vld [vmem:[%s16 + $0x68] sm:$0xff]
    %v7043 = vld [vmem:[%s16 + $0x70] sm:$0xff]
    %v7044 = vld [vmem:[%s16 + $0x78] sm:$0xff]
    %v7045 = vld [vmem:[%s16 + $0x80] sm:$0xff]
    %v7046 = vld [vmem:[%s16 + $0x88] sm:$0xff]
    %v7047 = vld [vmem:[%s16 + $0x90] sm:$0xff]
    %v7048 = vld [vmem:[%s16 + $0x98] sm:$0xff]
    %v7049 = vld [vmem:[%s16 + $0xa0] sm:$0xff]
    %v7050 = vld [vmem:[%s16 + $0xa8] sm:$0xff]
    %v7051 = vld [vmem:[%s16 + $0xb0] sm:$0xff]
    %v7052 = vld [vmem:[%s16 + $0xb8] sm:$0xff]
    %s7053 = scalar_lea.vmem %s17, 8
    %v7054 = vld [vmem:[%s7053] sm:$0xf]
    %v7055 = vld [vmem:[%s7053 + $0x4] sm:$0xf]
    %v7058 = vunpack.c.l.b16 %v7054
    %v7059 = vunpack.c.l.b16 %v7055
    %v7060 = vpack.c.b16 %v7059, %v7058
    %v7062 = vsel %vm3073, %v7060, 0
    %7064 = vmatprep.subr.bf16.mxu0 %v6982
    %7065 = vmatpush1.bf16.msra.mxu0 %v6979
    %7066 = vmatprep.subr.bf16.mxu0 0
    %7067 = vmatpush1.bf16.msra.mxu0 0
    %7068 = vmatprep.subr.bf16.mxu0 0
    %7069 = vmatpush1.bf16.msra.mxu0 0
    %7070 = vmatprep.subr.bf16.mxu0 0
    %7071 = vmatpush1.bf16.msra.mxu0 0
    %7072 = vmatprep.subr.bf16.mxu0 0
    %7073 = vmatpush1.bf16.msra.mxu0 0
    %7074 = vmatprep.subr.bf16.mxu0 0
    %7075 = vmatpush1.bf16.msra.mxu0 0
    %7076 = vmatprep.subr.bf16.mxu0 0
    %7077 = vmatpush1.bf16.msra.mxu0 0
    %7078 = vmatprep.subr.bf16.mxu0 0
    %7079 = vmatpush1.bf16.msra.mxu0 0
    %7080 = vmatprep.subr.bf16.mxu0 0
    %7081 = vmatpush1.bf16.msra.mxu0 0
    %7082 = vmatprep.subr.bf16.mxu0 0
    %7083 = vmatpush1.bf16.msra.mxu0 0
    %7084 = vmatprep.subr.bf16.mxu0 0
    %7085 = vmatpush1.bf16.msra.mxu0 0
    %7086 = vmatprep.subr.bf16.mxu0 0
    %7087 = vmatpush1.bf16.msra.mxu0 0
    %7088 = vmatprep.subr.bf16.mxu0 0
    %7089 = vmatpush1.bf16.msra.mxu0 0
    %7090 = vmatprep.subr.bf16.mxu0 0
    %7091 = vmatpush1.bf16.msra.mxu0 0
    %7092 = vmatprep.subr.bf16.mxu0 0
    %7093 = vmatpush1.bf16.msra.mxu0 0
    %7094 = vmatprep.subr.bf16.mxu0 0
    %7095 = vmatpush1.bf16.msra.mxu0 0
    %7096 = vmatprep.mubr.bf16.mxu0 0
    %7097 = vmatmul.mubr.bf16.gmra.mrb[0].mxu0 %v7062
    %v7098 = vpop.f32.mrb[0].mxu0
    %v7099 = vadd.f32 0.0, %v7098
    %v7100 = vpop.f32.mrb[0].mxu0
    %v7101 = vadd.f32 0.0, %v7100
    %v7102 = vpop.f32.mrb[0].mxu0
    %v7103 = vadd.f32 0.0, %v7102
    %v7104 = vpop.f32.mrb[0].mxu0
    %v7105 = vadd.f32 0.0, %v7104
    %7106 = vdwg.mxu0
    %v7107 = vpack.c.bf16 %v7103, %v7099
    %v7108 = vpack.c.bf16 %v7105, %v7101
    %s7109 = scalar_lea.vmem %s16, 192
    %v7110 = vld [vmem:[%s7109] sm:$0xff]
    %v7111 = vld [vmem:[%s7109 + $0x8] sm:$0xff]
    %v7112 = vld [vmem:[%s7109 + $0x10] sm:$0xff]
    %v7113 = vld [vmem:[%s7109 + $0x18] sm:$0xff]
    %v7114 = vld [vmem:[%s7109 + $0x20] sm:$0xff]
    %v7115 = vld [vmem:[%s7109 + $0x28] sm:$0xff]
    %v7116 = vld [vmem:[%s7109 + $0x30] sm:$0xff]
    %v7117 = vld [vmem:[%s7109 + $0x38] sm:$0xff]
    %v7118 = vld [vmem:[%s7109 + $0x40] sm:$0xff]
    %v7119 = vld [vmem:[%s7109 + $0x48] sm:$0xff]
    %v7120 = vld [vmem:[%s7109 + $0x50] sm:$0xff]
    %v7121 = vld [vmem:[%s7109 + $0x58] sm:$0xff]
    %v7122 = vld [vmem:[%s7109 + $0x60] sm:$0xff]
    %v7123 = vld [vmem:[%s7109 + $0x68] sm:$0xff]
    %v7124 = vld [vmem:[%s7109 + $0x70] sm:$0xff]
    %v7125 = vld [vmem:[%s7109 + $0x78] sm:$0xff]
    %v7126 = vld [vmem:[%s7109 + $0x80] sm:$0xff]
    %v7127 = vld [vmem:[%s7109 + $0x88] sm:$0xff]
    %v7128 = vld [vmem:[%s7109 + $0x90] sm:$0xff]
    %v7129 = vld [vmem:[%s7109 + $0x98] sm:$0xff]
    %v7130 = vld [vmem:[%s7109 + $0xa0] sm:$0xff]
    %v7131 = vld [vmem:[%s7109 + $0xa8] sm:$0xff]
    %v7132 = vld [vmem:[%s7109 + $0xb0] sm:$0xff]
    %v7133 = vld [vmem:[%s7109 + $0xb8] sm:$0xff]
    %v7158 = vunpack.c.l.b16 %v7110
    %v7159 = vunpack.c.h.b16 %v7110
    %v7160 = vunpack.c.l.b16 %v7111
    %v7161 = vunpack.c.h.b16 %v7111
    %v7162 = vunpack.c.l.b16 %v7112
    %v7163 = vunpack.c.h.b16 %v7112
    %v7164 = vunpack.c.l.b16 %v7113
    %v7165 = vunpack.c.h.b16 %v7113
    %v7166 = vunpack.c.l.b16 %v7114
    %v7167 = vunpack.c.h.b16 %v7114
    %v7168 = vunpack.c.l.b16 %v7115
    %v7169 = vunpack.c.h.b16 %v7115
    %v7170 = vunpack.c.l.b16 %v7116
    %v7171 = vunpack.c.h.b16 %v7116
    %v7172 = vunpack.c.l.b16 %v7117
    %v7173 = vunpack.c.h.b16 %v7117
    %v7174 = vunpack.c.l.b16 %v7118
    %v7175 = vunpack.c.h.b16 %v7118
    %v7176 = vunpack.c.l.b16 %v7119
    %v7177 = vunpack.c.h.b16 %v7119
    %v7178 = vunpack.c.l.b16 %v7120
    %v7179 = vunpack.c.h.b16 %v7120
    %v7180 = vunpack.c.l.b16 %v7121
    %v7181 = vunpack.c.h.b16 %v7121
    %v7182 = vunpack.c.l.b16 %v7122
    %v7183 = vunpack.c.h.b16 %v7122
    %v7184 = vunpack.c.l.b16 %v7123
    %v7185 = vunpack.c.h.b16 %v7123
    %v7186 = vunpack.c.l.b16 %v7124
    %v7187 = vunpack.c.h.b16 %v7124
    %v7188 = vunpack.c.l.b16 %v7125
    %v7189 = vunpack.c.h.b16 %v7125
    %v7190 = vunpack.c.l.b16 %v7126
    %v7191 = vunpack.c.h.b16 %v7126
    %v7192 = vunpack.c.l.b16 %v7127
    %v7193 = vunpack.c.h.b16 %v7127
    %v7194 = vunpack.c.l.b16 %v7128
    %v7195 = vunpack.c.h.b16 %v7128
    %v7196 = vunpack.c.l.b16 %v7129
    %v7197 = vunpack.c.h.b16 %v7129
    %v7198 = vunpack.c.l.b16 %v7130
    %v7199 = vunpack.c.h.b16 %v7130
    %v7200 = vunpack.c.l.b16 %v7131
    %v7201 = vunpack.c.h.b16 %v7131
    %v7202 = vunpack.c.l.b16 %v7132
    %v7203 = vunpack.c.h.b16 %v7132
    %v7204 = vunpack.c.l.b16 %v7133
    %v7205 = vunpack.c.h.b16 %v7133
    %v7206 = vpack.c.b16 %v7160, %v7158
    %v7207 = vpack.c.b16 %v7161, %v7159
    %v7208 = vpack.c.b16 %v7164, %v7162
    %v7209 = vpack.c.b16 %v7165, %v7163
    %v7210 = vpack.c.b16 %v7168, %v7166
    %v7211 = vpack.c.b16 %v7169, %v7167
    %v7212 = vpack.c.b16 %v7172, %v7170
    %v7213 = vpack.c.b16 %v7173, %v7171
    %v7214 = vpack.c.b16 %v7176, %v7174
    %v7215 = vpack.c.b16 %v7177, %v7175
    %v7216 = vpack.c.b16 %v7180, %v7178
    %v7217 = vpack.c.b16 %v7181, %v7179
    %v7218 = vpack.c.b16 %v7184, %v7182
    %v7219 = vpack.c.b16 %v7185, %v7183
    %v7220 = vpack.c.b16 %v7188, %v7186
    %v7221 = vpack.c.b16 %v7189, %v7187
    %v7222 = vpack.c.b16 %v7192, %v7190
    %v7223 = vpack.c.b16 %v7193, %v7191
    %v7224 = vpack.c.b16 %v7196, %v7194
    %v7225 = vpack.c.b16 %v7197, %v7195
    %v7226 = vpack.c.b16 %v7200, %v7198
    %v7227 = vpack.c.b16 %v7201, %v7199
    %v7228 = vpack.c.b16 %v7204, %v7202
    %v7229 = vpack.c.b16 %v7205, %v7203
    %v7255 = vsel %vm236, %v7108, 0
    %7257 = vmatprep.subr.bf16.mxu0 %v7207
    %7258 = vmatpush1.bf16.msra.mxu0 %v7206
    %7259 = vmatprep.subr.bf16.mxu0 %v7209
    %7260 = vmatpush1.bf16.msra.mxu0 %v7208
    %7261 = vmatprep.subr.bf16.mxu0 %v7211
    %7262 = vmatpush1.bf16.msra.mxu0 %v7210
    %7263 = vmatprep.subr.bf16.mxu0 %v7213
    %7264 = vmatpush1.bf16.msra.mxu0 %v7212
    %7265 = vmatprep.subr.bf16.mxu0 %v7215
    %7266 = vmatpush1.bf16.msra.mxu0 %v7214
    %7267 = vmatprep.subr.bf16.mxu0 %v7217
    %7268 = vmatpush1.bf16.msra.mxu0 %v7216
    %7269 = vmatprep.subr.bf16.mxu0 %v7219
    %7270 = vmatpush1.bf16.msra.mxu0 %v7218
    %7271 = vmatprep.subr.bf16.mxu0 %v7221
    %7272 = vmatpush1.bf16.msra.mxu0 %v7220
    %7273 = vmatprep.subr.bf16.mxu0 %v7223
    %7274 = vmatpush1.bf16.msra.mxu0 %v7222
    %7275 = vmatprep.subr.bf16.mxu0 %v7225
    %7276 = vmatpush1.bf16.msra.mxu0 %v7224
    %7277 = vmatprep.subr.bf16.mxu0 %v7227
    %7278 = vmatpush1.bf16.msra.mxu0 %v7226
    %7279 = vmatprep.subr.bf16.mxu0 %v7229
    %7280 = vmatpush1.bf16.msra.mxu0 %v7228
    %7281 = vmatprep.subr.bf16.mxu0 0
    %7282 = vmatpush1.bf16.msra.mxu0 0
    %7283 = vmatprep.subr.bf16.mxu0 0
    %7284 = vmatpush1.bf16.msra.mxu0 0
    %7285 = vmatprep.subr.bf16.mxu0 0
    %7286 = vmatpush1.bf16.msra.mxu0 0
    %7287 = vmatprep.subr.bf16.mxu0 0
    %7288 = vmatpush1.bf16.msra.mxu0 0
    %7289 = vmatprep.mubr.bf16.mxu0 %v7255
    %7290 = vmatmul.mubr.bf16.gmra.mrb[0].mxu0 %v7107
    %v7291 = vpop.f32.mrb[0].mxu0
    %v7292 = vadd.f32 0.0, %v7291
    %v7293 = vpop.f32.mrb[0].mxu0
    %v7294 = vadd.f32 0.0, %v7293
    %v7295 = vpop.f32.mrb[0].mxu0
    %v7296 = vadd.f32 0.0, %v7295
    %v7297 = vpop.f32.mrb[0].mxu0
    %v7298 = vadd.f32 0.0, %v7297
    %7299 = vdwg.mxu0
    %v7324 = vunpack.c.l.b16 %v7029
    %v7325 = vunpack.c.h.b16 %v7029
    %v7326 = vunpack.c.l.b16 %v7030
    %v7327 = vunpack.c.h.b16 %v7030
    %v7328 = vunpack.c.l.b16 %v7031
    %v7329 = vunpack.c.h.b16 %v7031
    %v7330 = vunpack.c.l.b16 %v7032
    %v7331 = vunpack.c.h.b16 %v7032
    %v7332 = vunpack.c.l.b16 %v7033
    %v7333 = vunpack.c.h.b16 %v7033
    %v7334 = vunpack.c.l.b16 %v7034
    %v7335 = vunpack.c.h.b16 %v7034
    %v7336 = vunpack.c.l.b16 %v7035
    %v7337 = vunpack.c.h.b16 %v7035
    %v7338 = vunpack.c.l.b16 %v7036
    %v7339 = vunpack.c.h.b16 %v7036
    %v7340 = vunpack.c.l.b16 %v7037
    %v7341 = vunpack.c.h.b16 %v7037
    %v7342 = vunpack.c.l.b16 %v7038
    %v7343 = vunpack.c.h.b16 %v7038
    %v7344 = vunpack.c.l.b16 %v7039
    %v7345 = vunpack.c.h.b16 %v7039
    %v7346 = vunpack.c.l.b16 %v7040
    %v7347 = vunpack.c.h.b16 %v7040
    %v7348 = vunpack.c.l.b16 %v7041
    %v7349 = vunpack.c.h.b16 %v7041
    %v7350 = vunpack.c.l.b16 %v7042
    %v7351 = vunpack.c.h.b16 %v7042
    %v7352 = vunpack.c.l.b16 %v7043
    %v7353 = vunpack.c.h.b16 %v7043
    %v7354 = vunpack.c.l.b16 %v7044
    %v7355 = vunpack.c.h.b16 %v7044
    %v7356 = vunpack.c.l.b16 %v7045
    %v7357 = vunpack.c.h.b16 %v7045
    %v7358 = vunpack.c.l.b16 %v7046
    %v7359 = vunpack.c.h.b16 %v7046
    %v7360 = vunpack.c.l.b16 %v7047
    %v7361 = vunpack.c.h.b16 %v7047
    %v7362 = vunpack.c.l.b16 %v7048
    %v7363 = vunpack.c.h.b16 %v7048
    %v7364 = vunpack.c.l.b16 %v7049
    %v7365 = vunpack.c.h.b16 %v7049
    %v7366 = vunpack.c.l.b16 %v7050
    %v7367 = vunpack.c.h.b16 %v7050
    %v7368 = vunpack.c.l.b16 %v7051
    %v7369 = vunpack.c.h.b16 %v7051
    %v7370 = vunpack.c.l.b16 %v7052
    %v7371 = vunpack.c.h.b16 %v7052
    %v7372 = vpack.c.b16 %v7326, %v7324
    %v7373 = vpack.c.b16 %v7327, %v7325
    %v7374 = vpack.c.b16 %v7330, %v7328
    %v7375 = vpack.c.b16 %v7331, %v7329
    %v7376 = vpack.c.b16 %v7334, %v7332
    %v7377 = vpack.c.b16 %v7335, %v7333
    %v7378 = vpack.c.b16 %v7338, %v7336
    %v7379 = vpack.c.b16 %v7339, %v7337
    %v7380 = vpack.c.b16 %v7342, %v7340
    %v7381 = vpack.c.b16 %v7343, %v7341
    %v7382 = vpack.c.b16 %v7346, %v7344
    %v7383 = vpack.c.b16 %v7347, %v7345
    %v7384 = vpack.c.b16 %v7350, %v7348
    %v7385 = vpack.c.b16 %v7351, %v7349
    %v7386 = vpack.c.b16 %v7354, %v7352
    %v7387 = vpack.c.b16 %v7355, %v7353
    %v7388 = vpack.c.b16 %v7358, %v7356
    %v7389 = vpack.c.b16 %v7359, %v7357
    %v7390 = vpack.c.b16 %v7362, %v7360
    %v7391 = vpack.c.b16 %v7363, %v7361
    %v7392 = vpack.c.b16 %v7366, %v7364
    %v7393 = vpack.c.b16 %v7367, %v7365
    %v7394 = vpack.c.b16 %v7370, %v7368
    %v7395 = vpack.c.b16 %v7371, %v7369
    %v7421 = vsel %vm236, %v7028, 0
    %7423 = vmatprep.subr.bf16.mxu0 %v7373
    %7424 = vmatpush1.bf16.msra.mxu0 %v7372
    %7425 = vmatprep.subr.bf16.mxu0 %v7375
    %7426 = vmatpush1.bf16.msra.mxu0 %v7374
    %7427 = vmatprep.subr.bf16.mxu0 %v7377
    %7428 = vmatpush1.bf16.msra.mxu0 %v7376
    %7429 = vmatprep.subr.bf16.mxu0 %v7379
    %7430 = vmatpush1.bf16.msra.mxu0 %v7378
    %7431 = vmatprep.subr.bf16.mxu0 %v7381
    %7432 = vmatpush1.bf16.msra.mxu0 %v7380
    %7433 = vmatprep.subr.bf16.mxu0 %v7383
    %7434 = vmatpush1.bf16.msra.mxu0 %v7382
    %7435 = vmatprep.subr.bf16.mxu0 %v7385
    %7436 = vmatpush1.bf16.msra.mxu0 %v7384
    %7437 = vmatprep.subr.bf16.mxu0 %v7387
    %7438 = vmatpush1.bf16.msra.mxu0 %v7386
    %7439 = vmatprep.subr.bf16.mxu0 %v7389
    %7440 = vmatpush1.bf16.msra.mxu0 %v7388
    %7441 = vmatprep.subr.bf16.mxu0 %v7391
    %7442 = vmatpush1.bf16.msra.mxu0 %v7390
    %7443 = vmatprep.subr.bf16.mxu0 %v7393
    %7444 = vmatpush1.bf16.msra.mxu0 %v7392
    %7445 = vmatprep.subr.bf16.mxu0 %v7395
    %7446 = vmatpush1.bf16.msra.mxu0 %v7394
    %7447 = vmatprep.subr.bf16.mxu0 0
    %7448 = vmatpush1.bf16.msra.mxu0 0
    %7449 = vmatprep.subr.bf16.mxu0 0
    %7450 = vmatpush1.bf16.msra.mxu0 0
    %7451 = vmatprep.subr.bf16.mxu0 0
    %7452 = vmatpush1.bf16.msra.mxu0 0
    %7453 = vmatprep.subr.bf16.mxu0 0
    %7454 = vmatpush1.bf16.msra.mxu0 0
    %7455 = vmatprep.mubr.bf16.mxu0 %v7421
    %7456 = vmatmul.mubr.bf16.gmra.mrb[0].mxu0 %v7027
    %v7457 = vpop.f32.mrb[0].mxu0
    %v7458 = vadd.f32 %v7292, %v7457
    %v7459 = vpop.f32.mrb[0].mxu0
    %v7460 = vadd.f32 %v7294, %v7459
    %v7461 = vpop.f32.mrb[0].mxu0
    %v7462 = vadd.f32 %v7296, %v7461
    %v7463 = vpop.f32.mrb[0].mxu0
    %v7464 = vadd.f32 %v7298, %v7463
    %7465 = vdwg.mxu0
    %s7466 = scalar_lea.vmem %s17, 16
    %v7467 = vld [vmem:[%s7466] sm:$0xf]
    %v7468 = vld [vmem:[%s7466 + $0x4] sm:$0xf]
    %v7471 = vunpack.c.l.b16 %v7467
    %v7472 = vunpack.c.l.b16 %v7468
    %v7473 = vpack.c.b16 %v7472, %v7471
    %v7475 = vsel %vm3073, %v7473, 0
    %7477 = vmatprep.subr.bf16.mxu0 %v6982
    %7478 = vmatpush1.bf16.msra.mxu0 %v6979
    %7479 = vmatprep.subr.bf16.mxu0 0
    %7480 = vmatpush1.bf16.msra.mxu0 0
    %7481 = vmatprep.subr.bf16.mxu0 0
    %7482 = vmatpush1.bf16.msra.mxu0 0
    %7483 = vmatprep.subr.bf16.mxu0 0
    %7484 = vmatpush1.bf16.msra.mxu0 0
    %7485 = vmatprep.subr.bf16.mxu0 0
    %7486 = vmatpush1.bf16.msra.mxu0 0
    %7487 = vmatprep.subr.bf16.mxu0 0
    %7488 = vmatpush1.bf16.msra.mxu0 0
    %7489 = vmatprep.subr.bf16.mxu0 0
    %7490 = vmatpush1.bf16.msra.mxu0 0
    %7491 = vmatprep.subr.bf16.mxu0 0
    %7492 = vmatpush1.bf16.msra.mxu0 0
    %7493 = vmatprep.subr.bf16.mxu0 0
    %7494 = vmatpush1.bf16.msra.mxu0 0
    %7495 = vmatprep.subr.bf16.mxu0 0
    %7496 = vmatpush1.bf16.msra.mxu0 0
    %7497 = vmatprep.subr.bf16.mxu0 0
    %7498 = vmatpush1.bf16.msra.mxu0 0
    %7499 = vmatprep.subr.bf16.mxu0 0
    %7500 = vmatpush1.bf16.msra.mxu0 0
    %7501 = vmatprep.subr.bf16.mxu0 0
    %7502 = vmatpush1.bf16.msra.mxu0 0
    %7503 = vmatprep.subr.bf16.mxu0 0
    %7504 = vmatpush1.bf16.msra.mxu0 0
    %7505 = vmatprep.subr.bf16.mxu0 0
    %7506 = vmatpush1.bf16.msra.mxu0 0
    %7507 = vmatprep.subr.bf16.mxu0 0
    %7508 = vmatpush1.bf16.msra.mxu0 0
    %7509 = vmatprep.mubr.bf16.mxu0 0
    %7510 = vmatmul.mubr.bf16.gmra.mrb[0].mxu0 %v7475
    %v7511 = vpop.f32.mrb[0].mxu0
    %v7512 = vadd.f32 0.0, %v7511
    %v7513 = vpop.f32.mrb[0].mxu0
    %v7514 = vadd.f32 0.0, %v7513
    %v7515 = vpop.f32.mrb[0].mxu0
    %v7516 = vadd.f32 0.0, %v7515
    %v7517 = vpop.f32.mrb[0].mxu0
    %v7518 = vadd.f32 0.0, %v7517
    %7519 = vdwg.mxu0
    %v7520 = vpack.c.bf16 %v7516, %v7512
    %v7521 = vpack.c.bf16 %v7518, %v7514
    %s7522 = scalar_lea.vmem %s16, 384
    %v7523 = vld [vmem:[%s7522] sm:$0xff]
    %v7524 = vld [vmem:[%s7522 + $0x8] sm:$0xff]
    %v7525 = vld [vmem:[%s7522 + $0x10] sm:$0xff]
    %v7526 = vld [vmem:[%s7522 + $0x18] sm:$0xff]
    %v7527 = vld [vmem:[%s7522 + $0x20] sm:$0xff]
    %v7528 = vld [vmem:[%s7522 + $0x28] sm:$0xff]
    %v7529 = vld [vmem:[%s7522 + $0x30] sm:$0xff]
    %v7530 = vld [vmem:[%s7522 + $0x38] sm:$0xff]
    %v7531 = vld [vmem:[%s7522 + $0x40] sm:$0xff]
    %v7532 = vld [vmem:[%s7522 + $0x48] sm:$0xff]
    %v7533 = vld [vmem:[%s7522 + $0x50] sm:$0xff]
    %v7534 = vld [vmem:[%s7522 + $0x58] sm:$0xff]
    %v7535 = vld [vmem:[%s7522 + $0x60] sm:$0xff]
    %v7536 = vld [vmem:[%s7522 + $0x68] sm:$0xff]
    %v7537 = vld [vmem:[%s7522 + $0x70] sm:$0xff]
    %v7538 = vld [vmem:[%s7522 + $0x78] sm:$0xff]
    %v7539 = vld [vmem:[%s7522 + $0x80] sm:$0xff]
    %v7540 = vld [vmem:[%s7522 + $0x88] sm:$0xff]
    %v7541 = vld [vmem:[%s7522 + $0x90] sm:$0xff]
    %v7542 = vld [vmem:[%s7522 + $0x98] sm:$0xff]
    %v7543 = vld [vmem:[%s7522 + $0xa0] sm:$0xff]
    %v7544 = vld [vmem:[%s7522 + $0xa8] sm:$0xff]
    %v7545 = vld [vmem:[%s7522 + $0xb0] sm:$0xff]
    %v7546 = vld [vmem:[%s7522 + $0xb8] sm:$0xff]
    %v7571 = vunpack.c.l.b16 %v7523
    %v7572 = vunpack.c.h.b16 %v7523
    %v7573 = vunpack.c.l.b16 %v7524
    %v7574 = vunpack.c.h.b16 %v7524
    %v7575 = vunpack.c.l.b16 %v7525
    %v7576 = vunpack.c.h.b16 %v7525
    %v7577 = vunpack.c.l.b16 %v7526
    %v7578 = vunpack.c.h.b16 %v7526
    %v7579 = vunpack.c.l.b16 %v7527
    %v7580 = vunpack.c.h.b16 %v7527
    %v7581 = vunpack.c.l.b16 %v7528
    %v7582 = vunpack.c.h.b16 %v7528
    %v7583 = vunpack.c.l.b16 %v7529
    %v7584 = vunpack.c.h.b16 %v7529
    %v7585 = vunpack.c.l.b16 %v7530
    %v7586 = vunpack.c.h.b16 %v7530
    %v7587 = vunpack.c.l.b16 %v7531
    %v7588 = vunpack.c.h.b16 %v7531
    %v7589 = vunpack.c.l.b16 %v7532
    %v7590 = vunpack.c.h.b16 %v7532
    %v7591 = vunpack.c.l.b16 %v7533
    %v7592 = vunpack.c.h.b16 %v7533
    %v7593 = vunpack.c.l.b16 %v7534
    %v7594 = vunpack.c.h.b16 %v7534
    %v7595 = vunpack.c.l.b16 %v7535
    %v7596 = vunpack.c.h.b16 %v7535
    %v7597 = vunpack.c.l.b16 %v7536
    %v7598 = vunpack.c.h.b16 %v7536
    %v7599 = vunpack.c.l.b16 %v7537
    %v7600 = vunpack.c.h.b16 %v7537
    %v7601 = vunpack.c.l.b16 %v7538
    %v7602 = vunpack.c.h.b16 %v7538
    %v7603 = vunpack.c.l.b16 %v7539
    %v7604 = vunpack.c.h.b16 %v7539
    %v7605 = vunpack.c.l.b16 %v7540
    %v7606 = vunpack.c.h.b16 %v7540
    %v7607 = vunpack.c.l.b16 %v7541
    %v7608 = vunpack.c.h.b16 %v7541
    %v7609 = vunpack.c.l.b16 %v7542
    %v7610 = vunpack.c.h.b16 %v7542
    %v7611 = vunpack.c.l.b16 %v7543
    %v7612 = vunpack.c.h.b16 %v7543
    %v7613 = vunpack.c.l.b16 %v7544
    %v7614 = vunpack.c.h.b16 %v7544
    %v7615 = vunpack.c.l.b16 %v7545
    %v7616 = vunpack.c.h.b16 %v7545
    %v7617 = vunpack.c.l.b16 %v7546
    %v7618 = vunpack.c.h.b16 %v7546
    %v7619 = vpack.c.b16 %v7573, %v7571
    %v7620 = vpack.c.b16 %v7574, %v7572
    %v7621 = vpack.c.b16 %v7577, %v7575
    %v7622 = vpack.c.b16 %v7578, %v7576
    %v7623 = vpack.c.b16 %v7581, %v7579
    %v7624 = vpack.c.b16 %v7582, %v7580
    %v7625 = vpack.c.b16 %v7585, %v7583
    %v7626 = vpack.c.b16 %v7586, %v7584
    %v7627 = vpack.c.b16 %v7589, %v7587
    %v7628 = vpack.c.b16 %v7590, %v7588
    %v7629 = vpack.c.b16 %v7593, %v7591
    %v7630 = vpack.c.b16 %v7594, %v7592
    %v7631 = vpack.c.b16 %v7597, %v7595
    %v7632 = vpack.c.b16 %v7598, %v7596
    %v7633 = vpack.c.b16 %v7601, %v7599
    %v7634 = vpack.c.b16 %v7602, %v7600
    %v7635 = vpack.c.b16 %v7605, %v7603
    %v7636 = vpack.c.b16 %v7606, %v7604
    %v7637 = vpack.c.b16 %v7609, %v7607
    %v7638 = vpack.c.b16 %v7610, %v7608
    %v7639 = vpack.c.b16 %v7613, %v7611
    %v7640 = vpack.c.b16 %v7614, %v7612
    %v7641 = vpack.c.b16 %v7617, %v7615
    %v7642 = vpack.c.b16 %v7618, %v7616
    %v7668 = vsel %vm236, %v7521, 0
    %7670 = vmatprep.subr.bf16.mxu0 %v7620
    %7671 = vmatpush1.bf16.msra.mxu0 %v7619
    %7672 = vmatprep.subr.bf16.mxu0 %v7622
    %7673 = vmatpush1.bf16.msra.mxu0 %v7621
    %7674 = vmatprep.subr.bf16.mxu0 %v7624
    %7675 = vmatpush1.bf16.msra.mxu0 %v7623
    %7676 = vmatprep.subr.bf16.mxu0 %v7626
    %7677 = vmatpush1.bf16.msra.mxu0 %v7625
    %7678 = vmatprep.subr.bf16.mxu0 %v7628
    %7679 = vmatpush1.bf16.msra.mxu0 %v7627
    %7680 = vmatprep.subr.bf16.mxu0 %v7630
    %7681 = vmatpush1.bf16.msra.mxu0 %v7629
    %7682 = vmatprep.subr.bf16.mxu0 %v7632
    %7683 = vmatpush1.bf16.msra.mxu0 %v7631
    %7684 = vmatprep.subr.bf16.mxu0 %v7634
    %7685 = vmatpush1.bf16.msra.mxu0 %v7633
    %7686 = vmatprep.subr.bf16.mxu0 %v7636
    %7687 = vmatpush1.bf16.msra.mxu0 %v7635
    %7688 = vmatprep.subr.bf16.mxu0 %v7638
    %7689 = vmatpush1.bf16.msra.mxu0 %v7637
    %7690 = vmatprep.subr.bf16.mxu0 %v7640
    %7691 = vmatpush1.bf16.msra.mxu0 %v7639
    %7692 = vmatprep.subr.bf16.mxu0 %v7642
    %7693 = vmatpush1.bf16.msra.mxu0 %v7641
    %7694 = vmatprep.subr.bf16.mxu0 0
    %7695 = vmatpush1.bf16.msra.mxu0 0
    %7696 = vmatprep.subr.bf16.mxu0 0
    %7697 = vmatpush1.bf16.msra.mxu0 0
    %7698 = vmatprep.subr.bf16.mxu0 0
    %7699 = vmatpush1.bf16.msra.mxu0 0
    %7700 = vmatprep.subr.bf16.mxu0 0
    %7701 = vmatpush1.bf16.msra.mxu0 0
    %7702 = vmatprep.mubr.bf16.mxu0 %v7668
    %7703 = vmatmul.mubr.bf16.gmra.mrb[0].mxu0 %v7520
    %v7704 = vpop.f32.mrb[0].mxu0
    %v7705 = vadd.f32 0.0, %v7704
    %v7706 = vpop.f32.mrb[0].mxu0
    %v7707 = vadd.f32 0.0, %v7706
    %v7708 = vpop.f32.mrb[0].mxu0
    %v7709 = vadd.f32 0.0, %v7708
    %v7710 = vpop.f32.mrb[0].mxu0
    %v7711 = vadd.f32 0.0, %v7710
    %7712 = vdwg.mxu0
    %v7713 = vadd.f32 %v7458, %v7705
    %v7714 = vadd.f32 %v7460, %v7707
    %v7715 = vadd.f32 %v7462, %v7709
    %v7716 = vadd.f32 %v7464, %v7711
    %s7717 = scalar_lea.vmem %s17, 24
    %v7718 = vld [vmem:[%s7717] sm:$0xf]
    %v7719 = vld [vmem:[%s7717 + $0x4] sm:$0xf]
    %v7722 = vunpack.c.l.b16 %v7718
    %v7723 = vunpack.c.l.b16 %v7719
    %v7724 = vpack.c.b16 %v7723, %v7722
    %v7726 = vsel %vm3073, %v7724, 0
    %7728 = vmatprep.subr.bf16.mxu0 %v6982
    %7729 = vmatpush1.bf16.msra.mxu0 %v6979
    %7730 = vmatprep.subr.bf16.mxu0 0
    %7731 = vmatpush1.bf16.msra.mxu0 0
    %7732 = vmatprep.subr.bf16.mxu0 0
    %7733 = vmatpush1.bf16.msra.mxu0 0
    %7734 = vmatprep.subr.bf16.mxu0 0
    %7735 = vmatpush1.bf16.msra.mxu0 0
    %7736 = vmatprep.subr.bf16.mxu0 0
    %7737 = vmatpush1.bf16.msra.mxu0 0
    %7738 = vmatprep.subr.bf16.mxu0 0
    %7739 = vmatpush1.bf16.msra.mxu0 0
    %7740 = vmatprep.subr.bf16.mxu0 0
    %7741 = vmatpush1.bf16.msra.mxu0 0
    %7742 = vmatprep.subr.bf16.mxu0 0
    %7743 = vmatpush1.bf16.msra.mxu0 0
    %7744 = vmatprep.subr.bf16.mxu0 0
    %7745 = vmatpush1.bf16.msra.mxu0 0
    %7746 = vmatprep.subr.bf16.mxu0 0
    %7747 = vmatpush1.bf16.msra.mxu0 0
    %7748 = vmatprep.subr.bf16.mxu0 0
    %7749 = vmatpush1.bf16.msra.mxu0 0
    %7750 = vmatprep.subr.bf16.mxu0 0
    %7751 = vmatpush1.bf16.msra.mxu0 0
    %7752 = vmatprep.subr.bf16.mxu0 0
    %7753 = vmatpush1.bf16.msra.mxu0 0
    %7754 = vmatprep.subr.bf16.mxu0 0
    %7755 = vmatpush1.bf16.msra.mxu0 0
    %7756 = vmatprep.subr.bf16.mxu0 0
    %7757 = vmatpush1.bf16.msra.mxu0 0
    %7758 = vmatprep.subr.bf16.mxu0 0
    %7759 = vmatpush1.bf16.msra.mxu0 0
    %7760 = vmatprep.mubr.bf16.mxu0 0
    %7761 = vmatmul.mubr.bf16.gmra.mrb[0].mxu0 %v7726
    %v7762 = vpop.f32.mrb[0].mxu0
    %v7763 = vadd.f32 0.0, %v7762
    %v7764 = vpop.f32.mrb[0].mxu0
    %v7765 = vadd.f32 0.0, %v7764
    %v7766 = vpop.f32.mrb[0].mxu0
    %v7767 = vadd.f32 0.0, %v7766
    %v7768 = vpop.f32.mrb[0].mxu0
    %v7769 = vadd.f32 0.0, %v7768
    %7770 = vdwg.mxu0
    %v7771 = vpack.c.bf16 %v7767, %v7763
    %v7772 = vpack.c.bf16 %v7769, %v7765
    %s7773 = scalar_lea.vmem %s16, 576
    %v7774 = vld [vmem:[%s7773] sm:$0xff]
    %v7775 = vld [vmem:[%s7773 + $0x8] sm:$0xff]
    %v7776 = vld [vmem:[%s7773 + $0x10] sm:$0xff]
    %v7777 = vld [vmem:[%s7773 + $0x18] sm:$0xff]
    %v7778 = vld [vmem:[%s7773 + $0x20] sm:$0xff]
    %v7779 = vld [vmem:[%s7773 + $0x28] sm:$0xff]
    %v7780 = vld [vmem:[%s7773 + $0x30] sm:$0xff]
    %v7781 = vld [vmem:[%s7773 + $0x38] sm:$0xff]
    %v7782 = vld [vmem:[%s7773 + $0x40] sm:$0xff]
    %v7783 = vld [vmem:[%s7773 + $0x48] sm:$0xff]
    %v7784 = vld [vmem:[%s7773 + $0x50] sm:$0xff]
    %v7785 = vld [vmem:[%s7773 + $0x58] sm:$0xff]
    %v7786 = vld [vmem:[%s7773 + $0x60] sm:$0xff]
    %v7787 = vld [vmem:[%s7773 + $0x68] sm:$0xff]
    %v7788 = vld [vmem:[%s7773 + $0x70] sm:$0xff]
    %v7789 = vld [vmem:[%s7773 + $0x78] sm:$0xff]
    %v7790 = vld [vmem:[%s7773 + $0x80] sm:$0xff]
    %v7791 = vld [vmem:[%s7773 + $0x88] sm:$0xff]
    %v7792 = vld [vmem:[%s7773 + $0x90] sm:$0xff]
    %v7793 = vld [vmem:[%s7773 + $0x98] sm:$0xff]
    %v7794 = vld [vmem:[%s7773 + $0xa0] sm:$0xff]
    %v7795 = vld [vmem:[%s7773 + $0xa8] sm:$0xff]
    %v7796 = vld [vmem:[%s7773 + $0xb0] sm:$0xff]
    %v7797 = vld [vmem:[%s7773 + $0xb8] sm:$0xff]
    %v7822 = vunpack.c.l.b16 %v7774
    %v7823 = vunpack.c.h.b16 %v7774
    %v7824 = vunpack.c.l.b16 %v7775
    %v7825 = vunpack.c.h.b16 %v7775
    %v7826 = vunpack.c.l.b16 %v7776
    %v7827 = vunpack.c.h.b16 %v7776
    %v7828 = vunpack.c.l.b16 %v7777
    %v7829 = vunpack.c.h.b16 %v7777
    %v7830 = vunpack.c.l.b16 %v7778
    %v7831 = vunpack.c.h.b16 %v7778
    %v7832 = vunpack.c.l.b16 %v7779
    %v7833 = vunpack.c.h.b16 %v7779
    %v7834 = vunpack.c.l.b16 %v7780
    %v7835 = vunpack.c.h.b16 %v7780
    %v7836 = vunpack.c.l.b16 %v7781
    %v7837 = vunpack.c.h.b16 %v7781
    %v7838 = vunpack.c.l.b16 %v7782
    %v7839 = vunpack.c.h.b16 %v7782
    %v7840 = vunpack.c.l.b16 %v7783
    %v7841 = vunpack.c.h.b16 %v7783
    %v7842 = vunpack.c.l.b16 %v7784
    %v7843 = vunpack.c.h.b16 %v7784
    %v7844 = vunpack.c.l.b16 %v7785
    %v7845 = vunpack.c.h.b16 %v7785
    %v7846 = vunpack.c.l.b16 %v7786
    %v7847 = vunpack.c.h.b16 %v7786
    %v7848 = vunpack.c.l.b16 %v7787
    %v7849 = vunpack.c.h.b16 %v7787
    %v7850 = vunpack.c.l.b16 %v7788
    %v7851 = vunpack.c.h.b16 %v7788
    %v7852 = vunpack.c.l.b16 %v7789
    %v7853 = vunpack.c.h.b16 %v7789
    %v7854 = vunpack.c.l.b16 %v7790
    %v7855 = vunpack.c.h.b16 %v7790
    %v7856 = vunpack.c.l.b16 %v7791
    %v7857 = vunpack.c.h.b16 %v7791
    %v7858 = vunpack.c.l.b16 %v7792
    %v7859 = vunpack.c.h.b16 %v7792
    %v7860 = vunpack.c.l.b16 %v7793
    %v7861 = vunpack.c.h.b16 %v7793
    %v7862 = vunpack.c.l.b16 %v7794
    %v7863 = vunpack.c.h.b16 %v7794
    %v7864 = vunpack.c.l.b16 %v7795
    %v7865 = vunpack.c.h.b16 %v7795
    %v7866 = vunpack.c.l.b16 %v7796
    %v7867 = vunpack.c.h.b16 %v7796
    %v7868 = vunpack.c.l.b16 %v7797
    %v7869 = vunpack.c.h.b16 %v7797
    %v7870 = vpack.c.b16 %v7824, %v7822
    %v7871 = vpack.c.b16 %v7825, %v7823
    %v7872 = vpack.c.b16 %v7828, %v7826
    %v7873 = vpack.c.b16 %v7829, %v7827
    %v7874 = vpack.c.b16 %v7832, %v7830
    %v7875 = vpack.c.b16 %v7833, %v7831
    %v7876 = vpack.c.b16 %v7836, %v7834
    %v7877 = vpack.c.b16 %v7837, %v7835
    %v7878 = vpack.c.b16 %v7840, %v7838
    %v7879 = vpack.c.b16 %v7841, %v7839
    %v7880 = vpack.c.b16 %v7844, %v7842
    %v7881 = vpack.c.b16 %v7845, %v7843
    %v7882 = vpack.c.b16 %v7848, %v7846
    %v7883 = vpack.c.b16 %v7849, %v7847
    %v7884 = vpack.c.b16 %v7852, %v7850
    %v7885 = vpack.c.b16 %v7853, %v7851
    %v7886 = vpack.c.b16 %v7856, %v7854
    %v7887 = vpack.c.b16 %v7857, %v7855
    %v7888 = vpack.c.b16 %v7860, %v7858
    %v7889 = vpack.c.b16 %v7861, %v7859
    %v7890 = vpack.c.b16 %v7864, %v7862
    %v7891 = vpack.c.b16 %v7865, %v7863
    %v7892 = vpack.c.b16 %v7868, %v7866
    %v7893 = vpack.c.b16 %v7869, %v7867
    %v7919 = vsel %vm236, %v7772, 0
    %7921 = vmatprep.subr.bf16.mxu0 %v7871
    %7922 = vmatpush1.bf16.msra.mxu0 %v7870
    %7923 = vmatprep.subr.bf16.mxu0 %v7873
    %7924 = vmatpush1.bf16.msra.mxu0 %v7872
    %7925 = vmatprep.subr.bf16.mxu0 %v7875
    %7926 = vmatpush1.bf16.msra.mxu0 %v7874
    %7927 = vmatprep.subr.bf16.mxu0 %v7877
    %7928 = vmatpush1.bf16.msra.mxu0 %v7876
    %7929 = vmatprep.subr.bf16.mxu0 %v7879
    %7930 = vmatpush1.bf16.msra.mxu0 %v7878
    %7931 = vmatprep.subr.bf16.mxu0 %v7881
    %7932 = vmatpush1.bf16.msra.mxu0 %v7880
    %7933 = vmatprep.subr.bf16.mxu0 %v7883
    %7934 = vmatpush1.bf16.msra.mxu0 %v7882
    %7935 = vmatprep.subr.bf16.mxu0 %v7885
    %7936 = vmatpush1.bf16.msra.mxu0 %v7884
    %7937 = vmatprep.subr.bf16.mxu0 %v7887
    %7938 = vmatpush1.bf16.msra.mxu0 %v7886
    %7939 = vmatprep.subr.bf16.mxu0 %v7889
    %7940 = vmatpush1.bf16.msra.mxu0 %v7888
    %7941 = vmatprep.subr.bf16.mxu0 %v7891
    %7942 = vmatpush1.bf16.msra.mxu0 %v7890
    %7943 = vmatprep.subr.bf16.mxu0 %v7893
    %7944 = vmatpush1.bf16.msra.mxu0 %v7892
    %7945 = vmatprep.subr.bf16.mxu0 0
    %7946 = vmatpush1.bf16.msra.mxu0 0
    %7947 = vmatprep.subr.bf16.mxu0 0
    %7948 = vmatpush1.bf16.msra.mxu0 0
    %7949 = vmatprep.subr.bf16.mxu0 0
    %7950 = vmatpush1.bf16.msra.mxu0 0
    %7951 = vmatprep.subr.bf16.mxu0 0
    %7952 = vmatpush1.bf16.msra.mxu0 0
    %7953 = vmatprep.mubr.bf16.mxu0 %v7919
    %7954 = vmatmul.mubr.bf16.gmra.mrb[0].mxu0 %v7771
    %v7955 = vpop.f32.mrb[0].mxu0
    %v7956 = vadd.f32 0.0, %v7955
    %v7957 = vpop.f32.mrb[0].mxu0
    %v7958 = vadd.f32 0.0, %v7957
    %v7959 = vpop.f32.mrb[0].mxu0
    %v7960 = vadd.f32 0.0, %v7959
    %v7961 = vpop.f32.mrb[0].mxu0
    %v7962 = vadd.f32 0.0, %v7961
    %7963 = vdwg.mxu0
    %v7964 = vadd.f32 %v7713, %v7956
    %v7965 = vadd.f32 %v7714, %v7958
    %v7966 = vadd.f32 %v7715, %v7960
    %v7967 = vadd.f32 %v7716, %v7962
    %v7968 = vld [vmem:[#allocation14] sm:$0x3]
    %v7970 = vlaneseq
    %v7971 = vshrl.u32 %v7970, 7
    %v7972 = vsub.s32 0, %v7971
    %v7973 = vrot.slane %v7968, %v7972
    %v7974 = vlaneseq
    %v7975 = vshrl.u32 %v7974, 7
    %v7976 = vsub.s32 1, %v7975
    %v7977 = vrot.slane %v7968, %v7976
    %v7980 = vadd.f32 %v7964, %v7973
    %v7981 = vadd.f32 %v7965, %v7977
    %v7982 = vadd.f32 %v7966, %v7973
    %v7983 = vadd.f32 %v7967, %v7977
    %v7984 = vmax.f32 %v7980, 0.0
    %v7985 = vmax.f32 %v7981, 0.0
    %v7986 = vmax.f32 %v7982, 0.0
    %v7987 = vmax.f32 %v7983, 0.0
    %v7988 = vpack.c.bf16 %v7986, %v7984
    %v7989 = vpack.c.bf16 %v7987, %v7985
    %v7990 = vld [vmem:[%s20] sm:$0xf]
    %v7991 = vld [vmem:[%s20 + $0x4] sm:$0xf]
    %v7992 = vld [vmem:[%s20 + $0x8] sm:$0xf]
    %v7993 = vld [vmem:[%s20 + $0xc] sm:$0xf]
    %v7998 = vunpack.c.l.b16 %v7990
    %v7999 = vunpack.c.l.b16 %v7991
    %v8000 = vunpack.c.l.b16 %v7992
    %v8001 = vunpack.c.l.b16 %v7993
    %v8002 = vpack.c.b16 %v7999, %v7998
    %v8003 = vpack.c.b16 %v8001, %v8000
    %v8005 = vsel %vm2104, %v8002, 0
    %v8008 = vsel %vm2104, %v8003, 0
    %8010 = vmatprep.subr.bf16.mxu0 %v7989
    %8011 = vmatpush1.bf16.msra.mxu0 %v7988
    %8012 = vmatprep.subr.bf16.mxu0 0
    %8013 = vmatpush1.bf16.msra.mxu0 0
    %8014 = vmatprep.subr.bf16.mxu0 0
    %8015 = vmatpush1.bf16.msra.mxu0 0
    %8016 = vmatprep.subr.bf16.mxu0 0
    %8017 = vmatpush1.bf16.msra.mxu0 0
    %8018 = vmatprep.subr.bf16.mxu0 0
    %8019 = vmatpush1.bf16.msra.mxu0 0
    %8020 = vmatprep.subr.bf16.mxu0 0
    %8021 = vmatpush1.bf16.msra.mxu0 0
    %8022 = vmatprep.subr.bf16.mxu0 0
    %8023 = vmatpush1.bf16.msra.mxu0 0
    %8024 = vmatprep.subr.bf16.mxu0 0
    %8025 = vmatpush1.bf16.msra.mxu0 0
    %8026 = vmatprep.subr.bf16.mxu0 0
    %8027 = vmatpush1.bf16.msra.mxu0 0
    %8028 = vmatprep.subr.bf16.mxu0 0
    %8029 = vmatpush1.bf16.msra.mxu0 0
    %8030 = vmatprep.subr.bf16.mxu0 0
    %8031 = vmatpush1.bf16.msra.mxu0 0
    %8032 = vmatprep.subr.bf16.mxu0 0
    %8033 = vmatpush1.bf16.msra.mxu0 0
    %8034 = vmatprep.subr.bf16.mxu0 0
    %8035 = vmatpush1.bf16.msra.mxu0 0
    %8036 = vmatprep.subr.bf16.mxu0 0
    %8037 = vmatpush1.bf16.msra.mxu0 0
    %8038 = vmatprep.subr.bf16.mxu0 0
    %8039 = vmatpush1.bf16.msra.mxu0 0
    %8040 = vmatprep.subr.bf16.mxu0 0
    %8041 = vmatpush1.bf16.msra.mxu0 0
    %8042 = vmatprep.mubr.bf16.mxu0 0
    %8043 = vmatmul.mubr.bf16.gmra.mrb[0].mxu0 %v8005
    %v8044 = vpop.f32.mrb[0].mxu0
    %v8045 = vadd.f32 0.0, %v8044
    %v8046 = vpop.f32.mrb[0].mxu0
    %v8047 = vadd.f32 0.0, %v8046
    %v8048 = vpop.f32.mrb[0].mxu0
    %v8049 = vadd.f32 0.0, %v8048
    %v8050 = vpop.f32.mrb[0].mxu0
    %v8051 = vadd.f32 0.0, %v8050
    %8052 = vmatprep.mubr.bf16.mxu0 0
    %8053 = vmatmul.mubr.bf16.gmra.mrb[0].mxu0 %v8008
    %v8054 = vpop.f32.mrb[0].mxu0
    %v8055 = vadd.f32 0.0, %v8054
    %v8056 = vpop.f32.mrb[0].mxu0
    %v8057 = vadd.f32 0.0, %v8056
    %v8058 = vpop.f32.mrb[0].mxu0
    %v8059 = vadd.f32 0.0, %v8058
    %v8060 = vpop.f32.mrb[0].mxu0
    %v8061 = vadd.f32 0.0, %v8060
    %8062 = vdwg.mxu0
    %v8063 = vpack.c.bf16 %v8049, %v8045
    %v8064 = vpack.c.bf16 %v8051, %v8047
    %v8065 = vpack.c.bf16 %v8059, %v8055
    %v8066 = vpack.c.bf16 %v8061, %v8057
    %v8067 = vld [vmem:[%s19] sm:$0xff]
    %v8068 = vld [vmem:[%s19 + $0x8] sm:$0xff]
    %v8069 = vld [vmem:[%s19 + $0x10] sm:$0xff]
    %v8070 = vld [vmem:[%s19 + $0x18] sm:$0xff]
    %v8071 = vld [vmem:[%s19 + $0x20] sm:$0xff]
    %v8072 = vld [vmem:[%s19 + $0x28] sm:$0xff]
    %v8073 = vld [vmem:[%s19 + $0x30] sm:$0xff]
    %v8074 = vld [vmem:[%s19 + $0x38] sm:$0xff]
    %v8075 = vld [vmem:[%s19 + $0x40] sm:$0xff]
    %v8076 = vld [vmem:[%s19 + $0x48] sm:$0xff]
    %v8077 = vld [vmem:[%s19 + $0x50] sm:$0xff]
    %v8078 = vld [vmem:[%s19 + $0x58] sm:$0xff]
    %v8079 = vld [vmem:[%s19 + $0x60] sm:$0xff]
    %v8080 = vld [vmem:[%s19 + $0x68] sm:$0xff]
    %v8081 = vld [vmem:[%s19 + $0x70] sm:$0xff]
    %v8082 = vld [vmem:[%s19 + $0x78] sm:$0xff]
    %v8083 = vld [vmem:[%s19 + $0x80] sm:$0xff]
    %v8084 = vld [vmem:[%s19 + $0x88] sm:$0xff]
    %v8085 = vld [vmem:[%s19 + $0x90] sm:$0xff]
    %v8086 = vld [vmem:[%s19 + $0x98] sm:$0xff]
    %v8087 = vld [vmem:[%s19 + $0xa0] sm:$0xff]
    %v8088 = vld [vmem:[%s19 + $0xa8] sm:$0xff]
    %v8089 = vld [vmem:[%s19 + $0xb0] sm:$0xff]
    %v8090 = vld [vmem:[%s19 + $0xb8] sm:$0xff]
    %s8091 = scalar_lea.vmem %s20, 16
    %v8092 = vld [vmem:[%s8091] sm:$0xf]
    %v8093 = vld [vmem:[%s8091 + $0x4] sm:$0xf]
    %v8094 = vld [vmem:[%s8091 + $0x8] sm:$0xf]
    %v8095 = vld [vmem:[%s8091 + $0xc] sm:$0xf]
    %v8100 = vunpack.c.l.b16 %v8092
    %v8101 = vunpack.c.l.b16 %v8093
    %v8102 = vunpack.c.l.b16 %v8094
    %v8103 = vunpack.c.l.b16 %v8095
    %v8104 = vpack.c.b16 %v8101, %v8100
    %v8105 = vpack.c.b16 %v8103, %v8102
    %v8107 = vsel %vm2104, %v8104, 0
    %v8110 = vsel %vm2104, %v8105, 0
    %8112 = vmatprep.subr.bf16.mxu0 %v7989
    %8113 = vmatpush1.bf16.msra.mxu0 %v7988
    %8114 = vmatprep.subr.bf16.mxu0 0
    %8115 = vmatpush1.bf16.msra.mxu0 0
    %8116 = vmatprep.subr.bf16.mxu0 0
    %8117 = vmatpush1.bf16.msra.mxu0 0
    %8118 = vmatprep.subr.bf16.mxu0 0
    %8119 = vmatpush1.bf16.msra.mxu0 0
    %8120 = vmatprep.subr.bf16.mxu0 0
    %8121 = vmatpush1.bf16.msra.mxu0 0
    %8122 = vmatprep.subr.bf16.mxu0 0
    %8123 = vmatpush1.bf16.msra.mxu0 0
    %8124 = vmatprep.subr.bf16.mxu0 0
    %8125 = vmatpush1.bf16.msra.mxu0 0
    %8126 = vmatprep.subr.bf16.mxu0 0
    %8127 = vmatpush1.bf16.msra.mxu0 0
    %8128 = vmatprep.subr.bf16.mxu0 0
    %8129 = vmatpush1.bf16.msra.mxu0 0
    %8130 = vmatprep.subr.bf16.mxu0 0
    %8131 = vmatpush1.bf16.msra.mxu0 0
    %8132 = vmatprep.subr.bf16.mxu0 0
    %8133 = vmatpush1.bf16.msra.mxu0 0
    %8134 = vmatprep.subr.bf16.mxu0 0
    %8135 = vmatpush1.bf16.msra.mxu0 0
    %8136 = vmatprep.subr.bf16.mxu0 0
    %8137 = vmatpush1.bf16.msra.mxu0 0
    %8138 = vmatprep.subr.bf16.mxu0 0
    %8139 = vmatpush1.bf16.msra.mxu0 0
    %8140 = vmatprep.subr.bf16.mxu0 0
    %8141 = vmatpush1.bf16.msra.mxu0 0
    %8142 = vmatprep.subr.bf16.mxu0 0
    %8143 = vmatpush1.bf16.msra.mxu0 0
    %8144 = vmatprep.mubr.bf16.mxu0 0
    %8145 = vmatmul.mubr.bf16.gmra.mrb[0].mxu0 %v8107
    %v8146 = vpop.f32.mrb[0].mxu0
    %v8147 = vadd.f32 0.0, %v8146
    %v8148 = vpop.f32.mrb[0].mxu0
    %v8149 = vadd.f32 0.0, %v8148
    %v8150 = vpop.f32.mrb[0].mxu0
    %v8151 = vadd.f32 0.0, %v8150
    %v8152 = vpop.f32.mrb[0].mxu0
    %v8153 = vadd.f32 0.0, %v8152
    %8154 = vmatprep.mubr.bf16.mxu0 0
    %8155 = vmatmul.mubr.bf16.gmra.mrb[0].mxu0 %v8110
    %v8156 = vpop.f32.mrb[0].mxu0
    %v8157 = vadd.f32 0.0, %v8156
    %v8158 = vpop.f32.mrb[0].mxu0
    %v8159 = vadd.f32 0.0, %v8158
    %v8160 = vpop.f32.mrb[0].mxu0
    %v8161 = vadd.f32 0.0, %v8160
    %v8162 = vpop.f32.mrb[0].mxu0
    %v8163 = vadd.f32 0.0, %v8162
    %8164 = vdwg.mxu0
    %v8165 = vpack.c.bf16 %v8151, %v8147
    %v8166 = vpack.c.bf16 %v8153, %v8149
    %v8167 = vpack.c.bf16 %v8161, %v8157
    %v8168 = vpack.c.bf16 %v8163, %v8159
    %s8169 = scalar_lea.vmem %s19, 192
    %v8170 = vld [vmem:[%s8169] sm:$0xff]
    %v8171 = vld [vmem:[%s8169 + $0x8] sm:$0xff]
    %v8172 = vld [vmem:[%s8169 + $0x10] sm:$0xff]
    %v8173 = vld [vmem:[%s8169 + $0x18] sm:$0xff]
    %v8174 = vld [vmem:[%s8169 + $0x20] sm:$0xff]
    %v8175 = vld [vmem:[%s8169 + $0x28] sm:$0xff]
    %v8176 = vld [vmem:[%s8169 + $0x30] sm:$0xff]
    %v8177 = vld [vmem:[%s8169 + $0x38] sm:$0xff]
    %v8178 = vld [vmem:[%s8169 + $0x40] sm:$0xff]
    %v8179 = vld [vmem:[%s8169 + $0x48] sm:$0xff]
    %v8180 = vld [vmem:[%s8169 + $0x50] sm:$0xff]
    %v8181 = vld [vmem:[%s8169 + $0x58] sm:$0xff]
    %v8182 = vld [vmem:[%s8169 + $0x60] sm:$0xff]
    %v8183 = vld [vmem:[%s8169 + $0x68] sm:$0xff]
    %v8184 = vld [vmem:[%s8169 + $0x70] sm:$0xff]
    %v8185 = vld [vmem:[%s8169 + $0x78] sm:$0xff]
    %v8186 = vld [vmem:[%s8169 + $0x80] sm:$0xff]
    %v8187 = vld [vmem:[%s8169 + $0x88] sm:$0xff]
    %v8188 = vld [vmem:[%s8169 + $0x90] sm:$0xff]
    %v8189 = vld [vmem:[%s8169 + $0x98] sm:$0xff]
    %v8190 = vld [vmem:[%s8169 + $0xa0] sm:$0xff]
    %v8191 = vld [vmem:[%s8169 + $0xa8] sm:$0xff]
    %v8192 = vld [vmem:[%s8169 + $0xb0] sm:$0xff]
    %v8193 = vld [vmem:[%s8169 + $0xb8] sm:$0xff]
    %v8218 = vunpack.c.l.b16 %v8170
    %v8219 = vunpack.c.h.b16 %v8170
    %v8220 = vunpack.c.l.b16 %v8171
    %v8221 = vunpack.c.h.b16 %v8171
    %v8222 = vunpack.c.l.b16 %v8172
    %v8223 = vunpack.c.h.b16 %v8172
    %v8224 = vunpack.c.l.b16 %v8173
    %v8225 = vunpack.c.h.b16 %v8173
    %v8226 = vunpack.c.l.b16 %v8174
    %v8227 = vunpack.c.h.b16 %v8174
    %v8228 = vunpack.c.l.b16 %v8175
    %v8229 = vunpack.c.h.b16 %v8175
    %v8230 = vunpack.c.l.b16 %v8176
    %v8231 = vunpack.c.h.b16 %v8176
    %v8232 = vunpack.c.l.b16 %v8177
    %v8233 = vunpack.c.h.b16 %v8177
    %v8234 = vunpack.c.l.b16 %v8178
    %v8235 = vunpack.c.h.b16 %v8178
    %v8236 = vunpack.c.l.b16 %v8179
    %v8237 = vunpack.c.h.b16 %v8179
    %v8238 = vunpack.c.l.b16 %v8180
    %v8239 = vunpack.c.h.b16 %v8180
    %v8240 = vunpack.c.l.b16 %v8181
    %v8241 = vunpack.c.h.b16 %v8181
    %v8242 = vunpack.c.l.b16 %v8182
    %v8243 = vunpack.c.h.b16 %v8182
    %v8244 = vunpack.c.l.b16 %v8183
    %v8245 = vunpack.c.h.b16 %v8183
    %v8246 = vunpack.c.l.b16 %v8184
    %v8247 = vunpack.c.h.b16 %v8184
    %v8248 = vunpack.c.l.b16 %v8185
    %v8249 = vunpack.c.h.b16 %v8185
    %v8250 = vunpack.c.l.b16 %v8186
    %v8251 = vunpack.c.h.b16 %v8186
    %v8252 = vunpack.c.l.b16 %v8187
    %v8253 = vunpack.c.h.b16 %v8187
    %v8254 = vunpack.c.l.b16 %v8188
    %v8255 = vunpack.c.h.b16 %v8188
    %v8256 = vunpack.c.l.b16 %v8189
    %v8257 = vunpack.c.h.b16 %v8189
    %v8258 = vunpack.c.l.b16 %v8190
    %v8259 = vunpack.c.h.b16 %v8190
    %v8260 = vunpack.c.l.b16 %v8191
    %v8261 = vunpack.c.h.b16 %v8191
    %v8262 = vunpack.c.l.b16 %v8192
    %v8263 = vunpack.c.h.b16 %v8192
    %v8264 = vunpack.c.l.b16 %v8193
    %v8265 = vunpack.c.h.b16 %v8193
    %v8266 = vpack.c.b16 %v8220, %v8218
    %v8267 = vpack.c.b16 %v8221, %v8219
    %v8268 = vpack.c.b16 %v8224, %v8222
    %v8269 = vpack.c.b16 %v8225, %v8223
    %v8270 = vpack.c.b16 %v8228, %v8226
    %v8271 = vpack.c.b16 %v8229, %v8227
    %v8272 = vpack.c.b16 %v8232, %v8230
    %v8273 = vpack.c.b16 %v8233, %v8231
    %v8274 = vpack.c.b16 %v8236, %v8234
    %v8275 = vpack.c.b16 %v8237, %v8235
    %v8276 = vpack.c.b16 %v8240, %v8238
    %v8277 = vpack.c.b16 %v8241, %v8239
    %v8278 = vpack.c.b16 %v8244, %v8242
    %v8279 = vpack.c.b16 %v8245, %v8243
    %v8280 = vpack.c.b16 %v8248, %v8246
    %v8281 = vpack.c.b16 %v8249, %v8247
    %v8282 = vpack.c.b16 %v8252, %v8250
    %v8283 = vpack.c.b16 %v8253, %v8251
    %v8284 = vpack.c.b16 %v8256, %v8254
    %v8285 = vpack.c.b16 %v8257, %v8255
    %v8286 = vpack.c.b16 %v8260, %v8258
    %v8287 = vpack.c.b16 %v8261, %v8259
    %v8288 = vpack.c.b16 %v8264, %v8262
    %v8289 = vpack.c.b16 %v8265, %v8263
    %v8315 = vsel %vm236, %v8166, 0
    %v8318 = vsel %vm236, %v8168, 0
    %8320 = vmatprep.subr.bf16.mxu0 %v8267
    %8321 = vmatpush1.bf16.msra.mxu0 %v8266
    %8322 = vmatprep.subr.bf16.mxu0 %v8269
    %8323 = vmatpush1.bf16.msra.mxu0 %v8268
    %8324 = vmatprep.subr.bf16.mxu0 %v8271
    %8325 = vmatpush1.bf16.msra.mxu0 %v8270
    %8326 = vmatprep.subr.bf16.mxu0 %v8273
    %8327 = vmatpush1.bf16.msra.mxu0 %v8272
    %8328 = vmatprep.subr.bf16.mxu0 %v8275
    %8329 = vmatpush1.bf16.msra.mxu0 %v8274
    %8330 = vmatprep.subr.bf16.mxu0 %v8277
    %8331 = vmatpush1.bf16.msra.mxu0 %v8276
    %8332 = vmatprep.subr.bf16.mxu0 %v8279
    %8333 = vmatpush1.bf16.msra.mxu0 %v8278
    %8334 = vmatprep.subr.bf16.mxu0 %v8281
    %8335 = vmatpush1.bf16.msra.mxu0 %v8280
    %8336 = vmatprep.subr.bf16.mxu0 %v8283
    %8337 = vmatpush1.bf16.msra.mxu0 %v8282
    %8338 = vmatprep.subr.bf16.mxu0 %v8285
    %8339 = vmatpush1.bf16.msra.mxu0 %v8284
    %8340 = vmatprep.subr.bf16.mxu0 %v8287
    %8341 = vmatpush1.bf16.msra.mxu0 %v8286
    %8342 = vmatprep.subr.bf16.mxu0 %v8289
    %8343 = vmatpush1.bf16.msra.mxu0 %v8288
    %8344 = vmatprep.subr.bf16.mxu0 0
    %8345 = vmatpush1.bf16.msra.mxu0 0
    %8346 = vmatprep.subr.bf16.mxu0 0
    %8347 = vmatpush1.bf16.msra.mxu0 0
    %8348 = vmatprep.subr.bf16.mxu0 0
    %8349 = vmatpush1.bf16.msra.mxu0 0
    %8350 = vmatprep.subr.bf16.mxu0 0
    %8351 = vmatpush1.bf16.msra.mxu0 0
    %8352 = vmatprep.mubr.bf16.mxu0 %v8315
    %8353 = vmatmul.mubr.bf16.gmra.mrb[0].mxu0 %v8165
    %v8354 = vpop.f32.mrb[0].mxu0
    %v8355 = vadd.f32 0.0, %v8354
    %v8356 = vpop.f32.mrb[0].mxu0
    %v8357 = vadd.f32 0.0, %v8356
    %v8358 = vpop.f32.mrb[0].mxu0
    %v8359 = vadd.f32 0.0, %v8358
    %v8360 = vpop.f32.mrb[0].mxu0
    %v8361 = vadd.f32 0.0, %v8360
    %8362 = vmatprep.mubr.bf16.mxu0 %v8318
    %8363 = vmatmul.mubr.bf16.gmra.mrb[0].mxu0 %v8167
    %v8364 = vpop.f32.mrb[0].mxu0
    %v8365 = vadd.f32 0.0, %v8364
    %v8366 = vpop.f32.mrb[0].mxu0
    %v8367 = vadd.f32 0.0, %v8366
    %v8368 = vpop.f32.mrb[0].mxu0
    %v8369 = vadd.f32 0.0, %v8368
    %v8370 = vpop.f32.mrb[0].mxu0
    %v8371 = vadd.f32 0.0, %v8370
    %8372 = vdwg.mxu0
    %v8397 = vunpack.c.l.b16 %v8067
    %v8398 = vunpack.c.h.b16 %v8067
    %v8399 = vunpack.c.l.b16 %v8068
    %v8400 = vunpack.c.h.b16 %v8068
    %v8401 = vunpack.c.l.b16 %v8069
    %v8402 = vunpack.c.h.b16 %v8069
    %v8403 = vunpack.c.l.b16 %v8070
    %v8404 = vunpack.c.h.b16 %v8070
    %v8405 = vunpack.c.l.b16 %v8071
    %v8406 = vunpack.c.h.b16 %v8071
    %v8407 = vunpack.c.l.b16 %v8072
    %v8408 = vunpack.c.h.b16 %v8072
    %v8409 = vunpack.c.l.b16 %v8073
    %v8410 = vunpack.c.h.b16 %v8073
    %v8411 = vunpack.c.l.b16 %v8074
    %v8412 = vunpack.c.h.b16 %v8074
    %v8413 = vunpack.c.l.b16 %v8075
    %v8414 = vunpack.c.h.b16 %v8075
    %v8415 = vunpack.c.l.b16 %v8076
    %v8416 = vunpack.c.h.b16 %v8076
    %v8417 = vunpack.c.l.b16 %v8077
    %v8418 = vunpack.c.h.b16 %v8077
    %v8419 = vunpack.c.l.b16 %v8078
    %v8420 = vunpack.c.h.b16 %v8078
    %v8421 = vunpack.c.l.b16 %v8079
    %v8422 = vunpack.c.h.b16 %v8079
    %v8423 = vunpack.c.l.b16 %v8080
    %v8424 = vunpack.c.h.b16 %v8080
    %v8425 = vunpack.c.l.b16 %v8081
    %v8426 = vunpack.c.h.b16 %v8081
    %v8427 = vunpack.c.l.b16 %v8082
    %v8428 = vunpack.c.h.b16 %v8082
    %v8429 = vunpack.c.l.b16 %v8083
    %v8430 = vunpack.c.h.b16 %v8083
    %v8431 = vunpack.c.l.b16 %v8084
    %v8432 = vunpack.c.h.b16 %v8084
    %v8433 = vunpack.c.l.b16 %v8085
    %v8434 = vunpack.c.h.b16 %v8085
    %v8435 = vunpack.c.l.b16 %v8086
    %v8436 = vunpack.c.h.b16 %v8086
    %v8437 = vunpack.c.l.b16 %v8087
    %v8438 = vunpack.c.h.b16 %v8087
    %v8439 = vunpack.c.l.b16 %v8088
    %v8440 = vunpack.c.h.b16 %v8088
    %v8441 = vunpack.c.l.b16 %v8089
    %v8442 = vunpack.c.h.b16 %v8089
    %v8443 = vunpack.c.l.b16 %v8090
    %v8444 = vunpack.c.h.b16 %v8090
    %v8445 = vpack.c.b16 %v8399, %v8397
    %v8446 = vpack.c.b16 %v8400, %v8398
    %v8447 = vpack.c.b16 %v8403, %v8401
    %v8448 = vpack.c.b16 %v8404, %v8402
    %v8449 = vpack.c.b16 %v8407, %v8405
    %v8450 = vpack.c.b16 %v8408, %v8406
    %v8451 = vpack.c.b16 %v8411, %v8409
    %v8452 = vpack.c.b16 %v8412, %v8410
    %v8453 = vpack.c.b16 %v8415, %v8413
    %v8454 = vpack.c.b16 %v8416, %v8414
    %v8455 = vpack.c.b16 %v8419, %v8417
    %v8456 = vpack.c.b16 %v8420, %v8418
    %v8457 = vpack.c.b16 %v8423, %v8421
    %v8458 = vpack.c.b16 %v8424, %v8422
    %v8459 = vpack.c.b16 %v8427, %v8425
    %v8460 = vpack.c.b16 %v8428, %v8426
    %v8461 = vpack.c.b16 %v8431, %v8429
    %v8462 = vpack.c.b16 %v8432, %v8430
    %v8463 = vpack.c.b16 %v8435, %v8433
    %v8464 = vpack.c.b16 %v8436, %v8434
    %v8465 = vpack.c.b16 %v8439, %v8437
    %v8466 = vpack.c.b16 %v8440, %v8438
    %v8467 = vpack.c.b16 %v8443, %v8441
    %v8468 = vpack.c.b16 %v8444, %v8442
    %v8494 = vsel %vm236, %v8064, 0
    %v8497 = vsel %vm236, %v8066, 0
    %8499 = vmatprep.subr.bf16.mxu0 %v8446
    %8500 = vmatpush1.bf16.msra.mxu0 %v8445
    %8501 = vmatprep.subr.bf16.mxu0 %v8448
    %8502 = vmatpush1.bf16.msra.mxu0 %v8447
    %8503 = vmatprep.subr.bf16.mxu0 %v8450
    %8504 = vmatpush1.bf16.msra.mxu0 %v8449
    %8505 = vmatprep.subr.bf16.mxu0 %v8452
    %8506 = vmatpush1.bf16.msra.mxu0 %v8451
    %8507 = vmatprep.subr.bf16.mxu0 %v8454
    %8508 = vmatpush1.bf16.msra.mxu0 %v8453
    %8509 = vmatprep.subr.bf16.mxu0 %v8456
    %8510 = vmatpush1.bf16.msra.mxu0 %v8455
    %8511 = vmatprep.subr.bf16.mxu0 %v8458
    %8512 = vmatpush1.bf16.msra.mxu0 %v8457
    %8513 = vmatprep.subr.bf16.mxu0 %v8460
    %8514 = vmatpush1.bf16.msra.mxu0 %v8459
    %8515 = vmatprep.subr.bf16.mxu0 %v8462
    %8516 = vmatpush1.bf16.msra.mxu0 %v8461
    %8517 = vmatprep.subr.bf16.mxu0 %v8464
    %8518 = vmatpush1.bf16.msra.mxu0 %v8463
    %8519 = vmatprep.subr.bf16.mxu0 %v8466
    %8520 = vmatpush1.bf16.msra.mxu0 %v8465
    %8521 = vmatprep.subr.bf16.mxu0 %v8468
    %8522 = vmatpush1.bf16.msra.mxu0 %v8467
    %8523 = vmatprep.subr.bf16.mxu0 0
    %8524 = vmatpush1.bf16.msra.mxu0 0
    %8525 = vmatprep.subr.bf16.mxu0 0
    %8526 = vmatpush1.bf16.msra.mxu0 0
    %8527 = vmatprep.subr.bf16.mxu0 0
    %8528 = vmatpush1.bf16.msra.mxu0 0
    %8529 = vmatprep.subr.bf16.mxu0 0
    %8530 = vmatpush1.bf16.msra.mxu0 0
    %8531 = vmatprep.mubr.bf16.mxu0 %v8494
    %8532 = vmatmul.mubr.bf16.gmra.mrb[0].mxu0 %v8063
    %v8533 = vpop.f32.mrb[0].mxu0
    %v8534 = vadd.f32 %v8355, %v8533
    %v8535 = vpop.f32.mrb[0].mxu0
    %v8536 = vadd.f32 %v8357, %v8535
    %v8537 = vpop.f32.mrb[0].mxu0
    %v8538 = vadd.f32 %v8359, %v8537
    %v8539 = vpop.f32.mrb[0].mxu0
    %v8540 = vadd.f32 %v8361, %v8539
    %8541 = vmatprep.mubr.bf16.mxu0 %v8497
    %8542 = vmatmul.mubr.bf16.gmra.mrb[0].mxu0 %v8065
    %v8543 = vpop.f32.mrb[0].mxu0
    %v8544 = vadd.f32 %v8365, %v8543
    %v8545 = vpop.f32.mrb[0].mxu0
    %v8546 = vadd.f32 %v8367, %v8545
    %v8547 = vpop.f32.mrb[0].mxu0
    %v8548 = vadd.f32 %v8369, %v8547
    %v8549 = vpop.f32.mrb[0].mxu0
    %v8550 = vadd.f32 %v8371, %v8549
    %8551 = vdwg.mxu0
    %s8552 = scalar_lea.vmem %s20, 32
    %v8553 = vld [vmem:[%s8552] sm:$0xf]
    %v8554 = vld [vmem:[%s8552 + $0x4] sm:$0xf]
    %v8555 = vld [vmem:[%s8552 + $0x8] sm:$0xf]
    %v8556 = vld [vmem:[%s8552 + $0xc] sm:$0xf]
    %v8561 = vunpack.c.l.b16 %v8553
    %v8562 = vunpack.c.l.b16 %v8554
    %v8563 = vunpack.c.l.b16 %v8555
    %v8564 = vunpack.c.l.b16 %v8556
    %v8565 = vpack.c.b16 %v8562, %v8561
    %v8566 = vpack.c.b16 %v8564, %v8563
    %v8568 = vsel %vm2104, %v8565, 0
    %v8571 = vsel %vm2104, %v8566, 0
    %8573 = vmatprep.subr.bf16.mxu0 %v7989
    %8574 = vmatpush1.bf16.msra.mxu0 %v7988
    %8575 = vmatprep.subr.bf16.mxu0 0
    %8576 = vmatpush1.bf16.msra.mxu0 0
    %8577 = vmatprep.subr.bf16.mxu0 0
    %8578 = vmatpush1.bf16.msra.mxu0 0
    %8579 = vmatprep.subr.bf16.mxu0 0
    %8580 = vmatpush1.bf16.msra.mxu0 0
    %8581 = vmatprep.subr.bf16.mxu0 0
    %8582 = vmatpush1.bf16.msra.mxu0 0
    %8583 = vmatprep.subr.bf16.mxu0 0
    %8584 = vmatpush1.bf16.msra.mxu0 0
    %8585 = vmatprep.subr.bf16.mxu0 0
    %8586 = vmatpush1.bf16.msra.mxu0 0
    %8587 = vmatprep.subr.bf16.mxu0 0
    %8588 = vmatpush1.bf16.msra.mxu0 0
    %8589 = vmatprep.subr.bf16.mxu0 0
    %8590 = vmatpush1.bf16.msra.mxu0 0
    %8591 = vmatprep.subr.bf16.mxu0 0
    %8592 = vmatpush1.bf16.msra.mxu0 0
    %8593 = vmatprep.subr.bf16.mxu0 0
    %8594 = vmatpush1.bf16.msra.mxu0 0
    %8595 = vmatprep.subr.bf16.mxu0 0
    %8596 = vmatpush1.bf16.msra.mxu0 0
    %8597 = vmatprep.subr.bf16.mxu0 0
    %8598 = vmatpush1.bf16.msra.mxu0 0
    %8599 = vmatprep.subr.bf16.mxu0 0
    %8600 = vmatpush1.bf16.msra.mxu0 0
    %8601 = vmatprep.subr.bf16.mxu0 0
    %8602 = vmatpush1.bf16.msra.mxu0 0
    %8603 = vmatprep.subr.bf16.mxu0 0
    %8604 = vmatpush1.bf16.msra.mxu0 0
    %8605 = vmatprep.mubr.bf16.mxu0 0
    %8606 = vmatmul.mubr.bf16.gmra.mrb[0].mxu0 %v8568
    %v8607 = vpop.f32.mrb[0].mxu0
    %v8608 = vadd.f32 0.0, %v8607
    %v8609 = vpop.f32.mrb[0].mxu0
    %v8610 = vadd.f32 0.0, %v8609
    %v8611 = vpop.f32.mrb[0].mxu0
    %v8612 = vadd.f32 0.0, %v8611
    %v8613 = vpop.f32.mrb[0].mxu0
    %v8614 = vadd.f32 0.0, %v8613
    %8615 = vmatprep.mubr.bf16.mxu0 0
    %8616 = vmatmul.mubr.bf16.gmra.mrb[0].mxu0 %v8571
    %v8617 = vpop.f32.mrb[0].mxu0
    %v8618 = vadd.f32 0.0, %v8617
    %v8619 = vpop.f32.mrb[0].mxu0
    %v8620 = vadd.f32 0.0, %v8619
    %v8621 = vpop.f32.mrb[0].mxu0
    %v8622 = vadd.f32 0.0, %v8621
    %v8623 = vpop.f32.mrb[0].mxu0
    %v8624 = vadd.f32 0.0, %v8623
    %8625 = vdwg.mxu0
    %v8626 = vpack.c.bf16 %v8612, %v8608
    %v8627 = vpack.c.bf16 %v8614, %v8610
    %v8628 = vpack.c.bf16 %v8622, %v8618
    %v8629 = vpack.c.bf16 %v8624, %v8620
    %s8630 = scalar_lea.vmem %s19, 384
    %v8631 = vld [vmem:[%s8630] sm:$0xff]
    %v8632 = vld [vmem:[%s8630 + $0x8] sm:$0xff]
    %v8633 = vld [vmem:[%s8630 + $0x10] sm:$0xff]
    %v8634 = vld [vmem:[%s8630 + $0x18] sm:$0xff]
    %v8635 = vld [vmem:[%s8630 + $0x20] sm:$0xff]
    %v8636 = vld [vmem:[%s8630 + $0x28] sm:$0xff]
    %v8637 = vld [vmem:[%s8630 + $0x30] sm:$0xff]
    %v8638 = vld [vmem:[%s8630 + $0x38] sm:$0xff]
    %v8639 = vld [vmem:[%s8630 + $0x40] sm:$0xff]
    %v8640 = vld [vmem:[%s8630 + $0x48] sm:$0xff]
    %v8641 = vld [vmem:[%s8630 + $0x50] sm:$0xff]
    %v8642 = vld [vmem:[%s8630 + $0x58] sm:$0xff]
    %v8643 = vld [vmem:[%s8630 + $0x60] sm:$0xff]
    %v8644 = vld [vmem:[%s8630 + $0x68] sm:$0xff]
    %v8645 = vld [vmem:[%s8630 + $0x70] sm:$0xff]
    %v8646 = vld [vmem:[%s8630 + $0x78] sm:$0xff]
    %v8647 = vld [vmem:[%s8630 + $0x80] sm:$0xff]
    %v8648 = vld [vmem:[%s8630 + $0x88] sm:$0xff]
    %v8649 = vld [vmem:[%s8630 + $0x90] sm:$0xff]
    %v8650 = vld [vmem:[%s8630 + $0x98] sm:$0xff]
    %v8651 = vld [vmem:[%s8630 + $0xa0] sm:$0xff]
    %v8652 = vld [vmem:[%s8630 + $0xa8] sm:$0xff]
    %v8653 = vld [vmem:[%s8630 + $0xb0] sm:$0xff]
    %v8654 = vld [vmem:[%s8630 + $0xb8] sm:$0xff]
    %v8679 = vunpack.c.l.b16 %v8631
    %v8680 = vunpack.c.h.b16 %v8631
    %v8681 = vunpack.c.l.b16 %v8632
    %v8682 = vunpack.c.h.b16 %v8632
    %v8683 = vunpack.c.l.b16 %v8633
    %v8684 = vunpack.c.h.b16 %v8633
    %v8685 = vunpack.c.l.b16 %v8634
    %v8686 = vunpack.c.h.b16 %v8634
    %v8687 = vunpack.c.l.b16 %v8635
    %v8688 = vunpack.c.h.b16 %v8635
    %v8689 = vunpack.c.l.b16 %v8636
    %v8690 = vunpack.c.h.b16 %v8636
    %v8691 = vunpack.c.l.b16 %v8637
    %v8692 = vunpack.c.h.b16 %v8637
    %v8693 = vunpack.c.l.b16 %v8638
    %v8694 = vunpack.c.h.b16 %v8638
    %v8695 = vunpack.c.l.b16 %v8639
    %v8696 = vunpack.c.h.b16 %v8639
    %v8697 = vunpack.c.l.b16 %v8640
    %v8698 = vunpack.c.h.b16 %v8640
    %v8699 = vunpack.c.l.b16 %v8641
    %v8700 = vunpack.c.h.b16 %v8641
    %v8701 = vunpack.c.l.b16 %v8642
    %v8702 = vunpack.c.h.b16 %v8642
    %v8703 = vunpack.c.l.b16 %v8643
    %v8704 = vunpack.c.h.b16 %v8643
    %v8705 = vunpack.c.l.b16 %v8644
    %v8706 = vunpack.c.h.b16 %v8644
    %v8707 = vunpack.c.l.b16 %v8645
    %v8708 = vunpack.c.h.b16 %v8645
    %v8709 = vunpack.c.l.b16 %v8646
    %v8710 = vunpack.c.h.b16 %v8646
    %v8711 = vunpack.c.l.b16 %v8647
    %v8712 = vunpack.c.h.b16 %v8647
    %v8713 = vunpack.c.l.b16 %v8648
    %v8714 = vunpack.c.h.b16 %v8648
    %v8715 = vunpack.c.l.b16 %v8649
    %v8716 = vunpack.c.h.b16 %v8649
    %v8717 = vunpack.c.l.b16 %v8650
    %v8718 = vunpack.c.h.b16 %v8650
    %v8719 = vunpack.c.l.b16 %v8651
    %v8720 = vunpack.c.h.b16 %v8651
    %v8721 = vunpack.c.l.b16 %v8652
    %v8722 = vunpack.c.h.b16 %v8652
    %v8723 = vunpack.c.l.b16 %v8653
    %v8724 = vunpack.c.h.b16 %v8653
    %v8725 = vunpack.c.l.b16 %v8654
    %v8726 = vunpack.c.h.b16 %v8654
    %v8727 = vpack.c.b16 %v8681, %v8679
    %v8728 = vpack.c.b16 %v8682, %v8680
    %v8729 = vpack.c.b16 %v8685, %v8683
    %v8730 = vpack.c.b16 %v8686, %v8684
    %v8731 = vpack.c.b16 %v8689, %v8687
    %v8732 = vpack.c.b16 %v8690, %v8688
    %v8733 = vpack.c.b16 %v8693, %v8691
    %v8734 = vpack.c.b16 %v8694, %v8692
    %v8735 = vpack.c.b16 %v8697, %v8695
    %v8736 = vpack.c.b16 %v8698, %v8696
    %v8737 = vpack.c.b16 %v8701, %v8699
    %v8738 = vpack.c.b16 %v8702, %v8700
    %v8739 = vpack.c.b16 %v8705, %v8703
    %v8740 = vpack.c.b16 %v8706, %v8704
    %v8741 = vpack.c.b16 %v8709, %v8707
    %v8742 = vpack.c.b16 %v8710, %v8708
    %v8743 = vpack.c.b16 %v8713, %v8711
    %v8744 = vpack.c.b16 %v8714, %v8712
    %v8745 = vpack.c.b16 %v8717, %v8715
    %v8746 = vpack.c.b16 %v8718, %v8716
    %v8747 = vpack.c.b16 %v8721, %v8719
    %v8748 = vpack.c.b16 %v8722, %v8720
    %v8749 = vpack.c.b16 %v8725, %v8723
    %v8750 = vpack.c.b16 %v8726, %v8724
    %v8776 = vsel %vm236, %v8627, 0
    %v8779 = vsel %vm236, %v8629, 0
    %8781 = vmatprep.subr.bf16.mxu0 %v8728
    %8782 = vmatpush1.bf16.msra.mxu0 %v8727
    %8783 = vmatprep.subr.bf16.mxu0 %v8730
    %8784 = vmatpush1.bf16.msra.mxu0 %v8729
    %8785 = vmatprep.subr.bf16.mxu0 %v8732
    %8786 = vmatpush1.bf16.msra.mxu0 %v8731
    %8787 = vmatprep.subr.bf16.mxu0 %v8734
    %8788 = vmatpush1.bf16.msra.mxu0 %v8733
    %8789 = vmatprep.subr.bf16.mxu0 %v8736
    %8790 = vmatpush1.bf16.msra.mxu0 %v8735
    %8791 = vmatprep.subr.bf16.mxu0 %v8738
    %8792 = vmatpush1.bf16.msra.mxu0 %v8737
    %8793 = vmatprep.subr.bf16.mxu0 %v8740
    %8794 = vmatpush1.bf16.msra.mxu0 %v8739
    %8795 = vmatprep.subr.bf16.mxu0 %v8742
    %8796 = vmatpush1.bf16.msra.mxu0 %v8741
    %8797 = vmatprep.subr.bf16.mxu0 %v8744
    %8798 = vmatpush1.bf16.msra.mxu0 %v8743
    %8799 = vmatprep.subr.bf16.mxu0 %v8746
    %8800 = vmatpush1.bf16.msra.mxu0 %v8745
    %8801 = vmatprep.subr.bf16.mxu0 %v8748
    %8802 = vmatpush1.bf16.msra.mxu0 %v8747
    %8803 = vmatprep.subr.bf16.mxu0 %v8750
    %8804 = vmatpush1.bf16.msra.mxu0 %v8749
    %8805 = vmatprep.subr.bf16.mxu0 0
    %8806 = vmatpush1.bf16.msra.mxu0 0
    %8807 = vmatprep.subr.bf16.mxu0 0
    %8808 = vmatpush1.bf16.msra.mxu0 0
    %8809 = vmatprep.subr.bf16.mxu0 0
    %8810 = vmatpush1.bf16.msra.mxu0 0
    %8811 = vmatprep.subr.bf16.mxu0 0
    %8812 = vmatpush1.bf16.msra.mxu0 0
    %8813 = vmatprep.mubr.bf16.mxu0 %v8776
    %8814 = vmatmul.mubr.bf16.gmra.mrb[0].mxu0 %v8626
    %v8815 = vpop.f32.mrb[0].mxu0
    %v8816 = vadd.f32 0.0, %v8815
    %v8817 = vpop.f32.mrb[0].mxu0
    %v8818 = vadd.f32 0.0, %v8817
    %v8819 = vpop.f32.mrb[0].mxu0
    %v8820 = vadd.f32 0.0, %v8819
    %v8821 = vpop.f32.mrb[0].mxu0
    %v8822 = vadd.f32 0.0, %v8821
    %8823 = vmatprep.mubr.bf16.mxu0 %v8779
    %8824 = vmatmul.mubr.bf16.gmra.mrb[0].mxu0 %v8628
    %v8825 = vpop.f32.mrb[0].mxu0
    %v8826 = vadd.f32 0.0, %v8825
    %v8827 = vpop.f32.mrb[0].mxu0
    %v8828 = vadd.f32 0.0, %v8827
    %v8829 = vpop.f32.mrb[0].mxu0
    %v8830 = vadd.f32 0.0, %v8829
    %v8831 = vpop.f32.mrb[0].mxu0
    %v8832 = vadd.f32 0.0, %v8831
    %8833 = vdwg.mxu0
    %v8834 = vadd.f32 %v8534, %v8816
    %v8835 = vadd.f32 %v8536, %v8818
    %v8836 = vadd.f32 %v8538, %v8820
    %v8837 = vadd.f32 %v8540, %v8822
    %v8838 = vadd.f32 %v8544, %v8826
    %v8839 = vadd.f32 %v8546, %v8828
    %v8840 = vadd.f32 %v8548, %v8830
    %v8841 = vadd.f32 %v8550, %v8832
    %s8842 = scalar_lea.vmem %s20, 48
    %v8843 = vld [vmem:[%s8842] sm:$0xf]
    %v8844 = vld [vmem:[%s8842 + $0x4] sm:$0xf]
    %v8845 = vld [vmem:[%s8842 + $0x8] sm:$0xf]
    %v8846 = vld [vmem:[%s8842 + $0xc] sm:$0xf]
    %v8851 = vunpack.c.l.b16 %v8843
    %v8852 = vunpack.c.l.b16 %v8844
    %v8853 = vunpack.c.l.b16 %v8845
    %v8854 = vunpack.c.l.b16 %v8846
    %v8855 = vpack.c.b16 %v8852, %v8851
    %v8856 = vpack.c.b16 %v8854, %v8853
    %v8858 = vsel %vm2104, %v8855, 0
    %v8861 = vsel %vm2104, %v8856, 0
    %8863 = vmatprep.subr.bf16.mxu0 %v7989
    %8864 = vmatpush1.bf16.msra.mxu0 %v7988
    %8865 = vmatprep.subr.bf16.mxu0 0
    %8866 = vmatpush1.bf16.msra.mxu0 0
    %8867 = vmatprep.subr.bf16.mxu0 0
    %8868 = vmatpush1.bf16.msra.mxu0 0
    %8869 = vmatprep.subr.bf16.mxu0 0
    %8870 = vmatpush1.bf16.msra.mxu0 0
    %8871 = vmatprep.subr.bf16.mxu0 0
    %8872 = vmatpush1.bf16.msra.mxu0 0
    %8873 = vmatprep.subr.bf16.mxu0 0
    %8874 = vmatpush1.bf16.msra.mxu0 0
    %8875 = vmatprep.subr.bf16.mxu0 0
    %8876 = vmatpush1.bf16.msra.mxu0 0
    %8877 = vmatprep.subr.bf16.mxu0 0
    %8878 = vmatpush1.bf16.msra.mxu0 0
    %8879 = vmatprep.subr.bf16.mxu0 0
    %8880 = vmatpush1.bf16.msra.mxu0 0
    %8881 = vmatprep.subr.bf16.mxu0 0
    %8882 = vmatpush1.bf16.msra.mxu0 0
    %8883 = vmatprep.subr.bf16.mxu0 0
    %8884 = vmatpush1.bf16.msra.mxu0 0
    %8885 = vmatprep.subr.bf16.mxu0 0
    %8886 = vmatpush1.bf16.msra.mxu0 0
    %8887 = vmatprep.subr.bf16.mxu0 0
    %8888 = vmatpush1.bf16.msra.mxu0 0
    %8889 = vmatprep.subr.bf16.mxu0 0
    %8890 = vmatpush1.bf16.msra.mxu0 0
    %8891 = vmatprep.subr.bf16.mxu0 0
    %8892 = vmatpush1.bf16.msra.mxu0 0
    %8893 = vmatprep.subr.bf16.mxu0 0
    %8894 = vmatpush1.bf16.msra.mxu0 0
    %8895 = vmatprep.mubr.bf16.mxu0 0
    %8896 = vmatmul.mubr.bf16.gmra.mrb[0].mxu0 %v8858
    %v8897 = vpop.f32.mrb[0].mxu0
    %v8898 = vadd.f32 0.0, %v8897
    %v8899 = vpop.f32.mrb[0].mxu0
    %v8900 = vadd.f32 0.0, %v8899
    %v8901 = vpop.f32.mrb[0].mxu0
    %v8902 = vadd.f32 0.0, %v8901
    %v8903 = vpop.f32.mrb[0].mxu0
    %v8904 = vadd.f32 0.0, %v8903
    %8905 = vmatprep.mubr.bf16.mxu0 0
    %8906 = vmatmul.mubr.bf16.gmra.mrb[0].mxu0 %v8861
    %v8907 = vpop.f32.mrb[0].mxu0
    %v8908 = vadd.f32 0.0, %v8907
    %v8909 = vpop.f32.mrb[0].mxu0
    %v8910 = vadd.f32 0.0, %v8909
    %v8911 = vpop.f32.mrb[0].mxu0
    %v8912 = vadd.f32 0.0, %v8911
    %v8913 = vpop.f32.mrb[0].mxu0
    %v8914 = vadd.f32 0.0, %v8913
    %8915 = vdwg.mxu0
    %v8916 = vpack.c.bf16 %v8902, %v8898
    %v8917 = vpack.c.bf16 %v8904, %v8900
    %v8918 = vpack.c.bf16 %v8912, %v8908
    %v8919 = vpack.c.bf16 %v8914, %v8910
    %s8920 = scalar_lea.vmem %s19, 576
    %v8921 = vld [vmem:[%s8920] sm:$0xff]
    %v8922 = vld [vmem:[%s8920 + $0x8] sm:$0xff]
    %v8923 = vld [vmem:[%s8920 + $0x10] sm:$0xff]
    %v8924 = vld [vmem:[%s8920 + $0x18] sm:$0xff]
    %v8925 = vld [vmem:[%s8920 + $0x20] sm:$0xff]
    %v8926 = vld [vmem:[%s8920 + $0x28] sm:$0xff]
    %v8927 = vld [vmem:[%s8920 + $0x30] sm:$0xff]
    %v8928 = vld [vmem:[%s8920 + $0x38] sm:$0xff]
    %v8929 = vld [vmem:[%s8920 + $0x40] sm:$0xff]
    %v8930 = vld [vmem:[%s8920 + $0x48] sm:$0xff]
    %v8931 = vld [vmem:[%s8920 + $0x50] sm:$0xff]
    %v8932 = vld [vmem:[%s8920 + $0x58] sm:$0xff]
    %v8933 = vld [vmem:[%s8920 + $0x60] sm:$0xff]
    %v8934 = vld [vmem:[%s8920 + $0x68] sm:$0xff]
    %v8935 = vld [vmem:[%s8920 + $0x70] sm:$0xff]
    %v8936 = vld [vmem:[%s8920 + $0x78] sm:$0xff]
    %v8937 = vld [vmem:[%s8920 + $0x80] sm:$0xff]
    %v8938 = vld [vmem:[%s8920 + $0x88] sm:$0xff]
    %v8939 = vld [vmem:[%s8920 + $0x90] sm:$0xff]
    %v8940 = vld [vmem:[%s8920 + $0x98] sm:$0xff]
    %v8941 = vld [vmem:[%s8920 + $0xa0] sm:$0xff]
    %v8942 = vld [vmem:[%s8920 + $0xa8] sm:$0xff]
    %v8943 = vld [vmem:[%s8920 + $0xb0] sm:$0xff]
    %v8944 = vld [vmem:[%s8920 + $0xb8] sm:$0xff]
    %v8969 = vunpack.c.l.b16 %v8921
    %v8970 = vunpack.c.h.b16 %v8921
    %v8971 = vunpack.c.l.b16 %v8922
    %v8972 = vunpack.c.h.b16 %v8922
    %v8973 = vunpack.c.l.b16 %v8923
    %v8974 = vunpack.c.h.b16 %v8923
    %v8975 = vunpack.c.l.b16 %v8924
    %v8976 = vunpack.c.h.b16 %v8924
    %v8977 = vunpack.c.l.b16 %v8925
    %v8978 = vunpack.c.h.b16 %v8925
    %v8979 = vunpack.c.l.b16 %v8926
    %v8980 = vunpack.c.h.b16 %v8926
    %v8981 = vunpack.c.l.b16 %v8927
    %v8982 = vunpack.c.h.b16 %v8927
    %v8983 = vunpack.c.l.b16 %v8928
    %v8984 = vunpack.c.h.b16 %v8928
    %v8985 = vunpack.c.l.b16 %v8929
    %v8986 = vunpack.c.h.b16 %v8929
    %v8987 = vunpack.c.l.b16 %v8930
    %v8988 = vunpack.c.h.b16 %v8930
    %v8989 = vunpack.c.l.b16 %v8931
    %v8990 = vunpack.c.h.b16 %v8931
    %v8991 = vunpack.c.l.b16 %v8932
    %v8992 = vunpack.c.h.b16 %v8932
    %v8993 = vunpack.c.l.b16 %v8933
    %v8994 = vunpack.c.h.b16 %v8933
    %v8995 = vunpack.c.l.b16 %v8934
    %v8996 = vunpack.c.h.b16 %v8934
    %v8997 = vunpack.c.l.b16 %v8935
    %v8998 = vunpack.c.h.b16 %v8935
    %v8999 = vunpack.c.l.b16 %v8936
    %v9000 = vunpack.c.h.b16 %v8936
    %v9001 = vunpack.c.l.b16 %v8937
    %v9002 = vunpack.c.h.b16 %v8937
    %v9003 = vunpack.c.l.b16 %v8938
    %v9004 = vunpack.c.h.b16 %v8938
    %v9005 = vunpack.c.l.b16 %v8939
    %v9006 = vunpack.c.h.b16 %v8939
    %v9007 = vunpack.c.l.b16 %v8940
    %v9008 = vunpack.c.h.b16 %v8940
    %v9009 = vunpack.c.l.b16 %v8941
    %v9010 = vunpack.c.h.b16 %v8941
    %v9011 = vunpack.c.l.b16 %v8942
    %v9012 = vunpack.c.h.b16 %v8942
    %v9013 = vunpack.c.l.b16 %v8943
    %v9014 = vunpack.c.h.b16 %v8943
    %v9015 = vunpack.c.l.b16 %v8944
    %v9016 = vunpack.c.h.b16 %v8944
    %v9017 = vpack.c.b16 %v8971, %v8969
    %v9018 = vpack.c.b16 %v8972, %v8970
    %v9019 = vpack.c.b16 %v8975, %v8973
    %v9020 = vpack.c.b16 %v8976, %v8974
    %v9021 = vpack.c.b16 %v8979, %v8977
    %v9022 = vpack.c.b16 %v8980, %v8978
    %v9023 = vpack.c.b16 %v8983, %v8981
    %v9024 = vpack.c.b16 %v8984, %v8982
    %v9025 = vpack.c.b16 %v8987, %v8985
    %v9026 = vpack.c.b16 %v8988, %v8986
    %v9027 = vpack.c.b16 %v8991, %v8989
    %v9028 = vpack.c.b16 %v8992, %v8990
    %v9029 = vpack.c.b16 %v8995, %v8993
    %v9030 = vpack.c.b16 %v8996, %v8994
    %v9031 = vpack.c.b16 %v8999, %v8997
    %v9032 = vpack.c.b16 %v9000, %v8998
    %v9033 = vpack.c.b16 %v9003, %v9001
    %v9034 = vpack.c.b16 %v9004, %v9002
    %v9035 = vpack.c.b16 %v9007, %v9005
    %v9036 = vpack.c.b16 %v9008, %v9006
    %v9037 = vpack.c.b16 %v9011, %v9009
    %v9038 = vpack.c.b16 %v9012, %v9010
    %v9039 = vpack.c.b16 %v9015, %v9013
    %v9040 = vpack.c.b16 %v9016, %v9014
    %v9066 = vsel %vm236, %v8917, 0
    %v9069 = vsel %vm236, %v8919, 0
    %9071 = vmatprep.subr.bf16.mxu0 %v9018
    %9072 = vmatpush1.bf16.msra.mxu0 %v9017
    %9073 = vmatprep.subr.bf16.mxu0 %v9020
    %9074 = vmatpush1.bf16.msra.mxu0 %v9019
    %9075 = vmatprep.subr.bf16.mxu0 %v9022
    %9076 = vmatpush1.bf16.msra.mxu0 %v9021
    %9077 = vmatprep.subr.bf16.mxu0 %v9024
    %9078 = vmatpush1.bf16.msra.mxu0 %v9023
    %9079 = vmatprep.subr.bf16.mxu0 %v9026
    %9080 = vmatpush1.bf16.msra.mxu0 %v9025
    %9081 = vmatprep.subr.bf16.mxu0 %v9028
    %9082 = vmatpush1.bf16.msra.mxu0 %v9027
    %9083 = vmatprep.subr.bf16.mxu0 %v9030
    %9084 = vmatpush1.bf16.msra.mxu0 %v9029
    %9085 = vmatprep.subr.bf16.mxu0 %v9032
    %9086 = vmatpush1.bf16.msra.mxu0 %v9031
    %9087 = vmatprep.subr.bf16.mxu0 %v9034
    %9088 = vmatpush1.bf16.msra.mxu0 %v9033
    %9089 = vmatprep.subr.bf16.mxu0 %v9036
    %9090 = vmatpush1.bf16.msra.mxu0 %v9035
    %9091 = vmatprep.subr.bf16.mxu0 %v9038
    %9092 = vmatpush1.bf16.msra.mxu0 %v9037
    %9093 = vmatprep.subr.bf16.mxu0 %v9040
    %9094 = vmatpush1.bf16.msra.mxu0 %v9039
    %9095 = vmatprep.subr.bf16.mxu0 0
    %9096 = vmatpush1.bf16.msra.mxu0 0
    %9097 = vmatprep.subr.bf16.mxu0 0
    %9098 = vmatpush1.bf16.msra.mxu0 0
    %9099 = vmatprep.subr.bf16.mxu0 0
    %9100 = vmatpush1.bf16.msra.mxu0 0
    %9101 = vmatprep.subr.bf16.mxu0 0
    %9102 = vmatpush1.bf16.msra.mxu0 0
    %9103 = vmatprep.mubr.bf16.mxu0 %v9066
    %9104 = vmatmul.mubr.bf16.gmra.mrb[0].mxu0 %v8916
    %v9105 = vpop.f32.mrb[0].mxu0
    %v9106 = vadd.f32 0.0, %v9105
    %v9107 = vpop.f32.mrb[0].mxu0
    %v9108 = vadd.f32 0.0, %v9107
    %v9109 = vpop.f32.mrb[0].mxu0
    %v9110 = vadd.f32 0.0, %v9109
    %v9111 = vpop.f32.mrb[0].mxu0
    %v9112 = vadd.f32 0.0, %v9111
    %9113 = vmatprep.mubr.bf16.mxu0 %v9069
    %9114 = vmatmul.mubr.bf16.gmra.mrb[0].mxu0 %v8918
    %v9115 = vpop.f32.mrb[0].mxu0
    %v9116 = vadd.f32 0.0, %v9115
    %v9117 = vpop.f32.mrb[0].mxu0
    %v9118 = vadd.f32 0.0, %v9117
    %v9119 = vpop.f32.mrb[0].mxu0
    %v9120 = vadd.f32 0.0, %v9119
    %v9121 = vpop.f32.mrb[0].mxu0
    %v9122 = vadd.f32 0.0, %v9121
    %9123 = vdwg.mxu0
    %v9124 = vadd.f32 %v8834, %v9106
    %v9125 = vadd.f32 %v8835, %v9108
    %v9126 = vadd.f32 %v8836, %v9110
    %v9127 = vadd.f32 %v8837, %v9112
    %v9128 = vadd.f32 %v8838, %v9116
    %v9129 = vadd.f32 %v8839, %v9118
    %v9130 = vadd.f32 %v8840, %v9120
    %v9131 = vadd.f32 %v8841, %v9122
    %v9132 = vld [vmem:[#allocation16] sm:$0x3]
    %v9134 = vlaneseq
    %v9135 = vshrl.u32 %v9134, 7
    %v9136 = vsub.s32 0, %v9135
    %v9137 = vrot.slane %v9132, %v9136
    %v9138 = vlaneseq
    %v9139 = vshrl.u32 %v9138, 7
    %v9140 = vsub.s32 1, %v9139
    %v9141 = vrot.slane %v9132, %v9140
    %v9144 = vadd.f32 %v9124, %v9137
    %v9145 = vadd.f32 %v9125, %v9141
    %v9146 = vadd.f32 %v9126, %v9137
    %v9147 = vadd.f32 %v9127, %v9141
    %v9148 = vadd.f32 %v9128, %v9137
    %v9149 = vadd.f32 %v9129, %v9141
    %v9150 = vadd.f32 %v9130, %v9137
    %v9151 = vadd.f32 %v9131, %v9141
    %v9152 = vmax.f32 %v9144, 0.0
    %v9153 = vmax.f32 %v9145, 0.0
    %v9154 = vmax.f32 %v9146, 0.0
    %v9155 = vmax.f32 %v9147, 0.0
    %v9156 = vmax.f32 %v9148, 0.0
    %v9157 = vmax.f32 %v9149, 0.0
    %v9158 = vmax.f32 %v9150, 0.0
    %v9159 = vmax.f32 %v9151, 0.0
    %v9160 = vpack.c.bf16 %v9154, %v9152
    %v9161 = vpack.c.bf16 %v9155, %v9153
    %v9162 = vpack.c.bf16 %v9158, %v9156
    %v9163 = vpack.c.bf16 %v9159, %v9157
    %v9164 = vld [vmem:[%s23] sm:$0xf]
    %v9165 = vld [vmem:[%s23 + $0x4] sm:$0xf]
    %v9166 = vld [vmem:[%s23 + $0x8] sm:$0xf]
    %v9167 = vld [vmem:[%s23 + $0xc] sm:$0xf]
    %v9168 = vld [vmem:[%s23 + $0x10] sm:$0xf]
    %v9169 = vld [vmem:[%s23 + $0x14] sm:$0xf]
    %v9170 = vld [vmem:[%s23 + $0x18] sm:$0xf]
    %v9171 = vld [vmem:[%s23 + $0x1c] sm:$0xf]
    %v9180 = vunpack.c.l.b16 %v9164
    %v9181 = vunpack.c.l.b16 %v9165
    %v9182 = vunpack.c.l.b16 %v9166
    %v9183 = vunpack.c.l.b16 %v9167
    %v9184 = vunpack.c.l.b16 %v9168
    %v9185 = vunpack.c.l.b16 %v9169
    %v9186 = vunpack.c.l.b16 %v9170
    %v9187 = vunpack.c.l.b16 %v9171
    %v9188 = vpack.c.b16 %v9181, %v9180
    %v9189 = vpack.c.b16 %v9183, %v9182
    %v9190 = vpack.c.b16 %v9185, %v9184
    %v9191 = vpack.c.b16 %v9187, %v9186
    %v9193 = vsel %vm1093, %v9188, 0
    %v9196 = vsel %vm1093, %v9189, 0
    %v9199 = vsel %vm1093, %v9190, 0
    %v9202 = vsel %vm1093, %v9191, 0
    %9204 = vmatprep.subr.bf16.mxu0 %v9161
    %9205 = vmatpush1.bf16.msra.mxu0 %v9160
    %9206 = vmatprep.subr.bf16.mxu0 %v9163
    %9207 = vmatpush1.bf16.msra.mxu0 %v9162
    %9208 = vmatprep.subr.bf16.mxu0 0
    %9209 = vmatpush1.bf16.msra.mxu0 0
    %9210 = vmatprep.subr.bf16.mxu0 0
    %9211 = vmatpush1.bf16.msra.mxu0 0
    %9212 = vmatprep.subr.bf16.mxu0 0
    %9213 = vmatpush1.bf16.msra.mxu0 0
    %9214 = vmatprep.subr.bf16.mxu0 0
    %9215 = vmatpush1.bf16.msra.mxu0 0
    %9216 = vmatprep.subr.bf16.mxu0 0
    %9217 = vmatpush1.bf16.msra.mxu0 0
    %9218 = vmatprep.subr.bf16.mxu0 0
    %9219 = vmatpush1.bf16.msra.mxu0 0
    %9220 = vmatprep.subr.bf16.mxu0 0
    %9221 = vmatpush1.bf16.msra.mxu0 0
    %9222 = vmatprep.subr.bf16.mxu0 0
    %9223 = vmatpush1.bf16.msra.mxu0 0
    %9224 = vmatprep.subr.bf16.mxu0 0
    %9225 = vmatpush1.bf16.msra.mxu0 0
    %9226 = vmatprep.subr.bf16.mxu0 0
    %9227 = vmatpush1.bf16.msra.mxu0 0
    %9228 = vmatprep.subr.bf16.mxu0 0
    %9229 = vmatpush1.bf16.msra.mxu0 0
    %9230 = vmatprep.subr.bf16.mxu0 0
    %9231 = vmatpush1.bf16.msra.mxu0 0
    %9232 = vmatprep.subr.bf16.mxu0 0
    %9233 = vmatpush1.bf16.msra.mxu0 0
    %9234 = vmatprep.subr.bf16.mxu0 0
    %9235 = vmatpush1.bf16.msra.mxu0 0
    %9236 = vmatprep.mubr.bf16.mxu0 0
    %9237 = vmatmul.mubr.bf16.gmra.mrb[0].mxu0 %v9193
    %v9238 = vpop.f32.mrb[0].mxu0
    %v9239 = vadd.f32 0.0, %v9238
    %v9240 = vpop.f32.mrb[0].mxu0
    %v9241 = vadd.f32 0.0, %v9240
    %v9242 = vpop.f32.mrb[0].mxu0
    %v9243 = vadd.f32 0.0, %v9242
    %v9244 = vpop.f32.mrb[0].mxu0
    %v9245 = vadd.f32 0.0, %v9244
    %9246 = vmatprep.mubr.bf16.mxu0 0
    %9247 = vmatmul.mubr.bf16.gmra.mrb[0].mxu0 %v9196
    %v9248 = vpop.f32.mrb[0].mxu0
    %v9249 = vadd.f32 0.0, %v9248
    %v9250 = vpop.f32.mrb[0].mxu0
    %v9251 = vadd.f32 0.0, %v9250
    %v9252 = vpop.f32.mrb[0].mxu0
    %v9253 = vadd.f32 0.0, %v9252
    %v9254 = vpop.f32.mrb[0].mxu0
    %v9255 = vadd.f32 0.0, %v9254
    %9256 = vmatprep.mubr.bf16.mxu0 0
    %9257 = vmatmul.mubr.bf16.gmra.mrb[0].mxu0 %v9199
    %v9258 = vpop.f32.mrb[0].mxu0
    %v9259 = vadd.f32 0.0, %v9258
    %v9260 = vpop.f32.mrb[0].mxu0
    %v9261 = vadd.f32 0.0, %v9260
    %v9262 = vpop.f32.mrb[0].mxu0
    %v9263 = vadd.f32 0.0, %v9262
    %v9264 = vpop.f32.mrb[0].mxu0
    %v9265 = vadd.f32 0.0, %v9264
    %9266 = vmatprep.mubr.bf16.mxu0 0
    %9267 = vmatmul.mubr.bf16.gmra.mrb[0].mxu0 %v9202
    %v9268 = vpop.f32.mrb[0].mxu0
    %v9269 = vadd.f32 0.0, %v9268
    %v9270 = vpop.f32.mrb[0].mxu0
    %v9271 = vadd.f32 0.0, %v9270
    %v9272 = vpop.f32.mrb[0].mxu0
    %v9273 = vadd.f32 0.0, %v9272
    %v9274 = vpop.f32.mrb[0].mxu0
    %v9275 = vadd.f32 0.0, %v9274
    %9276 = vdwg.mxu0
    %v9277 = vpack.c.bf16 %v9243, %v9239
    %v9278 = vpack.c.bf16 %v9245, %v9241
    %v9279 = vpack.c.bf16 %v9253, %v9249
    %v9280 = vpack.c.bf16 %v9255, %v9251
    %v9281 = vpack.c.bf16 %v9263, %v9259
    %v9282 = vpack.c.bf16 %v9265, %v9261
    %v9283 = vpack.c.bf16 %v9273, %v9269
    %v9284 = vpack.c.bf16 %v9275, %v9271
    %v9285 = vld [vmem:[#allocation17] sm:$0xf]
    %v9286 = vld [vmem:[#allocation17 + $0x4] sm:$0xf]
    %v9287 = vld [vmem:[#allocation17 + $0x8] sm:$0xf]
    %v9288 = vld [vmem:[#allocation17 + $0xc] sm:$0xf]
    %v9289 = vld [vmem:[#allocation17 + $0x10] sm:$0xf]
    %v9290 = vld [vmem:[#allocation17 + $0x14] sm:$0xf]
    %v9291 = vld [vmem:[#allocation17 + $0x18] sm:$0xf]
    %v9292 = vld [vmem:[#allocation17 + $0x1c] sm:$0xf]
    %v9293 = vld [vmem:[#allocation17 + $0x20] sm:$0xf]
    %v9294 = vld [vmem:[#allocation17 + $0x24] sm:$0xf]
    %v9295 = vld [vmem:[#allocation17 + $0x28] sm:$0xf]
    %v9296 = vld [vmem:[#allocation17 + $0x2c] sm:$0xf]
    %v9297 = vld [vmem:[#allocation17 + $0x30] sm:$0xf]
    %v9298 = vld [vmem:[#allocation17 + $0x34] sm:$0xf]
    %v9299 = vld [vmem:[#allocation17 + $0x38] sm:$0xf]
    %v9300 = vld [vmem:[#allocation17 + $0x3c] sm:$0xf]
    %v9301 = vld [vmem:[#allocation17 + $0x40] sm:$0xf]
    %v9302 = vld [vmem:[#allocation17 + $0x44] sm:$0xf]
    %v9303 = vld [vmem:[#allocation17 + $0x48] sm:$0xf]
    %v9304 = vld [vmem:[#allocation17 + $0x4c] sm:$0xf]
    %v9305 = vld [vmem:[#allocation17 + $0x50] sm:$0xf]
    %v9306 = vld [vmem:[#allocation17 + $0x54] sm:$0xf]
    %v9307 = vld [vmem:[#allocation17 + $0x58] sm:$0xf]
    %v9308 = vld [vmem:[#allocation17 + $0x5c] sm:$0xf]
    %s9309 = scalar_lea.vmem %s23, 32
    %v9310 = vld [vmem:[%s9309] sm:$0xf]
    %v9311 = vld [vmem:[%s9309 + $0x4] sm:$0xf]
    %v9312 = vld [vmem:[%s9309 + $0x8] sm:$0xf]
    %v9313 = vld [vmem:[%s9309 + $0xc] sm:$0xf]
    %v9314 = vld [vmem:[%s9309 + $0x10] sm:$0xf]
    %v9315 = vld [vmem:[%s9309 + $0x14] sm:$0xf]
    %v9316 = vld [vmem:[%s9309 + $0x18] sm:$0xf]
    %v9317 = vld [vmem:[%s9309 + $0x1c] sm:$0xf]
    %v9326 = vunpack.c.l.b16 %v9310
    %v9327 = vunpack.c.l.b16 %v9311
    %v9328 = vunpack.c.l.b16 %v9312
    %v9329 = vunpack.c.l.b16 %v9313
    %v9330 = vunpack.c.l.b16 %v9314
    %v9331 = vunpack.c.l.b16 %v9315
    %v9332 = vunpack.c.l.b16 %v9316
    %v9333 = vunpack.c.l.b16 %v9317
    %v9334 = vpack.c.b16 %v9327, %v9326
    %v9335 = vpack.c.b16 %v9329, %v9328
    %v9336 = vpack.c.b16 %v9331, %v9330
    %v9337 = vpack.c.b16 %v9333, %v9332
    %v9339 = vsel %vm1093, %v9334, 0
    %v9342 = vsel %vm1093, %v9335, 0
    %v9345 = vsel %vm1093, %v9336, 0
    %v9348 = vsel %vm1093, %v9337, 0
    %9350 = vmatprep.subr.bf16.mxu0 %v9161
    %9351 = vmatpush1.bf16.msra.mxu0 %v9160
    %9352 = vmatprep.subr.bf16.mxu0 %v9163
    %9353 = vmatpush1.bf16.msra.mxu0 %v9162
    %9354 = vmatprep.subr.bf16.mxu0 0
    %9355 = vmatpush1.bf16.msra.mxu0 0
    %9356 = vmatprep.subr.bf16.mxu0 0
    %9357 = vmatpush1.bf16.msra.mxu0 0
    %9358 = vmatprep.subr.bf16.mxu0 0
    %9359 = vmatpush1.bf16.msra.mxu0 0
    %9360 = vmatprep.subr.bf16.mxu0 0
    %9361 = vmatpush1.bf16.msra.mxu0 0
    %9362 = vmatprep.subr.bf16.mxu0 0
    %9363 = vmatpush1.bf16.msra.mxu0 0
    %9364 = vmatprep.subr.bf16.mxu0 0
    %9365 = vmatpush1.bf16.msra.mxu0 0
    %9366 = vmatprep.subr.bf16.mxu0 0
    %9367 = vmatpush1.bf16.msra.mxu0 0
    %9368 = vmatprep.subr.bf16.mxu0 0
    %9369 = vmatpush1.bf16.msra.mxu0 0
    %9370 = vmatprep.subr.bf16.mxu0 0
    %9371 = vmatpush1.bf16.msra.mxu0 0
    %9372 = vmatprep.subr.bf16.mxu0 0
    %9373 = vmatpush1.bf16.msra.mxu0 0
    %9374 = vmatprep.subr.bf16.mxu0 0
    %9375 = vmatpush1.bf16.msra.mxu0 0
    %9376 = vmatprep.subr.bf16.mxu0 0
    %9377 = vmatpush1.bf16.msra.mxu0 0
    %9378 = vmatprep.subr.bf16.mxu0 0
    %9379 = vmatpush1.bf16.msra.mxu0 0
    %9380 = vmatprep.subr.bf16.mxu0 0
    %9381 = vmatpush1.bf16.msra.mxu0 0
    %9382 = vmatprep.mubr.bf16.mxu0 0
    %9383 = vmatmul.mubr.bf16.gmra.mrb[0].mxu0 %v9339
    %v9384 = vpop.f32.mrb[0].mxu0
    %v9385 = vadd.f32 0.0, %v9384
    %v9386 = vpop.f32.mrb[0].mxu0
    %v9387 = vadd.f32 0.0, %v9386
    %v9388 = vpop.f32.mrb[0].mxu0
    %v9389 = vadd.f32 0.0, %v9388
    %v9390 = vpop.f32.mrb[0].mxu0
    %v9391 = vadd.f32 0.0, %v9390
    %9392 = vmatprep.mubr.bf16.mxu0 0
    %9393 = vmatmul.mubr.bf16.gmra.mrb[0].mxu0 %v9342
    %v9394 = vpop.f32.mrb[0].mxu0
    %v9395 = vadd.f32 0.0, %v9394
    %v9396 = vpop.f32.mrb[0].mxu0
    %v9397 = vadd.f32 0.0, %v9396
    %v9398 = vpop.f32.mrb[0].mxu0
    %v9399 = vadd.f32 0.0, %v9398
    %v9400 = vpop.f32.mrb[0].mxu0
    %v9401 = vadd.f32 0.0, %v9400
    %9402 = vmatprep.mubr.bf16.mxu0 0
    %9403 = vmatmul.mubr.bf16.gmra.mrb[0].mxu0 %v9345
    %v9404 = vpop.f32.mrb[0].mxu0
    %v9405 = vadd.f32 0.0, %v9404
    %v9406 = vpop.f32.mrb[0].mxu0
    %v9407 = vadd.f32 0.0, %v9406
    %v9408 = vpop.f32.mrb[0].mxu0
    %v9409 = vadd.f32 0.0, %v9408
    %v9410 = vpop.f32.mrb[0].mxu0
    %v9411 = vadd.f32 0.0, %v9410
    %9412 = vmatprep.mubr.bf16.mxu0 0
    %9413 = vmatmul.mubr.bf16.gmra.mrb[0].mxu0 %v9348
    %v9414 = vpop.f32.mrb[0].mxu0
    %v9415 = vadd.f32 0.0, %v9414
    %v9416 = vpop.f32.mrb[0].mxu0
    %v9417 = vadd.f32 0.0, %v9416
    %v9418 = vpop.f32.mrb[0].mxu0
    %v9419 = vadd.f32 0.0, %v9418
    %v9420 = vpop.f32.mrb[0].mxu0
    %v9421 = vadd.f32 0.0, %v9420
    %9422 = vdwg.mxu0
    %v9423 = vpack.c.bf16 %v9389, %v9385
    %v9424 = vpack.c.bf16 %v9391, %v9387
    %v9425 = vpack.c.bf16 %v9399, %v9395
    %v9426 = vpack.c.bf16 %v9401, %v9397
    %v9427 = vpack.c.bf16 %v9409, %v9405
    %v9428 = vpack.c.bf16 %v9411, %v9407
    %v9429 = vpack.c.bf16 %v9419, %v9415
    %v9430 = vpack.c.bf16 %v9421, %v9417
    %s9431 = scalar_lea.vmem [#allocation17], 96
    %v9432 = vld [vmem:[%s9431] sm:$0xf]
    %v9433 = vld [vmem:[%s9431 + $0x4] sm:$0xf]
    %v9434 = vld [vmem:[%s9431 + $0x8] sm:$0xf]
    %v9435 = vld [vmem:[%s9431 + $0xc] sm:$0xf]
    %v9436 = vld [vmem:[%s9431 + $0x10] sm:$0xf]
    %v9437 = vld [vmem:[%s9431 + $0x14] sm:$0xf]
    %v9438 = vld [vmem:[%s9431 + $0x18] sm:$0xf]
    %v9439 = vld [vmem:[%s9431 + $0x1c] sm:$0xf]
    %v9440 = vld [vmem:[%s9431 + $0x20] sm:$0xf]
    %v9441 = vld [vmem:[%s9431 + $0x24] sm:$0xf]
    %v9442 = vld [vmem:[%s9431 + $0x28] sm:$0xf]
    %v9443 = vld [vmem:[%s9431 + $0x2c] sm:$0xf]
    %v9444 = vld [vmem:[%s9431 + $0x30] sm:$0xf]
    %v9445 = vld [vmem:[%s9431 + $0x34] sm:$0xf]
    %v9446 = vld [vmem:[%s9431 + $0x38] sm:$0xf]
    %v9447 = vld [vmem:[%s9431 + $0x3c] sm:$0xf]
    %v9448 = vld [vmem:[%s9431 + $0x40] sm:$0xf]
    %v9449 = vld [vmem:[%s9431 + $0x44] sm:$0xf]
    %v9450 = vld [vmem:[%s9431 + $0x48] sm:$0xf]
    %v9451 = vld [vmem:[%s9431 + $0x4c] sm:$0xf]
    %v9452 = vld [vmem:[%s9431 + $0x50] sm:$0xf]
    %v9453 = vld [vmem:[%s9431 + $0x54] sm:$0xf]
    %v9454 = vld [vmem:[%s9431 + $0x58] sm:$0xf]
    %v9455 = vld [vmem:[%s9431 + $0x5c] sm:$0xf]
    %v9480 = vunpack.c.l.b16 %v9432
    %v9481 = vunpack.c.l.b16 %v9433
    %v9482 = vunpack.c.l.b16 %v9434
    %v9483 = vunpack.c.l.b16 %v9435
    %v9484 = vunpack.c.l.b16 %v9436
    %v9485 = vunpack.c.l.b16 %v9437
    %v9486 = vunpack.c.l.b16 %v9438
    %v9487 = vunpack.c.l.b16 %v9439
    %v9488 = vunpack.c.l.b16 %v9440
    %v9489 = vunpack.c.l.b16 %v9441
    %v9490 = vunpack.c.l.b16 %v9442
    %v9491 = vunpack.c.l.b16 %v9443
    %v9492 = vunpack.c.l.b16 %v9444
    %v9493 = vunpack.c.l.b16 %v9445
    %v9494 = vunpack.c.l.b16 %v9446
    %v9495 = vunpack.c.l.b16 %v9447
    %v9496 = vunpack.c.l.b16 %v9448
    %v9497 = vunpack.c.l.b16 %v9449
    %v9498 = vunpack.c.l.b16 %v9450
    %v9499 = vunpack.c.l.b16 %v9451
    %v9500 = vunpack.c.l.b16 %v9452
    %v9501 = vunpack.c.l.b16 %v9453
    %v9502 = vunpack.c.l.b16 %v9454
    %v9503 = vunpack.c.l.b16 %v9455
    %v9504 = vpack.c.b16 %v9481, %v9480
    %v9505 = vpack.c.b16 %v9483, %v9482
    %v9506 = vpack.c.b16 %v9485, %v9484
    %v9507 = vpack.c.b16 %v9487, %v9486
    %v9508 = vpack.c.b16 %v9489, %v9488
    %v9509 = vpack.c.b16 %v9491, %v9490
    %v9510 = vpack.c.b16 %v9493, %v9492
    %v9511 = vpack.c.b16 %v9495, %v9494
    %v9512 = vpack.c.b16 %v9497, %v9496
    %v9513 = vpack.c.b16 %v9499, %v9498
    %v9514 = vpack.c.b16 %v9501, %v9500
    %v9515 = vpack.c.b16 %v9503, %v9502
    %v9529 = vsel %vm236, %v9424, 0
    %v9532 = vsel %vm236, %v9426, 0
    %v9535 = vsel %vm236, %v9428, 0
    %v9538 = vsel %vm236, %v9430, 0
    %9540 = vmatprep.subr.bf16.mxu0 0
    %9541 = vmatpush1.bf16.msra.mxu0 %v9504
    %9542 = vmatprep.subr.bf16.mxu0 0
    %9543 = vmatpush1.bf16.msra.mxu0 %v9505
    %9544 = vmatprep.subr.bf16.mxu0 0
    %9545 = vmatpush1.bf16.msra.mxu0 %v9506
    %9546 = vmatprep.subr.bf16.mxu0 0
    %9547 = vmatpush1.bf16.msra.mxu0 %v9507
    %9548 = vmatprep.subr.bf16.mxu0 0
    %9549 = vmatpush1.bf16.msra.mxu0 %v9508
    %9550 = vmatprep.subr.bf16.mxu0 0
    %9551 = vmatpush1.bf16.msra.mxu0 %v9509
    %9552 = vmatprep.subr.bf16.mxu0 0
    %9553 = vmatpush1.bf16.msra.mxu0 %v9510
    %9554 = vmatprep.subr.bf16.mxu0 0
    %9555 = vmatpush1.bf16.msra.mxu0 %v9511
    %9556 = vmatprep.subr.bf16.mxu0 0
    %9557 = vmatpush1.bf16.msra.mxu0 %v9512
    %9558 = vmatprep.subr.bf16.mxu0 0
    %9559 = vmatpush1.bf16.msra.mxu0 %v9513
    %9560 = vmatprep.subr.bf16.mxu0 0
    %9561 = vmatpush1.bf16.msra.mxu0 %v9514
    %9562 = vmatprep.subr.bf16.mxu0 0
    %9563 = vmatpush1.bf16.msra.mxu0 %v9515
    %9564 = vmatprep.subr.bf16.mxu0 0
    %9565 = vmatpush1.bf16.msra.mxu0 0
    %9566 = vmatprep.subr.bf16.mxu0 0
    %9567 = vmatpush1.bf16.msra.mxu0 0
    %9568 = vmatprep.subr.bf16.mxu0 0
    %9569 = vmatpush1.bf16.msra.mxu0 0
    %9570 = vmatprep.subr.bf16.mxu0 0
    %9571 = vmatpush1.bf16.msra.mxu0 0
    %9572 = vmatprep.mubr.bf16.mxu0 %v9529
    %9573 = vmatmul.mubr.bf16.gmra.mrb[0].mxu0 %v9423
    %v9574 = vpop.f32.mrb[0].mxu0
    %v9575 = vadd.f32 0.0, %v9574
    %v9576 = vpop.f32.mrb[0].mxu0
    %v9577 = vpop.f32.mrb[0].mxu0
    %v9578 = vadd.f32 0.0, %v9577
    %v9579 = vpop.f32.mrb[0].mxu0
    %9580 = vmatprep.mubr.bf16.mxu0 %v9532
    %9581 = vmatmul.mubr.bf16.gmra.mrb[0].mxu0 %v9425
    %v9582 = vpop.f32.mrb[0].mxu0
    %v9583 = vadd.f32 0.0, %v9582
    %v9584 = vpop.f32.mrb[0].mxu0
    %v9585 = vpop.f32.mrb[0].mxu0
    %v9586 = vadd.f32 0.0, %v9585
    %v9587 = vpop.f32.mrb[0].mxu0
    %9588 = vmatprep.mubr.bf16.mxu0 %v9535
    %9589 = vmatmul.mubr.bf16.gmra.mrb[0].mxu0 %v9427
    %v9590 = vpop.f32.mrb[0].mxu0
    %v9591 = vadd.f32 0.0, %v9590
    %v9592 = vpop.f32.mrb[0].mxu0
    %v9593 = vpop.f32.mrb[0].mxu0
    %v9594 = vadd.f32 0.0, %v9593
    %v9595 = vpop.f32.mrb[0].mxu0
    %9596 = vmatprep.mubr.bf16.mxu0 %v9538
    %9597 = vmatmul.mubr.bf16.gmra.mrb[0].mxu0 %v9429
    %v9598 = vpop.f32.mrb[0].mxu0
    %v9599 = vadd.f32 0.0, %v9598
    %v9600 = vpop.f32.mrb[0].mxu0
    %v9601 = vpop.f32.mrb[0].mxu0
    %v9602 = vadd.f32 0.0, %v9601
    %v9603 = vpop.f32.mrb[0].mxu0
    %9604 = vdwg.mxu0
    %v9629 = vunpack.c.l.b16 %v9285
    %v9630 = vunpack.c.l.b16 %v9286
    %v9631 = vunpack.c.l.b16 %v9287
    %v9632 = vunpack.c.l.b16 %v9288
    %v9633 = vunpack.c.l.b16 %v9289
    %v9634 = vunpack.c.l.b16 %v9290
    %v9635 = vunpack.c.l.b16 %v9291
    %v9636 = vunpack.c.l.b16 %v9292
    %v9637 = vunpack.c.l.b16 %v9293
    %v9638 = vunpack.c.l.b16 %v9294
    %v9639 = vunpack.c.l.b16 %v9295
    %v9640 = vunpack.c.l.b16 %v9296
    %v9641 = vunpack.c.l.b16 %v9297
    %v9642 = vunpack.c.l.b16 %v9298
    %v9643 = vunpack.c.l.b16 %v9299
    %v9644 = vunpack.c.l.b16 %v9300
    %v9645 = vunpack.c.l.b16 %v9301
    %v9646 = vunpack.c.l.b16 %v9302
    %v9647 = vunpack.c.l.b16 %v9303
    %v9648 = vunpack.c.l.b16 %v9304
    %v9649 = vunpack.c.l.b16 %v9305
    %v9650 = vunpack.c.l.b16 %v9306
    %v9651 = vunpack.c.l.b16 %v9307
    %v9652 = vunpack.c.l.b16 %v9308
    %v9653 = vpack.c.b16 %v9630, %v9629
    %v9654 = vpack.c.b16 %v9632, %v9631
    %v9655 = vpack.c.b16 %v9634, %v9633
    %v9656 = vpack.c.b16 %v9636, %v9635
    %v9657 = vpack.c.b16 %v9638, %v9637
    %v9658 = vpack.c.b16 %v9640, %v9639
    %v9659 = vpack.c.b16 %v9642, %v9641
    %v9660 = vpack.c.b16 %v9644, %v9643
    %v9661 = vpack.c.b16 %v9646, %v9645
    %v9662 = vpack.c.b16 %v9648, %v9647
    %v9663 = vpack.c.b16 %v9650, %v9649
    %v9664 = vpack.c.b16 %v9652, %v9651
    %v9678 = vsel %vm236, %v9278, 0
    %v9681 = vsel %vm236, %v9280, 0
    %v9684 = vsel %vm236, %v9282, 0
    %v9687 = vsel %vm236, %v9284, 0
    %9689 = vmatprep.subr.bf16.mxu0 0
    %9690 = vmatpush1.bf16.msra.mxu0 %v9653
    %9691 = vmatprep.subr.bf16.mxu0 0
    %9692 = vmatpush1.bf16.msra.mxu0 %v9654
    %9693 = vmatprep.subr.bf16.mxu0 0
    %9694 = vmatpush1.bf16.msra.mxu0 %v9655
    %9695 = vmatprep.subr.bf16.mxu0 0
    %9696 = vmatpush1.bf16.msra.mxu0 %v9656
    %9697 = vmatprep.subr.bf16.mxu0 0
    %9698 = vmatpush1.bf16.msra.mxu0 %v9657
    %9699 = vmatprep.subr.bf16.mxu0 0
    %9700 = vmatpush1.bf16.msra.mxu0 %v9658
    %9701 = vmatprep.subr.bf16.mxu0 0
    %9702 = vmatpush1.bf16.msra.mxu0 %v9659
    %9703 = vmatprep.subr.bf16.mxu0 0
    %9704 = vmatpush1.bf16.msra.mxu0 %v9660
    %9705 = vmatprep.subr.bf16.mxu0 0
    %9706 = vmatpush1.bf16.msra.mxu0 %v9661
    %9707 = vmatprep.subr.bf16.mxu0 0
    %9708 = vmatpush1.bf16.msra.mxu0 %v9662
    %9709 = vmatprep.subr.bf16.mxu0 0
    %9710 = vmatpush1.bf16.msra.mxu0 %v9663
    %9711 = vmatprep.subr.bf16.mxu0 0
    %9712 = vmatpush1.bf16.msra.mxu0 %v9664
    %9713 = vmatprep.subr.bf16.mxu0 0
    %9714 = vmatpush1.bf16.msra.mxu0 0
    %9715 = vmatprep.subr.bf16.mxu0 0
    %9716 = vmatpush1.bf16.msra.mxu0 0
    %9717 = vmatprep.subr.bf16.mxu0 0
    %9718 = vmatpush1.bf16.msra.mxu0 0
    %9719 = vmatprep.subr.bf16.mxu0 0
    %9720 = vmatpush1.bf16.msra.mxu0 0
    %9721 = vmatprep.mubr.bf16.mxu0 %v9678
    %9722 = vmatmul.mubr.bf16.gmra.mrb[0].mxu0 %v9277
    %v9723 = vpop.f32.mrb[0].mxu0
    %v9724 = vadd.f32 %v9575, %v9723
    %v9725 = vpop.f32.mrb[0].mxu0
    %v9726 = vpop.f32.mrb[0].mxu0
    %v9727 = vadd.f32 %v9578, %v9726
    %v9728 = vpop.f32.mrb[0].mxu0
    %9729 = vmatprep.mubr.bf16.mxu0 %v9681
    %9730 = vmatmul.mubr.bf16.gmra.mrb[0].mxu0 %v9279
    %v9731 = vpop.f32.mrb[0].mxu0
    %v9732 = vadd.f32 %v9583, %v9731
    %v9733 = vpop.f32.mrb[0].mxu0
    %v9734 = vpop.f32.mrb[0].mxu0
    %v9735 = vadd.f32 %v9586, %v9734
    %v9736 = vpop.f32.mrb[0].mxu0
    %9737 = vmatprep.mubr.bf16.mxu0 %v9684
    %9738 = vmatmul.mubr.bf16.gmra.mrb[0].mxu0 %v9281
    %v9739 = vpop.f32.mrb[0].mxu0
    %v9740 = vadd.f32 %v9591, %v9739
    %v9741 = vpop.f32.mrb[0].mxu0
    %v9742 = vpop.f32.mrb[0].mxu0
    %v9743 = vadd.f32 %v9594, %v9742
    %v9744 = vpop.f32.mrb[0].mxu0
    %9745 = vmatprep.mubr.bf16.mxu0 %v9687
    %9746 = vmatmul.mubr.bf16.gmra.mrb[0].mxu0 %v9283
    %v9747 = vpop.f32.mrb[0].mxu0
    %v9748 = vadd.f32 %v9599, %v9747
    %v9749 = vpop.f32.mrb[0].mxu0
    %v9750 = vpop.f32.mrb[0].mxu0
    %v9751 = vadd.f32 %v9602, %v9750
    %v9752 = vpop.f32.mrb[0].mxu0
    %9753 = vdwg.mxu0
    %s9754 = scalar_lea.vmem %s23, 64
    %v9755 = vld [vmem:[%s9754] sm:$0xf]
    %v9756 = vld [vmem:[%s9754 + $0x4] sm:$0xf]
    %v9757 = vld [vmem:[%s9754 + $0x8] sm:$0xf]
    %v9758 = vld [vmem:[%s9754 + $0xc] sm:$0xf]
    %v9759 = vld [vmem:[%s9754 + $0x10] sm:$0xf]
    %v9760 = vld [vmem:[%s9754 + $0x14] sm:$0xf]
    %v9761 = vld [vmem:[%s9754 + $0x18] sm:$0xf]
    %v9762 = vld [vmem:[%s9754 + $0x1c] sm:$0xf]
    %v9771 = vunpack.c.l.b16 %v9755
    %v9772 = vunpack.c.l.b16 %v9756
    %v9773 = vunpack.c.l.b16 %v9757
    %v9774 = vunpack.c.l.b16 %v9758
    %v9775 = vunpack.c.l.b16 %v9759
    %v9776 = vunpack.c.l.b16 %v9760
    %v9777 = vunpack.c.l.b16 %v9761
    %v9778 = vunpack.c.l.b16 %v9762
    %v9779 = vpack.c.b16 %v9772, %v9771
    %v9780 = vpack.c.b16 %v9774, %v9773
    %v9781 = vpack.c.b16 %v9776, %v9775
    %v9782 = vpack.c.b16 %v9778, %v9777
    %v9784 = vsel %vm1093, %v9779, 0
    %v9787 = vsel %vm1093, %v9780, 0
    %v9790 = vsel %vm1093, %v9781, 0
    %v9793 = vsel %vm1093, %v9782, 0
    %9795 = vmatprep.subr.bf16.mxu0 %v9161
    %9796 = vmatpush1.bf16.msra.mxu0 %v9160
    %9797 = vmatprep.subr.bf16.mxu0 %v9163
    %9798 = vmatpush1.bf16.msra.mxu0 %v9162
    %9799 = vmatprep.subr.bf16.mxu0 0
    %9800 = vmatpush1.bf16.msra.mxu0 0
    %9801 = vmatprep.subr.bf16.mxu0 0
    %9802 = vmatpush1.bf16.msra.mxu0 0
    %9803 = vmatprep.subr.bf16.mxu0 0
    %9804 = vmatpush1.bf16.msra.mxu0 0
    %9805 = vmatprep.subr.bf16.mxu0 0
    %9806 = vmatpush1.bf16.msra.mxu0 0
    %9807 = vmatprep.subr.bf16.mxu0 0
    %9808 = vmatpush1.bf16.msra.mxu0 0
    %9809 = vmatprep.subr.bf16.mxu0 0
    %9810 = vmatpush1.bf16.msra.mxu0 0
    %9811 = vmatprep.subr.bf16.mxu0 0
    %9812 = vmatpush1.bf16.msra.mxu0 0
    %9813 = vmatprep.subr.bf16.mxu0 0
    %9814 = vmatpush1.bf16.msra.mxu0 0
    %9815 = vmatprep.subr.bf16.mxu0 0
    %9816 = vmatpush1.bf16.msra.mxu0 0
    %9817 = vmatprep.subr.bf16.mxu0 0
    %9818 = vmatpush1.bf16.msra.mxu0 0
    %9819 = vmatprep.subr.bf16.mxu0 0
    %9820 = vmatpush1.bf16.msra.mxu0 0
    %9821 = vmatprep.subr.bf16.mxu0 0
    %9822 = vmatpush1.bf16.msra.mxu0 0
    %9823 = vmatprep.subr.bf16.mxu0 0
    %9824 = vmatpush1.bf16.msra.mxu0 0
    %9825 = vmatprep.subr.bf16.mxu0 0
    %9826 = vmatpush1.bf16.msra.mxu0 0
    %9827 = vmatprep.mubr.bf16.mxu0 0
    %9828 = vmatmul.mubr.bf16.gmra.mrb[0].mxu0 %v9784
    %v9829 = vpop.f32.mrb[0].mxu0
    %v9830 = vadd.f32 0.0, %v9829
    %v9831 = vpop.f32.mrb[0].mxu0
    %v9832 = vadd.f32 0.0, %v9831
    %v9833 = vpop.f32.mrb[0].mxu0
    %v9834 = vadd.f32 0.0, %v9833
    %v9835 = vpop.f32.mrb[0].mxu0
    %v9836 = vadd.f32 0.0, %v9835
    %9837 = vmatprep.mubr.bf16.mxu0 0
    %9838 = vmatmul.mubr.bf16.gmra.mrb[0].mxu0 %v9787
    %v9839 = vpop.f32.mrb[0].mxu0
    %v9840 = vadd.f32 0.0, %v9839
    %v9841 = vpop.f32.mrb[0].mxu0
    %v9842 = vadd.f32 0.0, %v9841
    %v9843 = vpop.f32.mrb[0].mxu0
    %v9844 = vadd.f32 0.0, %v9843
    %v9845 = vpop.f32.mrb[0].mxu0
    %v9846 = vadd.f32 0.0, %v9845
    %9847 = vmatprep.mubr.bf16.mxu0 0
    %9848 = vmatmul.mubr.bf16.gmra.mrb[0].mxu0 %v9790
    %v9849 = vpop.f32.mrb[0].mxu0
    %v9850 = vadd.f32 0.0, %v9849
    %v9851 = vpop.f32.mrb[0].mxu0
    %v9852 = vadd.f32 0.0, %v9851
    %v9853 = vpop.f32.mrb[0].mxu0
    %v9854 = vadd.f32 0.0, %v9853
    %v9855 = vpop.f32.mrb[0].mxu0
    %v9856 = vadd.f32 0.0, %v9855
    %9857 = vmatprep.mubr.bf16.mxu0 0
    %9858 = vmatmul.mubr.bf16.gmra.mrb[0].mxu0 %v9793
    %v9859 = vpop.f32.mrb[0].mxu0
    %v9860 = vadd.f32 0.0, %v9859
    %v9861 = vpop.f32.mrb[0].mxu0
    %v9862 = vadd.f32 0.0, %v9861
    %v9863 = vpop.f32.mrb[0].mxu0
    %v9864 = vadd.f32 0.0, %v9863
    %v9865 = vpop.f32.mrb[0].mxu0
    %v9866 = vadd.f32 0.0, %v9865
    %9867 = vdwg.mxu0
    %v9868 = vpack.c.bf16 %v9834, %v9830
    %v9869 = vpack.c.bf16 %v9836, %v9832
    %v9870 = vpack.c.bf16 %v9844, %v9840
    %v9871 = vpack.c.bf16 %v9846, %v9842
    %v9872 = vpack.c.bf16 %v9854, %v9850
    %v9873 = vpack.c.bf16 %v9856, %v9852
    %v9874 = vpack.c.bf16 %v9864, %v9860
    %v9875 = vpack.c.bf16 %v9866, %v9862
    %s9876 = scalar_lea.vmem [#allocation17], 192
    %v9877 = vld [vmem:[%s9876] sm:$0xf]
    %v9878 = vld [vmem:[%s9876 + $0x4] sm:$0xf]
    %v9879 = vld [vmem:[%s9876 + $0x8] sm:$0xf]
    %v9880 = vld [vmem:[%s9876 + $0xc] sm:$0xf]
    %v9881 = vld [vmem:[%s9876 + $0x10] sm:$0xf]
    %v9882 = vld [vmem:[%s9876 + $0x14] sm:$0xf]
    %v9883 = vld [vmem:[%s9876 + $0x18] sm:$0xf]
    %v9884 = vld [vmem:[%s9876 + $0x1c] sm:$0xf]
    %v9885 = vld [vmem:[%s9876 + $0x20] sm:$0xf]
    %v9886 = vld [vmem:[%s9876 + $0x24] sm:$0xf]
    %v9887 = vld [vmem:[%s9876 + $0x28] sm:$0xf]
    %v9888 = vld [vmem:[%s9876 + $0x2c] sm:$0xf]
    %v9889 = vld [vmem:[%s9876 + $0x30] sm:$0xf]
    %v9890 = vld [vmem:[%s9876 + $0x34] sm:$0xf]
    %v9891 = vld [vmem:[%s9876 + $0x38] sm:$0xf]
    %v9892 = vld [vmem:[%s9876 + $0x3c] sm:$0xf]
    %v9893 = vld [vmem:[%s9876 + $0x40] sm:$0xf]
    %v9894 = vld [vmem:[%s9876 + $0x44] sm:$0xf]
    %v9895 = vld [vmem:[%s9876 + $0x48] sm:$0xf]
    %v9896 = vld [vmem:[%s9876 + $0x4c] sm:$0xf]
    %v9897 = vld [vmem:[%s9876 + $0x50] sm:$0xf]
    %v9898 = vld [vmem:[%s9876 + $0x54] sm:$0xf]
    %v9899 = vld [vmem:[%s9876 + $0x58] sm:$0xf]
    %v9900 = vld [vmem:[%s9876 + $0x5c] sm:$0xf]
    %v9925 = vunpack.c.l.b16 %v9877
    %v9926 = vunpack.c.l.b16 %v9878
    %v9927 = vunpack.c.l.b16 %v9879
    %v9928 = vunpack.c.l.b16 %v9880
    %v9929 = vunpack.c.l.b16 %v9881
    %v9930 = vunpack.c.l.b16 %v9882
    %v9931 = vunpack.c.l.b16 %v9883
    %v9932 = vunpack.c.l.b16 %v9884
    %v9933 = vunpack.c.l.b16 %v9885
    %v9934 = vunpack.c.l.b16 %v9886
    %v9935 = vunpack.c.l.b16 %v9887
    %v9936 = vunpack.c.l.b16 %v9888
    %v9937 = vunpack.c.l.b16 %v9889
    %v9938 = vunpack.c.l.b16 %v9890
    %v9939 = vunpack.c.l.b16 %v9891
    %v9940 = vunpack.c.l.b16 %v9892
    %v9941 = vunpack.c.l.b16 %v9893
    %v9942 = vunpack.c.l.b16 %v9894
    %v9943 = vunpack.c.l.b16 %v9895
    %v9944 = vunpack.c.l.b16 %v9896
    %v9945 = vunpack.c.l.b16 %v9897
    %v9946 = vunpack.c.l.b16 %v9898
    %v9947 = vunpack.c.l.b16 %v9899
    %v9948 = vunpack.c.l.b16 %v9900
    %v9949 = vpack.c.b16 %v9926, %v9925
    %v9950 = vpack.c.b16 %v9928, %v9927
    %v9951 = vpack.c.b16 %v9930, %v9929
    %v9952 = vpack.c.b16 %v9932, %v9931
    %v9953 = vpack.c.b16 %v9934, %v9933
    %v9954 = vpack.c.b16 %v9936, %v9935
    %v9955 = vpack.c.b16 %v9938, %v9937
    %v9956 = vpack.c.b16 %v9940, %v9939
    %v9957 = vpack.c.b16 %v9942, %v9941
    %v9958 = vpack.c.b16 %v9944, %v9943
    %v9959 = vpack.c.b16 %v9946, %v9945
    %v9960 = vpack.c.b16 %v9948, %v9947
    %v9974 = vsel %vm236, %v9869, 0
    %v9977 = vsel %vm236, %v9871, 0
    %v9980 = vsel %vm236, %v9873, 0
    %v9983 = vsel %vm236, %v9875, 0
    %9985 = vmatprep.subr.bf16.mxu0 0
    %9986 = vmatpush1.bf16.msra.mxu0 %v9949
    %9987 = vmatprep.subr.bf16.mxu0 0
    %9988 = vmatpush1.bf16.msra.mxu0 %v9950
    %9989 = vmatprep.subr.bf16.mxu0 0
    %9990 = vmatpush1.bf16.msra.mxu0 %v9951
    %9991 = vmatprep.subr.bf16.mxu0 0
    %9992 = vmatpush1.bf16.msra.mxu0 %v9952
    %9993 = vmatprep.subr.bf16.mxu0 0
    %9994 = vmatpush1.bf16.msra.mxu0 %v9953
    %9995 = vmatprep.subr.bf16.mxu0 0
    %9996 = vmatpush1.bf16.msra.mxu0 %v9954
    %9997 = vmatprep.subr.bf16.mxu0 0
    %9998 = vmatpush1.bf16.msra.mxu0 %v9955
    %9999 = vmatprep.subr.bf16.mxu0 0
    %10000 = vmatpush1.bf16.msra.mxu0 %v9956
    %10001 = vmatprep.subr.bf16.mxu0 0
    %10002 = vmatpush1.bf16.msra.mxu0 %v9957
    %10003 = vmatprep.subr.bf16.mxu0 0
    %10004 = vmatpush1.bf16.msra.mxu0 %v9958
    %10005 = vmatprep.subr.bf16.mxu0 0
    %10006 = vmatpush1.bf16.msra.mxu0 %v9959
    %10007 = vmatprep.subr.bf16.mxu0 0
    %10008 = vmatpush1.bf16.msra.mxu0 %v9960
    %10009 = vmatprep.subr.bf16.mxu0 0
    %10010 = vmatpush1.bf16.msra.mxu0 0
    %10011 = vmatprep.subr.bf16.mxu0 0
    %10012 = vmatpush1.bf16.msra.mxu0 0
    %10013 = vmatprep.subr.bf16.mxu0 0
    %10014 = vmatpush1.bf16.msra.mxu0 0
    %10015 = vmatprep.subr.bf16.mxu0 0
    %10016 = vmatpush1.bf16.msra.mxu0 0
    %10017 = vmatprep.mubr.bf16.mxu0 %v9974
    %10018 = vmatmul.mubr.bf16.gmra.mrb[0].mxu0 %v9868
    %v10019 = vpop.f32.mrb[0].mxu0
    %v10020 = vadd.f32 0.0, %v10019
    %v10021 = vpop.f32.mrb[0].mxu0
    %v10022 = vpop.f32.mrb[0].mxu0
    %v10023 = vadd.f32 0.0, %v10022
    %v10024 = vpop.f32.mrb[0].mxu0
    %10025 = vmatprep.mubr.bf16.mxu0 %v9977
    %10026 = vmatmul.mubr.bf16.gmra.mrb[0].mxu0 %v9870
    %v10027 = vpop.f32.mrb[0].mxu0
    %v10028 = vadd.f32 0.0, %v10027
    %v10029 = vpop.f32.mrb[0].mxu0
    %v10030 = vpop.f32.mrb[0].mxu0
    %v10031 = vadd.f32 0.0, %v10030
    %v10032 = vpop.f32.mrb[0].mxu0
    %10033 = vmatprep.mubr.bf16.mxu0 %v9980
    %10034 = vmatmul.mubr.bf16.gmra.mrb[0].mxu0 %v9872
    %v10035 = vpop.f32.mrb[0].mxu0
    %v10036 = vadd.f32 0.0, %v10035
    %v10037 = vpop.f32.mrb[0].mxu0
    %v10038 = vpop.f32.mrb[0].mxu0
    %v10039 = vadd.f32 0.0, %v10038
    %v10040 = vpop.f32.mrb[0].mxu0
    %10041 = vmatprep.mubr.bf16.mxu0 %v9983
    %10042 = vmatmul.mubr.bf16.gmra.mrb[0].mxu0 %v9874
    %v10043 = vpop.f32.mrb[0].mxu0
    %v10044 = vadd.f32 0.0, %v10043
    %v10045 = vpop.f32.mrb[0].mxu0
    %v10046 = vpop.f32.mrb[0].mxu0
    %v10047 = vadd.f32 0.0, %v10046
    %v10048 = vpop.f32.mrb[0].mxu0
    %10049 = vdwg.mxu0
    %v10050 = vadd.f32 %v9724, %v10020
    %v10051 = vadd.f32 %v9727, %v10023
    %v10052 = vadd.f32 %v9732, %v10028
    %v10053 = vadd.f32 %v9735, %v10031
    %v10054 = vadd.f32 %v9740, %v10036
    %v10055 = vadd.f32 %v9743, %v10039
    %v10056 = vadd.f32 %v9748, %v10044
    %v10057 = vadd.f32 %v9751, %v10047
    %s10058 = scalar_lea.vmem %s23, 96
    %v10059 = vld [vmem:[%s10058] sm:$0xf]
    %v10060 = vld [vmem:[%s10058 + $0x4] sm:$0xf]
    %v10061 = vld [vmem:[%s10058 + $0x8] sm:$0xf]
    %v10062 = vld [vmem:[%s10058 + $0xc] sm:$0xf]
    %v10063 = vld [vmem:[%s10058 + $0x10] sm:$0xf]
    %v10064 = vld [vmem:[%s10058 + $0x14] sm:$0xf]
    %v10065 = vld [vmem:[%s10058 + $0x18] sm:$0xf]
    %v10066 = vld [vmem:[%s10058 + $0x1c] sm:$0xf]
    %v10075 = vunpack.c.l.b16 %v10059
    %v10076 = vunpack.c.l.b16 %v10060
    %v10077 = vunpack.c.l.b16 %v10061
    %v10078 = vunpack.c.l.b16 %v10062
    %v10079 = vunpack.c.l.b16 %v10063
    %v10080 = vunpack.c.l.b16 %v10064
    %v10081 = vunpack.c.l.b16 %v10065
    %v10082 = vunpack.c.l.b16 %v10066
    %v10083 = vpack.c.b16 %v10076, %v10075
    %v10084 = vpack.c.b16 %v10078, %v10077
    %v10085 = vpack.c.b16 %v10080, %v10079
    %v10086 = vpack.c.b16 %v10082, %v10081
    %v10088 = vsel %vm1093, %v10083, 0
    %v10091 = vsel %vm1093, %v10084, 0
    %v10094 = vsel %vm1093, %v10085, 0
    %v10097 = vsel %vm1093, %v10086, 0
    %10099 = vmatprep.subr.bf16.mxu0 %v9161
    %10100 = vmatpush1.bf16.msra.mxu0 %v9160
    %10101 = vmatprep.subr.bf16.mxu0 %v9163
    %10102 = vmatpush1.bf16.msra.mxu0 %v9162
    %10103 = vmatprep.subr.bf16.mxu0 0
    %10104 = vmatpush1.bf16.msra.mxu0 0
    %10105 = vmatprep.subr.bf16.mxu0 0
    %10106 = vmatpush1.bf16.msra.mxu0 0
    %10107 = vmatprep.subr.bf16.mxu0 0
    %10108 = vmatpush1.bf16.msra.mxu0 0
    %10109 = vmatprep.subr.bf16.mxu0 0
    %10110 = vmatpush1.bf16.msra.mxu0 0
    %10111 = vmatprep.subr.bf16.mxu0 0
    %10112 = vmatpush1.bf16.msra.mxu0 0
    %10113 = vmatprep.subr.bf16.mxu0 0
    %10114 = vmatpush1.bf16.msra.mxu0 0
    %10115 = vmatprep.subr.bf16.mxu0 0
    %10116 = vmatpush1.bf16.msra.mxu0 0
    %10117 = vmatprep.subr.bf16.mxu0 0
    %10118 = vmatpush1.bf16.msra.mxu0 0
    %10119 = vmatprep.subr.bf16.mxu0 0
    %10120 = vmatpush1.bf16.msra.mxu0 0
    %10121 = vmatprep.subr.bf16.mxu0 0
    %10122 = vmatpush1.bf16.msra.mxu0 0
    %10123 = vmatprep.subr.bf16.mxu0 0
    %10124 = vmatpush1.bf16.msra.mxu0 0
    %10125 = vmatprep.subr.bf16.mxu0 0
    %10126 = vmatpush1.bf16.msra.mxu0 0
    %10127 = vmatprep.subr.bf16.mxu0 0
    %10128 = vmatpush1.bf16.msra.mxu0 0
    %10129 = vmatprep.subr.bf16.mxu0 0
    %10130 = vmatpush1.bf16.msra.mxu0 0
    %10131 = vmatprep.mubr.bf16.mxu0 0
    %10132 = vmatmul.mubr.bf16.gmra.mrb[0].mxu0 %v10088
    %v10133 = vpop.f32.mrb[0].mxu0
    %v10134 = vadd.f32 0.0, %v10133
    %v10135 = vpop.f32.mrb[0].mxu0
    %v10136 = vadd.f32 0.0, %v10135
    %v10137 = vpop.f32.mrb[0].mxu0
    %v10138 = vadd.f32 0.0, %v10137
    %v10139 = vpop.f32.mrb[0].mxu0
    %v10140 = vadd.f32 0.0, %v10139
    %10141 = vmatprep.mubr.bf16.mxu0 0
    %10142 = vmatmul.mubr.bf16.gmra.mrb[0].mxu0 %v10091
    %v10143 = vpop.f32.mrb[0].mxu0
    %v10144 = vadd.f32 0.0, %v10143
    %v10145 = vpop.f32.mrb[0].mxu0
    %v10146 = vadd.f32 0.0, %v10145
    %v10147 = vpop.f32.mrb[0].mxu0
    %v10148 = vadd.f32 0.0, %v10147
    %v10149 = vpop.f32.mrb[0].mxu0
    %v10150 = vadd.f32 0.0, %v10149
    %10151 = vmatprep.mubr.bf16.mxu0 0
    %10152 = vmatmul.mubr.bf16.gmra.mrb[0].mxu0 %v10094
    %v10153 = vpop.f32.mrb[0].mxu0
    %v10154 = vadd.f32 0.0, %v10153
    %v10155 = vpop.f32.mrb[0].mxu0
    %v10156 = vadd.f32 0.0, %v10155
    %v10157 = vpop.f32.mrb[0].mxu0
    %v10158 = vadd.f32 0.0, %v10157
    %v10159 = vpop.f32.mrb[0].mxu0
    %v10160 = vadd.f32 0.0, %v10159
    %10161 = vmatprep.mubr.bf16.mxu0 0
    %10162 = vmatmul.mubr.bf16.gmra.mrb[0].mxu0 %v10097
    %v10163 = vpop.f32.mrb[0].mxu0
    %v10164 = vadd.f32 0.0, %v10163
    %v10165 = vpop.f32.mrb[0].mxu0
    %v10166 = vadd.f32 0.0, %v10165
    %v10167 = vpop.f32.mrb[0].mxu0
    %v10168 = vadd.f32 0.0, %v10167
    %v10169 = vpop.f32.mrb[0].mxu0
    %v10170 = vadd.f32 0.0, %v10169
    %10171 = vdwg.mxu0
    %v10172 = vpack.c.bf16 %v10138, %v10134
    %v10173 = vpack.c.bf16 %v10140, %v10136
    %v10174 = vpack.c.bf16 %v10148, %v10144
    %v10175 = vpack.c.bf16 %v10150, %v10146
    %v10176 = vpack.c.bf16 %v10158, %v10154
    %v10177 = vpack.c.bf16 %v10160, %v10156
    %v10178 = vpack.c.bf16 %v10168, %v10164
    %v10179 = vpack.c.bf16 %v10170, %v10166
    %s10180 = scalar_lea.vmem [#allocation17], 288
    %v10181 = vld [vmem:[%s10180] sm:$0xf]
    %v10182 = vld [vmem:[%s10180 + $0x4] sm:$0xf]
    %v10183 = vld [vmem:[%s10180 + $0x8] sm:$0xf]
    %v10184 = vld [vmem:[%s10180 + $0xc] sm:$0xf]
    %v10185 = vld [vmem:[%s10180 + $0x10] sm:$0xf]
    %v10186 = vld [vmem:[%s10180 + $0x14] sm:$0xf]
    %v10187 = vld [vmem:[%s10180 + $0x18] sm:$0xf]
    %v10188 = vld [vmem:[%s10180 + $0x1c] sm:$0xf]
    %v10189 = vld [vmem:[%s10180 + $0x20] sm:$0xf]
    %v10190 = vld [vmem:[%s10180 + $0x24] sm:$0xf]
    %v10191 = vld [vmem:[%s10180 + $0x28] sm:$0xf]
    %v10192 = vld [vmem:[%s10180 + $0x2c] sm:$0xf]
    %v10193 = vld [vmem:[%s10180 + $0x30] sm:$0xf]
    %v10194 = vld [vmem:[%s10180 + $0x34] sm:$0xf]
    %v10195 = vld [vmem:[%s10180 + $0x38] sm:$0xf]
    %v10196 = vld [vmem:[%s10180 + $0x3c] sm:$0xf]
    %v10197 = vld [vmem:[%s10180 + $0x40] sm:$0xf]
    %v10198 = vld [vmem:[%s10180 + $0x44] sm:$0xf]
    %v10199 = vld [vmem:[%s10180 + $0x48] sm:$0xf]
    %v10200 = vld [vmem:[%s10180 + $0x4c] sm:$0xf]
    %v10201 = vld [vmem:[%s10180 + $0x50] sm:$0xf]
    %v10202 = vld [vmem:[%s10180 + $0x54] sm:$0xf]
    %v10203 = vld [vmem:[%s10180 + $0x58] sm:$0xf]
    %v10204 = vld [vmem:[%s10180 + $0x5c] sm:$0xf]
    %v10229 = vunpack.c.l.b16 %v10181
    %v10230 = vunpack.c.l.b16 %v10182
    %v10231 = vunpack.c.l.b16 %v10183
    %v10232 = vunpack.c.l.b16 %v10184
    %v10233 = vunpack.c.l.b16 %v10185
    %v10234 = vunpack.c.l.b16 %v10186
    %v10235 = vunpack.c.l.b16 %v10187
    %v10236 = vunpack.c.l.b16 %v10188
    %v10237 = vunpack.c.l.b16 %v10189
    %v10238 = vunpack.c.l.b16 %v10190
    %v10239 = vunpack.c.l.b16 %v10191
    %v10240 = vunpack.c.l.b16 %v10192
    %v10241 = vunpack.c.l.b16 %v10193
    %v10242 = vunpack.c.l.b16 %v10194
    %v10243 = vunpack.c.l.b16 %v10195
    %v10244 = vunpack.c.l.b16 %v10196
    %v10245 = vunpack.c.l.b16 %v10197
    %v10246 = vunpack.c.l.b16 %v10198
    %v10247 = vunpack.c.l.b16 %v10199
    %v10248 = vunpack.c.l.b16 %v10200
    %v10249 = vunpack.c.l.b16 %v10201
    %v10250 = vunpack.c.l.b16 %v10202
    %v10251 = vunpack.c.l.b16 %v10203
    %v10252 = vunpack.c.l.b16 %v10204
    %v10253 = vpack.c.b16 %v10230, %v10229
    %v10254 = vpack.c.b16 %v10232, %v10231
    %v10255 = vpack.c.b16 %v10234, %v10233
    %v10256 = vpack.c.b16 %v10236, %v10235
    %v10257 = vpack.c.b16 %v10238, %v10237
    %v10258 = vpack.c.b16 %v10240, %v10239
    %v10259 = vpack.c.b16 %v10242, %v10241
    %v10260 = vpack.c.b16 %v10244, %v10243
    %v10261 = vpack.c.b16 %v10246, %v10245
    %v10262 = vpack.c.b16 %v10248, %v10247
    %v10263 = vpack.c.b16 %v10250, %v10249
    %v10264 = vpack.c.b16 %v10252, %v10251
    %v10278 = vsel %vm236, %v10173, 0
    %v10281 = vsel %vm236, %v10175, 0
    %v10284 = vsel %vm236, %v10177, 0
    %v10287 = vsel %vm236, %v10179, 0
    %10289 = vmatprep.subr.bf16.mxu0 0
    %10290 = vmatpush1.bf16.msra.mxu0 %v10253
    %10291 = vmatprep.subr.bf16.mxu0 0
    %10292 = vmatpush1.bf16.msra.mxu0 %v10254
    %10293 = vmatprep.subr.bf16.mxu0 0
    %10294 = vmatpush1.bf16.msra.mxu0 %v10255
    %10295 = vmatprep.subr.bf16.mxu0 0
    %10296 = vmatpush1.bf16.msra.mxu0 %v10256
    %10297 = vmatprep.subr.bf16.mxu0 0
    %10298 = vmatpush1.bf16.msra.mxu0 %v10257
    %10299 = vmatprep.subr.bf16.mxu0 0
    %10300 = vmatpush1.bf16.msra.mxu0 %v10258
    %10301 = vmatprep.subr.bf16.mxu0 0
    %10302 = vmatpush1.bf16.msra.mxu0 %v10259
    %10303 = vmatprep.subr.bf16.mxu0 0
    %10304 = vmatpush1.bf16.msra.mxu0 %v10260
    %10305 = vmatprep.subr.bf16.mxu0 0
    %10306 = vmatpush1.bf16.msra.mxu0 %v10261
    %10307 = vmatprep.subr.bf16.mxu0 0
    %10308 = vmatpush1.bf16.msra.mxu0 %v10262
    %10309 = vmatprep.subr.bf16.mxu0 0
    %10310 = vmatpush1.bf16.msra.mxu0 %v10263
    %10311 = vmatprep.subr.bf16.mxu0 0
    %10312 = vmatpush1.bf16.msra.mxu0 %v10264
    %10313 = vmatprep.subr.bf16.mxu0 0
    %10314 = vmatpush1.bf16.msra.mxu0 0
    %10315 = vmatprep.subr.bf16.mxu0 0
    %10316 = vmatpush1.bf16.msra.mxu0 0
    %10317 = vmatprep.subr.bf16.mxu0 0
    %10318 = vmatpush1.bf16.msra.mxu0 0
    %10319 = vmatprep.subr.bf16.mxu0 0
    %10320 = vmatpush1.bf16.msra.mxu0 0
    %10321 = vmatprep.mubr.bf16.mxu0 %v10278
    %10322 = vmatmul.mubr.bf16.gmra.mrb[0].mxu0 %v10172
    %v10323 = vpop.f32.mrb[0].mxu0
    %v10324 = vadd.f32 0.0, %v10323
    %v10325 = vpop.f32.mrb[0].mxu0
    %v10326 = vpop.f32.mrb[0].mxu0
    %v10327 = vadd.f32 0.0, %v10326
    %v10328 = vpop.f32.mrb[0].mxu0
    %10329 = vmatprep.mubr.bf16.mxu0 %v10281
    %10330 = vmatmul.mubr.bf16.gmra.mrb[0].mxu0 %v10174
    %v10331 = vpop.f32.mrb[0].mxu0
    %v10332 = vadd.f32 0.0, %v10331
    %v10333 = vpop.f32.mrb[0].mxu0
    %v10334 = vpop.f32.mrb[0].mxu0
    %v10335 = vadd.f32 0.0, %v10334
    %v10336 = vpop.f32.mrb[0].mxu0
    %10337 = vmatprep.mubr.bf16.mxu0 %v10284
    %10338 = vmatmul.mubr.bf16.gmra.mrb[0].mxu0 %v10176
    %v10339 = vpop.f32.mrb[0].mxu0
    %v10340 = vadd.f32 0.0, %v10339
    %v10341 = vpop.f32.mrb[0].mxu0
    %v10342 = vpop.f32.mrb[0].mxu0
    %v10343 = vadd.f32 0.0, %v10342
    %v10344 = vpop.f32.mrb[0].mxu0
    %10345 = vmatprep.mubr.bf16.mxu0 %v10287
    %10346 = vmatmul.mubr.bf16.gmra.mrb[0].mxu0 %v10178
    %v10347 = vpop.f32.mrb[0].mxu0
    %v10348 = vadd.f32 0.0, %v10347
    %v10349 = vpop.f32.mrb[0].mxu0
    %v10350 = vpop.f32.mrb[0].mxu0
    %v10351 = vadd.f32 0.0, %v10350
    %v10352 = vpop.f32.mrb[0].mxu0
    %10353 = vdwg.mxu0
    %v10354 = vadd.f32 %v10050, %v10324
    %v10355 = vadd.f32 %v10051, %v10327
    %v10356 = vadd.f32 %v10052, %v10332
    %v10357 = vadd.f32 %v10053, %v10335
    %v10358 = vadd.f32 %v10054, %v10340
    %v10359 = vadd.f32 %v10055, %v10343
    %v10360 = vadd.f32 %v10056, %v10348
    %v10361 = vadd.f32 %v10057, %v10351
    %v10362 = vld [vmem:[%s24] sm:$0x1]
    %v10364 = vlaneseq
    %v10365 = vshrl.u32 %v10364, 7
    %v10366 = vsub.s32 0, %v10365
    %v10367 = vrot.slane %v10362, %v10366
    %v10369 = vadd.f32 %v10354, %v10367
    %v10370 = vadd.f32 %v10355, %v10367
    %v10371 = vadd.f32 %v10356, %v10367
    %v10372 = vadd.f32 %v10357, %v10367
    %v10373 = vadd.f32 %v10358, %v10367
    %v10374 = vadd.f32 %v10359, %v10367
    %v10375 = vadd.f32 %v10360, %v10367
    %v10376 = vadd.f32 %v10361, %v10367
    %v10377 = vxor.u32 %v10369, 2147483648
    %v10378 = vxor.u32 %v10370, 2147483648
    %v10379 = vxor.u32 %v10371, 2147483648
    %v10380 = vxor.u32 %v10372, 2147483648
    %v10381 = vxor.u32 %v10373, 2147483648
    %v10382 = vxor.u32 %v10374, 2147483648
    %v10383 = vxor.u32 %v10375, 2147483648
    %v10384 = vxor.u32 %v10376, 2147483648
    %v10385 = vmul.f32 %v10377, 1.442695
    %v10386 = vpow.pop %v10385
    %v10387 = vmul.f32 %v10378, 1.442695
    %v10388 = vpow.pop %v10387
    %v10389 = vmul.f32 %v10379, 1.442695
    %v10390 = vpow.pop %v10389
    %v10391 = vmul.f32 %v10380, 1.442695
    %v10392 = vpow.pop %v10391
    %v10393 = vmul.f32 %v10381, 1.442695
    %v10394 = vpow.pop %v10393
    %v10395 = vmul.f32 %v10382, 1.442695
    %v10396 = vpow.pop %v10395
    %v10397 = vmul.f32 %v10383, 1.442695
    %v10398 = vpow.pop %v10397
    %v10399 = vmul.f32 %v10384, 1.442695
    %v10400 = vpow.pop %v10399
    %v10401 = vadd.f32 %v10386, 1.0
    %v10402 = vadd.f32 %v10388, 1.0
    %v10403 = vadd.f32 %v10390, 1.0
    %v10404 = vadd.f32 %v10392, 1.0
    %v10405 = vadd.f32 %v10394, 1.0
    %v10406 = vadd.f32 %v10396, 1.0
    %v10407 = vadd.f32 %v10398, 1.0
    %v10408 = vadd.f32 %v10400, 1.0
    %v10409 = vrcp.pop %v10401
    %v10410 = vmul.f32 1.0, %v10409
    %v10411 = vrcp.pop %v10402
    %v10412 = vmul.f32 1.0, %v10411
    %v10413 = vrcp.pop %v10403
    %v10414 = vmul.f32 1.0, %v10413
    %v10415 = vrcp.pop %v10404
    %v10416 = vmul.f32 1.0, %v10415
    %v10417 = vrcp.pop %v10405
    %v10418 = vmul.f32 1.0, %v10417
    %v10419 = vrcp.pop %v10406
    %v10420 = vmul.f32 1.0, %v10419
    %v10421 = vrcp.pop %v10407
    %v10422 = vmul.f32 1.0, %v10421
    %v10423 = vrcp.pop %v10408
    %v10424 = vmul.f32 1.0, %v10423
    %10425 = vst.msk [vmem:[%s26] sm:$0xff] %vm451, %v10410
    %10426 = vst.msk [vmem:[%s26 + $0x8] sm:$0xff] %vm451, %v10412
    %10427 = vst.msk [vmem:[%s26 + $0x10] sm:$0xff] %vm451, %v10414
    %10428 = vst.msk [vmem:[%s26 + $0x18] sm:$0xff] %vm451, %v10416
    %10429 = vst.msk [vmem:[%s26 + $0x20] sm:$0xff] %vm451, %v10418
    %10430 = vst.msk [vmem:[%s26 + $0x28] sm:$0xff] %vm451, %v10420
    %10431 = vst.msk [vmem:[%s26 + $0x30] sm:$0xff] %vm451, %v10422
    %10432 = vst.msk [vmem:[%s26 + $0x38] sm:$0xff] %vm451, %v10424
    // Predicated region
    $region142: #{ae_cifar10_v3_forward.1} parent=1 // pred_check
      _
    $region143: #{ae_cifar10_v3_forward.1} parent=1 // pred_check_branch
      %10434 = sbr.rel (0) target = $region145
    $region144: #{ae_cifar10_v3_forward.1} parent=1 // pred_region
      %s10436 = ssub.s32 128, 128
      %10437 = vsyncadd [#allocation4], %s10436
      %s10439 = sshll.u32 [#allocation19], 4
      %s10440 = int_to_ptr.vmem [resolvable:$true] %s10439
      %10442 = dma.vmem_to_hbm [thread:$0]  %s10440, 128, %s25, [#allocation4]
    $region145: #{ae_cifar10_v3_forward.1} parent=1 // pred_fallthru
      _
    // Predicated region
    $region146: #{ae_cifar10_v3_forward.1} parent=1 // pred_check
      _
    $region147: #{ae_cifar10_v3_forward.1} parent=1 // pred_check_branch
      %10444 = sbr.rel (0) target = $region149
    $region148: #{ae_cifar10_v3_forward.1} parent=1 // pred_region
      _
    $region149: #{ae_cifar10_v3_forward.1} parent=1 // pred_fallthru
      _
    // Predicated region
    $region150: #{ae_cifar10_v3_forward.1} parent=1 // pred_check
      _
    $region151: #{ae_cifar10_v3_forward.1} parent=1 // pred_check_branch
      %10446 = sbr.rel (0) target = $region153
    $region152: #{ae_cifar10_v3_forward.1} parent=1 // pred_region
      %10447 = dma.done [#allocation4], 128
    $region153: #{ae_cifar10_v3_forward.1} parent=1 // pred_fallthru
      _
    // Predicated region
    $region154: #{ae_cifar10_v3_forward.1} parent=1 // pred_check
      _
    $region155: #{ae_cifar10_v3_forward.1} parent=1 // pred_check_branch
      %10449 = sbr.rel (0) target = $region157
    $region156: #{ae_cifar10_v3_forward.1} parent=1 // pred_region
      _
    $region157: #{ae_cifar10_v3_forward.1} parent=1 // pred_fallthru
      _
    %10450 = vsyncpa [#allocation3], 1
    %10451 = vsyncpa [#allocation6], 1
    %10452 = vsyncpa [#allocation9], 1
    %10453 = vsyncpa [#allocation12], 1
    %10454 = vsyncpa [#allocation15], 1
    %10455 = vsyncpa [#allocation18], 1
    %10456 = vsyncpa [#allocation4], 1

</llo_original>
